<compile_context>
chip_gen: v7x
topology: tpu7x:2x2x1
jax: 0.10.0
libtpu: 0.0.40
codegen_flags: <defaults>
</compile_context>

<pallas_src>
import functools

import jax
import jax.numpy as jnp
from jax.experimental import pallas as pl
from jax.experimental.pallas import tpu as pltpu

_LN_EPS = 1e-5
_VMEM_LIMIT = 32 * 1024 * 1024  # scoped-VMEM budget; safe on v5e/v6e/v7x
_CENTRE = 4                     # hard-coded centre slice index from the torch module

# TODO(synk): nn.Dropout is identity at inference (dropout prob ignored); training-mode dropout not implemented.


# ----------------------------- in-kernel helpers -----------------------------

def _layernorm(x, g, b):
    mu = jnp.mean(x, axis=-1, keepdims=True)
    var = jnp.mean(jnp.square(x - mu), axis=-1, keepdims=True)
    return (x - mu) * jax.lax.rsqrt(var + _LN_EPS) * g + b


def _gelu(x):
    # exact (erf-based) GELU matching torch.nn.GELU(); Abramowitz & Stegun
    # rational erf, with the divide routed to the EUP via pl.reciprocal.
    a1, a2, a3, a4, a5 = (0.254829592, -0.284496736, 1.421413741,
                          -1.453152027, 1.061405429)
    pc = 0.3275911
    z = x * 0.7071067811865476
    az = jnp.abs(z)
    t = pl.reciprocal(1.0 + pc * az, approx=True)
    poly = ((((a5 * t + a4) * t + a3) * t + a2) * t + a1) * t
    erf_abs = 1.0 - poly * jnp.exp(-az * az)
    erf = jnp.where(z < 0.0, -erf_abs, erf_abs)
    return 0.5 * x * (1.0 + erf)


def _round_up(x, m):
    return ((x + m - 1) // m) * m


# --------------------------------- kernels -----------------------------------

def _linear_kernel(x_ref, g_ref, b_ref, w_ref, bias_ref, o_ref, *, pre_layernorm):
    """out = LN?(x) @ W + b on a tile of rows (W pre-transposed to (K, N))."""
    x = x_ref[...].astype(jnp.float32)
    if pre_layernorm:
        x = _layernorm(x, g_ref[...], b_ref[...])
    y = jnp.dot(x.astype(jnp.bfloat16), w_ref[...],
                preferred_element_type=jnp.float32) + bias_ref[...]
    o_ref[...] = y.astype(o_ref.dtype)


def _inter_attn_kernel(x_ref, g_ref, b_ref, wq_ref, bq_ref, wkv_ref, bkv_ref,
                       wo_ref, bo_ref, hsel_ref, hselt_ref, o_ref,
                       *, num_heads, centre):
    """Centre-query inter-attention for TS sequences at once.

    out[t] = OutProj( softmax(q_c . K / sqrt(d)) V ) + x[t, centre]
    Per-head reduction / broadcast is done with a constant 0/1 head-selector
    matmul -> no per-head lane slices, no concat, no transposes.
    """
    x = x_ref[...].astype(jnp.float32)                      # (TS, L, E)
    TS, L, E = x.shape
    d = E // num_heads
    scale = 1.0 / (d ** 0.5)

    x2 = x.reshape(TS * L, E)
    xn = _layernorm(x2, g_ref[...], b_ref[...])             # (TS*L, E), f32

    # K,V for all rows: one big-M MXU matmul (M = TS*L, N = 2E).
    kv = jnp.dot(xn.astype(jnp.bfloat16), wkv_ref[...],
                 preferred_element_type=jnp.float32) + bkv_ref[...]   # (TS*L, 2E)
    # Q only for the centre rows (the only rows the graph consumes).
    xc = xn.reshape(TS, L, E)[:, centre, :]                 # (TS, E)
    q = jnp.dot(xc.astype(jnp.bfloat16), wq_ref[...],
                preferred_element_type=jnp.float32) + bq_ref[...]     # (TS, E)

    kv3 = kv.reshape(TS, L, 2 * E)
    k3 = kv3[:, :, :E]                                      # (TS, L, E)
    v3 = kv3[:, :, E:]                                      # (TS, L, E)

    # Per-head scores via head-selector matmul: s[t, l, h] = sum_{e in h} q*k.
    s_all = q[:, None, :] * k3                              # (TS, L, E)
    s_h = jnp.dot(s_all.reshape(TS * L, E), hsel_ref[...],
                  preferred_element_type=jnp.float32) * scale
    s_h = s_h.reshape(TS, L, num_heads)

    m = jnp.max(s_h, axis=1, keepdims=True)
    p = jnp.exp(s_h - m)
    den = jnp.sum(p, axis=1, keepdims=True)
    p = p * pl.reciprocal(den, approx=True)                 # EUP reciprocal

    # Broadcast each head's probability across its d lanes and contract over L.
    p_full = jnp.dot(p.reshape(TS * L, num_heads), hselt_ref[...],
                     preferred_element_type=jnp.float32).reshape(TS, L, E)
    ctx = jnp.sum(p_full * v3, axis=1)                      # (TS, E)

    out = jnp.dot(ctx.astype(jnp.bfloat16), wo_ref[...],
                  preferred_element_type=jnp.float32) + bo_ref[...]
    out = out + x[:, centre, :]                             # residual vs ORIGINAL x
    o_ref[...] = out.astype(o_ref.dtype)


def _intra_ffn_kernel(x_ref, wqkv_ref, bqkv_ref, wo_ref, bo_ref,
                      ln_g_ref, ln_b_ref, w1_ref, b1_ref, w2_ref, b2_ref, o_ref,
                      *, num_heads):
    """Fused: y = MHA(x) + x ; out = FFN(LN(y)) + y for one sequence."""
    x = x_ref[0].astype(jnp.float32)                        # (P, E)
    P, E = x.shape
    d = E // num_heads
    scale = 1.0 / (d ** 0.5)

    qkv = jnp.dot(x.astype(jnp.bfloat16), wqkv_ref[...],
                  preferred_element_type=jnp.float32) + bqkv_ref[...]  # (P, 3E)

    ctx = []
    for h in range(num_heads):                              # static unroll
        lo = h * d
        q_h = qkv[:, lo:lo + d].astype(jnp.bfloat16)
        k_h = qkv[:, E + lo:E + lo + d].astype(jnp.bfloat16)
        v_h = qkv[:, 2 * E + lo:2 * E + lo + d].astype(jnp.bfloat16)
        s = jax.lax.dot_general(q_h, k_h, (((1,), (1,)), ((), ())),
                                preferred_element_type=jnp.float32) * scale
        m = jnp.max(s, axis=-1, keepdims=True)
        p = jnp.exp(s - m)
        den = jnp.sum(p, axis=-1, keepdims=True)
        attn = p * pl.reciprocal(den, approx=True)
        ctx.append(jnp.dot(attn.astype(jnp.bfloat16), v_h,
                           preferred_element_type=jnp.float32))
    ctx = jnp.concatenate(ctx, axis=-1)                     # (P, E)

    att_out = jnp.dot(ctx.astype(jnp.bfloat16), wo_ref[...],
                      preferred_element_type=jnp.float32) + bo_ref[...]
    y = att_out + x                                         # intra residual

    # FeedForward: LN + Linear + GELU + Linear + residual (fused — no HBM trip)
    yn = _layernorm(y, ln_g_ref[...], ln_b_ref[...])
    h1 = jnp.dot(yn.astype(jnp.bfloat16), w1_ref[...],
                 preferred_element_type=jnp.float32) + b1_ref[...]
    h1 = _gelu(h1)
    h2 = jnp.dot(h1.astype(jnp.bfloat16), w2_ref[...],
                 preferred_element_type=jnp.float32) + b2_ref[...]
    o_ref[0] = (h2 + y).astype(o_ref.dtype)


# -------------------------------- wrappers ------------------------------------

def linear_pallas(x2d, w, b, *, ln_g=None, ln_b=None, out_dtype=jnp.bfloat16,
                  pad_out_lanes=False, tm_target=256):
    """y = LayerNorm?(x) @ w.T + b (w in torch (N, K) layout), rows tiled.

    pad_out_lanes=True pads N up to a multiple of 128 with zero columns so the
    output store is lane-dense (un-masked); the pad is sliced off afterwards.
    """
    M, K = x2d.shape
    N = w.shape[0]
    pre_ln = ln_g is not None

    Np = _round_up(max(N, 128), 128) if pad_out_lanes else N
    if Np != N:
        w_t = jnp.zeros((K, Np), jnp.bfloat16).at[:, :N].set(w.T.astype(jnp.bfloat16))
        bias = jnp.zeros((1, Np), jnp.float32).at[:, :N].set(
            b.reshape(1, N).astype(jnp.float32))
    else:
        w_t = w.T.astype(jnp.bfloat16)
        bias = b.reshape(1, N).astype(jnp.float32)

    g = (ln_g if pre_ln else jnp.ones((K,), jnp.float32)).reshape(1, K).astype(jnp.float32)
    beta = (ln_b if pre_ln else jnp.zeros((K,), jnp.float32)).reshape(1, K).astype(jnp.float32)

    # Pad M up to a friendly tile (instead of shrinking tm to an awkward divisor).
    tm = min(tm_target, _round_up(M, 8))
    Mp = _round_up(M, tm)
    x_in = x2d if Mp == M else jnp.pad(x2d, ((0, Mp - M), (0, 0)))

    kernel = functools.partial(_linear_kernel, pre_layernorm=pre_ln)
    out = pl.pallas_call(
        kernel,
        out_shape=jax.ShapeDtypeStruct((Mp, Np), out_dtype),
        grid_spec=pltpu.PrefetchScalarGridSpec(
            num_scalar_prefetch=0,
            grid=(Mp // tm,),
            in_specs=[
                pl.BlockSpec((tm, K), lambda i: (i, 0)),
                pl.BlockSpec((1, K), lambda i: (0, 0)),
                pl.BlockSpec((1, K), lambda i: (0, 0)),
                pl.BlockSpec((K, Np), lambda i: (0, 0)),
                pl.BlockSpec((1, Np), lambda i: (0, 0)),
            ],
            out_specs=pl.BlockSpec((tm, Np), lambda i: (i, 0)),
        ),
        compiler_params=pltpu.CompilerParams(
            dimension_semantics=("parallel",),
            vmem_limit_bytes=_VMEM_LIMIT),
    )(x_in, g, beta, w_t, bias)
    return out[:M, :N]


def inter_attention_pallas(x, att, heads, *, ln_g, ln_b, centre=_CENTRE, ts_target=32):
    """Centre-query inter-attention: (S, L, E) -> (S, E) = MHA(LN(x))[centre] + x[centre]."""
    S, L, E = x.shape
    assert E % heads == 0
    d = E // heads

    ts = min(ts_target, _round_up(S, 8))
    Sp = _round_up(S, ts)
    x_in = x if Sp == S else jnp.pad(x, ((0, Sp - S), (0, 0), (0, 0)))

    g = ln_g.reshape(1, E).astype(jnp.float32)
    beta = ln_b.reshape(1, E).astype(jnp.float32)
    in_w, in_b = att["in_w"], att["in_b"]
    wq_t = in_w[:E].T.astype(jnp.bfloat16)                  # (E, E)
    bq = in_b[:E].reshape(1, E).astype(jnp.float32)
    wkv_t = in_w[E:].T.astype(jnp.bfloat16)                 # (E, 2E)
    bkv = in_b[E:].reshape(1, 2 * E).astype(jnp.float32)
    wo_t = att["out_w"].T.astype(jnp.bfloat16)              # (E, E)
    bo = att["out_b"].reshape(1, E).astype(jnp.float32)
    # constant 0/1 head-selector: hsel[e, h] = 1 iff lane e belongs to head h
    hsel = (jnp.arange(E)[:, None] // d == jnp.arange(heads)[None, :]).astype(jnp.float32)
    hselt = hsel.T

    kernel = functools.partial(_inter_attn_kernel, num_heads=heads, centre=centre)
    out = pl.pallas_call(
        kernel,
        out_shape=jax.ShapeDtypeStruct((Sp, E), jnp.bfloat16),
        grid_spec=pltpu.PrefetchScalarGridSpec(
            num_scalar_prefetch=0,
            grid=(Sp // ts,),
            in_specs=[
                pl.BlockSpec((ts, L, E), lambda i: (i, 0, 0)),
                pl.BlockSpec((1, E), lambda i: (0, 0)),
                pl.BlockSpec((1, E), lambda i: (0, 0)),
                pl.BlockSpec((E, E), lambda i: (0, 0)),
                pl.BlockSpec((1, E), lambda i: (0, 0)),
                pl.BlockSpec((E, 2 * E), lambda i: (0, 0)),
                pl.BlockSpec((1, 2 * E), lambda i: (0, 0)),
                pl.BlockSpec((E, E), lambda i: (0, 0)),
                pl.BlockSpec((1, E), lambda i: (0, 0)),
                pl.BlockSpec((E, heads), lambda i: (0, 0)),
                pl.BlockSpec((heads, E), lambda i: (0, 0)),
            ],
            out_specs=pl.BlockSpec((ts, E), lambda i: (i, 0)),
        ),
        compiler_params=pltpu.CompilerParams(
            dimension_semantics=("parallel",),
            vmem_limit_bytes=_VMEM_LIMIT),
    )(x_in, g, beta, wq_t, bq, wkv_t, bkv, wo_t, bo, hsel, hselt)
    return out[:S]


def intra_ffn_pallas(xc, att, ff, heads):
    """Fused IntraAttention + residual + FeedForward + residual: (B, P, E) -> (B, P, E)."""
    B, P, E = xc.shape
    assert E % heads == 0
    H = ff["w1"].shape[0]

    wqkv_t = att["in_w"].T.astype(jnp.bfloat16)             # (E, 3E)
    bqkv = att["in_b"].reshape(1, 3 * E).astype(jnp.float32)
    wo_t = att["out_w"].T.astype(jnp.bfloat16)              # (E, E)
    bo = att["out_b"].reshape(1, E).astype(jnp.float32)
    g = ff["ln_g"].reshape(1, E).astype(jnp.float32)
    beta = ff["ln_b"].reshape(1, E).astype(jnp.float32)
    w1_t = ff["w1"].T.astype(jnp.bfloat16)                  # (E, H)
    b1 = ff["b1"].reshape(1, H).astype(jnp.float32)
    w2_t = ff["w2"].T.astype(jnp.bfloat16)                  # (H, E)
    b2 = ff["b2"].reshape(1, E).astype(jnp.float32)

    kernel = functools.partial(_intra_ffn_kernel, num_heads=heads)
    return pl.pallas_call(
        kernel,
        out_shape=jax.ShapeDtypeStruct((B, P, E), jnp.bfloat16),
        grid_spec=pltpu.PrefetchScalarGridSpec(
            num_scalar_prefetch=0,
            grid=(B,),
            in_specs=[
                pl.BlockSpec((1, P, E), lambda b: (b, 0, 0)),
                pl.BlockSpec((E, 3 * E), lambda b: (0, 0)),
                pl.BlockSpec((1, 3 * E), lambda b: (0, 0)),
                pl.BlockSpec((E, E), lambda b: (0, 0)),
                pl.BlockSpec((1, E), lambda b: (0, 0)),
                pl.BlockSpec((1, E), lambda b: (0, 0)),
                pl.BlockSpec((1, E), lambda b: (0, 0)),
                pl.BlockSpec((E, H), lambda b: (0, 0)),
                pl.BlockSpec((1, H), lambda b: (0, 0)),
                pl.BlockSpec((H, E), lambda b: (0, 0)),
                pl.BlockSpec((1, E), lambda b: (0, 0)),
            ],
            out_specs=pl.BlockSpec((1, P, E), lambda b: (b, 0, 0)),
        ),
        compiler_params=pltpu.CompilerParams(
            dimension_semantics=("parallel",),
            vmem_limit_bytes=_VMEM_LIMIT),
    )(xc, wqkv_t, bqkv, wo_t, bo, g, beta, w1_t, b1, w2_t, b2)


# ------------------------------ full forward ----------------------------------

def vit_forward_pallas(img, params, *, patch_size, heads):
    B, C, N, Himg, Wimg = img.shape
    hp, wp = Himg // patch_size, Wimg // patch_size
    P = hp * wp
    E = params["pos_embedding"].shape[-1]
    assert E % heads == 0, "embed_dim must be divisible by num_heads"
    assert N >= _CENTRE + 1, "neighbour axis must have >= 5 entries (centre index 4)"
    assert P == Himg * Wimg, "Embedding2Pixel requires patch_size == 1"

    # PixelEmbedding: rearrange is wrapper-side layout plumbing; the Linear is
    # a Pallas matmul with M = B*P*N folded into the row dimension.
    x = img.reshape(B, C, N, hp, patch_size, wp, patch_size)
    x = x.transpose(0, 3, 5, 2, 4, 6, 1).reshape(B * P * N, patch_size * patch_size * C)
    pe = params["pixel_embedding"]
    x = linear_pallas(x, pe["w"], pe["b"], out_dtype=jnp.bfloat16)
    x = x.reshape(B, P, N, E)
    x = x + params["pos_embedding"][:, :N].astype(jnp.bfloat16)   # bf16 between kernels
    x_seq = x.reshape(B * P, N, E)

    # Transformer: per the torch module every layer reads the same x and only
    # the LAST layer's x_final feeds the head (kept as-is for fidelity).
    x_final = None
    for layer in params["layers"]:
        inter, intra, ff = layer["inter"], layer["intra"], layer["ff"]
        centre_rows = inter_attention_pallas(
            x_seq, inter["att"], heads,
            ln_g=inter["ln_g"], ln_b=inter["ln_b"])                # (B*P, E) bf16
        x_final = intra_ffn_pallas(centre_rows.reshape(B, P, E),
                                   intra["att"], ff, heads)        # (B, P, E) bf16

    # final LayerNorm fused into the Embedding2Pixel projection; output lanes
    # padded to 128 (un-masked stores) and sliced back to C channels.
    e2p = params["embedding2pixel"]
    y = linear_pallas(x_final.reshape(B * P, E), e2p["w"], e2p["b"],
                      ln_g=params["final_ln_g"], ln_b=params["final_ln_b"],
                      out_dtype=jnp.float32, pad_out_lanes=True)   # (B*P, C) f32
    return y.reshape(B, Himg, Wimg, C).transpose(0, 3, 1, 2)


# ------------------------- pure-JAX reference (f32) ----------------------------

def _layernorm_ref(x, g, b):
    mu = jnp.mean(x, -1, keepdims=True)
    var = jnp.mean(jnp.square(x - mu), -1, keepdims=True)
    return (x - mu) / jnp.sqrt(var + _LN_EPS) * g + b


def _mha_ref(x, p, num_heads):
    S, L, E = x.shape
    d = E // num_heads
    w, b = p["in_w"], p["in_b"]
    q = x @ w[:E].T + b[:E]
    k = x @ w[E:2 * E].T + b[E:2 * E]
    v = x @ w[2 * E:].T + b[2 * E:]
    split = lambda t: t.reshape(S, L, num_heads, d).transpose(0, 2, 1, 3)
    q, k, v = split(q), split(k), split(v)
    s = jnp.einsum("shqd,shkd->shqk", q, k) / (d ** 0.5)
    a = jax.nn.softmax(s, axis=-1)
    ctx = jnp.einsum("shqk,shkd->shqd", a, v)
    ctx = ctx.transpose(0, 2, 1, 3).reshape(S, L, E)
    return ctx @ p["out_w"].T + p["out_b"]


def vit_forward_ref(img, params, *, patch_size, heads):
    B, C, N, Himg, Wimg = img.shape
    hp, wp = Himg // patch_size, Wimg // patch_size
    P = hp * wp
    E = params["pos_embedding"].shape[-1]
    x = img.reshape(B, C, N, hp, patch_size, wp, patch_size)
    x = x.transpose(0, 3, 5, 2, 4, 6, 1).reshape(B, P, N, patch_size * patch_size * C)
    pe = params["pixel_embedding"]
    x = x @ pe["w"].T + pe["b"]
    x = x + params["pos_embedding"][:, :N]
    x_final = None
    for layer in params["layers"]:
        inter, intra, ff = layer["inter"], layer["intra"], layer["ff"]
        xn = _layernorm_ref(x, inter["ln_g"], inter["ln_b"])
        x_inter = _mha_ref(xn.reshape(B * P, N, E), inter["att"], heads).reshape(B, P, N, E)
        x_inter_res = x_inter + x
        centre = x_inter_res[:, :, _CENTRE, :]
        x_intra_res = _mha_ref(centre, intra["att"], heads) + centre
        h = _layernorm_ref(x_intra_res, ff["ln_g"], ff["ln_b"])
        h = jax.nn.gelu(h @ ff["w1"].T + ff["b1"], approximate=False)
        h = h @ ff["w2"].T + ff["b2"]
        x_final = h + x_intra_res
    y = _layernorm_ref(x_final, params["final_ln_g"], params["final_ln_b"])
    e2p = params["embedding2pixel"]
    y = y @ e2p["w"].T + e2p["b"]
    return y.reshape(B, Himg, Wimg, C).transpose(0, 3, 1, 2)


# --------------------------------- params --------------------------------------

def init_params(key, *, img_size, patch_size, embedding_dim, heads, num_layers, channels):
    E = embedding_dim
    P = (img_size // patch_size) ** 2
    k_in = patch_size * patch_size * channels
    keys = jax.random.split(key, 8 + num_layers)
    w = lambda k, shape, s=0.1: jax.random.normal(k, shape, jnp.float32) * s
    params = {
        "pixel_embedding": {"w": w(keys[0], (E, k_in)), "b": w(keys[1], (E,), 0.05)},
        "pos_embedding": w(keys[2], (1, P, E), 0.5),
        "layers": [],
        "final_ln_g": 1.0 + w(keys[3], (E,), 0.05),
        "final_ln_b": w(keys[4], (E,), 0.05),
        "embedding2pixel": {"w": w(keys[5], (channels, E)), "b": w(keys[6], (channels,), 0.05)},
    }
    for i in range(num_layers):
        lk = jax.random.split(keys[7 + i], 16)
        params["layers"].append({
            "inter": {
                "ln_g": 1.0 + w(lk[0], (E,), 0.05), "ln_b": w(lk[1], (E,), 0.05),
                "att": {"in_w": w(lk[2], (3 * E, E)), "in_b": w(lk[3], (3 * E,), 0.05),
                        "out_w": w(lk[4], (E, E)), "out_b": w(lk[5], (E,), 0.05)},
            },
            "intra": {
                "att": {"in_w": w(lk[6], (3 * E, E)), "in_b": w(lk[7], (3 * E,), 0.05),
                        "out_w": w(lk[8], (E, E)), "out_b": w(lk[9], (E,), 0.05)},
            },
            "ff": {
                "ln_g": 1.0 + w(lk[10], (E,), 0.05), "ln_b": w(lk[11], (E,), 0.05),
                "w1": w(lk[12], (E, E)), "b1": w(lk[13], (E,), 0.05),
                "w2": w(lk[14], (E, E)), "b2": w(lk[15], (E,), 0.05),
            },
        })
    return params


# ---------------------------------- demo ---------------------------------------

if __name__ == "__main__":
    # img = (B, C, neighbours, H, W); neighbour axis must have >= 5 entries
    # (index 4 is the centre slice); patch_size = 1 so num_patches == img_size**2
    # (required by Embedding2Pixel).
    B, C, N = 2, 3, 8
    IMG, PATCH = 8, 1
    E, HEADS, LAYERS = 32, 4, 1

    key = jax.random.PRNGKey(0)
    k_img, k_par = jax.random.split(key)
    img = jax.random.normal(k_img, (B, C, N, IMG, IMG), jnp.float32)
    params = init_params(k_par, img_size=IMG, patch_size=PATCH, embedding_dim=E,
                         heads=HEADS, num_layers=LAYERS, channels=C)

    fwd = jax.jit(functools.partial(vit_forward_pallas, patch_size=PATCH, heads=HEADS))
    out = jax.block_until_ready(fwd(img, params))

    ref = vit_forward_ref(img, params, patch_size=PATCH, heads=HEADS)
    assert out.shape == (B, C, IMG, IMG), out.shape
    max_err = float(jnp.max(jnp.abs(out - ref)))
    # tolerance accounts for bf16 MXU matmuls, bf16 inter-kernel activations and
    # approx (EUP) reciprocals vs the f32 reference
    assert jnp.allclose(out, ref, atol=6e-2, rtol=6e-2), f"mismatch, max abs err {max_err}"

    print("KERNEL_OK")
</pallas_src>

<mosaic_0001>
module attributes {stable_mosaic.version = 11 : i64} {
  func.func @_linear_kernel(%arg0: i32, %arg1: memref<256x3xf32, #tpu.memory_space<vmem>>, %arg2: memref<1x3xf32, #tpu.memory_space<vmem>>, %arg3: memref<1x3xf32, #tpu.memory_space<vmem>>, %arg4: memref<3x32xbf16, #tpu.memory_space<vmem>>, %arg5: memref<1x32xf32, #tpu.memory_space<vmem>>, %arg6: memref<256x32xbf16, #tpu.memory_space<vmem>>) attributes {dimension_semantics = [#tpu.dimension_semantics<parallel>], iteration_bounds = array<i64: 4>, scalar_prefetch = 0 : i64, scratch_operands = 0 : i64, tpu.core_type = #tpu.core_type<tc>, window_params = [{transform_indices = @transform_0, window_bounds = array<i64: 256, 3>}, {pipeline_mode = #tpu.pipeline_mode<synchronous>, transform_indices = @transform_1, window_bounds = array<i64: 1, 3>}, {pipeline_mode = #tpu.pipeline_mode<synchronous>, transform_indices = @transform_2, window_bounds = array<i64: 1, 3>}, {pipeline_mode = #tpu.pipeline_mode<synchronous>, transform_indices = @transform_3, window_bounds = array<i64: 3, 32>}, {pipeline_mode = #tpu.pipeline_mode<synchronous>, transform_indices = @transform_4, window_bounds = array<i64: 1, 32>}, {transform_indices = @transform_5, window_bounds = array<i64: 256, 32>}]} {
    %c0 = arith.constant 0 : index
    %c0_0 = arith.constant 0 : index
    %0 = vector.load %arg1[%c0, %c0_0] : memref<256x3xf32, #tpu.memory_space<vmem>>, vector<256x3xf32>
    %1 = arith.truncf %0 : vector<256x3xf32> to vector<256x3xbf16>
    %c0_1 = arith.constant 0 : index
    %c0_2 = arith.constant 0 : index
    %2 = vector.load %arg4[%c0_1, %c0_2] : memref<3x32xbf16, #tpu.memory_space<vmem>>, vector<3x32xbf16>
    %cst = arith.constant dense<0.000000e+00> : vector<256x32xf32>
    %3 = tpu.matmul %1, %2, %cst {dimension_numbers = #tpu.dot_dimension_numbers<[1], [0], [0], [1], [0, 0, 1, 1], [], []>} : vector<256x3xbf16>, vector<3x32xbf16>, vector<256x32xf32> -> vector<256x32xf32>
    %c0_3 = arith.constant 0 : index
    %c0_4 = arith.constant 0 : index
    %4 = vector.load %arg5[%c0_3, %c0_4] : memref<1x32xf32, #tpu.memory_space<vmem>>, vector<1x32xf32>
    %5 = vector.broadcast %4 : vector<1x32xf32> to vector<256x32xf32>
    %6 = arith.addf %3, %5 : vector<256x32xf32>
    %7 = arith.truncf %6 : vector<256x32xf32> to vector<256x32xbf16>
    %c0_5 = arith.constant 0 : index
    %c0_6 = arith.constant 0 : index
    %8 = vector.load %arg6[%c0_5, %c0_6] : memref<256x32xbf16, #tpu.memory_space<vmem>>, vector<256x32xbf16>
    tpu.vector_store %arg6[%c0_5, %c0_6], %7 {strides = array<i32>} : memref<256x32xbf16, #tpu.memory_space<vmem>>, vector<256x32xbf16>,
    return
  }
  func.func @transform_0(%arg0: i32) -> (i32, i32) {
    %c0_i32 = arith.constant 0 : i32
    %c0_i32_0 = arith.constant 0 : i32
    return %arg0, %c0_i32 : i32, i32
  }
  func.func @transform_1(%arg0: i32) -> (i32, i32) {
    %c0_i32 = arith.constant 0 : i32
    %c0_i32_0 = arith.constant 0 : i32
    %c0_i32_1 = arith.constant 0 : i32
    return %c0_i32, %c0_i32_0 : i32, i32
  }
  func.func @transform_2(%arg0: i32) -> (i32, i32) {
    %c0_i32 = arith.constant 0 : i32
    %c0_i32_0 = arith.constant 0 : i32
    %c0_i32_1 = arith.constant 0 : i32
    return %c0_i32, %c0_i32_0 : i32, i32
  }
  func.func @transform_3(%arg0: i32) -> (i32, i32) {
    %c0_i32 = arith.constant 0 : i32
    %c0_i32_0 = arith.constant 0 : i32
    %c0_i32_1 = arith.constant 0 : i32
    return %c0_i32, %c0_i32_0 : i32, i32
  }
  func.func @transform_4(%arg0: i32) -> (i32, i32) {
    %c0_i32 = arith.constant 0 : i32
    %c0_i32_0 = arith.constant 0 : i32
    %c0_i32_1 = arith.constant 0 : i32
    return %c0_i32, %c0_i32_0 : i32, i32
  }
  func.func @transform_5(%arg0: i32) -> (i32, i32) {
    %c0_i32 = arith.constant 0 : i32
    %c0_i32_0 = arith.constant 0 : i32
    return %arg0, %c0_i32 : i32, i32
  }
}

module attributes {stable_mosaic.version = 11 : i64} {
  func.func @_intra_ffn_kernel(%arg0: i32, %arg1: memref<1x64x32xbf16, #tpu.memory_space<vmem>>, %arg2: memref<32x96xbf16, #tpu.memory_space<vmem>>, %arg3: memref<1x96xf32, #tpu.memory_space<vmem>>, %arg4: memref<32x32xbf16, #tpu.memory_space<vmem>>, %arg5: memref<1x32xf32, #tpu.memory_space<vmem>>, %arg6: memref<1x32xf32, #tpu.memory_space<vmem>>, %arg7: memref<1x32xf32, #tpu.memory_space<vmem>>, %arg8: memref<32x32xbf16, #tpu.memory_space<vmem>>, %arg9: memref<1x32xf32, #tpu.memory_space<vmem>>, %arg10: memref<32x32xbf16, #tpu.memory_space<vmem>>, %arg11: memref<1x32xf32, #tpu.memory_space<vmem>>, %arg12: memref<1x64x32xbf16, #tpu.memory_space<vmem>>) attributes {dimension_semantics = [#tpu.dimension_semantics<parallel>], iteration_bounds = array<i64: 2>, scalar_prefetch = 0 : i64, scratch_operands = 0 : i64, tpu.core_type = #tpu.core_type<tc>, window_params = [{transform_indices = @transform_0, window_bounds = array<i64: 1, 64, 32>}, {pipeline_mode = #tpu.pipeline_mode<synchronous>, transform_indices = @transform_1, window_bounds = array<i64: 32, 96>}, {pipeline_mode = #tpu.pipeline_mode<synchronous>, transform_indices = @transform_2, window_bounds = array<i64: 1, 96>}, {pipeline_mode = #tpu.pipeline_mode<synchronous>, transform_indices = @transform_3, window_bounds = array<i64: 32, 32>}, {pipeline_mode = #tpu.pipeline_mode<synchronous>, transform_indices = @transform_4, window_bounds = array<i64: 1, 32>}, {pipeline_mode = #tpu.pipeline_mode<synchronous>, transform_indices = @transform_5, window_bounds = array<i64: 1, 32>}, {pipeline_mode = #tpu.pipeline_mode<synchronous>, transform_indices = @transform_6, window_bounds = array<i64: 1, 32>}, {pipeline_mode = #tpu.pipeline_mode<synchronous>, transform_indices = @transform_7, window_bounds = array<i64: 32, 32>}, {pipeline_mode = #tpu.pipeline_mode<synchronous>, transform_indices = @transform_8, window_bounds = array<i64: 1, 32>}, {pipeline_mode = #tpu.pipeline_mode<synchronous>, transform_indices = @transform_9, window_bounds = array<i64: 32, 32>}, {pipeline_mode = #tpu.pipeline_mode<synchronous>, transform_indices = @transform_10, window_bounds = array<i64: 1, 32>}, {transform_indices = @transform_11, window_bounds = array<i64: 1, 64, 32>}]} {
    %c0 = arith.constant 0 : index
    %c0_0 = arith.constant 0 : index
    %c0_1 = arith.constant 0 : index
    %0 = vector.load %arg1[%c0, %c0_0, %c0_1] : memref<1x64x32xbf16, #tpu.memory_space<vmem>>, vector<1x64x32xbf16>
    %1 = vector.shape_cast %0 : vector<1x64x32xbf16> to vector<64x32xbf16>
    %2 = arith.extf %1 : vector<64x32xbf16> to vector<64x32xf32>
    %3 = arith.truncf %2 : vector<64x32xf32> to vector<64x32xbf16>
    %c0_2 = arith.constant 0 : index
    %c0_3 = arith.constant 0 : index
    %4 = vector.load %arg2[%c0_2, %c0_3] : memref<32x96xbf16, #tpu.memory_space<vmem>>, vector<32x96xbf16>
    %cst = arith.constant dense<0.000000e+00> : vector<64x96xf32>
    %5 = tpu.matmul %3, %4, %cst {dimension_numbers = #tpu.dot_dimension_numbers<[1], [0], [0], [1], [0, 0, 1, 1], [], []>} : vector<64x32xbf16>, vector<32x96xbf16>, vector<64x96xf32> -> vector<64x96xf32>
    %c0_4 = arith.constant 0 : index
    %c0_5 = arith.constant 0 : index
    %6 = vector.load %arg3[%c0_4, %c0_5] : memref<1x96xf32, #tpu.memory_space<vmem>>, vector<1x96xf32>
    %7 = vector.broadcast %6 : vector<1x96xf32> to vector<64x96xf32>
    %8 = arith.addf %5, %7 : vector<64x96xf32>
    %9 = vector.extract_strided_slice %8 {offsets = [0, 0], sizes = [64, 8], strides = [1, 1]} : vector<64x96xf32> to vector<64x8xf32>
    %10 = arith.truncf %9 : vector<64x8xf32> to vector<64x8xbf16>
    %11 = vector.extract_strided_slice %8 {offsets = [0, 32], sizes = [64, 8], strides = [1, 1]} : vector<64x96xf32> to vector<64x8xf32>
    %12 = arith.truncf %11 : vector<64x8xf32> to vector<64x8xbf16>
    %13 = vector.extract_strided_slice %8 {offsets = [0, 64], sizes = [64, 8], strides = [1, 1]} : vector<64x96xf32> to vector<64x8xf32>
    %14 = arith.truncf %13 : vector<64x8xf32> to vector<64x8xbf16>
    %cst_6 = arith.constant dense<0.000000e+00> : vector<64x64xf32>
    %15 = tpu.matmul %10, %12, %cst_6 {dimension_numbers = #tpu.dot_dimension_numbers<[1], [1], [0], [0], [0, 0, 1, 0], [], []>} : vector<64x8xbf16>, vector<64x8xbf16>, vector<64x64xf32> -> vector<64x64xf32>
    %cst_7 = arith.constant 0.353553385 : f32
    %16 = vector.broadcast %cst_7 : f32 to vector<64x64xf32>
    %17 = arith.mulf %15, %16 : vector<64x64xf32>
    %cst_8 = arith.constant dense<0xFF800000> : vector<64xf32>
    %18 = vector.multi_reduction <maximumf>, %17, %cst_8 [1] : vector<64x64xf32> to vector<64xf32>
    %19 = vector.shape_cast %18 : vector<64xf32> to vector<64x1xf32>
    %20 = vector.broadcast %19 : vector<64x1xf32> to vector<64x64xf32>
    %21 = arith.subf %17, %20 : vector<64x64xf32>
    %22 = math.exp %21 : vector<64x64xf32>
    %cst_9 = arith.constant dense<0.000000e+00> : vector<64xf32>
    %23 = vector.multi_reduction <add>, %22, %cst_9 [1] : vector<64x64xf32> to vector<64xf32>
    %24 = vector.shape_cast %23 : vector<64xf32> to vector<64x1xf32>
    %25 = tpu.reciprocal %24 {approx = true} : vector<64x1xf32> -> vector<64x1xf32>
    %26 = vector.broadcast %25 : vector<64x1xf32> to vector<64x64xf32>
    %27 = arith.mulf %22, %26 : vector<64x64xf32>
    %28 = arith.truncf %27 : vector<64x64xf32> to vector<64x64xbf16>
    %cst_10 = arith.constant dense<0.000000e+00> : vector<64x8xf32>
    %29 = tpu.matmul %28, %14, %cst_10 {dimension_numbers = #tpu.dot_dimension_numbers<[1], [0], [0], [1], [0, 0, 1, 1], [], []>} : vector<64x64xbf16>, vector<64x8xbf16>, vector<64x8xf32> -> vector<64x8xf32>
    %30 = vector.extract_strided_slice %8 {offsets = [0, 8], sizes = [64, 8], strides = [1, 1]} : vector<64x96xf32> to vector<64x8xf32>
    %31 = arith.truncf %30 : vector<64x8xf32> to vector<64x8xbf16>
    %32 = vector.extract_strided_slice %8 {offsets = [0, 40], sizes = [64, 8], strides = [1, 1]} : vector<64x96xf32> to vector<64x8xf32>
    %33 = arith.truncf %32 : vector<64x8xf32> to vector<64x8xbf16>
    %34 = vector.extract_strided_slice %8 {offsets = [0, 72], sizes = [64, 8], strides = [1, 1]} : vector<64x96xf32> to vector<64x8xf32>
    %35 = arith.truncf %34 : vector<64x8xf32> to vector<64x8xbf16>
    %cst_11 = arith.constant dense<0.000000e+00> : vector<64x64xf32>
    %36 = tpu.matmul %31, %33, %cst_11 {dimension_numbers = #tpu.dot_dimension_numbers<[1], [1], [0], [0], [0, 0, 1, 0], [], []>} : vector<64x8xbf16>, vector<64x8xbf16>, vector<64x64xf32> -> vector<64x64xf32>
    %cst_12 = arith.constant 0.353553385 : f32
    %37 = vector.broadcast %cst_12 : f32 to vector<64x64xf32>
    %38 = arith.mulf %36, %37 : vector<64x64xf32>
    %cst_13 = arith.constant dense<0xFF800000> : vector<64xf32>
    %39 = vector.multi_reduction <maximumf>, %38, %cst_13 [1] : vector<64x64xf32> to vector<64xf32>
    %40 = vector.shape_cast %39 : vector<64xf32> to vector<64x1xf32>
    %41 = vector.broadcast %40 : vector<64x1xf32> to vector<64x64xf32>
    %42 = arith.subf %38, %41 : vector<64x64xf32>
    %43 = math.exp %42 : vector<64x64xf32>
    %cst_14 = arith.constant dense<0.000000e+00> : vector<64xf32>
    %44 = vector.multi_reduction <add>, %43, %cst_14 [1] : vector<64x64xf32> to vector<64xf32>
    %45 = vector.shape_cast %44 : vector<64xf32> to vector<64x1xf32>
    %46 = tpu.reciprocal %45 {approx = true} : vector<64x1xf32> -> vector<64x1xf32>
    %47 = vector.broadcast %46 : vector<64x1xf32> to vector<64x64xf32>
    %48 = arith.mulf %43, %47 : vector<64x64xf32>
    %49 = arith.truncf %48 : vector<64x64xf32> to vector<64x64xbf16>
    %cst_15 = arith.constant dense<0.000000e+00> : vector<64x8xf32>
    %50 = tpu.matmul %49, %35, %cst_15 {dimension_numbers = #tpu.dot_dimension_numbers<[1], [0], [0], [1], [0, 0, 1, 1], [], []>} : vector<64x64xbf16>, vector<64x8xbf16>, vector<64x8xf32> -> vector<64x8xf32>
    %51 = vector.extract_strided_slice %8 {offsets = [0, 16], sizes = [64, 8], strides = [1, 1]} : vector<64x96xf32> to vector<64x8xf32>
    %52 = arith.truncf %51 : vector<64x8xf32> to vector<64x8xbf16>
    %53 = vector.extract_strided_slice %8 {offsets = [0, 48], sizes = [64, 8], strides = [1, 1]} : vector<64x96xf32> to vector<64x8xf32>
    %54 = arith.truncf %53 : vector<64x8xf32> to vector<64x8xbf16>
    %55 = vector.extract_strided_slice %8 {offsets = [0, 80], sizes = [64, 8], strides = [1, 1]} : vector<64x96xf32> to vector<64x8xf32>
    %56 = arith.truncf %55 : vector<64x8xf32> to vector<64x8xbf16>
    %cst_16 = arith.constant dense<0.000000e+00> : vector<64x64xf32>
    %57 = tpu.matmul %52, %54, %cst_16 {dimension_numbers = #tpu.dot_dimension_numbers<[1], [1], [0], [0], [0, 0, 1, 0], [], []>} : vector<64x8xbf16>, vector<64x8xbf16>, vector<64x64xf32> -> vector<64x64xf32>
    %cst_17 = arith.constant 0.353553385 : f32
    %58 = vector.broadcast %cst_17 : f32 to vector<64x64xf32>
    %59 = arith.mulf %57, %58 : vector<64x64xf32>
    %cst_18 = arith.constant dense<0xFF800000> : vector<64xf32>
    %60 = vector.multi_reduction <maximumf>, %59, %cst_18 [1] : vector<64x64xf32> to vector<64xf32>
    %61 = vector.shape_cast %60 : vector<64xf32> to vector<64x1xf32>
    %62 = vector.broadcast %61 : vector<64x1xf32> to vector<64x64xf32>
    %63 = arith.subf %59, %62 : vector<64x64xf32>
    %64 = math.exp %63 : vector<64x64xf32>
    %cst_19 = arith.constant dense<0.000000e+00> : vector<64xf32>
    %65 = vector.multi_reduction <add>, %64, %cst_19 [1] : vector<64x64xf32> to vector<64xf32>
    %66 = vector.shape_cast %65 : vector<64xf32> to vector<64x1xf32>
    %67 = tpu.reciprocal %66 {approx = true} : vector<64x1xf32> -> vector<64x1xf32>
    %68 = vector.broadcast %67 : vector<64x1xf32> to vector<64x64xf32>
    %69 = arith.mulf %64, %68 : vector<64x64xf32>
    %70 = arith.truncf %69 : vector<64x64xf32> to vector<64x64xbf16>
    %cst_20 = arith.constant dense<0.000000e+00> : vector<64x8xf32>
    %71 = tpu.matmul %70, %56, %cst_20 {dimension_numbers = #tpu.dot_dimension_numbers<[1], [0], [0], [1], [0, 0, 1, 1], [], []>} : vector<64x64xbf16>, vector<64x8xbf16>, vector<64x8xf32> -> vector<64x8xf32>
    %72 = vector.extract_strided_slice %8 {offsets = [0, 24], sizes = [64, 8], strides = [1, 1]} : vector<64x96xf32> to vector<64x8xf32>
    %73 = arith.truncf %72 : vector<64x8xf32> to vector<64x8xbf16>
    %74 = vector.extract_strided_slice %8 {offsets = [0, 56], sizes = [64, 8], strides = [1, 1]} : vector<64x96xf32> to vector<64x8xf32>
    %75 = arith.truncf %74 : vector<64x8xf32> to vector<64x8xbf16>
    %76 = vector.extract_strided_slice %8 {offsets = [0, 88], sizes = [64, 8], strides = [1, 1]} : vector<64x96xf32> to vector<64x8xf32>
    %77 = arith.truncf %76 : vector<64x8xf32> to vector<64x8xbf16>
    %cst_21 = arith.constant dense<0.000000e+00> : vector<64x64xf32>
    %78 = tpu.matmul %73, %75, %cst_21 {dimension_numbers = #tpu.dot_dimension_numbers<[1], [1], [0], [0], [0, 0, 1, 0], [], []>} : vector<64x8xbf16>, vector<64x8xbf16>, vector<64x64xf32> -> vector<64x64xf32>
    %cst_22 = arith.constant 0.353553385 : f32
    %79 = vector.broadcast %cst_22 : f32 to vector<64x64xf32>
    %80 = arith.mulf %78, %79 : vector<64x64xf32>
    %cst_23 = arith.constant dense<0xFF800000> : vector<64xf32>
    %81 = vector.multi_reduction <maximumf>, %80, %cst_23 [1] : vector<64x64xf32> to vector<64xf32>
    %82 = vector.shape_cast %81 : vector<64xf32> to vector<64x1xf32>
    %83 = vector.broadcast %82 : vector<64x1xf32> to vector<64x64xf32>
    %84 = arith.subf %80, %83 : vector<64x64xf32>
    %85 = math.exp %84 : vector<64x64xf32>
    %cst_24 = arith.constant dense<0.000000e+00> : vector<64xf32>
    %86 = vector.multi_reduction <add>, %85, %cst_24 [1] : vector<64x64xf32> to vector<64xf32>
    %87 = vector.shape_cast %86 : vector<64xf32> to vector<64x1xf32>
    %88 = tpu.reciprocal %87 {approx = true} : vector<64x1xf32> -> vector<64x1xf32>
    %89 = vector.broadcast %88 : vector<64x1xf32> to vector<64x64xf32>
    %90 = arith.mulf %85, %89 : vector<64x64xf32>
    %91 = arith.truncf %90 : vector<64x64xf32> to vector<64x64xbf16>
    %cst_25 = arith.constant dense<0.000000e+00> : vector<64x8xf32>
    %92 = tpu.matmul %91, %77, %cst_25 {dimension_numbers = #tpu.dot_dimension_numbers<[1], [0], [0], [1], [0, 0, 1, 1], [], []>} : vector<64x64xbf16>, vector<64x8xbf16>, vector<64x8xf32> -> vector<64x8xf32>
    %93 = tpu.concatenate %29, %50, %71, %92 in 1 : vector<64x8xf32>, vector<64x8xf32>, vector<64x8xf32>, vector<64x8xf32> -> vector<64x32xf32>
    %94 = arith.truncf %93 : vector<64x32xf32> to vector<64x32xbf16>
    %c0_26 = arith.constant 0 : index
    %c0_27 = arith.constant 0 : index
    %95 = vector.load %arg4[%c0_26, %c0_27] : memref<32x32xbf16, #tpu.memory_space<vmem>>, vector<32x32xbf16>
    %cst_28 = arith.constant dense<0.000000e+00> : vector<64x32xf32>
    %96 = tpu.matmul %94, %95, %cst_28 {dimension_numbers = #tpu.dot_dimension_numbers<[1], [0], [0], [1], [0, 0, 1, 1], [], []>} : vector<64x32xbf16>, vector<32x32xbf16>, vector<64x32xf32> -> vector<64x32xf32>
    %c0_29 = arith.constant 0 : index
    %c0_30 = arith.constant 0 : index
    %97 = vector.load %arg5[%c0_29, %c0_30] : memref<1x32xf32, #tpu.memory_space<vmem>>, vector<1x32xf32>
    %98 = vector.broadcast %97 : vector<1x32xf32> to vector<64x32xf32>
    %99 = arith.addf %96, %98 : vector<64x32xf32>
    %100 = arith.addf %99, %2 : vector<64x32xf32>
    %c0_31 = arith.constant 0 : index
    %c0_32 = arith.constant 0 : index
    %101 = vector.load %arg6[%c0_31, %c0_32] : memref<1x32xf32, #tpu.memory_space<vmem>>, vector<1x32xf32>
    %c0_33 = arith.constant 0 : index
    %c0_34 = arith.constant 0 : index
    %102 = vector.load %arg7[%c0_33, %c0_34] : memref<1x32xf32, #tpu.memory_space<vmem>>, vector<1x32xf32>
    %cst_35 = arith.constant dense<0.000000e+00> : vector<64xf32>
    %103 = vector.multi_reduction <add>, %100, %cst_35 [1] : vector<64x32xf32> to vector<64xf32>
    %104 = vector.shape_cast %103 : vector<64xf32> to vector<64x1xf32>
    %cst_36 = arith.constant 3.200000e+01 : f32
    %105 = vector.broadcast %cst_36 : f32 to vector<64x1xf32>
    %106 = arith.divf %104, %105 : vector<64x1xf32>
    %107 = vector.broadcast %106 : vector<64x1xf32> to vector<64x32xf32>
    %108 = arith.subf %100, %107 : vector<64x32xf32>
    %109 = arith.mulf %108, %108 : vector<64x32xf32>
    %cst_37 = arith.constant dense<0.000000e+00> : vector<64xf32>
    %110 = vector.multi_reduction <add>, %109, %cst_37 [1] : vector<64x32xf32> to vector<64xf32>
    %111 = vector.shape_cast %110 : vector<64xf32> to vector<64x1xf32>
    %cst_38 = arith.constant 3.200000e+01 : f32
    %112 = vector.broadcast %cst_38 : f32 to vector<64x1xf32>
    %113 = arith.divf %111, %112 : vector<64x1xf32>
    %114 = vector.broadcast %106 : vector<64x1xf32> to vector<64x32xf32>
    %115 = arith.subf %100, %114 : vector<64x32xf32>
    %cst_39 = arith.constant 9.99999974E-6 : f32
    %116 = vector.broadcast %cst_39 : f32 to vector<64x1xf32>
    %117 = arith.addf %113, %116 : vector<64x1xf32>
    %118 = math.rsqrt %117 : vector<64x1xf32>
    %119 = vector.broadcast %118 : vector<64x1xf32> to vector<64x32xf32>
    %120 = arith.mulf %115, %119 : vector<64x32xf32>
    %121 = vector.broadcast %101 : vector<1x32xf32> to vector<64x32xf32>
    %122 = arith.mulf %120, %121 : vector<64x32xf32>
    %123 = vector.broadcast %102 : vector<1x32xf32> to vector<64x32xf32>
    %124 = arith.addf %122, %123 : vector<64x32xf32>
    %125 = arith.truncf %124 : vector<64x32xf32> to vector<64x32xbf16>
    %c0_40 = arith.constant 0 : index
    %c0_41 = arith.constant 0 : index
    %126 = vector.load %arg8[%c0_40, %c0_41] : memref<32x32xbf16, #tpu.memory_space<vmem>>, vector<32x32xbf16>
    %cst_42 = arith.constant dense<0.000000e+00> : vector<64x32xf32>
    %127 = tpu.matmul %125, %126, %cst_42 {dimension_numbers = #tpu.dot_dimension_numbers<[1], [0], [0], [1], [0, 0, 1, 1], [], []>} : vector<64x32xbf16>, vector<32x32xbf16>, vector<64x32xf32> -> vector<64x32xf32>
    %c0_43 = arith.constant 0 : index
    %c0_44 = arith.constant 0 : index
    %128 = vector.load %arg9[%c0_43, %c0_44] : memref<1x32xf32, #tpu.memory_space<vmem>>, vector<1x32xf32>
    %129 = vector.broadcast %128 : vector<1x32xf32> to vector<64x32xf32>
    %130 = arith.addf %127, %129 : vector<64x32xf32>
    %cst_45 = arith.constant 0.707106769 : f32
    %131 = vector.broadcast %cst_45 : f32 to vector<64x32xf32>
    %132 = arith.mulf %130, %131 : vector<64x32xf32>
    %133 = math.absf %132 : vector<64x32xf32>
    %cst_46 = arith.constant 0.327591091 : f32
    %134 = vector.broadcast %cst_46 : f32 to vector<64x32xf32>
    %135 = arith.mulf %134, %133 : vector<64x32xf32>
    %cst_47 = arith.constant 1.000000e+00 : f32
    %136 = vector.broadcast %cst_47 : f32 to vector<64x32xf32>
    %137 = arith.addf %136, %135 : vector<64x32xf32>
    %138 = tpu.reciprocal %137 {approx = true} : vector<64x32xf32> -> vector<64x32xf32>
    %cst_48 = arith.constant 1.06140542 : f32
    %139 = vector.broadcast %cst_48 : f32 to vector<64x32xf32>
    %140 = arith.mulf %139, %138 : vector<64x32xf32>
    %cst_49 = arith.constant -1.45315206 : f32
    %141 = vector.broadcast %cst_49 : f32 to vector<64x32xf32>
    %142 = arith.addf %140, %141 : vector<64x32xf32>
    %143 = arith.mulf %142, %138 : vector<64x32xf32>
    %cst_50 = arith.constant 1.42141378 : f32
    %144 = vector.broadcast %cst_50 : f32 to vector<64x32xf32>
    %145 = arith.addf %143, %144 : vector<64x32xf32>
    %146 = arith.mulf %145, %138 : vector<64x32xf32>
    %cst_51 = arith.constant -0.284496725 : f32
    %147 = vector.broadcast %cst_51 : f32 to vector<64x32xf32>
    %148 = arith.addf %146, %147 : vector<64x32xf32>
    %149 = arith.mulf %148, %138 : vector<64x32xf32>
    %cst_52 = arith.constant 0.254829586 : f32
    %150 = vector.broadcast %cst_52 : f32 to vector<64x32xf32>
    %151 = arith.addf %149, %150 : vector<64x32xf32>
    %152 = arith.mulf %151, %138 : vector<64x32xf32>
    %cst_53 = arith.constant 0.000000e+00 : f32
    %153 = vector.broadcast %cst_53 : f32 to vector<64x32xf32>
    %154 = arith.subf %153, %133 : vector<64x32xf32>
    %155 = arith.mulf %154, %133 : vector<64x32xf32>
    %156 = math.exp %155 : vector<64x32xf32>
    %157 = arith.mulf %152, %156 : vector<64x32xf32>
    %cst_54 = arith.constant 1.000000e+00 : f32
    %158 = vector.broadcast %cst_54 : f32 to vector<64x32xf32>
    %159 = arith.subf %158, %157 : vector<64x32xf32>
    %cst_55 = arith.constant 0.000000e+00 : f32
    %160 = vector.broadcast %cst_55 : f32 to vector<64x32xf32>
    %161 = arith.cmpf olt, %132, %160 : vector<64x32xf32>
    %cst_56 = arith.constant 0.000000e+00 : f32
    %162 = vector.broadcast %cst_56 : f32 to vector<64x32xf32>
    %163 = arith.subf %162, %159 : vector<64x32xf32>
    %164 = arith.select %161, %163, %159 : vector<64x32xi1>, vector<64x32xf32>
    %cst_57 = arith.constant 5.000000e-01 : f32
    %165 = vector.broadcast %cst_57 : f32 to vector<64x32xf32>
    %166 = arith.mulf %165, %130 : vector<64x32xf32>
    %cst_58 = arith.constant 1.000000e+00 : f32
    %167 = vector.broadcast %cst_58 : f32 to vector<64x32xf32>
    %168 = arith.addf %167, %164 : vector<64x32xf32>
    %169 = arith.mulf %166, %168 : vector<64x32xf32>
    %170 = arith.truncf %169 : vector<64x32xf32> to vector<64x32xbf16>
    %c0_59 = arith.constant 0 : index
    %c0_60 = arith.constant 0 : index
    %171 = vector.load %arg10[%c0_59, %c0_60] : memref<32x32xbf16, #tpu.memory_space<vmem>>, vector<32x32xbf16>
    %cst_61 = arith.constant dense<0.000000e+00> : vector<64x32xf32>
    %172 = tpu.matmul %170, %171, %cst_61 {dimension_numbers = #tpu.dot_dimension_numbers<[1], [0], [0], [1], [0, 0, 1, 1], [], []>} : vector<64x32xbf16>, vector<32x32xbf16>, vector<64x32xf32> -> vector<64x32xf32>
    %c0_62 = arith.constant 0 : index
    %c0_63 = arith.constant 0 : index
    %173 = vector.load %arg11[%c0_62, %c0_63] : memref<1x32xf32, #tpu.memory_space<vmem>>, vector<1x32xf32>
    %174 = vector.broadcast %173 : vector<1x32xf32> to vector<64x32xf32>
    %175 = arith.addf %172, %174 : vector<64x32xf32>
    %176 = arith.addf %175, %100 : vector<64x32xf32>
    %177 = arith.truncf %176 : vector<64x32xf32> to vector<64x32xbf16>
    %c0_64 = arith.constant 0 : index
    %c0_65 = arith.constant 0 : index
    %c0_66 = arith.constant 0 : index
    %178 = vector.load %arg12[%c0_64, %c0_65, %c0_66] : memref<1x64x32xbf16, #tpu.memory_space<vmem>>, vector<1x64x32xbf16>
    %179 = vector.shape_cast %178 : vector<1x64x32xbf16> to vector<64x32xbf16>
    %180 = vector.shape_cast %177 : vector<64x32xbf16> to vector<1x64x32xbf16>
    tpu.vector_store %arg12[%c0_64, %c0_65, %c0_66], %180 {strides = array<i32>} : memref<1x64x32xbf16, #tpu.memory_space<vmem>>, vector<1x64x32xbf16>,
    return
  }
  func.func @transform_0(%arg0: i32) -> (i32, i32, i32) {
    %c0_i32 = arith.constant 0 : i32
    %c0_i32_0 = arith.constant 0 : i32
    %c0_i32_1 = arith.constant 0 : i32
    return %arg0, %c0_i32, %c0_i32_0 : i32, i32, i32
  }
  func.func @transform_1(%arg0: i32) -> (i32, i32) {
    %c0_i32 = arith.constant 0 : i32
    %c0_i32_0 = arith.constant 0 : i32
    %c0_i32_1 = arith.constant 0 : i32
    return %c0_i32, %c0_i32_0 : i32, i32
  }
  func.func @transform_2(%arg0: i32) -> (i32, i32) {
    %c0_i32 = arith.constant 0 : i32
    %c0_i32_0 = arith.constant 0 : i32
    %c0_i32_1 = arith.constant 0 : i32
    return %c0_i32, %c0_i32_0 : i32, i32
  }
  func.func @transform_3(%arg0: i32) -> (i32, i32) {
    %c0_i32 = arith.constant 0 : i32
    %c0_i32_0 = arith.constant 0 : i32
    %c0_i32_1 = arith.constant 0 : i32
    return %c0_i32, %c0_i32_0 : i32, i32
  }
  func.func @transform_4(%arg0: i32) -> (i32, i32) {
    %c0_i32 = arith.constant 0 : i32
    %c0_i32_0 = arith.constant 0 : i32
    %c0_i32_1 = arith.constant 0 : i32
    return %c0_i32, %c0_i32_0 : i32, i32
  }
  func.func @transform_5(%arg0: i32) -> (i32, i32) {
    %c0_i32 = arith.constant 0 : i32
    %c0_i32_0 = arith.constant 0 : i32
    %c0_i32_1 = arith.constant 0 : i32
    return %c0_i32, %c0_i32_0 : i32, i32
  }
  func.func @transform_6(%arg0: i32) -> (i32, i32) {
    %c0_i32 = arith.constant 0 : i32
    %c0_i32_0 = arith.constant 0 : i32
    %c0_i32_1 = arith.constant 0 : i32
    return %c0_i32, %c0_i32_0 : i32, i32
  }
  func.func @transform_7(%arg0: i32) -> (i32, i32) {
    %c0_i32 = arith.constant 0 : i32
    %c0_i32_0 = arith.constant 0 : i32
    %c0_i32_1 = arith.constant 0 : i32
    return %c0_i32, %c0_i32_0 : i32, i32
  }
  func.func @transform_8(%arg0: i32) -> (i32, i32) {
    %c0_i32 = arith.constant 0 : i32
    %c0_i32_0 = arith.constant 0 : i32
    %c0_i32_1 = arith.constant 0 : i32
    return %c0_i32, %c0_i32_0 : i32, i32
  }
  func.func @transform_9(%arg0: i32) -> (i32, i32) {
    %c0_i32 = arith.constant 0 : i32
    %c0_i32_0 = arith.constant 0 : i32
    %c0_i32_1 = arith.constant 0 : i32
    return %c0_i32, %c0_i32_0 : i32, i32
  }
  func.func @transform_10(%arg0: i32) -> (i32, i32) {
    %c0_i32 = arith.constant 0 : i32
    %c0_i32_0 = arith.constant 0 : i32
    %c0_i32_1 = arith.constant 0 : i32
    return %c0_i32, %c0_i32_0 : i32, i32
  }
  func.func @transform_11(%arg0: i32) -> (i32, i32, i32) {
    %c0_i32 = arith.constant 0 : i32
    %c0_i32_0 = arith.constant 0 : i32
    %c0_i32_1 = arith.constant 0 : i32
    return %arg0, %c0_i32, %c0_i32_0 : i32, i32, i32
  }
}

module attributes {stable_mosaic.version = 11 : i64} {
  func.func @_inter_attn_kernel(%arg0: i32, %arg1: memref<32x8x32xbf16, #tpu.memory_space<vmem>>, %arg2: memref<1x32xf32, #tpu.memory_space<vmem>>, %arg3: memref<1x32xf32, #tpu.memory_space<vmem>>, %arg4: memref<32x32xbf16, #tpu.memory_space<vmem>>, %arg5: memref<1x32xf32, #tpu.memory_space<vmem>>, %arg6: memref<32x64xbf16, #tpu.memory_space<vmem>>, %arg7: memref<1x64xf32, #tpu.memory_space<vmem>>, %arg8: memref<32x32xbf16, #tpu.memory_space<vmem>>, %arg9: memref<1x32xf32, #tpu.memory_space<vmem>>, %arg10: memref<32x4xf32, #tpu.memory_space<vmem>>, %arg11: memref<4x32xf32, #tpu.memory_space<vmem>>, %arg12: memref<32x32xbf16, #tpu.memory_space<vmem>>) attributes {dimension_semantics = [#tpu.dimension_semantics<parallel>], iteration_bounds = array<i64: 4>, scalar_prefetch = 0 : i64, scratch_operands = 0 : i64, tpu.core_type = #tpu.core_type<tc>, window_params = [{transform_indices = @transform_0, window_bounds = array<i64: 32, 8, 32>}, {pipeline_mode = #tpu.pipeline_mode<synchronous>, transform_indices = @transform_1, window_bounds = array<i64: 1, 32>}, {pipeline_mode = #tpu.pipeline_mode<synchronous>, transform_indices = @transform_2, window_bounds = array<i64: 1, 32>}, {pipeline_mode = #tpu.pipeline_mode<synchronous>, transform_indices = @transform_3, window_bounds = array<i64: 32, 32>}, {pipeline_mode = #tpu.pipeline_mode<synchronous>, transform_indices = @transform_4, window_bounds = array<i64: 1, 32>}, {pipeline_mode = #tpu.pipeline_mode<synchronous>, transform_indices = @transform_5, window_bounds = array<i64: 32, 64>}, {pipeline_mode = #tpu.pipeline_mode<synchronous>, transform_indices = @transform_6, window_bounds = array<i64: 1, 64>}, {pipeline_mode = #tpu.pipeline_mode<synchronous>, transform_indices = @transform_7, window_bounds = array<i64: 32, 32>}, {pipeline_mode = #tpu.pipeline_mode<synchronous>, transform_indices = @transform_8, window_bounds = array<i64: 1, 32>}, {pipeline_mode = #tpu.pipeline_mode<synchronous>, transform_indices = @transform_9, window_bounds = array<i64: 32, 4>}, {pipeline_mode = #tpu.pipeline_mode<synchronous>, transform_indices = @transform_10, window_bounds = array<i64: 4, 32>}, {transform_indices = @transform_11, window_bounds = array<i64: 32, 32>}]} {
    %c0 = arith.constant 0 : index
    %c0_0 = arith.constant 0 : index
    %c0_1 = arith.constant 0 : index
    %0 = vector.load %arg1[%c0, %c0_0, %c0_1] : memref<32x8x32xbf16, #tpu.memory_space<vmem>>, vector<32x8x32xbf16>
    %1 = arith.extf %0 : vector<32x8x32xbf16> to vector<32x8x32xf32>
    %2 = vector.shape_cast %1 : vector<32x8x32xf32> to vector<256x32xf32>
    %c0_2 = arith.constant 0 : index
    %c0_3 = arith.constant 0 : index
    %3 = vector.load %arg2[%c0_2, %c0_3] : memref<1x32xf32, #tpu.memory_space<vmem>>, vector<1x32xf32>
    %c0_4 = arith.constant 0 : index
    %c0_5 = arith.constant 0 : index
    %4 = vector.load %arg3[%c0_4, %c0_5] : memref<1x32xf32, #tpu.memory_space<vmem>>, vector<1x32xf32>
    %cst = arith.constant dense<0.000000e+00> : vector<256xf32>
    %5 = vector.multi_reduction <add>, %2, %cst [1] : vector<256x32xf32> to vector<256xf32>
    %6 = vector.shape_cast %5 : vector<256xf32> to vector<256x1xf32>
    %cst_6 = arith.constant 3.200000e+01 : f32
    %7 = vector.broadcast %cst_6 : f32 to vector<256x1xf32>
    %8 = arith.divf %6, %7 : vector<256x1xf32>
    %9 = vector.broadcast %8 : vector<256x1xf32> to vector<256x32xf32>
    %10 = arith.subf %2, %9 : vector<256x32xf32>
    %11 = arith.mulf %10, %10 : vector<256x32xf32>
    %cst_7 = arith.constant dense<0.000000e+00> : vector<256xf32>
    %12 = vector.multi_reduction <add>, %11, %cst_7 [1] : vector<256x32xf32> to vector<256xf32>
    %13 = vector.shape_cast %12 : vector<256xf32> to vector<256x1xf32>
    %cst_8 = arith.constant 3.200000e+01 : f32
    %14 = vector.broadcast %cst_8 : f32 to vector<256x1xf32>
    %15 = arith.divf %13, %14 : vector<256x1xf32>
    %16 = vector.broadcast %8 : vector<256x1xf32> to vector<256x32xf32>
    %17 = arith.subf %2, %16 : vector<256x32xf32>
    %cst_9 = arith.constant 9.99999974E-6 : f32
    %18 = vector.broadcast %cst_9 : f32 to vector<256x1xf32>
    %19 = arith.addf %15, %18 : vector<256x1xf32>
    %20 = math.rsqrt %19 : vector<256x1xf32>
    %21 = vector.broadcast %20 : vector<256x1xf32> to vector<256x32xf32>
    %22 = arith.mulf %17, %21 : vector<256x32xf32>
    %23 = vector.broadcast %3 : vector<1x32xf32> to vector<256x32xf32>
    %24 = arith.mulf %22, %23 : vector<256x32xf32>
    %25 = vector.broadcast %4 : vector<1x32xf32> to vector<256x32xf32>
    %26 = arith.addf %24, %25 : vector<256x32xf32>
    %27 = arith.truncf %26 : vector<256x32xf32> to vector<256x32xbf16>
    %c0_10 = arith.constant 0 : index
    %c0_11 = arith.constant 0 : index
    %28 = vector.load %arg6[%c0_10, %c0_11] : memref<32x64xbf16, #tpu.memory_space<vmem>>, vector<32x64xbf16>
    %cst_12 = arith.constant dense<0.000000e+00> : vector<256x64xf32>
    %29 = tpu.matmul %27, %28, %cst_12 {dimension_numbers = #tpu.dot_dimension_numbers<[1], [0], [0], [1], [0, 0, 1, 1], [], []>} : vector<256x32xbf16>, vector<32x64xbf16>, vector<256x64xf32> -> vector<256x64xf32>
    %c0_13 = arith.constant 0 : index
    %c0_14 = arith.constant 0 : index
    %30 = vector.load %arg7[%c0_13, %c0_14] : memref<1x64xf32, #tpu.memory_space<vmem>>, vector<1x64xf32>
    %31 = vector.broadcast %30 : vector<1x64xf32> to vector<256x64xf32>
    %32 = arith.addf %29, %31 : vector<256x64xf32>
    %33 = vector.shape_cast %26 : vector<256x32xf32> to vector<32x8x32xf32>
    %34 = vector.extract_strided_slice %33 {offsets = [0, 4, 0], sizes = [32, 1, 32], strides = [1, 1, 1]} : vector<32x8x32xf32> to vector<32x1x32xf32>
    %35 = vector.shape_cast %34 : vector<32x1x32xf32> to vector<32x32xf32>
    %36 = arith.truncf %35 : vector<32x32xf32> to vector<32x32xbf16>
    %c0_15 = arith.constant 0 : index
    %c0_16 = arith.constant 0 : index
    %37 = vector.load %arg4[%c0_15, %c0_16] : memref<32x32xbf16, #tpu.memory_space<vmem>>, vector<32x32xbf16>
    %cst_17 = arith.constant dense<0.000000e+00> : vector<32x32xf32>
    %38 = tpu.matmul %36, %37, %cst_17 {dimension_numbers = #tpu.dot_dimension_numbers<[1], [0], [0], [1], [0, 0, 1, 1], [], []>} : vector<32x32xbf16>, vector<32x32xbf16>, vector<32x32xf32> -> vector<32x32xf32>
    %c0_18 = arith.constant 0 : index
    %c0_19 = arith.constant 0 : index
    %39 = vector.load %arg5[%c0_18, %c0_19] : memref<1x32xf32, #tpu.memory_space<vmem>>, vector<1x32xf32>
    %40 = vector.broadcast %39 : vector<1x32xf32> to vector<32x32xf32>
    %41 = arith.addf %38, %40 : vector<32x32xf32>
    %42 = vector.shape_cast %32 : vector<256x64xf32> to vector<32x8x64xf32>
    %43 = vector.extract_strided_slice %42 {offsets = [0, 0, 0], sizes = [32, 8, 32], strides = [1, 1, 1]} : vector<32x8x64xf32> to vector<32x8x32xf32>
    %44 = vector.extract_strided_slice %42 {offsets = [0, 0, 32], sizes = [32, 8, 32], strides = [1, 1, 1]} : vector<32x8x64xf32> to vector<32x8x32xf32>
    %45 = vector.shape_cast %41 : vector<32x32xf32> to vector<32x1x32xf32>
    %46 = vector.broadcast %45 : vector<32x1x32xf32> to vector<32x8x32xf32>
    %47 = arith.mulf %46, %43 : vector<32x8x32xf32>
    %48 = vector.shape_cast %47 : vector<32x8x32xf32> to vector<256x32xf32>
    %c0_20 = arith.constant 0 : index
    %c0_21 = arith.constant 0 : index
    %49 = vector.load %arg10[%c0_20, %c0_21] : memref<32x4xf32, #tpu.memory_space<vmem>>, vector<32x4xf32>
    %cst_22 = arith.constant dense<0.000000e+00> : vector<256x4xf32>
    %50 = tpu.matmul %48, %49, %cst_22 {dimension_numbers = #tpu.dot_dimension_numbers<[1], [0], [0], [1], [0, 0, 1, 1], [], []>} : vector<256x32xf32>, vector<32x4xf32>, vector<256x4xf32> -> vector<256x4xf32>
    %cst_23 = arith.constant 0.353553385 : f32
    %51 = vector.broadcast %cst_23 : f32 to vector<256x4xf32>
    %52 = arith.mulf %50, %51 : vector<256x4xf32>
    %53 = vector.shape_cast %52 : vector<256x4xf32> to vector<32x8x4xf32>
    %cst_24 = arith.constant dense<0xFF800000> : vector<32x4xf32>
    %54 = vector.multi_reduction <maximumf>, %53, %cst_24 [1] : vector<32x8x4xf32> to vector<32x4xf32>
    %55 = vector.shape_cast %54 : vector<32x4xf32> to vector<32x1x4xf32>
    %56 = vector.broadcast %55 : vector<32x1x4xf32> to vector<32x8x4xf32>
    %57 = arith.subf %53, %56 : vector<32x8x4xf32>
    %58 = math.exp %57 : vector<32x8x4xf32>
    %cst_25 = arith.constant dense<0.000000e+00> : vector<32x4xf32>
    %59 = vector.multi_reduction <add>, %58, %cst_25 [1] : vector<32x8x4xf32> to vector<32x4xf32>
    %60 = vector.shape_cast %59 : vector<32x4xf32> to vector<32x1x4xf32>
    %61 = tpu.reciprocal %60 {approx = true} : vector<32x1x4xf32> -> vector<32x1x4xf32>
    %62 = vector.broadcast %61 : vector<32x1x4xf32> to vector<32x8x4xf32>
    %63 = arith.mulf %58, %62 : vector<32x8x4xf32>
    %64 = vector.shape_cast %63 : vector<32x8x4xf32> to vector<256x4xf32>
    %c0_26 = arith.constant 0 : index
    %c0_27 = arith.constant 0 : index
    %65 = vector.load %arg11[%c0_26, %c0_27] : memref<4x32xf32, #tpu.memory_space<vmem>>, vector<4x32xf32>
    %cst_28 = arith.constant dense<0.000000e+00> : vector<256x32xf32>
    %66 = tpu.matmul %64, %65, %cst_28 {dimension_numbers = #tpu.dot_dimension_numbers<[1], [0], [0], [1], [0, 0, 1, 1], [], []>} : vector<256x4xf32>, vector<4x32xf32>, vector<256x32xf32> -> vector<256x32xf32>
    %67 = vector.shape_cast %66 : vector<256x32xf32> to vector<32x8x32xf32>
    %68 = arith.mulf %67, %44 : vector<32x8x32xf32>
    %cst_29 = arith.constant dense<0.000000e+00> : vector<32x32xf32>
    %69 = vector.multi_reduction <add>, %68, %cst_29 [1] : vector<32x8x32xf32> to vector<32x32xf32>
    %70 = arith.truncf %69 : vector<32x32xf32> to vector<32x32xbf16>
    %c0_30 = arith.constant 0 : index
    %c0_31 = arith.constant 0 : index
    %71 = vector.load %arg8[%c0_30, %c0_31] : memref<32x32xbf16, #tpu.memory_space<vmem>>, vector<32x32xbf16>
    %cst_32 = arith.constant dense<0.000000e+00> : vector<32x32xf32>
    %72 = tpu.matmul %70, %71, %cst_32 {dimension_numbers = #tpu.dot_dimension_numbers<[1], [0], [0], [1], [0, 0, 1, 1], [], []>} : vector<32x32xbf16>, vector<32x32xbf16>, vector<32x32xf32> -> vector<32x32xf32>
    %c0_33 = arith.constant 0 : index
    %c0_34 = arith.constant 0 : index
    %73 = vector.load %arg9[%c0_33, %c0_34] : memref<1x32xf32, #tpu.memory_space<vmem>>, vector<1x32xf32>
    %74 = vector.broadcast %73 : vector<1x32xf32> to vector<32x32xf32>
    %75 = arith.addf %72, %74 : vector<32x32xf32>
    %76 = vector.extract_strided_slice %1 {offsets = [0, 4, 0], sizes = [32, 1, 32], strides = [1, 1, 1]} : vector<32x8x32xf32> to vector<32x1x32xf32>
    %77 = vector.shape_cast %76 : vector<32x1x32xf32> to vector<32x32xf32>
    %78 = arith.addf %75, %77 : vector<32x32xf32>
    %79 = arith.truncf %78 : vector<32x32xf32> to vector<32x32xbf16>
    %c0_35 = arith.constant 0 : index
    %c0_36 = arith.constant 0 : index
    %80 = vector.load %arg12[%c0_35, %c0_36] : memref<32x32xbf16, #tpu.memory_space<vmem>>, vector<32x32xbf16>
    tpu.vector_store %arg12[%c0_35, %c0_36], %79 {strides = array<i32>} : memref<32x32xbf16, #tpu.memory_space<vmem>>, vector<32x32xbf16>,
    return
  }
  func.func @transform_0(%arg0: i32) -> (i32, i32, i32) {
    %c0_i32 = arith.constant 0 : i32
    %c0_i32_0 = arith.constant 0 : i32
    %c0_i32_1 = arith.constant 0 : i32
    return %arg0, %c0_i32, %c0_i32_0 : i32, i32, i32
  }
  func.func @transform_1(%arg0: i32) -> (i32, i32) {
    %c0_i32 = arith.constant 0 : i32
    %c0_i32_0 = arith.constant 0 : i32
    %c0_i32_1 = arith.constant 0 : i32
    return %c0_i32, %c0_i32_0 : i32, i32
  }
  func.func @transform_2(%arg0: i32) -> (i32, i32) {
    %c0_i32 = arith.constant 0 : i32
    %c0_i32_0 = arith.constant 0 : i32
    %c0_i32_1 = arith.constant 0 : i32
    return %c0_i32, %c0_i32_0 : i32, i32
  }
  func.func @transform_3(%arg0: i32) -> (i32, i32) {
    %c0_i32 = arith.constant 0 : i32
    %c0_i32_0 = arith.constant 0 : i32
    %c0_i32_1 = arith.constant 0 : i32
    return %c0_i32, %c0_i32_0 : i32, i32
  }
  func.func @transform_4(%arg0: i32) -> (i32, i32) {
    %c0_i32 = arith.constant 0 : i32
    %c0_i32_0 = arith.constant 0 : i32
    %c0_i32_1 = arith.constant 0 : i32
    return %c0_i32, %c0_i32_0 : i32, i32
  }
  func.func @transform_5(%arg0: i32) -> (i32, i32) {
    %c0_i32 = arith.constant 0 : i32
    %c0_i32_0 = arith.constant 0 : i32
    %c0_i32_1 = arith.constant 0 : i32
    return %c0_i32, %c0_i32_0 : i32, i32
  }
  func.func @transform_6(%arg0: i32) -> (i32, i32) {
    %c0_i32 = arith.constant 0 : i32
    %c0_i32_0 = arith.constant 0 : i32
    %c0_i32_1 = arith.constant 0 : i32
    return %c0_i32, %c0_i32_0 : i32, i32
  }
  func.func @transform_7(%arg0: i32) -> (i32, i32) {
    %c0_i32 = arith.constant 0 : i32
    %c0_i32_0 = arith.constant 0 : i32
    %c0_i32_1 = arith.constant 0 : i32
    return %c0_i32, %c0_i32_0 : i32, i32
  }
  func.func @transform_8(%arg0: i32) -> (i32, i32) {
    %c0_i32 = arith.constant 0 : i32
    %c0_i32_0 = arith.constant 0 : i32
    %c0_i32_1 = arith.constant 0 : i32
    return %c0_i32, %c0_i32_0 : i32, i32
  }
  func.func @transform_9(%arg0: i32) -> (i32, i32) {
    %c0_i32 = arith.constant 0 : i32
    %c0_i32_0 = arith.constant 0 : i32
    %c0_i32_1 = arith.constant 0 : i32
    return %c0_i32, %c0_i32_0 : i32, i32
  }
  func.func @transform_10(%arg0: i32) -> (i32, i32) {
    %c0_i32 = arith.constant 0 : i32
    %c0_i32_0 = arith.constant 0 : i32
    %c0_i32_1 = arith.constant 0 : i32
    return %c0_i32, %c0_i32_0 : i32, i32
  }
  func.func @transform_11(%arg0: i32) -> (i32, i32) {
    %c0_i32 = arith.constant 0 : i32
    %c0_i32_0 = arith.constant 0 : i32
    return %arg0, %c0_i32 : i32, i32
  }
}

module attributes {stable_mosaic.version = 11 : i64} {
  func.func @_linear_kernel(%arg0: i32, %arg1: memref<128x32xbf16, #tpu.memory_space<vmem>>, %arg2: memref<1x32xf32, #tpu.memory_space<vmem>>, %arg3: memref<1x32xf32, #tpu.memory_space<vmem>>, %arg4: memref<32x128xbf16, #tpu.memory_space<vmem>>, %arg5: memref<1x128xf32, #tpu.memory_space<vmem>>, %arg6: memref<128x128xf32, #tpu.memory_space<vmem>>) attributes {dimension_semantics = [#tpu.dimension_semantics<parallel>], iteration_bounds = array<i64: 1>, scalar_prefetch = 0 : i64, scratch_operands = 0 : i64, tpu.core_type = #tpu.core_type<tc>, window_params = [{transform_indices = @transform_0, window_bounds = array<i64: 128, 32>}, {pipeline_mode = #tpu.pipeline_mode<synchronous>, transform_indices = @transform_1, window_bounds = array<i64: 1, 32>}, {pipeline_mode = #tpu.pipeline_mode<synchronous>, transform_indices = @transform_2, window_bounds = array<i64: 1, 32>}, {pipeline_mode = #tpu.pipeline_mode<synchronous>, transform_indices = @transform_3, window_bounds = array<i64: 32, 128>}, {pipeline_mode = #tpu.pipeline_mode<synchronous>, transform_indices = @transform_4, window_bounds = array<i64: 1, 128>}, {transform_indices = @transform_5, window_bounds = array<i64: 128, 128>}]} {
    %c0 = arith.constant 0 : index
    %c0_0 = arith.constant 0 : index
    %0 = vector.load %arg1[%c0, %c0_0] : memref<128x32xbf16, #tpu.memory_space<vmem>>, vector<128x32xbf16>
    %1 = arith.extf %0 : vector<128x32xbf16> to vector<128x32xf32>
    %c0_1 = arith.constant 0 : index
    %c0_2 = arith.constant 0 : index
    %2 = vector.load %arg2[%c0_1, %c0_2] : memref<1x32xf32, #tpu.memory_space<vmem>>, vector<1x32xf32>
    %c0_3 = arith.constant 0 : index
    %c0_4 = arith.constant 0 : index
    %3 = vector.load %arg3[%c0_3, %c0_4] : memref<1x32xf32, #tpu.memory_space<vmem>>, vector<1x32xf32>
    %cst = arith.constant dense<0.000000e+00> : vector<128xf32>
    %4 = vector.multi_reduction <add>, %1, %cst [1] : vector<128x32xf32> to vector<128xf32>
    %5 = vector.shape_cast %4 : vector<128xf32> to vector<128x1xf32>
    %cst_5 = arith.constant 3.200000e+01 : f32
    %6 = vector.broadcast %cst_5 : f32 to vector<128x1xf32>
    %7 = arith.divf %5, %6 : vector<128x1xf32>
    %8 = vector.broadcast %7 : vector<128x1xf32> to vector<128x32xf32>
    %9 = arith.subf %1, %8 : vector<128x32xf32>
    %10 = arith.mulf %9, %9 : vector<128x32xf32>
    %cst_6 = arith.constant dense<0.000000e+00> : vector<128xf32>
    %11 = vector.multi_reduction <add>, %10, %cst_6 [1] : vector<128x32xf32> to vector<128xf32>
    %12 = vector.shape_cast %11 : vector<128xf32> to vector<128x1xf32>
    %cst_7 = arith.constant 3.200000e+01 : f32
    %13 = vector.broadcast %cst_7 : f32 to vector<128x1xf32>
    %14 = arith.divf %12, %13 : vector<128x1xf32>
    %15 = vector.broadcast %7 : vector<128x1xf32> to vector<128x32xf32>
    %16 = arith.subf %1, %15 : vector<128x32xf32>
    %cst_8 = arith.constant 9.99999974E-6 : f32
    %17 = vector.broadcast %cst_8 : f32 to vector<128x1xf32>
    %18 = arith.addf %14, %17 : vector<128x1xf32>
    %19 = math.rsqrt %18 : vector<128x1xf32>
    %20 = vector.broadcast %19 : vector<128x1xf32> to vector<128x32xf32>
    %21 = arith.mulf %16, %20 : vector<128x32xf32>
    %22 = vector.broadcast %2 : vector<1x32xf32> to vector<128x32xf32>
    %23 = arith.mulf %21, %22 : vector<128x32xf32>
    %24 = vector.broadcast %3 : vector<1x32xf32> to vector<128x32xf32>
    %25 = arith.addf %23, %24 : vector<128x32xf32>
    %26 = arith.truncf %25 : vector<128x32xf32> to vector<128x32xbf16>
    %c0_9 = arith.constant 0 : index
    %c0_10 = arith.constant 0 : index
    %27 = vector.load %arg4[%c0_9, %c0_10] : memref<32x128xbf16, #tpu.memory_space<vmem>>, vector<32x128xbf16>
    %cst_11 = arith.constant dense<0.000000e+00> : vector<128x128xf32>
    %28 = tpu.matmul %26, %27, %cst_11 {dimension_numbers = #tpu.dot_dimension_numbers<[1], [0], [0], [1], [0, 0, 1, 1], [], []>} : vector<128x32xbf16>, vector<32x128xbf16>, vector<128x128xf32> -> vector<128x128xf32>
    %c0_12 = arith.constant 0 : index
    %c0_13 = arith.constant 0 : index
    %29 = vector.load %arg5[%c0_12, %c0_13] : memref<1x128xf32, #tpu.memory_space<vmem>>, vector<1x128xf32>
    %30 = vector.broadcast %29 : vector<1x128xf32> to vector<128x128xf32>
    %31 = arith.addf %28, %30 : vector<128x128xf32>
    %c0_14 = arith.constant 0 : index
    %c0_15 = arith.constant 0 : index
    %32 = vector.load %arg6[%c0_14, %c0_15] : memref<128x128xf32, #tpu.memory_space<vmem>>, vector<128x128xf32>
    tpu.vector_store %arg6[%c0_14, %c0_15], %31 {strides = array<i32>} : memref<128x128xf32, #tpu.memory_space<vmem>>, vector<128x128xf32>,
    return
  }
  func.func @transform_0(%arg0: i32) -> (i32, i32) {
    %c0_i32 = arith.constant 0 : i32
    %c0_i32_0 = arith.constant 0 : i32
    return %arg0, %c0_i32 : i32, i32
  }
  func.func @transform_1(%arg0: i32) -> (i32, i32) {
    %c0_i32 = arith.constant 0 : i32
    %c0_i32_0 = arith.constant 0 : i32
    %c0_i32_1 = arith.constant 0 : i32
    return %c0_i32, %c0_i32_0 : i32, i32
  }
  func.func @transform_2(%arg0: i32) -> (i32, i32) {
    %c0_i32 = arith.constant 0 : i32
    %c0_i32_0 = arith.constant 0 : i32
    %c0_i32_1 = arith.constant 0 : i32
    return %c0_i32, %c0_i32_0 : i32, i32
  }
  func.func @transform_3(%arg0: i32) -> (i32, i32) {
    %c0_i32 = arith.constant 0 : i32
    %c0_i32_0 = arith.constant 0 : i32
    %c0_i32_1 = arith.constant 0 : i32
    return %c0_i32, %c0_i32_0 : i32, i32
  }
  func.func @transform_4(%arg0: i32) -> (i32, i32) {
    %c0_i32 = arith.constant 0 : i32
    %c0_i32_0 = arith.constant 0 : i32
    %c0_i32_1 = arith.constant 0 : i32
    return %c0_i32, %c0_i32_0 : i32, i32
  }
  func.func @transform_5(%arg0: i32) -> (i32, i32) {
    %c0_i32 = arith.constant 0 : i32
    %c0_i32_0 = arith.constant 0 : i32
    return %arg0, %c0_i32 : i32, i32
  }
}

</mosaic_0001>

<llo_original>
// kernel: vit_forward_pallas.4
$region0: #{vit_forward_pallas.4}
  #allocation0 [shape = 'u32[]', space=smem, size = 0x4, offset = 0x4, fixed_abs, tag = 'smem constant byte address 0x4 - core index']
  #allocation1 [shape = 'u32[144,128]{1,0:T(1,128)}', space=vmem, size = 0x12000, scoped, tag = 'internal scratch']
  %s0 = inlined_call_operand.vmem [shape: f32[1024,3], index: 0, kind: input, shape index: {}]
  %s1 = inlined_call_operand.vmem [shape: f32[1,3], index: 1, kind: input, shape index: {}]
  %s2 = inlined_call_operand.vmem [shape: f32[1,3], index: 2, kind: input, shape index: {}]
  %s3 = inlined_call_operand.vmem [shape: bf16[3,32], index: 3, kind: input, shape index: {}]
  %s4 = inlined_call_operand.vmem [shape: f32[1,32], index: 4, kind: input, shape index: {}]
  %s5 = inlined_call_operand.vmem [shape: bf16[1024,32], index: 5, kind: output, shape index: {}]
  %s6 = sld [smem:[#allocation0]]
  $region53: #{vit_forward_pallas.4} parent=0
    _
  %s8 = ssub.s32 1, %s6
  %s9 = scalar_select 0, %s8, %s6
  loop: start=0, step=1, limit=6
  $region2: #{vit_forward_pallas.4} parent=0 // loop_pre_header
    _
  $region3: #{vit_forward_pallas.4} parent=0 // loop_header
    %s11 = sphi 0, %s15
    %p12 = scmp.ge.s32.totalorder %s11, 6
    %s21 = sphi 0, %s23
    %s24 = sphi 0, %s21
    %s25 = sphi 0, %s24
    %s41 = sphi 0, %s25
    %s45 = sphi 0, %s45
    %s47 = sphi 0, %s45
    %s48 = sphi 0, %s47
    %s62 = sphi 0, %s48
    %s66 = sphi 0, %s66
    %s68 = sphi 0, %s66
    %s69 = sphi 0, %s68
    %s83 = sphi 0, %s69
    %s87 = sphi 0, %s87
    %s89 = sphi 0, %s87
    %s90 = sphi 0, %s89
    %s104 = sphi 0, %s90
    %s108 = sphi 0, %s108
    %s110 = sphi 0, %s108
    %s111 = sphi 0, %s110
    %s125 = sphi 0, %s111
    %s131 = sphi 0, %s133
    %s134 = sphi 0, %s131
    %s135 = sphi 0, %s134
    %s151 = sphi 0, %s135
  $region4: #{vit_forward_pallas.4} parent=0 // loop_header_branch
    %14 = sbr.rel (%p12) target = $region8
  $region5: #{vit_forward_pallas.4} parent=0 // loop_body
    %s16 = ssub.s32 %s11, 1
    %s17 = ssub.s32 %s11, 2
    %s18 = sadd.s32 %s11, 1
    %s19 = ssub.s32 %s11, %s18
    %p20 = scmp.eq.s32.totalorder %s19, 0
    %s22 = sadd.s32 %s21, 1
    %s23 = scalar_select %p20, %s21, %s22
    %p26 = pneg %p20
    %p27 = scmp.eq.s32.totalorder %s11, 3
    %p28 = por %p26, %p27
    %p29 = scmp.ne.s32.totalorder %s21, %s24
    %p30 = scmp.eq.s32.totalorder %s11, 0
    %p31 = por %p29, %p30
    %p32 = scmp.ne.s32.totalorder %s21, %s24
    %p33 = scmp.eq.s32.totalorder %s16, 3
    %p34 = por %p32, %p33
    %p35 = scmp.ne.s32.totalorder %s24, %s25
    %p36 = scmp.eq.s32.totalorder %s16, 0
    %p37 = por %p35, %p36
    %p38 = scmp.ne.s32.totalorder %s24, %s25
    %p39 = scmp.eq.s32.totalorder %s17, 3
    %p40 = por %p38, %p39
    %p42 = scmp.ne.s32.totalorder %s25, %s41
    %p43 = scmp.eq.s32.totalorder %s17, 0
    %p44 = por %p42, %p43
    %s46 = sadd.s32 %s45, 1
    %p49 = scmp.eq.s32.totalorder %s11, 3
    %p50 = scmp.ne.s32.totalorder %s45, %s47
    %p51 = scmp.eq.s32.totalorder %s11, 0
    %p52 = por %p50, %p51
    %p53 = scmp.ne.s32.totalorder %s45, %s47
    %p54 = scmp.eq.s32.totalorder %s16, 3
    %p55 = por %p53, %p54
    %p56 = scmp.ne.s32.totalorder %s47, %s48
    %p57 = scmp.eq.s32.totalorder %s16, 0
    %p58 = por %p56, %p57
    %p59 = scmp.ne.s32.totalorder %s47, %s48
    %p60 = scmp.eq.s32.totalorder %s17, 3
    %p61 = por %p59, %p60
    %p63 = scmp.ne.s32.totalorder %s48, %s62
    %p64 = scmp.eq.s32.totalorder %s17, 0
    %p65 = por %p63, %p64
    %s67 = sadd.s32 %s66, 1
    %p70 = scmp.eq.s32.totalorder %s11, 3
    %p71 = scmp.ne.s32.totalorder %s66, %s68
    %p72 = scmp.eq.s32.totalorder %s11, 0
    %p73 = por %p71, %p72
    %p74 = scmp.ne.s32.totalorder %s66, %s68
    %p75 = scmp.eq.s32.totalorder %s16, 3
    %p76 = por %p74, %p75
    %p77 = scmp.ne.s32.totalorder %s68, %s69
    %p78 = scmp.eq.s32.totalorder %s16, 0
    %p79 = por %p77, %p78
    %p80 = scmp.ne.s32.totalorder %s68, %s69
    %p81 = scmp.eq.s32.totalorder %s17, 3
    %p82 = por %p80, %p81
    %p84 = scmp.ne.s32.totalorder %s69, %s83
    %p85 = scmp.eq.s32.totalorder %s17, 0
    %p86 = por %p84, %p85
    %s88 = sadd.s32 %s87, 1
    %p91 = scmp.eq.s32.totalorder %s11, 3
    %p92 = scmp.ne.s32.totalorder %s87, %s89
    %p93 = scmp.eq.s32.totalorder %s11, 0
    %p94 = por %p92, %p93
    %p95 = scmp.ne.s32.totalorder %s87, %s89
    %p96 = scmp.eq.s32.totalorder %s16, 3
    %p97 = por %p95, %p96
    %p98 = scmp.ne.s32.totalorder %s89, %s90
    %p99 = scmp.eq.s32.totalorder %s16, 0
    %p100 = por %p98, %p99
    %p101 = scmp.ne.s32.totalorder %s89, %s90
    %p102 = scmp.eq.s32.totalorder %s17, 3
    %p103 = por %p101, %p102
    %p105 = scmp.ne.s32.totalorder %s90, %s104
    %p106 = scmp.eq.s32.totalorder %s17, 0
    %p107 = por %p105, %p106
    %s109 = sadd.s32 %s108, 1
    %p112 = scmp.eq.s32.totalorder %s11, 3
    %p113 = scmp.ne.s32.totalorder %s108, %s110
    %p114 = scmp.eq.s32.totalorder %s11, 0
    %p115 = por %p113, %p114
    %p116 = scmp.ne.s32.totalorder %s108, %s110
    %p117 = scmp.eq.s32.totalorder %s16, 3
    %p118 = por %p116, %p117
    %p119 = scmp.ne.s32.totalorder %s110, %s111
    %p120 = scmp.eq.s32.totalorder %s16, 0
    %p121 = por %p119, %p120
    %p122 = scmp.ne.s32.totalorder %s110, %s111
    %p123 = scmp.eq.s32.totalorder %s17, 3
    %p124 = por %p122, %p123
    %p126 = scmp.ne.s32.totalorder %s111, %s125
    %p127 = scmp.eq.s32.totalorder %s17, 0
    %p128 = por %p126, %p127
    %s129 = ssub.s32 %s11, %s18
    %p130 = scmp.eq.s32.totalorder %s129, 0
    %s132 = sadd.s32 %s131, 1
    %s133 = scalar_select %p130, %s131, %s132
    %p136 = pneg %p130
    %p137 = scmp.eq.s32.totalorder %s11, 3
    %p138 = por %p136, %p137
    %p139 = scmp.ne.s32.totalorder %s131, %s134
    %p140 = scmp.eq.s32.totalorder %s11, 0
    %p141 = por %p139, %p140
    %p142 = scmp.ne.s32.totalorder %s131, %s134
    %p143 = scmp.eq.s32.totalorder %s16, 3
    %p144 = por %p142, %p143
    %p145 = scmp.ne.s32.totalorder %s134, %s135
    %p146 = scmp.eq.s32.totalorder %s16, 0
    %p147 = por %p145, %p146
    %p148 = scmp.ne.s32.totalorder %s134, %s135
    %p149 = scmp.eq.s32.totalorder %s17, 3
    %p150 = por %p148, %p149
    %p152 = scmp.ne.s32.totalorder %s135, %s151
    %p153 = scmp.eq.s32.totalorder %s17, 0
    %p154 = por %p152, %p153
    %p155 = scmp.le.s32.totalorder 1, %s11
    %p156 = scmp.lt.s32.totalorder %s11, 5
    %p157 = pnand %p155, %p156
    %p158 = pneg %p157
    // Predicated region
    $region9: #{vit_forward_pallas.4} parent=5 // pred_check
      _
    $region10: #{vit_forward_pallas.4} parent=5 // pred_check_branch
      %160 = sbr.rel (%p157) target = $region12
    $region11: #{vit_forward_pallas.4} parent=5 // pred_region
      %s161 = ssub.s32 %s11, 1
      // Predicated region
      $region13: #{vit_forward_pallas.4} parent=11 // pred_check
        %p162 = pneg %p58
      $region14: #{vit_forward_pallas.4} parent=11 // pred_check_branch
        %164 = sbr.rel (%p162) target = $region16
      $region15: #{vit_forward_pallas.4} parent=11 // pred_region
        _
      $region16: #{vit_forward_pallas.4} parent=11 // pred_fallthru
        _
      // Predicated region
      $region17: #{vit_forward_pallas.4} parent=11 // pred_check
        %p165 = pneg %p79
      $region18: #{vit_forward_pallas.4} parent=11 // pred_check_branch
        %167 = sbr.rel (%p165) target = $region20
      $region19: #{vit_forward_pallas.4} parent=11 // pred_region
        _
      $region20: #{vit_forward_pallas.4} parent=11 // pred_fallthru
        _
      // Predicated region
      $region21: #{vit_forward_pallas.4} parent=11 // pred_check
        %p168 = pneg %p100
      $region22: #{vit_forward_pallas.4} parent=11 // pred_check_branch
        %170 = sbr.rel (%p168) target = $region24
      $region23: #{vit_forward_pallas.4} parent=11 // pred_region
        _
      $region24: #{vit_forward_pallas.4} parent=11 // pred_fallthru
        _
      // Predicated region
      $region25: #{vit_forward_pallas.4} parent=11 // pred_check
        %p171 = pneg %p121
      $region26: #{vit_forward_pallas.4} parent=11 // pred_check_branch
        %173 = sbr.rel (%p171) target = $region28
      $region27: #{vit_forward_pallas.4} parent=11 // pred_region
        _
      $region28: #{vit_forward_pallas.4} parent=11 // pred_fallthru
        _
    $region12: #{vit_forward_pallas.4} parent=5 // pred_fallthru
      _
    %p174 = scmp.lt.s32.totalorder %s11, 4
    // Predicated region
    $region29: #{vit_forward_pallas.4} parent=5 // pred_check
      %p175 = pneg %p174
    $region30: #{vit_forward_pallas.4} parent=5 // pred_check_branch
      %177 = sbr.rel (%p175) target = $region32
    $region31: #{vit_forward_pallas.4} parent=5 // pred_region
      // Predicated region
      $region33: #{vit_forward_pallas.4} parent=31 // pred_check
        %p178 = pneg %p31
      $region34: #{vit_forward_pallas.4} parent=31 // pred_check_branch
        %180 = sbr.rel (%p178) target = $region36
      $region35: #{vit_forward_pallas.4} parent=31 // pred_region
        %s181 = smul.u32 32, %s11
        %p182 = scmp.lt.s32.totalorder %s181, 127
        %s183 = scalar_select %p182, %s181, 127
        %s184 = smul.addr %s183, 8
        %s185 = scalar_lea.vmem %s0, %s184
        %s186 = smul.u32 32, %s11
      $region36: #{vit_forward_pallas.4} parent=31 // pred_fallthru
        _
    $region32: #{vit_forward_pallas.4} parent=5 // pred_fallthru
      _
    %p187 = scmp.le.s32.totalorder 1, %s11
    %p188 = scmp.lt.s32.totalorder %s11, 5
    %p189 = pnand %p187, %p188
    %p190 = pneg %p189
    // Predicated region
    $region37: #{vit_forward_pallas.4} parent=5 // pred_check
      _
    $region38: #{vit_forward_pallas.4} parent=5 // pred_check_branch
      %192 = sbr.rel (%p189) target = $region40
    $region39: #{vit_forward_pallas.4} parent=5 // pred_region
      %s193 = ssub.s32 %s11, 1
      %s194 = smul.u32 32, %s16
      %p195 = scmp.lt.s32.totalorder %s194, 127
      %s196 = scalar_select %p195, %s194, 127
      %s197 = smul.addr %s196, 8
      %s198 = scalar_lea.vmem %s0, %s197
      %p199 = pneg %p37
      %p200 = pneg %p34
      %p201 = pneg %p58
      %p202 = pneg %p55
      %p203 = pneg %p79
      %p204 = pneg %p76
      %p205 = pneg %p100
      %p206 = pneg %p97
      %p207 = pneg %p121
      %p208 = pneg %p118
      %p209 = pneg %p147
      %p210 = pneg %p144
      %s211 = smul.u32 32, %s16
      %p212 = scmp.lt.s32.totalorder %s211, 127
      %s213 = scalar_select %p212, %s211, 127
      %s214 = smul.addr %s213, 4
      %s215 = scalar_lea.vmem %s5, %s214
      %s216 = smul.u32 32, %s16
      %p217 = scmp.lt.s32.totalorder %s216, 127
      %s218 = scalar_select %p217, %s216, 127
      %s219 = smul.addr %s218, 8
      %s220 = scalar_lea.vmem %s0, %s219
      %s221 = smul.u32 32, %s16
      %s222 = smul.u32 32, %s16
      %p223 = scmp.lt.s32.totalorder %s222, 127
      %s224 = scalar_select %p223, %s222, 127
      %s225 = smul.addr %s224, 4
      %s226 = scalar_lea.vmem %s5, %s225
      %s227 = smul.u32 32, %s16
      %v229 = vld [vmem:[%s220] sm:$0xff]
      %v230 = vld [vmem:[%s220 + $0x8] sm:$0xff]
      %v231 = vld [vmem:[%s220 + $0x10] sm:$0xff]
      %v232 = vld [vmem:[%s220 + $0x18] sm:$0xff]
      %v233 = vld [vmem:[%s220 + $0x20] sm:$0xff]
      %v234 = vld [vmem:[%s220 + $0x28] sm:$0xff]
      %v235 = vld [vmem:[%s220 + $0x30] sm:$0xff]
      %v236 = vld [vmem:[%s220 + $0x38] sm:$0xff]
      %v237 = vld [vmem:[%s220 + $0x40] sm:$0xff]
      %v238 = vld [vmem:[%s220 + $0x48] sm:$0xff]
      %v239 = vld [vmem:[%s220 + $0x50] sm:$0xff]
      %v240 = vld [vmem:[%s220 + $0x58] sm:$0xff]
      %v241 = vld [vmem:[%s220 + $0x60] sm:$0xff]
      %v242 = vld [vmem:[%s220 + $0x68] sm:$0xff]
      %v243 = vld [vmem:[%s220 + $0x70] sm:$0xff]
      %v244 = vld [vmem:[%s220 + $0x78] sm:$0xff]
      %v245 = vld [vmem:[%s220 + $0x80] sm:$0xff]
      %v246 = vld [vmem:[%s220 + $0x88] sm:$0xff]
      %v247 = vld [vmem:[%s220 + $0x90] sm:$0xff]
      %v248 = vld [vmem:[%s220 + $0x98] sm:$0xff]
      %v249 = vld [vmem:[%s220 + $0xa0] sm:$0xff]
      %v250 = vld [vmem:[%s220 + $0xa8] sm:$0xff]
      %v251 = vld [vmem:[%s220 + $0xb0] sm:$0xff]
      %v252 = vld [vmem:[%s220 + $0xb8] sm:$0xff]
      %v253 = vld [vmem:[%s220 + $0xc0] sm:$0xff]
      %v254 = vld [vmem:[%s220 + $0xc8] sm:$0xff]
      %v255 = vld [vmem:[%s220 + $0xd0] sm:$0xff]
      %v256 = vld [vmem:[%s220 + $0xd8] sm:$0xff]
      %v257 = vld [vmem:[%s220 + $0xe0] sm:$0xff]
      %v258 = vld [vmem:[%s220 + $0xe8] sm:$0xff]
      %v259 = vld [vmem:[%s220 + $0xf0] sm:$0xff]
      %v260 = vld [vmem:[%s220 + $0xf8] sm:$0xff]
      %v261 = vpack.c.bf16 %v230, %v229
      %v262 = vpack.c.bf16 %v232, %v231
      %v263 = vpack.c.bf16 %v234, %v233
      %v264 = vpack.c.bf16 %v236, %v235
      %v265 = vpack.c.bf16 %v238, %v237
      %v266 = vpack.c.bf16 %v240, %v239
      %v267 = vpack.c.bf16 %v242, %v241
      %v268 = vpack.c.bf16 %v244, %v243
      %v269 = vpack.c.bf16 %v246, %v245
      %v270 = vpack.c.bf16 %v248, %v247
      %v271 = vpack.c.bf16 %v250, %v249
      %v272 = vpack.c.bf16 %v252, %v251
      %v273 = vpack.c.bf16 %v254, %v253
      %v274 = vpack.c.bf16 %v256, %v255
      %v275 = vpack.c.bf16 %v258, %v257
      %v276 = vpack.c.bf16 %v260, %v259
      %v277 = vld [vmem:[%s3] sm:$0x3]
      %v278 = vld [vmem:[%s4] sm:$0x1]
      %v280 = vlaneseq
      %v281 = vshrl.u32 %v280, 7
      %v282 = vsub.s32 0, %v281
      %v283 = vrot.slane %v278, %v282
      %vm285 = vcmask 23552
      %v287 = vsel %vm285, %v261, 0
      %v290 = vsel %vm285, %v262, 0
      %v293 = vsel %vm285, %v263, 0
      %v296 = vsel %vm285, %v264, 0
      %v299 = vsel %vm285, %v265, 0
      %v302 = vsel %vm285, %v266, 0
      %v305 = vsel %vm285, %v267, 0
      %v308 = vsel %vm285, %v268, 0
      %v311 = vsel %vm285, %v269, 0
      %v314 = vsel %vm285, %v270, 0
      %v317 = vsel %vm285, %v271, 0
      %v320 = vsel %vm285, %v272, 0
      %v323 = vsel %vm285, %v273, 0
      %v326 = vsel %vm285, %v274, 0
      %v329 = vsel %vm285, %v275, 0
      %v332 = vsel %vm285, %v276, 0
      %vm334 = vcmask 1040384
      %vm335 = vcmask 1041408
      %v336 = vsel %vm334, 4294967295, 65535
      %v337 = vsel %vm335, %v336, 0
      %v339 = vand.u32 %v277, %v337
      %341 = vmatprep.subr.bf16.mxu0 0
      %342 = vmatpush1.bf16.msra.mxu0 %v339
      %343 = vmatprep.subr.bf16.mxu0 0
      %344 = vmatpush1.bf16.msra.mxu0 0
      %345 = vmatprep.subr.bf16.mxu0 0
      %346 = vmatpush1.bf16.msra.mxu0 0
      %347 = vmatprep.subr.bf16.mxu0 0
      %348 = vmatpush1.bf16.msra.mxu0 0
      %349 = vmatprep.subr.bf16.mxu0 0
      %350 = vmatpush1.bf16.msra.mxu0 0
      %351 = vmatprep.subr.bf16.mxu0 0
      %352 = vmatpush1.bf16.msra.mxu0 0
      %353 = vmatprep.subr.bf16.mxu0 0
      %354 = vmatpush1.bf16.msra.mxu0 0
      %355 = vmatprep.subr.bf16.mxu0 0
      %356 = vmatpush1.bf16.msra.mxu0 0
      %357 = vmatprep.subr.bf16.mxu0 0
      %358 = vmatpush1.bf16.msra.mxu0 0
      %359 = vmatprep.subr.bf16.mxu0 0
      %360 = vmatpush1.bf16.msra.mxu0 0
      %361 = vmatprep.subr.bf16.mxu0 0
      %362 = vmatpush1.bf16.msra.mxu0 0
      %363 = vmatprep.subr.bf16.mxu0 0
      %364 = vmatpush1.bf16.msra.mxu0 0
      %365 = vmatprep.subr.bf16.mxu0 0
      %366 = vmatpush1.bf16.msra.mxu0 0
      %367 = vmatprep.subr.bf16.mxu0 0
      %368 = vmatpush1.bf16.msra.mxu0 0
      %369 = vmatprep.subr.bf16.mxu0 0
      %370 = vmatpush1.bf16.msra.mxu0 0
      %371 = vmatprep.subr.bf16.mxu0 0
      %372 = vmatpush1.bf16.msra.mxu0 0
      %373 = vmatprep.mubr.bf16.mxu0 0
      %374 = vmatmul.mubr.bf16.gmra.mrb[0].mxu0 %v287
      %v375 = vpop.f32.mrb[0].mxu0
      %v376 = vadd.f32 %v283, %v375
      %v377 = vpop.f32.mrb[0].mxu0
      %v378 = vpop.f32.mrb[0].mxu0
      %v379 = vadd.f32 %v283, %v378
      %v380 = vpop.f32.mrb[0].mxu0
      %381 = vmatprep.mubr.bf16.mxu0 0
      %382 = vmatmul.mubr.bf16.gmra.mrb[0].mxu0 %v290
      %v383 = vpop.f32.mrb[0].mxu0
      %v384 = vadd.f32 %v283, %v383
      %v385 = vpop.f32.mrb[0].mxu0
      %v386 = vpop.f32.mrb[0].mxu0
      %v387 = vadd.f32 %v283, %v386
      %v388 = vpop.f32.mrb[0].mxu0
      %389 = vmatprep.mubr.bf16.mxu0 0
      %390 = vmatmul.mubr.bf16.gmra.mrb[0].mxu0 %v293
      %v391 = vpop.f32.mrb[0].mxu0
      %v392 = vadd.f32 %v283, %v391
      %v393 = vpop.f32.mrb[0].mxu0
      %v394 = vpop.f32.mrb[0].mxu0
      %v395 = vadd.f32 %v283, %v394
      %v396 = vpop.f32.mrb[0].mxu0
      %397 = vmatprep.mubr.bf16.mxu0 0
      %398 = vmatmul.mubr.bf16.gmra.mrb[0].mxu0 %v296
      %v399 = vpop.f32.mrb[0].mxu0
      %v400 = vadd.f32 %v283, %v399
      %v401 = vpop.f32.mrb[0].mxu0
      %v402 = vpop.f32.mrb[0].mxu0
      %v403 = vadd.f32 %v283, %v402
      %v404 = vpop.f32.mrb[0].mxu0
      %405 = vmatprep.mubr.bf16.mxu0 0
      %406 = vmatmul.mubr.bf16.gmra.mrb[0].mxu0 %v299
      %v407 = vpop.f32.mrb[0].mxu0
      %v408 = vadd.f32 %v283, %v407
      %v409 = vpop.f32.mrb[0].mxu0
      %v410 = vpop.f32.mrb[0].mxu0
      %v411 = vadd.f32 %v283, %v410
      %v412 = vpop.f32.mrb[0].mxu0
      %413 = vmatprep.mubr.bf16.mxu0 0
      %414 = vmatmul.mubr.bf16.gmra.mrb[0].mxu0 %v302
      %v415 = vpop.f32.mrb[0].mxu0
      %v416 = vadd.f32 %v283, %v415
      %v417 = vpop.f32.mrb[0].mxu0
      %v418 = vpop.f32.mrb[0].mxu0
      %v419 = vadd.f32 %v283, %v418
      %v420 = vpop.f32.mrb[0].mxu0
      %421 = vmatprep.mubr.bf16.mxu0 0
      %422 = vmatmul.mubr.bf16.gmra.mrb[0].mxu0 %v305
      %v423 = vpop.f32.mrb[0].mxu0
      %v424 = vadd.f32 %v283, %v423
      %v425 = vpop.f32.mrb[0].mxu0
      %v426 = vpop.f32.mrb[0].mxu0
      %v427 = vadd.f32 %v283, %v426
      %v428 = vpop.f32.mrb[0].mxu0
      %429 = vmatprep.mubr.bf16.mxu0 0
      %430 = vmatmul.mubr.bf16.gmra.mrb[0].mxu0 %v308
      %v431 = vpop.f32.mrb[0].mxu0
      %v432 = vadd.f32 %v283, %v431
      %v433 = vpop.f32.mrb[0].mxu0
      %v434 = vpop.f32.mrb[0].mxu0
      %v435 = vadd.f32 %v283, %v434
      %v436 = vpop.f32.mrb[0].mxu0
      %437 = vmatprep.mubr.bf16.mxu0 0
      %438 = vmatmul.mubr.bf16.gmra.mrb[0].mxu0 %v311
      %v439 = vpop.f32.mrb[0].mxu0
      %v440 = vadd.f32 %v283, %v439
      %v441 = vpop.f32.mrb[0].mxu0
      %v442 = vpop.f32.mrb[0].mxu0
      %v443 = vadd.f32 %v283, %v442
      %v444 = vpop.f32.mrb[0].mxu0
      %445 = vmatprep.mubr.bf16.mxu0 0
      %446 = vmatmul.mubr.bf16.gmra.mrb[0].mxu0 %v314
      %v447 = vpop.f32.mrb[0].mxu0
      %v448 = vadd.f32 %v283, %v447
      %v449 = vpop.f32.mrb[0].mxu0
      %v450 = vpop.f32.mrb[0].mxu0
      %v451 = vadd.f32 %v283, %v450
      %v452 = vpop.f32.mrb[0].mxu0
      %453 = vmatprep.mubr.bf16.mxu0 0
      %454 = vmatmul.mubr.bf16.gmra.mrb[0].mxu0 %v317
      %v455 = vpop.f32.mrb[0].mxu0
      %v456 = vadd.f32 %v283, %v455
      %v457 = vpop.f32.mrb[0].mxu0
      %v458 = vpop.f32.mrb[0].mxu0
      %v459 = vadd.f32 %v283, %v458
      %v460 = vpop.f32.mrb[0].mxu0
      %461 = vmatprep.mubr.bf16.mxu0 0
      %462 = vmatmul.mubr.bf16.gmra.mrb[0].mxu0 %v320
      %v463 = vpop.f32.mrb[0].mxu0
      %v464 = vadd.f32 %v283, %v463
      %v465 = vpop.f32.mrb[0].mxu0
      %v466 = vpop.f32.mrb[0].mxu0
      %v467 = vadd.f32 %v283, %v466
      %v468 = vpop.f32.mrb[0].mxu0
      %469 = vmatprep.mubr.bf16.mxu0 0
      %470 = vmatmul.mubr.bf16.gmra.mrb[0].mxu0 %v323
      %v471 = vpop.f32.mrb[0].mxu0
      %v472 = vadd.f32 %v283, %v471
      %v473 = vpop.f32.mrb[0].mxu0
      %v474 = vpop.f32.mrb[0].mxu0
      %v475 = vadd.f32 %v283, %v474
      %v476 = vpop.f32.mrb[0].mxu0
      %477 = vmatprep.mubr.bf16.mxu0 0
      %478 = vmatmul.mubr.bf16.gmra.mrb[0].mxu0 %v326
      %v479 = vpop.f32.mrb[0].mxu0
      %v480 = vadd.f32 %v283, %v479
      %v481 = vpop.f32.mrb[0].mxu0
      %v482 = vpop.f32.mrb[0].mxu0
      %v483 = vadd.f32 %v283, %v482
      %v484 = vpop.f32.mrb[0].mxu0
      %485 = vmatprep.mubr.bf16.mxu0 0
      %486 = vmatmul.mubr.bf16.gmra.mrb[0].mxu0 %v329
      %v487 = vpop.f32.mrb[0].mxu0
      %v488 = vadd.f32 %v283, %v487
      %v489 = vpop.f32.mrb[0].mxu0
      %v490 = vpop.f32.mrb[0].mxu0
      %v491 = vadd.f32 %v283, %v490
      %v492 = vpop.f32.mrb[0].mxu0
      %493 = vmatprep.mubr.bf16.mxu0 0
      %494 = vmatmul.mubr.bf16.gmra.mrb[0].mxu0 %v332
      %v495 = vpop.f32.mrb[0].mxu0
      %v496 = vadd.f32 %v283, %v495
      %v497 = vpop.f32.mrb[0].mxu0
      %v498 = vpop.f32.mrb[0].mxu0
      %v499 = vadd.f32 %v283, %v498
      %v500 = vpop.f32.mrb[0].mxu0
      %501 = vdwg.mxu0
      %v502 = vpack.c.bf16 %v379, %v376
      %v503 = vpack.c.bf16 %v387, %v384
      %v504 = vpack.c.bf16 %v395, %v392
      %v505 = vpack.c.bf16 %v403, %v400
      %v506 = vpack.c.bf16 %v411, %v408
      %v507 = vpack.c.bf16 %v419, %v416
      %v508 = vpack.c.bf16 %v427, %v424
      %v509 = vpack.c.bf16 %v435, %v432
      %v510 = vpack.c.bf16 %v443, %v440
      %v511 = vpack.c.bf16 %v451, %v448
      %v512 = vpack.c.bf16 %v459, %v456
      %v513 = vpack.c.bf16 %v467, %v464
      %v514 = vpack.c.bf16 %v475, %v472
      %v515 = vpack.c.bf16 %v483, %v480
      %v516 = vpack.c.bf16 %v491, %v488
      %v517 = vpack.c.bf16 %v499, %v496
      %v534 = vunpack.c.l.b16 %v502
      %v535 = vunpack.c.h.b16 %v502
      %v536 = vunpack.c.l.b16 %v503
      %v537 = vunpack.c.h.b16 %v503
      %v538 = vunpack.c.l.b16 %v504
      %v539 = vunpack.c.h.b16 %v504
      %v540 = vunpack.c.l.b16 %v505
      %v541 = vunpack.c.h.b16 %v505
      %v542 = vunpack.c.l.b16 %v506
      %v543 = vunpack.c.h.b16 %v506
      %v544 = vunpack.c.l.b16 %v507
      %v545 = vunpack.c.h.b16 %v507
      %v546 = vunpack.c.l.b16 %v508
      %v547 = vunpack.c.h.b16 %v508
      %v548 = vunpack.c.l.b16 %v509
      %v549 = vunpack.c.h.b16 %v509
      %v550 = vunpack.c.l.b16 %v510
      %v551 = vunpack.c.h.b16 %v510
      %v552 = vunpack.c.l.b16 %v511
      %v553 = vunpack.c.h.b16 %v511
      %v554 = vunpack.c.l.b16 %v512
      %v555 = vunpack.c.h.b16 %v512
      %v556 = vunpack.c.l.b16 %v513
      %v557 = vunpack.c.h.b16 %v513
      %v558 = vunpack.c.l.b16 %v514
      %v559 = vunpack.c.h.b16 %v514
      %v560 = vunpack.c.l.b16 %v515
      %v561 = vunpack.c.h.b16 %v515
      %v562 = vunpack.c.l.b16 %v516
      %v563 = vunpack.c.h.b16 %v516
      %v564 = vunpack.c.l.b16 %v517
      %v565 = vunpack.c.h.b16 %v517
      %v566 = vpack.c.b16 %v534, %v534
      %v567 = vpack.c.b16 %v535, %v535
      %v568 = vpack.c.b16 %v536, %v536
      %v569 = vpack.c.b16 %v537, %v537
      %v570 = vpack.c.b16 %v538, %v538
      %v571 = vpack.c.b16 %v539, %v539
      %v572 = vpack.c.b16 %v540, %v540
      %v573 = vpack.c.b16 %v541, %v541
      %v574 = vpack.c.b16 %v542, %v542
      %v575 = vpack.c.b16 %v543, %v543
      %v576 = vpack.c.b16 %v544, %v544
      %v577 = vpack.c.b16 %v545, %v545
      %v578 = vpack.c.b16 %v546, %v546
      %v579 = vpack.c.b16 %v547, %v547
      %v580 = vpack.c.b16 %v548, %v548
      %v581 = vpack.c.b16 %v549, %v549
      %v582 = vpack.c.b16 %v550, %v550
      %v583 = vpack.c.b16 %v551, %v551
      %v584 = vpack.c.b16 %v552, %v552
      %v585 = vpack.c.b16 %v553, %v553
      %v586 = vpack.c.b16 %v554, %v554
      %v587 = vpack.c.b16 %v555, %v555
      %v588 = vpack.c.b16 %v556, %v556
      %v589 = vpack.c.b16 %v557, %v557
      %v590 = vpack.c.b16 %v558, %v558
      %v591 = vpack.c.b16 %v559, %v559
      %v592 = vpack.c.b16 %v560, %v560
      %v593 = vpack.c.b16 %v561, %v561
      %v594 = vpack.c.b16 %v562, %v562
      %v595 = vpack.c.b16 %v563, %v563
      %v596 = vpack.c.b16 %v564, %v564
      %v597 = vpack.c.b16 %v565, %v565
      %vm630 = vcmask 257024
      %631 = vst.msk [vmem:[%s226] sm:$0xf] %vm630, %v566
      %632 = vst.msk [vmem:[%s226 + $0x4] sm:$0xf] %vm630, %v567
      %633 = vst.msk [vmem:[%s226 + $0x8] sm:$0xf] %vm630, %v568
      %634 = vst.msk [vmem:[%s226 + $0xc] sm:$0xf] %vm630, %v569
      %635 = vst.msk [vmem:[%s226 + $0x10] sm:$0xf] %vm630, %v570
      %636 = vst.msk [vmem:[%s226 + $0x14] sm:$0xf] %vm630, %v571
      %637 = vst.msk [vmem:[%s226 + $0x18] sm:$0xf] %vm630, %v572
      %638 = vst.msk [vmem:[%s226 + $0x1c] sm:$0xf] %vm630, %v573
      %639 = vst.msk [vmem:[%s226 + $0x20] sm:$0xf] %vm630, %v574
      %640 = vst.msk [vmem:[%s226 + $0x24] sm:$0xf] %vm630, %v575
      %641 = vst.msk [vmem:[%s226 + $0x28] sm:$0xf] %vm630, %v576
      %642 = vst.msk [vmem:[%s226 + $0x2c] sm:$0xf] %vm630, %v577
      %643 = vst.msk [vmem:[%s226 + $0x30] sm:$0xf] %vm630, %v578
      %644 = vst.msk [vmem:[%s226 + $0x34] sm:$0xf] %vm630, %v579
      %645 = vst.msk [vmem:[%s226 + $0x38] sm:$0xf] %vm630, %v580
      %646 = vst.msk [vmem:[%s226 + $0x3c] sm:$0xf] %vm630, %v581
      %647 = vst.msk [vmem:[%s226 + $0x40] sm:$0xf] %vm630, %v582
      %648 = vst.msk [vmem:[%s226 + $0x44] sm:$0xf] %vm630, %v583
      %649 = vst.msk [vmem:[%s226 + $0x48] sm:$0xf] %vm630, %v584
      %650 = vst.msk [vmem:[%s226 + $0x4c] sm:$0xf] %vm630, %v585
      %651 = vst.msk [vmem:[%s226 + $0x50] sm:$0xf] %vm630, %v586
      %652 = vst.msk [vmem:[%s226 + $0x54] sm:$0xf] %vm630, %v587
      %653 = vst.msk [vmem:[%s226 + $0x58] sm:$0xf] %vm630, %v588
      %654 = vst.msk [vmem:[%s226 + $0x5c] sm:$0xf] %vm630, %v589
      %655 = vst.msk [vmem:[%s226 + $0x60] sm:$0xf] %vm630, %v590
      %656 = vst.msk [vmem:[%s226 + $0x64] sm:$0xf] %vm630, %v591
      %657 = vst.msk [vmem:[%s226 + $0x68] sm:$0xf] %vm630, %v592
      %658 = vst.msk [vmem:[%s226 + $0x6c] sm:$0xf] %vm630, %v593
      %659 = vst.msk [vmem:[%s226 + $0x70] sm:$0xf] %vm630, %v594
      %660 = vst.msk [vmem:[%s226 + $0x74] sm:$0xf] %vm630, %v595
      %661 = vst.msk [vmem:[%s226 + $0x78] sm:$0xf] %vm630, %v596
      %662 = vst.msk [vmem:[%s226 + $0x7c] sm:$0xf] %vm630, %v597
      %s663 = smul.u32 32, %s16
      %p664 = scmp.lt.s32.totalorder %s663, 127
      %s665 = scalar_select %p664, %s663, 127
      %s666 = smul.addr %s665, 4
      %s667 = scalar_lea.vmem %s5, %s666
      // Predicated region
      $region41: #{vit_forward_pallas.4} parent=39 // pred_check
        %p668 = pneg %p144
      $region42: #{vit_forward_pallas.4} parent=39 // pred_check_branch
        %670 = sbr.rel (%p668) target = $region44
      $region43: #{vit_forward_pallas.4} parent=39 // pred_region
        %s671 = smul.u32 32, %s16
      $region44: #{vit_forward_pallas.4} parent=39 // pred_fallthru
        _
    $region40: #{vit_forward_pallas.4} parent=5 // pred_fallthru
      _
    %p672 = scmp.le.s32.totalorder 2, %s11
    // Predicated region
    $region45: #{vit_forward_pallas.4} parent=5 // pred_check
      %p673 = pneg %p672
    $region46: #{vit_forward_pallas.4} parent=5 // pred_check_branch
      %675 = sbr.rel (%p673) target = $region48
    $region47: #{vit_forward_pallas.4} parent=5 // pred_region
      %s676 = ssub.s32 %s11, 2
      // Predicated region
      $region49: #{vit_forward_pallas.4} parent=47 // pred_check
        %p677 = pneg %p150
      $region50: #{vit_forward_pallas.4} parent=47 // pred_check_branch
        %679 = sbr.rel (%p677) target = $region52
      $region51: #{vit_forward_pallas.4} parent=47 // pred_region
        %s680 = smul.u32 32, %s17
        %p681 = scmp.lt.s32.totalorder %s680, 127
        %s682 = scalar_select %p681, %s680, 127
        %s683 = smul.addr %s682, 4
        %s684 = scalar_lea.vmem %s5, %s683
      $region52: #{vit_forward_pallas.4} parent=47 // pred_fallthru
        _
    $region48: #{vit_forward_pallas.4} parent=5 // pred_fallthru
      _
  $region6: #{vit_forward_pallas.4} parent=0 // loop_footer
    %s15 = sadd.s32 1, %s11
  $region7: #{vit_forward_pallas.4} parent=0 // loop_footer_branch
    %10 = sbr.rel target = $region3
  $region8: #{vit_forward_pallas.4} parent=0 // loop_exit
    _

// kernel: vit_forward_pallas.6
$region0: #{vit_forward_pallas.6}
  #allocation0 [shape = 'u32[]', space=smem, size = 0x4, offset = 0x4, fixed_abs, tag = 'smem constant byte address 0x4 - core index']
  #allocation1 [shape = 'u32[144,128]{1,0:T(1,128)}', space=vmem, size = 0x12000, scoped, tag = 'internal scratch']
  %s0 = inlined_call_operand.vmem [shape: bf16[2,64,32], index: 0, kind: input, shape index: {}]
  %s1 = inlined_call_operand.vmem [shape: bf16[32,96], index: 1, kind: input, shape index: {}]
  %s2 = inlined_call_operand.vmem [shape: f32[1,96], index: 2, kind: input, shape index: {}]
  %s3 = inlined_call_operand.vmem [shape: bf16[32,32], index: 3, kind: input, shape index: {}]
  %s4 = inlined_call_operand.vmem [shape: f32[1,32], index: 4, kind: input, shape index: {}]
  %s5 = inlined_call_operand.vmem [shape: f32[1,32], index: 5, kind: input, shape index: {}]
  %s6 = inlined_call_operand.vmem [shape: f32[1,32], index: 6, kind: input, shape index: {}]
  %s7 = inlined_call_operand.vmem [shape: bf16[32,32], index: 7, kind: input, shape index: {}]
  %s8 = inlined_call_operand.vmem [shape: f32[1,32], index: 8, kind: input, shape index: {}]
  %s9 = inlined_call_operand.vmem [shape: bf16[32,32], index: 9, kind: input, shape index: {}]
  %s10 = inlined_call_operand.vmem [shape: f32[1,32], index: 10, kind: input, shape index: {}]
  %s11 = inlined_call_operand.vmem [shape: bf16[2,64,32], index: 11, kind: output, shape index: {}]
  %s12 = sld [smem:[#allocation0]]
  $region77: #{vit_forward_pallas.6} parent=0
    _
  %s14 = ssub.s32 1, %s12
  %s15 = scalar_select 0, %s14, %s12
  loop: start=0, step=1, limit=4
  $region2: #{vit_forward_pallas.6} parent=0 // loop_pre_header
    _
  $region3: #{vit_forward_pallas.6} parent=0 // loop_header
    %s17 = sphi 0, %s21
    %p18 = scmp.ge.s32.totalorder %s17, 4
    %s27 = sphi 0, %s29
    %s30 = sphi 0, %s27
    %s31 = sphi 0, %s30
    %s47 = sphi 0, %s31
    %s51 = sphi 0, %s51
    %s53 = sphi 0, %s51
    %s54 = sphi 0, %s53
    %s68 = sphi 0, %s54
    %s72 = sphi 0, %s72
    %s74 = sphi 0, %s72
    %s75 = sphi 0, %s74
    %s89 = sphi 0, %s75
    %s93 = sphi 0, %s93
    %s95 = sphi 0, %s93
    %s96 = sphi 0, %s95
    %s110 = sphi 0, %s96
    %s114 = sphi 0, %s114
    %s116 = sphi 0, %s114
    %s117 = sphi 0, %s116
    %s131 = sphi 0, %s117
    %s135 = sphi 0, %s135
    %s137 = sphi 0, %s135
    %s138 = sphi 0, %s137
    %s152 = sphi 0, %s138
    %s156 = sphi 0, %s156
    %s158 = sphi 0, %s156
    %s159 = sphi 0, %s158
    %s173 = sphi 0, %s159
    %s177 = sphi 0, %s177
    %s179 = sphi 0, %s177
    %s180 = sphi 0, %s179
    %s194 = sphi 0, %s180
    %s198 = sphi 0, %s198
    %s200 = sphi 0, %s198
    %s201 = sphi 0, %s200
    %s215 = sphi 0, %s201
    %s219 = sphi 0, %s219
    %s221 = sphi 0, %s219
    %s222 = sphi 0, %s221
    %s236 = sphi 0, %s222
    %s240 = sphi 0, %s240
    %s242 = sphi 0, %s240
    %s243 = sphi 0, %s242
    %s257 = sphi 0, %s243
    %s263 = sphi 0, %s265
    %s266 = sphi 0, %s263
    %s267 = sphi 0, %s266
    %s283 = sphi 0, %s267
  $region4: #{vit_forward_pallas.6} parent=0 // loop_header_branch
    %20 = sbr.rel (%p18) target = $region8
  $region5: #{vit_forward_pallas.6} parent=0 // loop_body
    %s22 = ssub.s32 %s17, 1
    %s23 = ssub.s32 %s17, 2
    %s24 = sadd.s32 %s17, 1
    %s25 = ssub.s32 %s17, %s24
    %p26 = scmp.eq.s32.totalorder %s25, 0
    %s28 = sadd.s32 %s27, 1
    %s29 = scalar_select %p26, %s27, %s28
    %p32 = pneg %p26
    %p33 = scmp.eq.s32.totalorder %s17, 1
    %p34 = por %p32, %p33
    %p35 = scmp.ne.s32.totalorder %s27, %s30
    %p36 = scmp.eq.s32.totalorder %s17, 0
    %p37 = por %p35, %p36
    %p38 = scmp.ne.s32.totalorder %s27, %s30
    %p39 = scmp.eq.s32.totalorder %s22, 1
    %p40 = por %p38, %p39
    %p41 = scmp.ne.s32.totalorder %s30, %s31
    %p42 = scmp.eq.s32.totalorder %s22, 0
    %p43 = por %p41, %p42
    %p44 = scmp.ne.s32.totalorder %s30, %s31
    %p45 = scmp.eq.s32.totalorder %s23, 1
    %p46 = por %p44, %p45
    %p48 = scmp.ne.s32.totalorder %s31, %s47
    %p49 = scmp.eq.s32.totalorder %s23, 0
    %p50 = por %p48, %p49
    %s52 = sadd.s32 %s51, 1
    %p55 = scmp.eq.s32.totalorder %s17, 1
    %p56 = scmp.ne.s32.totalorder %s51, %s53
    %p57 = scmp.eq.s32.totalorder %s17, 0
    %p58 = por %p56, %p57
    %p59 = scmp.ne.s32.totalorder %s51, %s53
    %p60 = scmp.eq.s32.totalorder %s22, 1
    %p61 = por %p59, %p60
    %p62 = scmp.ne.s32.totalorder %s53, %s54
    %p63 = scmp.eq.s32.totalorder %s22, 0
    %p64 = por %p62, %p63
    %p65 = scmp.ne.s32.totalorder %s53, %s54
    %p66 = scmp.eq.s32.totalorder %s23, 1
    %p67 = por %p65, %p66
    %p69 = scmp.ne.s32.totalorder %s54, %s68
    %p70 = scmp.eq.s32.totalorder %s23, 0
    %p71 = por %p69, %p70
    %s73 = sadd.s32 %s72, 1
    %p76 = scmp.eq.s32.totalorder %s17, 1
    %p77 = scmp.ne.s32.totalorder %s72, %s74
    %p78 = scmp.eq.s32.totalorder %s17, 0
    %p79 = por %p77, %p78
    %p80 = scmp.ne.s32.totalorder %s72, %s74
    %p81 = scmp.eq.s32.totalorder %s22, 1
    %p82 = por %p80, %p81
    %p83 = scmp.ne.s32.totalorder %s74, %s75
    %p84 = scmp.eq.s32.totalorder %s22, 0
    %p85 = por %p83, %p84
    %p86 = scmp.ne.s32.totalorder %s74, %s75
    %p87 = scmp.eq.s32.totalorder %s23, 1
    %p88 = por %p86, %p87
    %p90 = scmp.ne.s32.totalorder %s75, %s89
    %p91 = scmp.eq.s32.totalorder %s23, 0
    %p92 = por %p90, %p91
    %s94 = sadd.s32 %s93, 1
    %p97 = scmp.eq.s32.totalorder %s17, 1
    %p98 = scmp.ne.s32.totalorder %s93, %s95
    %p99 = scmp.eq.s32.totalorder %s17, 0
    %p100 = por %p98, %p99
    %p101 = scmp.ne.s32.totalorder %s93, %s95
    %p102 = scmp.eq.s32.totalorder %s22, 1
    %p103 = por %p101, %p102
    %p104 = scmp.ne.s32.totalorder %s95, %s96
    %p105 = scmp.eq.s32.totalorder %s22, 0
    %p106 = por %p104, %p105
    %p107 = scmp.ne.s32.totalorder %s95, %s96
    %p108 = scmp.eq.s32.totalorder %s23, 1
    %p109 = por %p107, %p108
    %p111 = scmp.ne.s32.totalorder %s96, %s110
    %p112 = scmp.eq.s32.totalorder %s23, 0
    %p113 = por %p111, %p112
    %s115 = sadd.s32 %s114, 1
    %p118 = scmp.eq.s32.totalorder %s17, 1
    %p119 = scmp.ne.s32.totalorder %s114, %s116
    %p120 = scmp.eq.s32.totalorder %s17, 0
    %p121 = por %p119, %p120
    %p122 = scmp.ne.s32.totalorder %s114, %s116
    %p123 = scmp.eq.s32.totalorder %s22, 1
    %p124 = por %p122, %p123
    %p125 = scmp.ne.s32.totalorder %s116, %s117
    %p126 = scmp.eq.s32.totalorder %s22, 0
    %p127 = por %p125, %p126
    %p128 = scmp.ne.s32.totalorder %s116, %s117
    %p129 = scmp.eq.s32.totalorder %s23, 1
    %p130 = por %p128, %p129
    %p132 = scmp.ne.s32.totalorder %s117, %s131
    %p133 = scmp.eq.s32.totalorder %s23, 0
    %p134 = por %p132, %p133
    %s136 = sadd.s32 %s135, 1
    %p139 = scmp.eq.s32.totalorder %s17, 1
    %p140 = scmp.ne.s32.totalorder %s135, %s137
    %p141 = scmp.eq.s32.totalorder %s17, 0
    %p142 = por %p140, %p141
    %p143 = scmp.ne.s32.totalorder %s135, %s137
    %p144 = scmp.eq.s32.totalorder %s22, 1
    %p145 = por %p143, %p144
    %p146 = scmp.ne.s32.totalorder %s137, %s138
    %p147 = scmp.eq.s32.totalorder %s22, 0
    %p148 = por %p146, %p147
    %p149 = scmp.ne.s32.totalorder %s137, %s138
    %p150 = scmp.eq.s32.totalorder %s23, 1
    %p151 = por %p149, %p150
    %p153 = scmp.ne.s32.totalorder %s138, %s152
    %p154 = scmp.eq.s32.totalorder %s23, 0
    %p155 = por %p153, %p154
    %s157 = sadd.s32 %s156, 1
    %p160 = scmp.eq.s32.totalorder %s17, 1
    %p161 = scmp.ne.s32.totalorder %s156, %s158
    %p162 = scmp.eq.s32.totalorder %s17, 0
    %p163 = por %p161, %p162
    %p164 = scmp.ne.s32.totalorder %s156, %s158
    %p165 = scmp.eq.s32.totalorder %s22, 1
    %p166 = por %p164, %p165
    %p167 = scmp.ne.s32.totalorder %s158, %s159
    %p168 = scmp.eq.s32.totalorder %s22, 0
    %p169 = por %p167, %p168
    %p170 = scmp.ne.s32.totalorder %s158, %s159
    %p171 = scmp.eq.s32.totalorder %s23, 1
    %p172 = por %p170, %p171
    %p174 = scmp.ne.s32.totalorder %s159, %s173
    %p175 = scmp.eq.s32.totalorder %s23, 0
    %p176 = por %p174, %p175
    %s178 = sadd.s32 %s177, 1
    %p181 = scmp.eq.s32.totalorder %s17, 1
    %p182 = scmp.ne.s32.totalorder %s177, %s179
    %p183 = scmp.eq.s32.totalorder %s17, 0
    %p184 = por %p182, %p183
    %p185 = scmp.ne.s32.totalorder %s177, %s179
    %p186 = scmp.eq.s32.totalorder %s22, 1
    %p187 = por %p185, %p186
    %p188 = scmp.ne.s32.totalorder %s179, %s180
    %p189 = scmp.eq.s32.totalorder %s22, 0
    %p190 = por %p188, %p189
    %p191 = scmp.ne.s32.totalorder %s179, %s180
    %p192 = scmp.eq.s32.totalorder %s23, 1
    %p193 = por %p191, %p192
    %p195 = scmp.ne.s32.totalorder %s180, %s194
    %p196 = scmp.eq.s32.totalorder %s23, 0
    %p197 = por %p195, %p196
    %s199 = sadd.s32 %s198, 1
    %p202 = scmp.eq.s32.totalorder %s17, 1
    %p203 = scmp.ne.s32.totalorder %s198, %s200
    %p204 = scmp.eq.s32.totalorder %s17, 0
    %p205 = por %p203, %p204
    %p206 = scmp.ne.s32.totalorder %s198, %s200
    %p207 = scmp.eq.s32.totalorder %s22, 1
    %p208 = por %p206, %p207
    %p209 = scmp.ne.s32.totalorder %s200, %s201
    %p210 = scmp.eq.s32.totalorder %s22, 0
    %p211 = por %p209, %p210
    %p212 = scmp.ne.s32.totalorder %s200, %s201
    %p213 = scmp.eq.s32.totalorder %s23, 1
    %p214 = por %p212, %p213
    %p216 = scmp.ne.s32.totalorder %s201, %s215
    %p217 = scmp.eq.s32.totalorder %s23, 0
    %p218 = por %p216, %p217
    %s220 = sadd.s32 %s219, 1
    %p223 = scmp.eq.s32.totalorder %s17, 1
    %p224 = scmp.ne.s32.totalorder %s219, %s221
    %p225 = scmp.eq.s32.totalorder %s17, 0
    %p226 = por %p224, %p225
    %p227 = scmp.ne.s32.totalorder %s219, %s221
    %p228 = scmp.eq.s32.totalorder %s22, 1
    %p229 = por %p227, %p228
    %p230 = scmp.ne.s32.totalorder %s221, %s222
    %p231 = scmp.eq.s32.totalorder %s22, 0
    %p232 = por %p230, %p231
    %p233 = scmp.ne.s32.totalorder %s221, %s222
    %p234 = scmp.eq.s32.totalorder %s23, 1
    %p235 = por %p233, %p234
    %p237 = scmp.ne.s32.totalorder %s222, %s236
    %p238 = scmp.eq.s32.totalorder %s23, 0
    %p239 = por %p237, %p238
    %s241 = sadd.s32 %s240, 1
    %p244 = scmp.eq.s32.totalorder %s17, 1
    %p245 = scmp.ne.s32.totalorder %s240, %s242
    %p246 = scmp.eq.s32.totalorder %s17, 0
    %p247 = por %p245, %p246
    %p248 = scmp.ne.s32.totalorder %s240, %s242
    %p249 = scmp.eq.s32.totalorder %s22, 1
    %p250 = por %p248, %p249
    %p251 = scmp.ne.s32.totalorder %s242, %s243
    %p252 = scmp.eq.s32.totalorder %s22, 0
    %p253 = por %p251, %p252
    %p254 = scmp.ne.s32.totalorder %s242, %s243
    %p255 = scmp.eq.s32.totalorder %s23, 1
    %p256 = por %p254, %p255
    %p258 = scmp.ne.s32.totalorder %s243, %s257
    %p259 = scmp.eq.s32.totalorder %s23, 0
    %p260 = por %p258, %p259
    %s261 = ssub.s32 %s17, %s24
    %p262 = scmp.eq.s32.totalorder %s261, 0
    %s264 = sadd.s32 %s263, 1
    %s265 = scalar_select %p262, %s263, %s264
    %p268 = pneg %p262
    %p269 = scmp.eq.s32.totalorder %s17, 1
    %p270 = por %p268, %p269
    %p271 = scmp.ne.s32.totalorder %s263, %s266
    %p272 = scmp.eq.s32.totalorder %s17, 0
    %p273 = por %p271, %p272
    %p274 = scmp.ne.s32.totalorder %s263, %s266
    %p275 = scmp.eq.s32.totalorder %s22, 1
    %p276 = por %p274, %p275
    %p277 = scmp.ne.s32.totalorder %s266, %s267
    %p278 = scmp.eq.s32.totalorder %s22, 0
    %p279 = por %p277, %p278
    %p280 = scmp.ne.s32.totalorder %s266, %s267
    %p281 = scmp.eq.s32.totalorder %s23, 1
    %p282 = por %p280, %p281
    %p284 = scmp.ne.s32.totalorder %s267, %s283
    %p285 = scmp.eq.s32.totalorder %s23, 0
    %p286 = por %p284, %p285
    %p287 = scmp.le.s32.totalorder 1, %s17
    %p288 = scmp.lt.s32.totalorder %s17, 3
    %p289 = pnand %p287, %p288
    %p290 = pneg %p289
    // Predicated region
    $region9: #{vit_forward_pallas.6} parent=5 // pred_check
      _
    $region10: #{vit_forward_pallas.6} parent=5 // pred_check_branch
      %292 = sbr.rel (%p289) target = $region12
    $region11: #{vit_forward_pallas.6} parent=5 // pred_region
      %s293 = ssub.s32 %s17, 1
      // Predicated region
      $region13: #{vit_forward_pallas.6} parent=11 // pred_check
        %p294 = pneg %p64
      $region14: #{vit_forward_pallas.6} parent=11 // pred_check_branch
        %296 = sbr.rel (%p294) target = $region16
      $region15: #{vit_forward_pallas.6} parent=11 // pred_region
        _
      $region16: #{vit_forward_pallas.6} parent=11 // pred_fallthru
        _
      // Predicated region
      $region17: #{vit_forward_pallas.6} parent=11 // pred_check
        %p297 = pneg %p85
      $region18: #{vit_forward_pallas.6} parent=11 // pred_check_branch
        %299 = sbr.rel (%p297) target = $region20
      $region19: #{vit_forward_pallas.6} parent=11 // pred_region
        _
      $region20: #{vit_forward_pallas.6} parent=11 // pred_fallthru
        _
      // Predicated region
      $region21: #{vit_forward_pallas.6} parent=11 // pred_check
        %p300 = pneg %p106
      $region22: #{vit_forward_pallas.6} parent=11 // pred_check_branch
        %302 = sbr.rel (%p300) target = $region24
      $region23: #{vit_forward_pallas.6} parent=11 // pred_region
        _
      $region24: #{vit_forward_pallas.6} parent=11 // pred_fallthru
        _
      // Predicated region
      $region25: #{vit_forward_pallas.6} parent=11 // pred_check
        %p303 = pneg %p127
      $region26: #{vit_forward_pallas.6} parent=11 // pred_check_branch
        %305 = sbr.rel (%p303) target = $region28
      $region27: #{vit_forward_pallas.6} parent=11 // pred_region
        _
      $region28: #{vit_forward_pallas.6} parent=11 // pred_fallthru
        _
      // Predicated region
      $region29: #{vit_forward_pallas.6} parent=11 // pred_check
        %p306 = pneg %p148
      $region30: #{vit_forward_pallas.6} parent=11 // pred_check_branch
        %308 = sbr.rel (%p306) target = $region32
      $region31: #{vit_forward_pallas.6} parent=11 // pred_region
        _
      $region32: #{vit_forward_pallas.6} parent=11 // pred_fallthru
        _
      // Predicated region
      $region33: #{vit_forward_pallas.6} parent=11 // pred_check
        %p309 = pneg %p169
      $region34: #{vit_forward_pallas.6} parent=11 // pred_check_branch
        %311 = sbr.rel (%p309) target = $region36
      $region35: #{vit_forward_pallas.6} parent=11 // pred_region
        _
      $region36: #{vit_forward_pallas.6} parent=11 // pred_fallthru
        _
      // Predicated region
      $region37: #{vit_forward_pallas.6} parent=11 // pred_check
        %p312 = pneg %p190
      $region38: #{vit_forward_pallas.6} parent=11 // pred_check_branch
        %314 = sbr.rel (%p312) target = $region40
      $region39: #{vit_forward_pallas.6} parent=11 // pred_region
        _
      $region40: #{vit_forward_pallas.6} parent=11 // pred_fallthru
        _
      // Predicated region
      $region41: #{vit_forward_pallas.6} parent=11 // pred_check
        %p315 = pneg %p211
      $region42: #{vit_forward_pallas.6} parent=11 // pred_check_branch
        %317 = sbr.rel (%p315) target = $region44
      $region43: #{vit_forward_pallas.6} parent=11 // pred_region
        _
      $region44: #{vit_forward_pallas.6} parent=11 // pred_fallthru
        _
      // Predicated region
      $region45: #{vit_forward_pallas.6} parent=11 // pred_check
        %p318 = pneg %p232
      $region46: #{vit_forward_pallas.6} parent=11 // pred_check_branch
        %320 = sbr.rel (%p318) target = $region48
      $region47: #{vit_forward_pallas.6} parent=11 // pred_region
        _
      $region48: #{vit_forward_pallas.6} parent=11 // pred_fallthru
        _
      // Predicated region
      $region49: #{vit_forward_pallas.6} parent=11 // pred_check
        %p321 = pneg %p253
      $region50: #{vit_forward_pallas.6} parent=11 // pred_check_branch
        %323 = sbr.rel (%p321) target = $region52
      $region51: #{vit_forward_pallas.6} parent=11 // pred_region
        _
      $region52: #{vit_forward_pallas.6} parent=11 // pred_fallthru
        _
    $region12: #{vit_forward_pallas.6} parent=5 // pred_fallthru
      _
    %p324 = scmp.lt.s32.totalorder %s17, 2
    // Predicated region
    $region53: #{vit_forward_pallas.6} parent=5 // pred_check
      %p325 = pneg %p324
    $region54: #{vit_forward_pallas.6} parent=5 // pred_check_branch
      %327 = sbr.rel (%p325) target = $region56
    $region55: #{vit_forward_pallas.6} parent=5 // pred_region
      // Predicated region
      $region57: #{vit_forward_pallas.6} parent=55 // pred_check
        %p328 = pneg %p37
      $region58: #{vit_forward_pallas.6} parent=55 // pred_check_branch
        %330 = sbr.rel (%p328) target = $region60
      $region59: #{vit_forward_pallas.6} parent=55 // pred_region
        %p331 = scmp.lt.s32.totalorder %s17, 1
        %s332 = scalar_select %p331, %s17, 1
        %s333 = smul.addr %s332, 8
        %s334 = smul.addr %s333, 4
        %s335 = scalar_lea.vmem %s0, %s334
      $region60: #{vit_forward_pallas.6} parent=55 // pred_fallthru
        _
    $region56: #{vit_forward_pallas.6} parent=5 // pred_fallthru
      _
    %p336 = scmp.le.s32.totalorder 1, %s17
    %p337 = scmp.lt.s32.totalorder %s17, 3
    %p338 = pnand %p336, %p337
    %p339 = pneg %p338
    // Predicated region
    $region61: #{vit_forward_pallas.6} parent=5 // pred_check
      _
    $region62: #{vit_forward_pallas.6} parent=5 // pred_check_branch
      %341 = sbr.rel (%p338) target = $region64
    $region63: #{vit_forward_pallas.6} parent=5 // pred_region
      %s342 = ssub.s32 %s17, 1
      %p343 = scmp.lt.s32.totalorder %s22, 1
      %s344 = scalar_select %p343, %s22, 1
      %s345 = smul.addr %s344, 8
      %s346 = smul.addr %s345, 4
      %s347 = scalar_lea.vmem %s0, %s346
      %p348 = pneg %p43
      %p349 = pneg %p40
      %p350 = pneg %p64
      %p351 = pneg %p61
      %p352 = pneg %p85
      %p353 = pneg %p82
      %p354 = pneg %p106
      %p355 = pneg %p103
      %p356 = pneg %p127
      %p357 = pneg %p124
      %p358 = pneg %p148
      %p359 = pneg %p145
      %p360 = pneg %p169
      %p361 = pneg %p166
      %p362 = pneg %p190
      %p363 = pneg %p187
      %p364 = pneg %p211
      %p365 = pneg %p208
      %p366 = pneg %p232
      %p367 = pneg %p229
      %p368 = pneg %p253
      %p369 = pneg %p250
      %p370 = pneg %p279
      %p371 = pneg %p276
      %p372 = scmp.lt.s32.totalorder %s22, 1
      %s373 = scalar_select %p372, %s22, 1
      %s374 = smul.addr %s373, 8
      %s375 = smul.addr %s374, 4
      %s376 = scalar_lea.vmem %s11, %s375
      %p377 = scmp.lt.s32.totalorder %s22, 1
      %s378 = scalar_select %p377, %s22, 1
      %s379 = smul.addr %s378, 8
      %s380 = smul.addr %s379, 4
      %s381 = scalar_lea.vmem %s0, %s380
      %p382 = scmp.lt.s32.totalorder %s22, 1
      %s383 = scalar_select %p382, %s22, 1
      %s384 = smul.addr %s383, 8
      %s385 = smul.addr %s384, 4
      %s386 = scalar_lea.vmem %s11, %s385
      %v388 = vld [vmem:[%s381] sm:$0xf]
      %v389 = vld [vmem:[%s381 + $0x4] sm:$0xf]
      %v390 = vld [vmem:[%s381 + $0x8] sm:$0xf]
      %v391 = vld [vmem:[%s381 + $0xc] sm:$0xf]
      %v392 = vld [vmem:[%s381 + $0x10] sm:$0xf]
      %v393 = vld [vmem:[%s381 + $0x14] sm:$0xf]
      %v394 = vld [vmem:[%s381 + $0x18] sm:$0xf]
      %v395 = vld [vmem:[%s381 + $0x1c] sm:$0xf]
      %v396 = vunpack.c.l.bf16 %v388
      %v397 = vunpack.c.l.bf16 %v389
      %v398 = vunpack.c.l.bf16 %v390
      %v399 = vunpack.c.l.bf16 %v391
      %v400 = vunpack.c.l.bf16 %v392
      %v401 = vunpack.c.l.bf16 %v393
      %v402 = vunpack.c.l.bf16 %v394
      %v403 = vunpack.c.l.bf16 %v395
      %v404 = vld [vmem:[%s1] sm:$0xf]
      %v405 = vld [vmem:[%s1 + $0x4] sm:$0xf]
      %v406 = vld [vmem:[%s1 + $0x8] sm:$0xf]
      %v407 = vld [vmem:[%s1 + $0xc] sm:$0xf]
      %v408 = vld [vmem:[%s2] sm:$0x1]
      %v410 = vlaneseq
      %v411 = vshrl.u32 %v410, 7
      %v412 = vsub.s32 0, %v411
      %v413 = vrot.slane %v408, %v412
      %v423 = vunpack.c.l.b16 %v388
      %v424 = vunpack.c.l.b16 %v389
      %v425 = vunpack.c.l.b16 %v390
      %v426 = vunpack.c.l.b16 %v391
      %v427 = vunpack.c.l.b16 %v392
      %v428 = vunpack.c.l.b16 %v393
      %v429 = vunpack.c.l.b16 %v394
      %v430 = vunpack.c.l.b16 %v395
      %v431 = vpack.c.b16 %v424, %v423
      %v432 = vpack.c.b16 %v426, %v425
      %v433 = vpack.c.b16 %v428, %v427
      %v434 = vpack.c.b16 %v430, %v429
      %v439 = vunpack.c.l.b16 %v404
      %v440 = vunpack.c.l.b16 %v405
      %v441 = vunpack.c.l.b16 %v406
      %v442 = vunpack.c.l.b16 %v407
      %v443 = vpack.c.b16 %v440, %v439
      %v444 = vpack.c.b16 %v442, %v441
      %vm447 = vcmask 261120
      %v449 = vsel %vm447, %v431, 0
      %v452 = vsel %vm447, %v432, 0
      %v455 = vsel %vm447, %v433, 0
      %v458 = vsel %vm447, %v434, 0
      %460 = vmatprep.subr.bf16.mxu0 0
      %461 = vmatpush1.bf16.msra.mxu0 %v443
      %462 = vmatprep.subr.bf16.mxu0 0
      %463 = vmatpush1.bf16.msra.mxu0 %v444
      %464 = vmatprep.subr.bf16.mxu0 0
      %465 = vmatpush1.bf16.msra.mxu0 0
      %466 = vmatprep.subr.bf16.mxu0 0
      %467 = vmatpush1.bf16.msra.mxu0 0
      %468 = vmatprep.subr.bf16.mxu0 0
      %469 = vmatpush1.bf16.msra.mxu0 0
      %470 = vmatprep.subr.bf16.mxu0 0
      %471 = vmatpush1.bf16.msra.mxu0 0
      %472 = vmatprep.subr.bf16.mxu0 0
      %473 = vmatpush1.bf16.msra.mxu0 0
      %474 = vmatprep.subr.bf16.mxu0 0
      %475 = vmatpush1.bf16.msra.mxu0 0
      %476 = vmatprep.subr.bf16.mxu0 0
      %477 = vmatpush1.bf16.msra.mxu0 0
      %478 = vmatprep.subr.bf16.mxu0 0
      %479 = vmatpush1.bf16.msra.mxu0 0
      %480 = vmatprep.subr.bf16.mxu0 0
      %481 = vmatpush1.bf16.msra.mxu0 0
      %482 = vmatprep.subr.bf16.mxu0 0
      %483 = vmatpush1.bf16.msra.mxu0 0
      %484 = vmatprep.subr.bf16.mxu0 0
      %485 = vmatpush1.bf16.msra.mxu0 0
      %486 = vmatprep.subr.bf16.mxu0 0
      %487 = vmatpush1.bf16.msra.mxu0 0
      %488 = vmatprep.subr.bf16.mxu0 0
      %489 = vmatpush1.bf16.msra.mxu0 0
      %490 = vmatprep.subr.bf16.mxu0 0
      %491 = vmatpush1.bf16.msra.mxu0 0
      %492 = vmatprep.mubr.bf16.mxu0 0
      %493 = vmatmul.mubr.bf16.gmra.mrb[0].mxu0 %v449
      %v494 = vpop.f32.mrb[0].mxu0
      %v495 = vadd.f32 %v413, %v494
      %v496 = vpop.f32.mrb[0].mxu0
      %v497 = vpop.f32.mrb[0].mxu0
      %v498 = vadd.f32 %v413, %v497
      %v499 = vpop.f32.mrb[0].mxu0
      %500 = vmatprep.mubr.bf16.mxu0 0
      %501 = vmatmul.mubr.bf16.gmra.mrb[0].mxu0 %v452
      %v502 = vpop.f32.mrb[0].mxu0
      %v503 = vadd.f32 %v413, %v502
      %v504 = vpop.f32.mrb[0].mxu0
      %v505 = vpop.f32.mrb[0].mxu0
      %v506 = vadd.f32 %v413, %v505
      %v507 = vpop.f32.mrb[0].mxu0
      %508 = vmatprep.mubr.bf16.mxu0 0
      %509 = vmatmul.mubr.bf16.gmra.mrb[0].mxu0 %v455
      %v510 = vpop.f32.mrb[0].mxu0
      %v511 = vadd.f32 %v413, %v510
      %v512 = vpop.f32.mrb[0].mxu0
      %v513 = vpop.f32.mrb[0].mxu0
      %v514 = vadd.f32 %v413, %v513
      %v515 = vpop.f32.mrb[0].mxu0
      %516 = vmatprep.mubr.bf16.mxu0 0
      %517 = vmatmul.mubr.bf16.gmra.mrb[0].mxu0 %v458
      %v518 = vpop.f32.mrb[0].mxu0
      %v519 = vadd.f32 %v413, %v518
      %v520 = vpop.f32.mrb[0].mxu0
      %v521 = vpop.f32.mrb[0].mxu0
      %v522 = vadd.f32 %v413, %v521
      %v523 = vpop.f32.mrb[0].mxu0
      %524 = vdwg.mxu0
      %v525 = vpack.c.bf16 %v498, %v495
      %v526 = vpack.c.bf16 %v506, %v503
      %v527 = vpack.c.bf16 %v514, %v511
      %v528 = vpack.c.bf16 %v522, %v519
      %533 = vrot.lane.b32.xlu0 %v525, 96
      %v534 = vpop.permute.xlu0 %533
      %535 = vrot.lane.b32.xlu0 %v526, 96
      %v536 = vpop.permute.xlu0 %535
      %537 = vrot.lane.b32.xlu0 %v527, 96
      %v538 = vpop.permute.xlu0 %537
      %539 = vrot.lane.b32.xlu0 %v528, 96
      %v540 = vpop.permute.xlu0 %539
      %vm541 = vcmask 64512
      %v543 = vsel %vm541, %v525, 0
      %v546 = vsel %vm541, %v526, 0
      %v549 = vsel %vm541, %v527, 0
      %v552 = vsel %vm541, %v528, 0
      %v555 = vsel %vm541, %v534, 0
      %v558 = vsel %vm541, %v536, 0
      %v561 = vsel %vm541, %v538, 0
      %v564 = vsel %vm541, %v540, 0
      %566 = vmatprep.subr.bf16.mxu0 0
      %567 = vmatpush1.bf16.xpose.msra.mxu0 %v555
      %568 = vmatprep.subr.bf16.mxu0 0
      %569 = vmatpush1.bf16.xpose.msra.mxu0 %v558
      %570 = vmatprep.subr.bf16.mxu0 0
      %571 = vmatpush1.bf16.xpose.msra.mxu0 %v561
      %572 = vmatprep.subr.bf16.mxu0 0
      %573 = vmatpush1.bf16.xpose.msra.mxu0 %v564
      %574 = vmatprep.subr.bf16.mxu0 0
      %575 = vmatpush1.bf16.xpose.msra.mxu0 0
      %576 = vmatprep.subr.bf16.mxu0 0
      %577 = vmatpush1.bf16.xpose.msra.mxu0 0
      %578 = vmatprep.subr.bf16.mxu0 0
      %579 = vmatpush1.bf16.xpose.msra.mxu0 0
      %580 = vmatprep.subr.bf16.mxu0 0
      %581 = vmatpush1.bf16.xpose.msra.mxu0 0
      %582 = vmatprep.subr.bf16.mxu0 0
      %583 = vmatpush1.bf16.xpose.msra.mxu0 0
      %584 = vmatprep.subr.bf16.mxu0 0
      %585 = vmatpush1.bf16.xpose.msra.mxu0 0
      %586 = vmatprep.subr.bf16.mxu0 0
      %587 = vmatpush1.bf16.xpose.msra.mxu0 0
      %588 = vmatprep.subr.bf16.mxu0 0
      %589 = vmatpush1.bf16.xpose.msra.mxu0 0
      %590 = vmatprep.subr.bf16.mxu0 0
      %591 = vmatpush1.bf16.xpose.msra.mxu0 0
      %592 = vmatprep.subr.bf16.mxu0 0
      %593 = vmatpush1.bf16.xpose.msra.mxu0 0
      %594 = vmatprep.subr.bf16.mxu0 0
      %595 = vmatpush1.bf16.xpose.msra.mxu0 0
      %596 = vmatprep.subr.bf16.mxu0 0
      %597 = vmatpush1.bf16.xpose.msra.mxu0 0
      %598 = vmatprep.mubr.bf16.mxu0 0
      %599 = vmatmul.mubr.bf16.gmra.mrb[0].mxu0 %v543
      %v600 = vpop.f32.mrb[0].mxu0
      %v601 = vadd.f32 0.0, %v600
      %v602 = vpop.f32.mrb[0].mxu0
      %v603 = vpop.f32.mrb[0].mxu0
      %v604 = vadd.f32 0.0, %v603
      %v605 = vpop.f32.mrb[0].mxu0
      %606 = vmatprep.mubr.bf16.mxu0 0
      %607 = vmatmul.mubr.bf16.gmra.mrb[0].mxu0 %v546
      %v608 = vpop.f32.mrb[0].mxu0
      %v609 = vadd.f32 0.0, %v608
      %v610 = vpop.f32.mrb[0].mxu0
      %v611 = vpop.f32.mrb[0].mxu0
      %v612 = vadd.f32 0.0, %v611
      %v613 = vpop.f32.mrb[0].mxu0
      %614 = vmatprep.mubr.bf16.mxu0 0
      %615 = vmatmul.mubr.bf16.gmra.mrb[0].mxu0 %v549
      %v616 = vpop.f32.mrb[0].mxu0
      %v617 = vadd.f32 0.0, %v616
      %v618 = vpop.f32.mrb[0].mxu0
      %v619 = vpop.f32.mrb[0].mxu0
      %v620 = vadd.f32 0.0, %v619
      %v621 = vpop.f32.mrb[0].mxu0
      %622 = vmatprep.mubr.bf16.mxu0 0
      %623 = vmatmul.mubr.bf16.gmra.mrb[0].mxu0 %v552
      %v624 = vpop.f32.mrb[0].mxu0
      %v625 = vadd.f32 0.0, %v624
      %v626 = vpop.f32.mrb[0].mxu0
      %v627 = vpop.f32.mrb[0].mxu0
      %v628 = vadd.f32 0.0, %v627
      %v629 = vpop.f32.mrb[0].mxu0
      %630 = vdwg.mxu0
      %v631 = vmul.f32 %v601, 0.35355338
      %v632 = vmul.f32 %v604, 0.35355338
      %v633 = vmul.f32 %v609, 0.35355338
      %v634 = vmul.f32 %v612, 0.35355338
      %v635 = vmul.f32 %v617, 0.35355338
      %v636 = vmul.f32 %v620, 0.35355338
      %v637 = vmul.f32 %v625, 0.35355338
      %v638 = vmul.f32 %v628, 0.35355338
      %vm639 = vcmask 523264
      %v640 = vsel %vm639, %v631, -inf
      %641 = vmax.xlane.f32.xlu0 %v640
      %v642 = vpop.xlane.xlu0 %641
      %v643 = vsel %vm639, %v632, -inf
      %644 = vmax.xlane.f32.xlu0 %v643
      %v645 = vpop.xlane.xlu0 %644
      %v646 = vsel %vm639, %v633, -inf
      %647 = vmax.xlane.f32.xlu0 %v646
      %v648 = vpop.xlane.xlu0 %647
      %v649 = vsel %vm639, %v634, -inf
      %650 = vmax.xlane.f32.xlu0 %v649
      %v651 = vpop.xlane.xlu0 %650
      %v652 = vsel %vm639, %v635, -inf
      %653 = vmax.xlane.f32.xlu0 %v652
      %v654 = vpop.xlane.xlu0 %653
      %v655 = vsel %vm639, %v636, -inf
      %656 = vmax.xlane.f32.xlu0 %v655
      %v657 = vpop.xlane.xlu0 %656
      %v658 = vsel %vm639, %v637, -inf
      %659 = vmax.xlane.f32.xlu0 %v658
      %v660 = vpop.xlane.xlu0 %659
      %v661 = vsel %vm639, %v638, -inf
      %662 = vmax.xlane.f32.xlu0 %v661
      %v663 = vpop.xlane.xlu0 %662
      %v664 = vsub.f32 %v631, %v642
      %v665 = vsub.f32 %v632, %v645
      %v666 = vsub.f32 %v633, %v648
      %v667 = vsub.f32 %v634, %v651
      %v668 = vsub.f32 %v635, %v654
      %v669 = vsub.f32 %v636, %v657
      %v670 = vsub.f32 %v637, %v660
      %v671 = vsub.f32 %v638, %v663
      %v672 = vmul.f32 %v664, 1.442695
      %v673 = vpow.pop %v672
      %v674 = vmul.f32 %v665, 1.442695
      %v675 = vpow.pop %v674
      %v676 = vmul.f32 %v666, 1.442695
      %v677 = vpow.pop %v676
      %v678 = vmul.f32 %v667, 1.442695
      %v679 = vpow.pop %v678
      %v680 = vmul.f32 %v668, 1.442695
      %v681 = vpow.pop %v680
      %v682 = vmul.f32 %v669, 1.442695
      %v683 = vpow.pop %v682
      %v684 = vmul.f32 %v670, 1.442695
      %v685 = vpow.pop %v684
      %v686 = vmul.f32 %v671, 1.442695
      %v687 = vpow.pop %v686
      %v688 = vsel %vm639, %v673, 0.0
      %689 = vadd.xlane.f32.xlu0 %v688
      %v690 = vpop.xlane.xlu0 %689
      %v691 = vsel %vm639, %v675, 0.0
      %692 = vadd.xlane.f32.xlu0 %v691
      %v693 = vpop.xlane.xlu0 %692
      %v694 = vsel %vm639, %v677, 0.0
      %695 = vadd.xlane.f32.xlu0 %v694
      %v696 = vpop.xlane.xlu0 %695
      %v697 = vsel %vm639, %v679, 0.0
      %698 = vadd.xlane.f32.xlu0 %v697
      %v699 = vpop.xlane.xlu0 %698
      %v700 = vsel %vm639, %v681, 0.0
      %701 = vadd.xlane.f32.xlu0 %v700
      %v702 = vpop.xlane.xlu0 %701
      %v703 = vsel %vm639, %v683, 0.0
      %704 = vadd.xlane.f32.xlu0 %v703
      %v705 = vpop.xlane.xlu0 %704
      %v706 = vsel %vm639, %v685, 0.0
      %707 = vadd.xlane.f32.xlu0 %v706
      %v708 = vpop.xlane.xlu0 %707
      %v709 = vsel %vm639, %v687, 0.0
      %710 = vadd.xlane.f32.xlu0 %v709
      %v711 = vpop.xlane.xlu0 %710
      %v712 = vrcp.pop %v690
      %v713 = vrcp.pop %v693
      %v714 = vrcp.pop %v696
      %v715 = vrcp.pop %v699
      %v716 = vrcp.pop %v702
      %v717 = vrcp.pop %v705
      %v718 = vrcp.pop %v708
      %v719 = vrcp.pop %v711
      %v720 = vmul.f32 %v673, %v712
      %v721 = vmul.f32 %v675, %v713
      %v722 = vmul.f32 %v677, %v714
      %v723 = vmul.f32 %v679, %v715
      %v724 = vmul.f32 %v681, %v716
      %v725 = vmul.f32 %v683, %v717
      %v726 = vmul.f32 %v685, %v718
      %v727 = vmul.f32 %v687, %v719
      %v728 = vpack.c.bf16 %v721, %v720
      %v729 = vpack.c.bf16 %v723, %v722
      %v730 = vpack.c.bf16 %v725, %v724
      %v731 = vpack.c.bf16 %v727, %v726
      %732 = vrot.lane.b32.xlu0 %v525, 64
      %v733 = vpop.permute.xlu0 %732
      %734 = vrot.lane.b32.xlu0 %v526, 64
      %v735 = vpop.permute.xlu0 %734
      %736 = vrot.lane.b32.xlu0 %v527, 64
      %v737 = vpop.permute.xlu0 %736
      %738 = vrot.lane.b32.xlu0 %v528, 64
      %v739 = vpop.permute.xlu0 %738
      %v745 = vsel %vm639, %v728, 0
      %v748 = vsel %vm639, %v729, 0
      %v751 = vsel %vm639, %v730, 0
      %v754 = vsel %vm639, %v731, 0
      %756 = vmatprep.subr.bf16.mxu0 0
      %757 = vmatpush1.bf16.msra.mxu0 %v733
      %758 = vmatprep.subr.bf16.mxu0 0
      %759 = vmatpush1.bf16.msra.mxu0 %v735
      %760 = vmatprep.subr.bf16.mxu0 0
      %761 = vmatpush1.bf16.msra.mxu0 %v737
      %762 = vmatprep.subr.bf16.mxu0 0
      %763 = vmatpush1.bf16.msra.mxu0 %v739
      %764 = vmatprep.subr.bf16.mxu0 0
      %765 = vmatpush1.bf16.msra.mxu0 0
      %766 = vmatprep.subr.bf16.mxu0 0
      %767 = vmatpush1.bf16.msra.mxu0 0
      %768 = vmatprep.subr.bf16.mxu0 0
      %769 = vmatpush1.bf16.msra.mxu0 0
      %770 = vmatprep.subr.bf16.mxu0 0
      %771 = vmatpush1.bf16.msra.mxu0 0
      %772 = vmatprep.subr.bf16.mxu0 0
      %773 = vmatpush1.bf16.msra.mxu0 0
      %774 = vmatprep.subr.bf16.mxu0 0
      %775 = vmatpush1.bf16.msra.mxu0 0
      %776 = vmatprep.subr.bf16.mxu0 0
      %777 = vmatpush1.bf16.msra.mxu0 0
      %778 = vmatprep.subr.bf16.mxu0 0
      %779 = vmatpush1.bf16.msra.mxu0 0
      %780 = vmatprep.subr.bf16.mxu0 0
      %781 = vmatpush1.bf16.msra.mxu0 0
      %782 = vmatprep.subr.bf16.mxu0 0
      %783 = vmatpush1.bf16.msra.mxu0 0
      %784 = vmatprep.subr.bf16.mxu0 0
      %785 = vmatpush1.bf16.msra.mxu0 0
      %786 = vmatprep.subr.bf16.mxu0 0
      %787 = vmatpush1.bf16.msra.mxu0 0
      %788 = vmatprep.mubr.bf16.mxu0 0
      %789 = vmatmul.mubr.bf16.gmra.mrb[0].mxu0 %v745
      %v790 = vpop.f32.mrb[0].mxu0
      %v791 = vadd.f32 0.0, %v790
      %v792 = vpop.f32.mrb[0].mxu0
      %v793 = vpop.f32.mrb[0].mxu0
      %v794 = vadd.f32 0.0, %v793
      %v795 = vpop.f32.mrb[0].mxu0
      %796 = vmatprep.mubr.bf16.mxu0 0
      %797 = vmatmul.mubr.bf16.gmra.mrb[0].mxu0 %v748
      %v798 = vpop.f32.mrb[0].mxu0
      %v799 = vadd.f32 0.0, %v798
      %v800 = vpop.f32.mrb[0].mxu0
      %v801 = vpop.f32.mrb[0].mxu0
      %v802 = vadd.f32 0.0, %v801
      %v803 = vpop.f32.mrb[0].mxu0
      %804 = vmatprep.mubr.bf16.mxu0 0
      %805 = vmatmul.mubr.bf16.gmra.mrb[0].mxu0 %v751
      %v806 = vpop.f32.mrb[0].mxu0
      %v807 = vadd.f32 0.0, %v806
      %v808 = vpop.f32.mrb[0].mxu0
      %v809 = vpop.f32.mrb[0].mxu0
      %v810 = vadd.f32 0.0, %v809
      %v811 = vpop.f32.mrb[0].mxu0
      %812 = vmatprep.mubr.bf16.mxu0 0
      %813 = vmatmul.mubr.bf16.gmra.mrb[0].mxu0 %v754
      %v814 = vpop.f32.mrb[0].mxu0
      %v815 = vadd.f32 0.0, %v814
      %v816 = vpop.f32.mrb[0].mxu0
      %v817 = vpop.f32.mrb[0].mxu0
      %v818 = vadd.f32 0.0, %v817
      %v819 = vpop.f32.mrb[0].mxu0
      %820 = vdwg.mxu0
      %821 = vrot.lane.b32.xlu0 %v525, 120
      %v822 = vpop.permute.xlu0 %821
      %823 = vrot.lane.b32.xlu0 %v526, 120
      %v824 = vpop.permute.xlu0 %823
      %825 = vrot.lane.b32.xlu0 %v527, 120
      %v826 = vpop.permute.xlu0 %825
      %827 = vrot.lane.b32.xlu0 %v528, 120
      %v828 = vpop.permute.xlu0 %827
      %829 = vrot.lane.b32.xlu0 %v525, 88
      %v830 = vpop.permute.xlu0 %829
      %831 = vrot.lane.b32.xlu0 %v526, 88
      %v832 = vpop.permute.xlu0 %831
      %833 = vrot.lane.b32.xlu0 %v527, 88
      %v834 = vpop.permute.xlu0 %833
      %835 = vrot.lane.b32.xlu0 %v528, 88
      %v836 = vpop.permute.xlu0 %835
      %v838 = vsel %vm541, %v822, 0
      %v841 = vsel %vm541, %v824, 0
      %v844 = vsel %vm541, %v826, 0
      %v847 = vsel %vm541, %v828, 0
      %v850 = vsel %vm541, %v830, 0
      %v853 = vsel %vm541, %v832, 0
      %v856 = vsel %vm541, %v834, 0
      %v859 = vsel %vm541, %v836, 0
      %861 = vmatprep.subr.bf16.mxu0 0
      %862 = vmatpush1.bf16.xpose.msra.mxu0 %v850
      %863 = vmatprep.subr.bf16.mxu0 0
      %864 = vmatpush1.bf16.xpose.msra.mxu0 %v853
      %865 = vmatprep.subr.bf16.mxu0 0
      %866 = vmatpush1.bf16.xpose.msra.mxu0 %v856
      %867 = vmatprep.subr.bf16.mxu0 0
      %868 = vmatpush1.bf16.xpose.msra.mxu0 %v859
      %869 = vmatprep.subr.bf16.mxu0 0
      %870 = vmatpush1.bf16.xpose.msra.mxu0 0
      %871 = vmatprep.subr.bf16.mxu0 0
      %872 = vmatpush1.bf16.xpose.msra.mxu0 0
      %873 = vmatprep.subr.bf16.mxu0 0
      %874 = vmatpush1.bf16.xpose.msra.mxu0 0
      %875 = vmatprep.subr.bf16.mxu0 0
      %876 = vmatpush1.bf16.xpose.msra.mxu0 0
      %877 = vmatprep.subr.bf16.mxu0 0
      %878 = vmatpush1.bf16.xpose.msra.mxu0 0
      %879 = vmatprep.subr.bf16.mxu0 0
      %880 = vmatpush1.bf16.xpose.msra.mxu0 0
      %881 = vmatprep.subr.bf16.mxu0 0
      %882 = vmatpush1.bf16.xpose.msra.mxu0 0
      %883 = vmatprep.subr.bf16.mxu0 0
      %884 = vmatpush1.bf16.xpose.msra.mxu0 0
      %885 = vmatprep.subr.bf16.mxu0 0
      %886 = vmatpush1.bf16.xpose.msra.mxu0 0
      %887 = vmatprep.subr.bf16.mxu0 0
      %888 = vmatpush1.bf16.xpose.msra.mxu0 0
      %889 = vmatprep.subr.bf16.mxu0 0
      %890 = vmatpush1.bf16.xpose.msra.mxu0 0
      %891 = vmatprep.subr.bf16.mxu0 0
      %892 = vmatpush1.bf16.xpose.msra.mxu0 0
      %893 = vmatprep.mubr.bf16.mxu0 0
      %894 = vmatmul.mubr.bf16.gmra.mrb[0].mxu0 %v838
      %v895 = vpop.f32.mrb[0].mxu0
      %v896 = vadd.f32 0.0, %v895
      %v897 = vpop.f32.mrb[0].mxu0
      %v898 = vpop.f32.mrb[0].mxu0
      %v899 = vadd.f32 0.0, %v898
      %v900 = vpop.f32.mrb[0].mxu0
      %901 = vmatprep.mubr.bf16.mxu0 0
      %902 = vmatmul.mubr.bf16.gmra.mrb[0].mxu0 %v841
      %v903 = vpop.f32.mrb[0].mxu0
      %v904 = vadd.f32 0.0, %v903
      %v905 = vpop.f32.mrb[0].mxu0
      %v906 = vpop.f32.mrb[0].mxu0
      %v907 = vadd.f32 0.0, %v906
      %v908 = vpop.f32.mrb[0].mxu0
      %909 = vmatprep.mubr.bf16.mxu0 0
      %910 = vmatmul.mubr.bf16.gmra.mrb[0].mxu0 %v844
      %v911 = vpop.f32.mrb[0].mxu0
      %v912 = vadd.f32 0.0, %v911
      %v913 = vpop.f32.mrb[0].mxu0
      %v914 = vpop.f32.mrb[0].mxu0
      %v915 = vadd.f32 0.0, %v914
      %v916 = vpop.f32.mrb[0].mxu0
      %917 = vmatprep.mubr.bf16.mxu0 0
      %918 = vmatmul.mubr.bf16.gmra.mrb[0].mxu0 %v847
      %v919 = vpop.f32.mrb[0].mxu0
      %v920 = vadd.f32 0.0, %v919
      %v921 = vpop.f32.mrb[0].mxu0
      %v922 = vpop.f32.mrb[0].mxu0
      %v923 = vadd.f32 0.0, %v922
      %v924 = vpop.f32.mrb[0].mxu0
      %925 = vdwg.mxu0
      %v926 = vmul.f32 %v896, 0.35355338
      %v927 = vmul.f32 %v899, 0.35355338
      %v928 = vmul.f32 %v904, 0.35355338
      %v929 = vmul.f32 %v907, 0.35355338
      %v930 = vmul.f32 %v912, 0.35355338
      %v931 = vmul.f32 %v915, 0.35355338
      %v932 = vmul.f32 %v920, 0.35355338
      %v933 = vmul.f32 %v923, 0.35355338
      %v934 = vsel %vm639, %v926, -inf
      %935 = vmax.xlane.f32.xlu0 %v934
      %v936 = vpop.xlane.xlu0 %935
      %v937 = vsel %vm639, %v927, -inf
      %938 = vmax.xlane.f32.xlu0 %v937
      %v939 = vpop.xlane.xlu0 %938
      %v940 = vsel %vm639, %v928, -inf
      %941 = vmax.xlane.f32.xlu0 %v940
      %v942 = vpop.xlane.xlu0 %941
      %v943 = vsel %vm639, %v929, -inf
      %944 = vmax.xlane.f32.xlu0 %v943
      %v945 = vpop.xlane.xlu0 %944
      %v946 = vsel %vm639, %v930, -inf
      %947 = vmax.xlane.f32.xlu0 %v946
      %v948 = vpop.xlane.xlu0 %947
      %v949 = vsel %vm639, %v931, -inf
      %950 = vmax.xlane.f32.xlu0 %v949
      %v951 = vpop.xlane.xlu0 %950
      %v952 = vsel %vm639, %v932, -inf
      %953 = vmax.xlane.f32.xlu0 %v952
      %v954 = vpop.xlane.xlu0 %953
      %v955 = vsel %vm639, %v933, -inf
      %956 = vmax.xlane.f32.xlu0 %v955
      %v957 = vpop.xlane.xlu0 %956
      %v958 = vsub.f32 %v926, %v936
      %v959 = vsub.f32 %v927, %v939
      %v960 = vsub.f32 %v928, %v942
      %v961 = vsub.f32 %v929, %v945
      %v962 = vsub.f32 %v930, %v948
      %v963 = vsub.f32 %v931, %v951
      %v964 = vsub.f32 %v932, %v954
      %v965 = vsub.f32 %v933, %v957
      %v966 = vmul.f32 %v958, 1.442695
      %v967 = vpow.pop %v966
      %v968 = vmul.f32 %v959, 1.442695
      %v969 = vpow.pop %v968
      %v970 = vmul.f32 %v960, 1.442695
      %v971 = vpow.pop %v970
      %v972 = vmul.f32 %v961, 1.442695
      %v973 = vpow.pop %v972
      %v974 = vmul.f32 %v962, 1.442695
      %v975 = vpow.pop %v974
      %v976 = vmul.f32 %v963, 1.442695
      %v977 = vpow.pop %v976
      %v978 = vmul.f32 %v964, 1.442695
      %v979 = vpow.pop %v978
      %v980 = vmul.f32 %v965, 1.442695
      %v981 = vpow.pop %v980
      %v982 = vsel %vm639, %v967, 0.0
      %983 = vadd.xlane.f32.xlu0 %v982
      %v984 = vpop.xlane.xlu0 %983
      %v985 = vsel %vm639, %v969, 0.0
      %986 = vadd.xlane.f32.xlu0 %v985
      %v987 = vpop.xlane.xlu0 %986
      %v988 = vsel %vm639, %v971, 0.0
      %989 = vadd.xlane.f32.xlu0 %v988
      %v990 = vpop.xlane.xlu0 %989
      %v991 = vsel %vm639, %v973, 0.0
      %992 = vadd.xlane.f32.xlu0 %v991
      %v993 = vpop.xlane.xlu0 %992
      %v994 = vsel %vm639, %v975, 0.0
      %995 = vadd.xlane.f32.xlu0 %v994
      %v996 = vpop.xlane.xlu0 %995
      %v997 = vsel %vm639, %v977, 0.0
      %998 = vadd.xlane.f32.xlu0 %v997
      %v999 = vpop.xlane.xlu0 %998
      %v1000 = vsel %vm639, %v979, 0.0
      %1001 = vadd.xlane.f32.xlu0 %v1000
      %v1002 = vpop.xlane.xlu0 %1001
      %v1003 = vsel %vm639, %v981, 0.0
      %1004 = vadd.xlane.f32.xlu0 %v1003
      %v1005 = vpop.xlane.xlu0 %1004
      %v1006 = vrcp.pop %v984
      %v1007 = vrcp.pop %v987
      %v1008 = vrcp.pop %v990
      %v1009 = vrcp.pop %v993
      %v1010 = vrcp.pop %v996
      %v1011 = vrcp.pop %v999
      %v1012 = vrcp.pop %v1002
      %v1013 = vrcp.pop %v1005
      %v1014 = vmul.f32 %v967, %v1006
      %v1015 = vmul.f32 %v969, %v1007
      %v1016 = vmul.f32 %v971, %v1008
      %v1017 = vmul.f32 %v973, %v1009
      %v1018 = vmul.f32 %v975, %v1010
      %v1019 = vmul.f32 %v977, %v1011
      %v1020 = vmul.f32 %v979, %v1012
      %v1021 = vmul.f32 %v981, %v1013
      %v1022 = vpack.c.bf16 %v1015, %v1014
      %v1023 = vpack.c.bf16 %v1017, %v1016
      %v1024 = vpack.c.bf16 %v1019, %v1018
      %v1025 = vpack.c.bf16 %v1021, %v1020
      %1026 = vrot.lane.b32.xlu0 %v525, 56
      %v1027 = vpop.permute.xlu0 %1026
      %1028 = vrot.lane.b32.xlu0 %v526, 56
      %v1029 = vpop.permute.xlu0 %1028
      %1030 = vrot.lane.b32.xlu0 %v527, 56
      %v1031 = vpop.permute.xlu0 %1030
      %1032 = vrot.lane.b32.xlu0 %v528, 56
      %v1033 = vpop.permute.xlu0 %1032
      %v1039 = vsel %vm639, %v1022, 0
      %v1042 = vsel %vm639, %v1023, 0
      %v1045 = vsel %vm639, %v1024, 0
      %v1048 = vsel %vm639, %v1025, 0
      %1050 = vmatprep.subr.bf16.mxu0 0
      %1051 = vmatpush1.bf16.msra.mxu0 %v1027
      %1052 = vmatprep.subr.bf16.mxu0 0
      %1053 = vmatpush1.bf16.msra.mxu0 %v1029
      %1054 = vmatprep.subr.bf16.mxu0 0
      %1055 = vmatpush1.bf16.msra.mxu0 %v1031
      %1056 = vmatprep.subr.bf16.mxu0 0
      %1057 = vmatpush1.bf16.msra.mxu0 %v1033
      %1058 = vmatprep.subr.bf16.mxu0 0
      %1059 = vmatpush1.bf16.msra.mxu0 0
      %1060 = vmatprep.subr.bf16.mxu0 0
      %1061 = vmatpush1.bf16.msra.mxu0 0
      %1062 = vmatprep.subr.bf16.mxu0 0
      %1063 = vmatpush1.bf16.msra.mxu0 0
      %1064 = vmatprep.subr.bf16.mxu0 0
      %1065 = vmatpush1.bf16.msra.mxu0 0
      %1066 = vmatprep.subr.bf16.mxu0 0
      %1067 = vmatpush1.bf16.msra.mxu0 0
      %1068 = vmatprep.subr.bf16.mxu0 0
      %1069 = vmatpush1.bf16.msra.mxu0 0
      %1070 = vmatprep.subr.bf16.mxu0 0
      %1071 = vmatpush1.bf16.msra.mxu0 0
      %1072 = vmatprep.subr.bf16.mxu0 0
      %1073 = vmatpush1.bf16.msra.mxu0 0
      %1074 = vmatprep.subr.bf16.mxu0 0
      %1075 = vmatpush1.bf16.msra.mxu0 0
      %1076 = vmatprep.subr.bf16.mxu0 0
      %1077 = vmatpush1.bf16.msra.mxu0 0
      %1078 = vmatprep.subr.bf16.mxu0 0
      %1079 = vmatpush1.bf16.msra.mxu0 0
      %1080 = vmatprep.subr.bf16.mxu0 0
      %1081 = vmatpush1.bf16.msra.mxu0 0
      %1082 = vmatprep.mubr.bf16.mxu0 0
      %1083 = vmatmul.mubr.bf16.gmra.mrb[0].mxu0 %v1039
      %v1084 = vpop.f32.mrb[0].mxu0
      %v1085 = vadd.f32 0.0, %v1084
      %v1086 = vpop.f32.mrb[0].mxu0
      %v1087 = vpop.f32.mrb[0].mxu0
      %v1088 = vadd.f32 0.0, %v1087
      %v1089 = vpop.f32.mrb[0].mxu0
      %1090 = vmatprep.mubr.bf16.mxu0 0
      %1091 = vmatmul.mubr.bf16.gmra.mrb[0].mxu0 %v1042
      %v1092 = vpop.f32.mrb[0].mxu0
      %v1093 = vadd.f32 0.0, %v1092
      %v1094 = vpop.f32.mrb[0].mxu0
      %v1095 = vpop.f32.mrb[0].mxu0
      %v1096 = vadd.f32 0.0, %v1095
      %v1097 = vpop.f32.mrb[0].mxu0
      %1098 = vmatprep.mubr.bf16.mxu0 0
      %1099 = vmatmul.mubr.bf16.gmra.mrb[0].mxu0 %v1045
      %v1100 = vpop.f32.mrb[0].mxu0
      %v1101 = vadd.f32 0.0, %v1100
      %v1102 = vpop.f32.mrb[0].mxu0
      %v1103 = vpop.f32.mrb[0].mxu0
      %v1104 = vadd.f32 0.0, %v1103
      %v1105 = vpop.f32.mrb[0].mxu0
      %1106 = vmatprep.mubr.bf16.mxu0 0
      %1107 = vmatmul.mubr.bf16.gmra.mrb[0].mxu0 %v1048
      %v1108 = vpop.f32.mrb[0].mxu0
      %v1109 = vadd.f32 0.0, %v1108
      %v1110 = vpop.f32.mrb[0].mxu0
      %v1111 = vpop.f32.mrb[0].mxu0
      %v1112 = vadd.f32 0.0, %v1111
      %v1113 = vpop.f32.mrb[0].mxu0
      %1114 = vdwg.mxu0
      %1115 = vrot.lane.b32.xlu0 %v525, 112
      %v1116 = vpop.permute.xlu0 %1115
      %1117 = vrot.lane.b32.xlu0 %v526, 112
      %v1118 = vpop.permute.xlu0 %1117
      %1119 = vrot.lane.b32.xlu0 %v527, 112
      %v1120 = vpop.permute.xlu0 %1119
      %1121 = vrot.lane.b32.xlu0 %v528, 112
      %v1122 = vpop.permute.xlu0 %1121
      %1123 = vrot.lane.b32.xlu0 %v525, 80
      %v1124 = vpop.permute.xlu0 %1123
      %1125 = vrot.lane.b32.xlu0 %v526, 80
      %v1126 = vpop.permute.xlu0 %1125
      %1127 = vrot.lane.b32.xlu0 %v527, 80
      %v1128 = vpop.permute.xlu0 %1127
      %1129 = vrot.lane.b32.xlu0 %v528, 80
      %v1130 = vpop.permute.xlu0 %1129
      %v1132 = vsel %vm541, %v1116, 0
      %v1135 = vsel %vm541, %v1118, 0
      %v1138 = vsel %vm541, %v1120, 0
      %v1141 = vsel %vm541, %v1122, 0
      %v1144 = vsel %vm541, %v1124, 0
      %v1147 = vsel %vm541, %v1126, 0
      %v1150 = vsel %vm541, %v1128, 0
      %v1153 = vsel %vm541, %v1130, 0
      %1155 = vmatprep.subr.bf16.mxu0 0
      %1156 = vmatpush1.bf16.xpose.msra.mxu0 %v1144
      %1157 = vmatprep.subr.bf16.mxu0 0
      %1158 = vmatpush1.bf16.xpose.msra.mxu0 %v1147
      %1159 = vmatprep.subr.bf16.mxu0 0
      %1160 = vmatpush1.bf16.xpose.msra.mxu0 %v1150
      %1161 = vmatprep.subr.bf16.mxu0 0
      %1162 = vmatpush1.bf16.xpose.msra.mxu0 %v1153
      %1163 = vmatprep.subr.bf16.mxu0 0
      %1164 = vmatpush1.bf16.xpose.msra.mxu0 0
      %1165 = vmatprep.subr.bf16.mxu0 0
      %1166 = vmatpush1.bf16.xpose.msra.mxu0 0
      %1167 = vmatprep.subr.bf16.mxu0 0
      %1168 = vmatpush1.bf16.xpose.msra.mxu0 0
      %1169 = vmatprep.subr.bf16.mxu0 0
      %1170 = vmatpush1.bf16.xpose.msra.mxu0 0
      %1171 = vmatprep.subr.bf16.mxu0 0
      %1172 = vmatpush1.bf16.xpose.msra.mxu0 0
      %1173 = vmatprep.subr.bf16.mxu0 0
      %1174 = vmatpush1.bf16.xpose.msra.mxu0 0
      %1175 = vmatprep.subr.bf16.mxu0 0
      %1176 = vmatpush1.bf16.xpose.msra.mxu0 0
      %1177 = vmatprep.subr.bf16.mxu0 0
      %1178 = vmatpush1.bf16.xpose.msra.mxu0 0
      %1179 = vmatprep.subr.bf16.mxu0 0
      %1180 = vmatpush1.bf16.xpose.msra.mxu0 0
      %1181 = vmatprep.subr.bf16.mxu0 0
      %1182 = vmatpush1.bf16.xpose.msra.mxu0 0
      %1183 = vmatprep.subr.bf16.mxu0 0
      %1184 = vmatpush1.bf16.xpose.msra.mxu0 0
      %1185 = vmatprep.subr.bf16.mxu0 0
      %1186 = vmatpush1.bf16.xpose.msra.mxu0 0
      %1187 = vmatprep.mubr.bf16.mxu0 0
      %1188 = vmatmul.mubr.bf16.gmra.mrb[0].mxu0 %v1132
      %v1189 = vpop.f32.mrb[0].mxu0
      %v1190 = vadd.f32 0.0, %v1189
      %v1191 = vpop.f32.mrb[0].mxu0
      %v1192 = vpop.f32.mrb[0].mxu0
      %v1193 = vadd.f32 0.0, %v1192
      %v1194 = vpop.f32.mrb[0].mxu0
      %1195 = vmatprep.mubr.bf16.mxu0 0
      %1196 = vmatmul.mubr.bf16.gmra.mrb[0].mxu0 %v1135
      %v1197 = vpop.f32.mrb[0].mxu0
      %v1198 = vadd.f32 0.0, %v1197
      %v1199 = vpop.f32.mrb[0].mxu0
      %v1200 = vpop.f32.mrb[0].mxu0
      %v1201 = vadd.f32 0.0, %v1200
      %v1202 = vpop.f32.mrb[0].mxu0
      %1203 = vmatprep.mubr.bf16.mxu0 0
      %1204 = vmatmul.mubr.bf16.gmra.mrb[0].mxu0 %v1138
      %v1205 = vpop.f32.mrb[0].mxu0
      %v1206 = vadd.f32 0.0, %v1205
      %v1207 = vpop.f32.mrb[0].mxu0
      %v1208 = vpop.f32.mrb[0].mxu0
      %v1209 = vadd.f32 0.0, %v1208
      %v1210 = vpop.f32.mrb[0].mxu0
      %1211 = vmatprep.mubr.bf16.mxu0 0
      %1212 = vmatmul.mubr.bf16.gmra.mrb[0].mxu0 %v1141
      %v1213 = vpop.f32.mrb[0].mxu0
      %v1214 = vadd.f32 0.0, %v1213
      %v1215 = vpop.f32.mrb[0].mxu0
      %v1216 = vpop.f32.mrb[0].mxu0
      %v1217 = vadd.f32 0.0, %v1216
      %v1218 = vpop.f32.mrb[0].mxu0
      %1219 = vdwg.mxu0
      %v1220 = vmul.f32 %v1190, 0.35355338
      %v1221 = vmul.f32 %v1193, 0.35355338
      %v1222 = vmul.f32 %v1198, 0.35355338
      %v1223 = vmul.f32 %v1201, 0.35355338
      %v1224 = vmul.f32 %v1206, 0.35355338
      %v1225 = vmul.f32 %v1209, 0.35355338
      %v1226 = vmul.f32 %v1214, 0.35355338
      %v1227 = vmul.f32 %v1217, 0.35355338
      %v1228 = vsel %vm639, %v1220, -inf
      %1229 = vmax.xlane.f32.xlu0 %v1228
      %v1230 = vpop.xlane.xlu0 %1229
      %v1231 = vsel %vm639, %v1221, -inf
      %1232 = vmax.xlane.f32.xlu0 %v1231
      %v1233 = vpop.xlane.xlu0 %1232
      %v1234 = vsel %vm639, %v1222, -inf
      %1235 = vmax.xlane.f32.xlu0 %v1234
      %v1236 = vpop.xlane.xlu0 %1235
      %v1237 = vsel %vm639, %v1223, -inf
      %1238 = vmax.xlane.f32.xlu0 %v1237
      %v1239 = vpop.xlane.xlu0 %1238
      %v1240 = vsel %vm639, %v1224, -inf
      %1241 = vmax.xlane.f32.xlu0 %v1240
      %v1242 = vpop.xlane.xlu0 %1241
      %v1243 = vsel %vm639, %v1225, -inf
      %1244 = vmax.xlane.f32.xlu0 %v1243
      %v1245 = vpop.xlane.xlu0 %1244
      %v1246 = vsel %vm639, %v1226, -inf
      %1247 = vmax.xlane.f32.xlu0 %v1246
      %v1248 = vpop.xlane.xlu0 %1247
      %v1249 = vsel %vm639, %v1227, -inf
      %1250 = vmax.xlane.f32.xlu0 %v1249
      %v1251 = vpop.xlane.xlu0 %1250
      %v1252 = vsub.f32 %v1220, %v1230
      %v1253 = vsub.f32 %v1221, %v1233
      %v1254 = vsub.f32 %v1222, %v1236
      %v1255 = vsub.f32 %v1223, %v1239
      %v1256 = vsub.f32 %v1224, %v1242
      %v1257 = vsub.f32 %v1225, %v1245
      %v1258 = vsub.f32 %v1226, %v1248
      %v1259 = vsub.f32 %v1227, %v1251
      %v1260 = vmul.f32 %v1252, 1.442695
      %v1261 = vpow.pop %v1260
      %v1262 = vmul.f32 %v1253, 1.442695
      %v1263 = vpow.pop %v1262
      %v1264 = vmul.f32 %v1254, 1.442695
      %v1265 = vpow.pop %v1264
      %v1266 = vmul.f32 %v1255, 1.442695
      %v1267 = vpow.pop %v1266
      %v1268 = vmul.f32 %v1256, 1.442695
      %v1269 = vpow.pop %v1268
      %v1270 = vmul.f32 %v1257, 1.442695
      %v1271 = vpow.pop %v1270
      %v1272 = vmul.f32 %v1258, 1.442695
      %v1273 = vpow.pop %v1272
      %v1274 = vmul.f32 %v1259, 1.442695
      %v1275 = vpow.pop %v1274
      %v1276 = vsel %vm639, %v1261, 0.0
      %1277 = vadd.xlane.f32.xlu0 %v1276
      %v1278 = vpop.xlane.xlu0 %1277
      %v1279 = vsel %vm639, %v1263, 0.0
      %1280 = vadd.xlane.f32.xlu0 %v1279
      %v1281 = vpop.xlane.xlu0 %1280
      %v1282 = vsel %vm639, %v1265, 0.0
      %1283 = vadd.xlane.f32.xlu0 %v1282
      %v1284 = vpop.xlane.xlu0 %1283
      %v1285 = vsel %vm639, %v1267, 0.0
      %1286 = vadd.xlane.f32.xlu0 %v1285
      %v1287 = vpop.xlane.xlu0 %1286
      %v1288 = vsel %vm639, %v1269, 0.0
      %1289 = vadd.xlane.f32.xlu0 %v1288
      %v1290 = vpop.xlane.xlu0 %1289
      %v1291 = vsel %vm639, %v1271, 0.0
      %1292 = vadd.xlane.f32.xlu0 %v1291
      %v1293 = vpop.xlane.xlu0 %1292
      %v1294 = vsel %vm639, %v1273, 0.0
      %1295 = vadd.xlane.f32.xlu0 %v1294
      %v1296 = vpop.xlane.xlu0 %1295
      %v1297 = vsel %vm639, %v1275, 0.0
      %1298 = vadd.xlane.f32.xlu0 %v1297
      %v1299 = vpop.xlane.xlu0 %1298
      %v1300 = vrcp.pop %v1278
      %v1301 = vrcp.pop %v1281
      %v1302 = vrcp.pop %v1284
      %v1303 = vrcp.pop %v1287
      %v1304 = vrcp.pop %v1290
      %v1305 = vrcp.pop %v1293
      %v1306 = vrcp.pop %v1296
      %v1307 = vrcp.pop %v1299
      %v1308 = vmul.f32 %v1261, %v1300
      %v1309 = vmul.f32 %v1263, %v1301
      %v1310 = vmul.f32 %v1265, %v1302
      %v1311 = vmul.f32 %v1267, %v1303
      %v1312 = vmul.f32 %v1269, %v1304
      %v1313 = vmul.f32 %v1271, %v1305
      %v1314 = vmul.f32 %v1273, %v1306
      %v1315 = vmul.f32 %v1275, %v1307
      %v1316 = vpack.c.bf16 %v1309, %v1308
      %v1317 = vpack.c.bf16 %v1311, %v1310
      %v1318 = vpack.c.bf16 %v1313, %v1312
      %v1319 = vpack.c.bf16 %v1315, %v1314
      %1320 = vrot.lane.b32.xlu0 %v525, 48
      %v1321 = vpop.permute.xlu0 %1320
      %1322 = vrot.lane.b32.xlu0 %v526, 48
      %v1323 = vpop.permute.xlu0 %1322
      %1324 = vrot.lane.b32.xlu0 %v527, 48
      %v1325 = vpop.permute.xlu0 %1324
      %1326 = vrot.lane.b32.xlu0 %v528, 48
      %v1327 = vpop.permute.xlu0 %1326
      %v1333 = vsel %vm639, %v1316, 0
      %v1336 = vsel %vm639, %v1317, 0
      %v1339 = vsel %vm639, %v1318, 0
      %v1342 = vsel %vm639, %v1319, 0
      %1344 = vmatprep.subr.bf16.mxu0 0
      %1345 = vmatpush1.bf16.msra.mxu0 %v1321
      %1346 = vmatprep.subr.bf16.mxu0 0
      %1347 = vmatpush1.bf16.msra.mxu0 %v1323
      %1348 = vmatprep.subr.bf16.mxu0 0
      %1349 = vmatpush1.bf16.msra.mxu0 %v1325
      %1350 = vmatprep.subr.bf16.mxu0 0
      %1351 = vmatpush1.bf16.msra.mxu0 %v1327
      %1352 = vmatprep.subr.bf16.mxu0 0
      %1353 = vmatpush1.bf16.msra.mxu0 0
      %1354 = vmatprep.subr.bf16.mxu0 0
      %1355 = vmatpush1.bf16.msra.mxu0 0
      %1356 = vmatprep.subr.bf16.mxu0 0
      %1357 = vmatpush1.bf16.msra.mxu0 0
      %1358 = vmatprep.subr.bf16.mxu0 0
      %1359 = vmatpush1.bf16.msra.mxu0 0
      %1360 = vmatprep.subr.bf16.mxu0 0
      %1361 = vmatpush1.bf16.msra.mxu0 0
      %1362 = vmatprep.subr.bf16.mxu0 0
      %1363 = vmatpush1.bf16.msra.mxu0 0
      %1364 = vmatprep.subr.bf16.mxu0 0
      %1365 = vmatpush1.bf16.msra.mxu0 0
      %1366 = vmatprep.subr.bf16.mxu0 0
      %1367 = vmatpush1.bf16.msra.mxu0 0
      %1368 = vmatprep.subr.bf16.mxu0 0
      %1369 = vmatpush1.bf16.msra.mxu0 0
      %1370 = vmatprep.subr.bf16.mxu0 0
      %1371 = vmatpush1.bf16.msra.mxu0 0
      %1372 = vmatprep.subr.bf16.mxu0 0
      %1373 = vmatpush1.bf16.msra.mxu0 0
      %1374 = vmatprep.subr.bf16.mxu0 0
      %1375 = vmatpush1.bf16.msra.mxu0 0
      %1376 = vmatprep.mubr.bf16.mxu0 0
      %1377 = vmatmul.mubr.bf16.gmra.mrb[0].mxu0 %v1333
      %v1378 = vpop.f32.mrb[0].mxu0
      %v1379 = vadd.f32 0.0, %v1378
      %v1380 = vpop.f32.mrb[0].mxu0
      %v1381 = vpop.f32.mrb[0].mxu0
      %v1382 = vadd.f32 0.0, %v1381
      %v1383 = vpop.f32.mrb[0].mxu0
      %1384 = vmatprep.mubr.bf16.mxu0 0
      %1385 = vmatmul.mubr.bf16.gmra.mrb[0].mxu0 %v1336
      %v1386 = vpop.f32.mrb[0].mxu0
      %v1387 = vadd.f32 0.0, %v1386
      %v1388 = vpop.f32.mrb[0].mxu0
      %v1389 = vpop.f32.mrb[0].mxu0
      %v1390 = vadd.f32 0.0, %v1389
      %v1391 = vpop.f32.mrb[0].mxu0
      %1392 = vmatprep.mubr.bf16.mxu0 0
      %1393 = vmatmul.mubr.bf16.gmra.mrb[0].mxu0 %v1339
      %v1394 = vpop.f32.mrb[0].mxu0
      %v1395 = vadd.f32 0.0, %v1394
      %v1396 = vpop.f32.mrb[0].mxu0
      %v1397 = vpop.f32.mrb[0].mxu0
      %v1398 = vadd.f32 0.0, %v1397
      %v1399 = vpop.f32.mrb[0].mxu0
      %1400 = vmatprep.mubr.bf16.mxu0 0
      %1401 = vmatmul.mubr.bf16.gmra.mrb[0].mxu0 %v1342
      %v1402 = vpop.f32.mrb[0].mxu0
      %v1403 = vadd.f32 0.0, %v1402
      %v1404 = vpop.f32.mrb[0].mxu0
      %v1405 = vpop.f32.mrb[0].mxu0
      %v1406 = vadd.f32 0.0, %v1405
      %v1407 = vpop.f32.mrb[0].mxu0
      %1408 = vdwg.mxu0
      %1409 = vrot.lane.b32.xlu0 %v525, 104
      %v1410 = vpop.permute.xlu0 %1409
      %1411 = vrot.lane.b32.xlu0 %v526, 104
      %v1412 = vpop.permute.xlu0 %1411
      %1413 = vrot.lane.b32.xlu0 %v527, 104
      %v1414 = vpop.permute.xlu0 %1413
      %1415 = vrot.lane.b32.xlu0 %v528, 104
      %v1416 = vpop.permute.xlu0 %1415
      %1417 = vrot.lane.b32.xlu0 %v525, 72
      %v1418 = vpop.permute.xlu0 %1417
      %1419 = vrot.lane.b32.xlu0 %v526, 72
      %v1420 = vpop.permute.xlu0 %1419
      %1421 = vrot.lane.b32.xlu0 %v527, 72
      %v1422 = vpop.permute.xlu0 %1421
      %1423 = vrot.lane.b32.xlu0 %v528, 72
      %v1424 = vpop.permute.xlu0 %1423
      %v1426 = vsel %vm541, %v1410, 0
      %v1429 = vsel %vm541, %v1412, 0
      %v1432 = vsel %vm541, %v1414, 0
      %v1435 = vsel %vm541, %v1416, 0
      %v1438 = vsel %vm541, %v1418, 0
      %v1441 = vsel %vm541, %v1420, 0
      %v1444 = vsel %vm541, %v1422, 0
      %v1447 = vsel %vm541, %v1424, 0
      %1449 = vmatprep.subr.bf16.mxu0 0
      %1450 = vmatpush1.bf16.xpose.msra.mxu0 %v1438
      %1451 = vmatprep.subr.bf16.mxu0 0
      %1452 = vmatpush1.bf16.xpose.msra.mxu0 %v1441
      %1453 = vmatprep.subr.bf16.mxu0 0
      %1454 = vmatpush1.bf16.xpose.msra.mxu0 %v1444
      %1455 = vmatprep.subr.bf16.mxu0 0
      %1456 = vmatpush1.bf16.xpose.msra.mxu0 %v1447
      %1457 = vmatprep.subr.bf16.mxu0 0
      %1458 = vmatpush1.bf16.xpose.msra.mxu0 0
      %1459 = vmatprep.subr.bf16.mxu0 0
      %1460 = vmatpush1.bf16.xpose.msra.mxu0 0
      %1461 = vmatprep.subr.bf16.mxu0 0
      %1462 = vmatpush1.bf16.xpose.msra.mxu0 0
      %1463 = vmatprep.subr.bf16.mxu0 0
      %1464 = vmatpush1.bf16.xpose.msra.mxu0 0
      %1465 = vmatprep.subr.bf16.mxu0 0
      %1466 = vmatpush1.bf16.xpose.msra.mxu0 0
      %1467 = vmatprep.subr.bf16.mxu0 0
      %1468 = vmatpush1.bf16.xpose.msra.mxu0 0
      %1469 = vmatprep.subr.bf16.mxu0 0
      %1470 = vmatpush1.bf16.xpose.msra.mxu0 0
      %1471 = vmatprep.subr.bf16.mxu0 0
      %1472 = vmatpush1.bf16.xpose.msra.mxu0 0
      %1473 = vmatprep.subr.bf16.mxu0 0
      %1474 = vmatpush1.bf16.xpose.msra.mxu0 0
      %1475 = vmatprep.subr.bf16.mxu0 0
      %1476 = vmatpush1.bf16.xpose.msra.mxu0 0
      %1477 = vmatprep.subr.bf16.mxu0 0
      %1478 = vmatpush1.bf16.xpose.msra.mxu0 0
      %1479 = vmatprep.subr.bf16.mxu0 0
      %1480 = vmatpush1.bf16.xpose.msra.mxu0 0
      %1481 = vmatprep.mubr.bf16.mxu0 0
      %1482 = vmatmul.mubr.bf16.gmra.mrb[0].mxu0 %v1426
      %v1483 = vpop.f32.mrb[0].mxu0
      %v1484 = vadd.f32 0.0, %v1483
      %v1485 = vpop.f32.mrb[0].mxu0
      %v1486 = vpop.f32.mrb[0].mxu0
      %v1487 = vadd.f32 0.0, %v1486
      %v1488 = vpop.f32.mrb[0].mxu0
      %1489 = vmatprep.mubr.bf16.mxu0 0
      %1490 = vmatmul.mubr.bf16.gmra.mrb[0].mxu0 %v1429
      %v1491 = vpop.f32.mrb[0].mxu0
      %v1492 = vadd.f32 0.0, %v1491
      %v1493 = vpop.f32.mrb[0].mxu0
      %v1494 = vpop.f32.mrb[0].mxu0
      %v1495 = vadd.f32 0.0, %v1494
      %v1496 = vpop.f32.mrb[0].mxu0
      %1497 = vmatprep.mubr.bf16.mxu0 0
      %1498 = vmatmul.mubr.bf16.gmra.mrb[0].mxu0 %v1432
      %v1499 = vpop.f32.mrb[0].mxu0
      %v1500 = vadd.f32 0.0, %v1499
      %v1501 = vpop.f32.mrb[0].mxu0
      %v1502 = vpop.f32.mrb[0].mxu0
      %v1503 = vadd.f32 0.0, %v1502
      %v1504 = vpop.f32.mrb[0].mxu0
      %1505 = vmatprep.mubr.bf16.mxu0 0
      %1506 = vmatmul.mubr.bf16.gmra.mrb[0].mxu0 %v1435
      %v1507 = vpop.f32.mrb[0].mxu0
      %v1508 = vadd.f32 0.0, %v1507
      %v1509 = vpop.f32.mrb[0].mxu0
      %v1510 = vpop.f32.mrb[0].mxu0
      %v1511 = vadd.f32 0.0, %v1510
      %v1512 = vpop.f32.mrb[0].mxu0
      %1513 = vdwg.mxu0
      %v1514 = vmul.f32 %v1484, 0.35355338
      %v1515 = vmul.f32 %v1487, 0.35355338
      %v1516 = vmul.f32 %v1492, 0.35355338
      %v1517 = vmul.f32 %v1495, 0.35355338
      %v1518 = vmul.f32 %v1500, 0.35355338
      %v1519 = vmul.f32 %v1503, 0.35355338
      %v1520 = vmul.f32 %v1508, 0.35355338
      %v1521 = vmul.f32 %v1511, 0.35355338
      %v1522 = vsel %vm639, %v1514, -inf
      %1523 = vmax.xlane.f32.xlu0 %v1522
      %v1524 = vpop.xlane.xlu0 %1523
      %v1525 = vsel %vm639, %v1515, -inf
      %1526 = vmax.xlane.f32.xlu0 %v1525
      %v1527 = vpop.xlane.xlu0 %1526
      %v1528 = vsel %vm639, %v1516, -inf
      %1529 = vmax.xlane.f32.xlu0 %v1528
      %v1530 = vpop.xlane.xlu0 %1529
      %v1531 = vsel %vm639, %v1517, -inf
      %1532 = vmax.xlane.f32.xlu0 %v1531
      %v1533 = vpop.xlane.xlu0 %1532
      %v1534 = vsel %vm639, %v1518, -inf
      %1535 = vmax.xlane.f32.xlu0 %v1534
      %v1536 = vpop.xlane.xlu0 %1535
      %v1537 = vsel %vm639, %v1519, -inf
      %1538 = vmax.xlane.f32.xlu0 %v1537
      %v1539 = vpop.xlane.xlu0 %1538
      %v1540 = vsel %vm639, %v1520, -inf
      %1541 = vmax.xlane.f32.xlu0 %v1540
      %v1542 = vpop.xlane.xlu0 %1541
      %v1543 = vsel %vm639, %v1521, -inf
      %1544 = vmax.xlane.f32.xlu0 %v1543
      %v1545 = vpop.xlane.xlu0 %1544
      %v1546 = vsub.f32 %v1514, %v1524
      %v1547 = vsub.f32 %v1515, %v1527
      %v1548 = vsub.f32 %v1516, %v1530
      %v1549 = vsub.f32 %v1517, %v1533
      %v1550 = vsub.f32 %v1518, %v1536
      %v1551 = vsub.f32 %v1519, %v1539
      %v1552 = vsub.f32 %v1520, %v1542
      %v1553 = vsub.f32 %v1521, %v1545
      %v1554 = vmul.f32 %v1546, 1.442695
      %v1555 = vpow.pop %v1554
      %v1556 = vmul.f32 %v1547, 1.442695
      %v1557 = vpow.pop %v1556
      %v1558 = vmul.f32 %v1548, 1.442695
      %v1559 = vpow.pop %v1558
      %v1560 = vmul.f32 %v1549, 1.442695
      %v1561 = vpow.pop %v1560
      %v1562 = vmul.f32 %v1550, 1.442695
      %v1563 = vpow.pop %v1562
      %v1564 = vmul.f32 %v1551, 1.442695
      %v1565 = vpow.pop %v1564
      %v1566 = vmul.f32 %v1552, 1.442695
      %v1567 = vpow.pop %v1566
      %v1568 = vmul.f32 %v1553, 1.442695
      %v1569 = vpow.pop %v1568
      %v1570 = vsel %vm639, %v1555, 0.0
      %1571 = vadd.xlane.f32.xlu0 %v1570
      %v1572 = vpop.xlane.xlu0 %1571
      %v1573 = vsel %vm639, %v1557, 0.0
      %1574 = vadd.xlane.f32.xlu0 %v1573
      %v1575 = vpop.xlane.xlu0 %1574
      %v1576 = vsel %vm639, %v1559, 0.0
      %1577 = vadd.xlane.f32.xlu0 %v1576
      %v1578 = vpop.xlane.xlu0 %1577
      %v1579 = vsel %vm639, %v1561, 0.0
      %1580 = vadd.xlane.f32.xlu0 %v1579
      %v1581 = vpop.xlane.xlu0 %1580
      %v1582 = vsel %vm639, %v1563, 0.0
      %1583 = vadd.xlane.f32.xlu0 %v1582
      %v1584 = vpop.xlane.xlu0 %1583
      %v1585 = vsel %vm639, %v1565, 0.0
      %1586 = vadd.xlane.f32.xlu0 %v1585
      %v1587 = vpop.xlane.xlu0 %1586
      %v1588 = vsel %vm639, %v1567, 0.0
      %1589 = vadd.xlane.f32.xlu0 %v1588
      %v1590 = vpop.xlane.xlu0 %1589
      %v1591 = vsel %vm639, %v1569, 0.0
      %1592 = vadd.xlane.f32.xlu0 %v1591
      %v1593 = vpop.xlane.xlu0 %1592
      %v1594 = vrcp.pop %v1572
      %v1595 = vrcp.pop %v1575
      %v1596 = vrcp.pop %v1578
      %v1597 = vrcp.pop %v1581
      %v1598 = vrcp.pop %v1584
      %v1599 = vrcp.pop %v1587
      %v1600 = vrcp.pop %v1590
      %v1601 = vrcp.pop %v1593
      %v1602 = vmul.f32 %v1555, %v1594
      %v1603 = vmul.f32 %v1557, %v1595
      %v1604 = vmul.f32 %v1559, %v1596
      %v1605 = vmul.f32 %v1561, %v1597
      %v1606 = vmul.f32 %v1563, %v1598
      %v1607 = vmul.f32 %v1565, %v1599
      %v1608 = vmul.f32 %v1567, %v1600
      %v1609 = vmul.f32 %v1569, %v1601
      %v1610 = vpack.c.bf16 %v1603, %v1602
      %v1611 = vpack.c.bf16 %v1605, %v1604
      %v1612 = vpack.c.bf16 %v1607, %v1606
      %v1613 = vpack.c.bf16 %v1609, %v1608
      %1614 = vrot.lane.b32.xlu0 %v525, 40
      %v1615 = vpop.permute.xlu0 %1614
      %1616 = vrot.lane.b32.xlu0 %v526, 40
      %v1617 = vpop.permute.xlu0 %1616
      %1618 = vrot.lane.b32.xlu0 %v527, 40
      %v1619 = vpop.permute.xlu0 %1618
      %1620 = vrot.lane.b32.xlu0 %v528, 40
      %v1621 = vpop.permute.xlu0 %1620
      %v1627 = vsel %vm639, %v1610, 0
      %v1630 = vsel %vm639, %v1611, 0
      %v1633 = vsel %vm639, %v1612, 0
      %v1636 = vsel %vm639, %v1613, 0
      %1638 = vmatprep.subr.bf16.mxu0 0
      %1639 = vmatpush1.bf16.msra.mxu0 %v1615
      %1640 = vmatprep.subr.bf16.mxu0 0
      %1641 = vmatpush1.bf16.msra.mxu0 %v1617
      %1642 = vmatprep.subr.bf16.mxu0 0
      %1643 = vmatpush1.bf16.msra.mxu0 %v1619
      %1644 = vmatprep.subr.bf16.mxu0 0
      %1645 = vmatpush1.bf16.msra.mxu0 %v1621
      %1646 = vmatprep.subr.bf16.mxu0 0
      %1647 = vmatpush1.bf16.msra.mxu0 0
      %1648 = vmatprep.subr.bf16.mxu0 0
      %1649 = vmatpush1.bf16.msra.mxu0 0
      %1650 = vmatprep.subr.bf16.mxu0 0
      %1651 = vmatpush1.bf16.msra.mxu0 0
      %1652 = vmatprep.subr.bf16.mxu0 0
      %1653 = vmatpush1.bf16.msra.mxu0 0
      %1654 = vmatprep.subr.bf16.mxu0 0
      %1655 = vmatpush1.bf16.msra.mxu0 0
      %1656 = vmatprep.subr.bf16.mxu0 0
      %1657 = vmatpush1.bf16.msra.mxu0 0
      %1658 = vmatprep.subr.bf16.mxu0 0
      %1659 = vmatpush1.bf16.msra.mxu0 0
      %1660 = vmatprep.subr.bf16.mxu0 0
      %1661 = vmatpush1.bf16.msra.mxu0 0
      %1662 = vmatprep.subr.bf16.mxu0 0
      %1663 = vmatpush1.bf16.msra.mxu0 0
      %1664 = vmatprep.subr.bf16.mxu0 0
      %1665 = vmatpush1.bf16.msra.mxu0 0
      %1666 = vmatprep.subr.bf16.mxu0 0
      %1667 = vmatpush1.bf16.msra.mxu0 0
      %1668 = vmatprep.subr.bf16.mxu0 0
      %1669 = vmatpush1.bf16.msra.mxu0 0
      %1670 = vmatprep.mubr.bf16.mxu0 0
      %1671 = vmatmul.mubr.bf16.gmra.mrb[0].mxu0 %v1627
      %v1672 = vpop.f32.mrb[0].mxu0
      %v1673 = vadd.f32 0.0, %v1672
      %v1674 = vpop.f32.mrb[0].mxu0
      %v1675 = vpop.f32.mrb[0].mxu0
      %v1676 = vadd.f32 0.0, %v1675
      %v1677 = vpop.f32.mrb[0].mxu0
      %1678 = vmatprep.mubr.bf16.mxu0 0
      %1679 = vmatmul.mubr.bf16.gmra.mrb[0].mxu0 %v1630
      %v1680 = vpop.f32.mrb[0].mxu0
      %v1681 = vadd.f32 0.0, %v1680
      %v1682 = vpop.f32.mrb[0].mxu0
      %v1683 = vpop.f32.mrb[0].mxu0
      %v1684 = vadd.f32 0.0, %v1683
      %v1685 = vpop.f32.mrb[0].mxu0
      %1686 = vmatprep.mubr.bf16.mxu0 0
      %1687 = vmatmul.mubr.bf16.gmra.mrb[0].mxu0 %v1633
      %v1688 = vpop.f32.mrb[0].mxu0
      %v1689 = vadd.f32 0.0, %v1688
      %v1690 = vpop.f32.mrb[0].mxu0
      %v1691 = vpop.f32.mrb[0].mxu0
      %v1692 = vadd.f32 0.0, %v1691
      %v1693 = vpop.f32.mrb[0].mxu0
      %1694 = vmatprep.mubr.bf16.mxu0 0
      %1695 = vmatmul.mubr.bf16.gmra.mrb[0].mxu0 %v1636
      %v1696 = vpop.f32.mrb[0].mxu0
      %v1697 = vadd.f32 0.0, %v1696
      %v1698 = vpop.f32.mrb[0].mxu0
      %v1699 = vpop.f32.mrb[0].mxu0
      %v1700 = vadd.f32 0.0, %v1699
      %v1701 = vpop.f32.mrb[0].mxu0
      %1702 = vdwg.mxu0
      %1711 = vrot.lane.b32.xlu0 %v1085, 8
      %v1712 = vpop.permute.xlu0 %1711
      %1713 = vrot.lane.b32.xlu0 %v1088, 8
      %v1714 = vpop.permute.xlu0 %1713
      %1715 = vrot.lane.b32.xlu0 %v1093, 8
      %v1716 = vpop.permute.xlu0 %1715
      %1717 = vrot.lane.b32.xlu0 %v1096, 8
      %v1718 = vpop.permute.xlu0 %1717
      %1719 = vrot.lane.b32.xlu0 %v1101, 8
      %v1720 = vpop.permute.xlu0 %1719
      %1721 = vrot.lane.b32.xlu0 %v1104, 8
      %v1722 = vpop.permute.xlu0 %1721
      %1723 = vrot.lane.b32.xlu0 %v1109, 8
      %v1724 = vpop.permute.xlu0 %1723
      %1725 = vrot.lane.b32.xlu0 %v1112, 8
      %v1726 = vpop.permute.xlu0 %1725
      %1743 = vrot.lane.b32.xlu0 %v1379, 16
      %v1744 = vpop.permute.xlu0 %1743
      %1745 = vrot.lane.b32.xlu0 %v1382, 16
      %v1746 = vpop.permute.xlu0 %1745
      %1747 = vrot.lane.b32.xlu0 %v1387, 16
      %v1748 = vpop.permute.xlu0 %1747
      %1749 = vrot.lane.b32.xlu0 %v1390, 16
      %v1750 = vpop.permute.xlu0 %1749
      %1751 = vrot.lane.b32.xlu0 %v1395, 16
      %v1752 = vpop.permute.xlu0 %1751
      %1753 = vrot.lane.b32.xlu0 %v1398, 16
      %v1754 = vpop.permute.xlu0 %1753
      %1755 = vrot.lane.b32.xlu0 %v1403, 16
      %v1756 = vpop.permute.xlu0 %1755
      %1757 = vrot.lane.b32.xlu0 %v1406, 16
      %v1758 = vpop.permute.xlu0 %1757
      %1775 = vrot.lane.b32.xlu0 %v1673, 24
      %v1776 = vpop.permute.xlu0 %1775
      %1777 = vrot.lane.b32.xlu0 %v1676, 24
      %v1778 = vpop.permute.xlu0 %1777
      %1779 = vrot.lane.b32.xlu0 %v1681, 24
      %v1780 = vpop.permute.xlu0 %1779
      %1781 = vrot.lane.b32.xlu0 %v1684, 24
      %v1782 = vpop.permute.xlu0 %1781
      %1783 = vrot.lane.b32.xlu0 %v1689, 24
      %v1784 = vpop.permute.xlu0 %1783
      %1785 = vrot.lane.b32.xlu0 %v1692, 24
      %v1786 = vpop.permute.xlu0 %1785
      %1787 = vrot.lane.b32.xlu0 %v1697, 24
      %v1788 = vpop.permute.xlu0 %1787
      %1789 = vrot.lane.b32.xlu0 %v1700, 24
      %v1790 = vpop.permute.xlu0 %1789
      %v1799 = vsel %vm541, %v791, %v1712
      %v1800 = vsel %vm541, %v794, %v1714
      %v1801 = vsel %vm541, %v799, %v1716
      %v1802 = vsel %vm541, %v802, %v1718
      %v1803 = vsel %vm541, %v807, %v1720
      %v1804 = vsel %vm541, %v810, %v1722
      %v1805 = vsel %vm541, %v815, %v1724
      %v1806 = vsel %vm541, %v818, %v1726
      %vm1807 = vcmask 130048
      %v1808 = vsel %vm1807, %v1799, %v1744
      %v1809 = vsel %vm1807, %v1800, %v1746
      %v1810 = vsel %vm1807, %v1801, %v1748
      %v1811 = vsel %vm1807, %v1802, %v1750
      %v1812 = vsel %vm1807, %v1803, %v1752
      %v1813 = vsel %vm1807, %v1804, %v1754
      %v1814 = vsel %vm1807, %v1805, %v1756
      %v1815 = vsel %vm1807, %v1806, %v1758
      %vm1816 = vcmask 195584
      %v1817 = vsel %vm1816, %v1808, %v1776
      %v1818 = vsel %vm1816, %v1809, %v1778
      %v1819 = vsel %vm1816, %v1810, %v1780
      %v1820 = vsel %vm1816, %v1811, %v1782
      %v1821 = vsel %vm1816, %v1812, %v1784
      %v1822 = vsel %vm1816, %v1813, %v1786
      %v1823 = vsel %vm1816, %v1814, %v1788
      %v1824 = vsel %vm1816, %v1815, %v1790
      %v1825 = vpack.c.bf16 %v1818, %v1817
      %v1826 = vpack.c.bf16 %v1820, %v1819
      %v1827 = vpack.c.bf16 %v1822, %v1821
      %v1828 = vpack.c.bf16 %v1824, %v1823
      %v1829 = vld [vmem:[%s3] sm:$0xf]
      %v1830 = vld [vmem:[%s3 + $0x4] sm:$0xf]
      %v1831 = vld [vmem:[%s3 + $0x8] sm:$0xf]
      %v1832 = vld [vmem:[%s3 + $0xc] sm:$0xf]
      %v1833 = vld [vmem:[%s4] sm:$0x1]
      %v1835 = vlaneseq
      %v1836 = vshrl.u32 %v1835, 7
      %v1837 = vsub.s32 0, %v1836
      %v1838 = vrot.slane %v1833, %v1837
      %v1844 = vunpack.c.l.b16 %v1829
      %v1845 = vunpack.c.l.b16 %v1830
      %v1846 = vunpack.c.l.b16 %v1831
      %v1847 = vunpack.c.l.b16 %v1832
      %v1848 = vpack.c.b16 %v1845, %v1844
      %v1849 = vpack.c.b16 %v1847, %v1846
      %v1853 = vsel %vm447, %v1825, 0
      %v1856 = vsel %vm447, %v1826, 0
      %v1859 = vsel %vm447, %v1827, 0
      %v1862 = vsel %vm447, %v1828, 0
      %1864 = vmatprep.subr.bf16.mxu0 0
      %1865 = vmatpush1.bf16.msra.mxu0 %v1848
      %1866 = vmatprep.subr.bf16.mxu0 0
      %1867 = vmatpush1.bf16.msra.mxu0 %v1849
      %1868 = vmatprep.subr.bf16.mxu0 0
      %1869 = vmatpush1.bf16.msra.mxu0 0
      %1870 = vmatprep.subr.bf16.mxu0 0
      %1871 = vmatpush1.bf16.msra.mxu0 0
      %1872 = vmatprep.subr.bf16.mxu0 0
      %1873 = vmatpush1.bf16.msra.mxu0 0
      %1874 = vmatprep.subr.bf16.mxu0 0
      %1875 = vmatpush1.bf16.msra.mxu0 0
      %1876 = vmatprep.subr.bf16.mxu0 0
      %1877 = vmatpush1.bf16.msra.mxu0 0
      %1878 = vmatprep.subr.bf16.mxu0 0
      %1879 = vmatpush1.bf16.msra.mxu0 0
      %1880 = vmatprep.subr.bf16.mxu0 0
      %1881 = vmatpush1.bf16.msra.mxu0 0
      %1882 = vmatprep.subr.bf16.mxu0 0
      %1883 = vmatpush1.bf16.msra.mxu0 0
      %1884 = vmatprep.subr.bf16.mxu0 0
      %1885 = vmatpush1.bf16.msra.mxu0 0
      %1886 = vmatprep.subr.bf16.mxu0 0
      %1887 = vmatpush1.bf16.msra.mxu0 0
      %1888 = vmatprep.subr.bf16.mxu0 0
      %1889 = vmatpush1.bf16.msra.mxu0 0
      %1890 = vmatprep.subr.bf16.mxu0 0
      %1891 = vmatpush1.bf16.msra.mxu0 0
      %1892 = vmatprep.subr.bf16.mxu0 0
      %1893 = vmatpush1.bf16.msra.mxu0 0
      %1894 = vmatprep.subr.bf16.mxu0 0
      %1895 = vmatpush1.bf16.msra.mxu0 0
      %1896 = vmatprep.mubr.bf16.mxu0 0
      %1897 = vmatmul.mubr.bf16.gmra.mrb[0].mxu0 %v1853
      %v1898 = vpop.f32.mrb[0].mxu0
      %v1899 = vadd.f32 %v1838, %v1898
      %v1900 = vpop.f32.mrb[0].mxu0
      %v1901 = vpop.f32.mrb[0].mxu0
      %v1902 = vadd.f32 %v1838, %v1901
      %v1903 = vpop.f32.mrb[0].mxu0
      %1904 = vmatprep.mubr.bf16.mxu0 0
      %1905 = vmatmul.mubr.bf16.gmra.mrb[0].mxu0 %v1856
      %v1906 = vpop.f32.mrb[0].mxu0
      %v1907 = vadd.f32 %v1838, %v1906
      %v1908 = vpop.f32.mrb[0].mxu0
      %v1909 = vpop.f32.mrb[0].mxu0
      %v1910 = vadd.f32 %v1838, %v1909
      %v1911 = vpop.f32.mrb[0].mxu0
      %1912 = vmatprep.mubr.bf16.mxu0 0
      %1913 = vmatmul.mubr.bf16.gmra.mrb[0].mxu0 %v1859
      %v1914 = vpop.f32.mrb[0].mxu0
      %v1915 = vadd.f32 %v1838, %v1914
      %v1916 = vpop.f32.mrb[0].mxu0
      %v1917 = vpop.f32.mrb[0].mxu0
      %v1918 = vadd.f32 %v1838, %v1917
      %v1919 = vpop.f32.mrb[0].mxu0
      %1920 = vmatprep.mubr.bf16.mxu0 0
      %1921 = vmatmul.mubr.bf16.gmra.mrb[0].mxu0 %v1862
      %v1922 = vpop.f32.mrb[0].mxu0
      %v1923 = vadd.f32 %v1838, %v1922
      %v1924 = vpop.f32.mrb[0].mxu0
      %v1925 = vpop.f32.mrb[0].mxu0
      %v1926 = vadd.f32 %v1838, %v1925
      %v1927 = vpop.f32.mrb[0].mxu0
      %1928 = vdwg.mxu0
      %v1929 = vadd.f32 %v1899, %v396
      %v1930 = vadd.f32 %v1902, %v397
      %v1931 = vadd.f32 %v1907, %v398
      %v1932 = vadd.f32 %v1910, %v399
      %v1933 = vadd.f32 %v1915, %v400
      %v1934 = vadd.f32 %v1918, %v401
      %v1935 = vadd.f32 %v1923, %v402
      %v1936 = vadd.f32 %v1926, %v403
      %v1937 = vld [vmem:[%s5] sm:$0x1]
      %v1938 = vld [vmem:[%s6] sm:$0x1]
      %v1939 = vsel %vm447, %v1929, 0.0
      %1940 = vadd.xlane.f32.xlu0 %v1939
      %v1941 = vpop.xlane.xlu0 %1940
      %v1942 = vsel %vm447, %v1930, 0.0
      %1943 = vadd.xlane.f32.xlu0 %v1942
      %v1944 = vpop.xlane.xlu0 %1943
      %v1945 = vsel %vm447, %v1931, 0.0
      %1946 = vadd.xlane.f32.xlu0 %v1945
      %v1947 = vpop.xlane.xlu0 %1946
      %v1948 = vsel %vm447, %v1932, 0.0
      %1949 = vadd.xlane.f32.xlu0 %v1948
      %v1950 = vpop.xlane.xlu0 %1949
      %v1951 = vsel %vm447, %v1933, 0.0
      %1952 = vadd.xlane.f32.xlu0 %v1951
      %v1953 = vpop.xlane.xlu0 %1952
      %v1954 = vsel %vm447, %v1934, 0.0
      %1955 = vadd.xlane.f32.xlu0 %v1954
      %v1956 = vpop.xlane.xlu0 %1955
      %v1957 = vsel %vm447, %v1935, 0.0
      %1958 = vadd.xlane.f32.xlu0 %v1957
      %v1959 = vpop.xlane.xlu0 %1958
      %v1960 = vsel %vm447, %v1936, 0.0
      %1961 = vadd.xlane.f32.xlu0 %v1960
      %v1962 = vpop.xlane.xlu0 %1961
      %v1963 = vrcp.pop 32.0
      %v1964 = vmul.f32 %v1941, %v1963
      %v1965 = vmul.f32 %v1944, %v1963
      %v1966 = vmul.f32 %v1947, %v1963
      %v1967 = vmul.f32 %v1950, %v1963
      %v1968 = vmul.f32 %v1953, %v1963
      %v1969 = vmul.f32 %v1956, %v1963
      %v1970 = vmul.f32 %v1959, %v1963
      %v1971 = vmul.f32 %v1962, %v1963
      %v1972 = vsub.f32 %v1929, %v1964
      %v1973 = vsub.f32 %v1930, %v1965
      %v1974 = vsub.f32 %v1931, %v1966
      %v1975 = vsub.f32 %v1932, %v1967
      %v1976 = vsub.f32 %v1933, %v1968
      %v1977 = vsub.f32 %v1934, %v1969
      %v1978 = vsub.f32 %v1935, %v1970
      %v1979 = vsub.f32 %v1936, %v1971
      %v1980 = vmul.f32 %v1972, %v1972
      %v1981 = vmul.f32 %v1973, %v1973
      %v1982 = vmul.f32 %v1974, %v1974
      %v1983 = vmul.f32 %v1975, %v1975
      %v1984 = vmul.f32 %v1976, %v1976
      %v1985 = vmul.f32 %v1977, %v1977
      %v1986 = vmul.f32 %v1978, %v1978
      %v1987 = vmul.f32 %v1979, %v1979
      %v1988 = vsel %vm447, %v1980, 0.0
      %1989 = vadd.xlane.f32.xlu0 %v1988
      %v1990 = vpop.xlane.xlu0 %1989
      %v1991 = vsel %vm447, %v1981, 0.0
      %1992 = vadd.xlane.f32.xlu0 %v1991
      %v1993 = vpop.xlane.xlu0 %1992
      %v1994 = vsel %vm447, %v1982, 0.0
      %1995 = vadd.xlane.f32.xlu0 %v1994
      %v1996 = vpop.xlane.xlu0 %1995
      %v1997 = vsel %vm447, %v1983, 0.0
      %1998 = vadd.xlane.f32.xlu0 %v1997
      %v1999 = vpop.xlane.xlu0 %1998
      %v2000 = vsel %vm447, %v1984, 0.0
      %2001 = vadd.xlane.f32.xlu0 %v2000
      %v2002 = vpop.xlane.xlu0 %2001
      %v2003 = vsel %vm447, %v1985, 0.0
      %2004 = vadd.xlane.f32.xlu0 %v2003
      %v2005 = vpop.xlane.xlu0 %2004
      %v2006 = vsel %vm447, %v1986, 0.0
      %2007 = vadd.xlane.f32.xlu0 %v2006
      %v2008 = vpop.xlane.xlu0 %2007
      %v2009 = vsel %vm447, %v1987, 0.0
      %2010 = vadd.xlane.f32.xlu0 %v2009
      %v2011 = vpop.xlane.xlu0 %2010
      %v2012 = vmul.f32 %v1990, %v1963
      %v2013 = vmul.f32 %v1993, %v1963
      %v2014 = vmul.f32 %v1996, %v1963
      %v2015 = vmul.f32 %v1999, %v1963
      %v2016 = vmul.f32 %v2002, %v1963
      %v2017 = vmul.f32 %v2005, %v1963
      %v2018 = vmul.f32 %v2008, %v1963
      %v2019 = vmul.f32 %v2011, %v1963
      %v2020 = vadd.f32 %v2012, 1e-05
      %v2021 = vadd.f32 %v2013, 1e-05
      %v2022 = vadd.f32 %v2014, 1e-05
      %v2023 = vadd.f32 %v2015, 1e-05
      %v2024 = vadd.f32 %v2016, 1e-05
      %v2025 = vadd.f32 %v2017, 1e-05
      %v2026 = vadd.f32 %v2018, 1e-05
      %v2027 = vadd.f32 %v2019, 1e-05
      %v2028 = vrsqrt.pop %v2020
      %v2029 = vrsqrt.pop %v2021
      %v2030 = vrsqrt.pop %v2022
      %v2031 = vrsqrt.pop %v2023
      %v2032 = vrsqrt.pop %v2024
      %v2033 = vrsqrt.pop %v2025
      %v2034 = vrsqrt.pop %v2026
      %v2035 = vrsqrt.pop %v2027
      %v2036 = vmul.f32 %v1972, %v2028
      %v2037 = vmul.f32 %v1973, %v2029
      %v2038 = vmul.f32 %v1974, %v2030
      %v2039 = vmul.f32 %v1975, %v2031
      %v2040 = vmul.f32 %v1976, %v2032
      %v2041 = vmul.f32 %v1977, %v2033
      %v2042 = vmul.f32 %v1978, %v2034
      %v2043 = vmul.f32 %v1979, %v2035
      %v2045 = vlaneseq
      %v2046 = vshrl.u32 %v2045, 7
      %v2047 = vsub.s32 0, %v2046
      %v2048 = vrot.slane %v1937, %v2047
      %v2050 = vmul.f32 %v2036, %v2048
      %v2051 = vmul.f32 %v2037, %v2048
      %v2052 = vmul.f32 %v2038, %v2048
      %v2053 = vmul.f32 %v2039, %v2048
      %v2054 = vmul.f32 %v2040, %v2048
      %v2055 = vmul.f32 %v2041, %v2048
      %v2056 = vmul.f32 %v2042, %v2048
      %v2057 = vmul.f32 %v2043, %v2048
      %v2059 = vlaneseq
      %v2060 = vshrl.u32 %v2059, 7
      %v2061 = vsub.s32 0, %v2060
      %v2062 = vrot.slane %v1938, %v2061
      %v2064 = vadd.f32 %v2050, %v2062
      %v2065 = vadd.f32 %v2051, %v2062
      %v2066 = vadd.f32 %v2052, %v2062
      %v2067 = vadd.f32 %v2053, %v2062
      %v2068 = vadd.f32 %v2054, %v2062
      %v2069 = vadd.f32 %v2055, %v2062
      %v2070 = vadd.f32 %v2056, %v2062
      %v2071 = vadd.f32 %v2057, %v2062
      %v2072 = vpack.c.bf16 %v2065, %v2064
      %v2073 = vpack.c.bf16 %v2067, %v2066
      %v2074 = vpack.c.bf16 %v2069, %v2068
      %v2075 = vpack.c.bf16 %v2071, %v2070
      %v2076 = vld [vmem:[%s7] sm:$0xf]
      %v2077 = vld [vmem:[%s7 + $0x4] sm:$0xf]
      %v2078 = vld [vmem:[%s7 + $0x8] sm:$0xf]
      %v2079 = vld [vmem:[%s7 + $0xc] sm:$0xf]
      %v2080 = vld [vmem:[%s8] sm:$0x1]
      %v2082 = vlaneseq
      %v2083 = vshrl.u32 %v2082, 7
      %v2084 = vsub.s32 0, %v2083
      %v2085 = vrot.slane %v2080, %v2084
      %v2091 = vunpack.c.l.b16 %v2076
      %v2092 = vunpack.c.l.b16 %v2077
      %v2093 = vunpack.c.l.b16 %v2078
      %v2094 = vunpack.c.l.b16 %v2079
      %v2095 = vpack.c.b16 %v2092, %v2091
      %v2096 = vpack.c.b16 %v2094, %v2093
      %v2100 = vsel %vm447, %v2072, 0
      %v2103 = vsel %vm447, %v2073, 0
      %v2106 = vsel %vm447, %v2074, 0
      %v2109 = vsel %vm447, %v2075, 0
      %2111 = vmatprep.subr.bf16.mxu0 0
      %2112 = vmatpush1.bf16.msra.mxu0 %v2095
      %2113 = vmatprep.subr.bf16.mxu0 0
      %2114 = vmatpush1.bf16.msra.mxu0 %v2096
      %2115 = vmatprep.subr.bf16.mxu0 0
      %2116 = vmatpush1.bf16.msra.mxu0 0
      %2117 = vmatprep.subr.bf16.mxu0 0
      %2118 = vmatpush1.bf16.msra.mxu0 0
      %2119 = vmatprep.subr.bf16.mxu0 0
      %2120 = vmatpush1.bf16.msra.mxu0 0
      %2121 = vmatprep.subr.bf16.mxu0 0
      %2122 = vmatpush1.bf16.msra.mxu0 0
      %2123 = vmatprep.subr.bf16.mxu0 0
      %2124 = vmatpush1.bf16.msra.mxu0 0
      %2125 = vmatprep.subr.bf16.mxu0 0
      %2126 = vmatpush1.bf16.msra.mxu0 0
      %2127 = vmatprep.subr.bf16.mxu0 0
      %2128 = vmatpush1.bf16.msra.mxu0 0
      %2129 = vmatprep.subr.bf16.mxu0 0
      %2130 = vmatpush1.bf16.msra.mxu0 0
      %2131 = vmatprep.subr.bf16.mxu0 0
      %2132 = vmatpush1.bf16.msra.mxu0 0
      %2133 = vmatprep.subr.bf16.mxu0 0
      %2134 = vmatpush1.bf16.msra.mxu0 0
      %2135 = vmatprep.subr.bf16.mxu0 0
      %2136 = vmatpush1.bf16.msra.mxu0 0
      %2137 = vmatprep.subr.bf16.mxu0 0
      %2138 = vmatpush1.bf16.msra.mxu0 0
      %2139 = vmatprep.subr.bf16.mxu0 0
      %2140 = vmatpush1.bf16.msra.mxu0 0
      %2141 = vmatprep.subr.bf16.mxu0 0
      %2142 = vmatpush1.bf16.msra.mxu0 0
      %2143 = vmatprep.mubr.bf16.mxu0 0
      %2144 = vmatmul.mubr.bf16.gmra.mrb[0].mxu0 %v2100
      %v2145 = vpop.f32.mrb[0].mxu0
      %v2146 = vadd.f32 %v2085, %v2145
      %v2147 = vpop.f32.mrb[0].mxu0
      %v2148 = vpop.f32.mrb[0].mxu0
      %v2149 = vadd.f32 %v2085, %v2148
      %v2150 = vpop.f32.mrb[0].mxu0
      %2151 = vmatprep.mubr.bf16.mxu0 0
      %2152 = vmatmul.mubr.bf16.gmra.mrb[0].mxu0 %v2103
      %v2153 = vpop.f32.mrb[0].mxu0
      %v2154 = vadd.f32 %v2085, %v2153
      %v2155 = vpop.f32.mrb[0].mxu0
      %v2156 = vpop.f32.mrb[0].mxu0
      %v2157 = vadd.f32 %v2085, %v2156
      %v2158 = vpop.f32.mrb[0].mxu0
      %2159 = vmatprep.mubr.bf16.mxu0 0
      %2160 = vmatmul.mubr.bf16.gmra.mrb[0].mxu0 %v2106
      %v2161 = vpop.f32.mrb[0].mxu0
      %v2162 = vadd.f32 %v2085, %v2161
      %v2163 = vpop.f32.mrb[0].mxu0
      %v2164 = vpop.f32.mrb[0].mxu0
      %v2165 = vadd.f32 %v2085, %v2164
      %v2166 = vpop.f32.mrb[0].mxu0
      %2167 = vmatprep.mubr.bf16.mxu0 0
      %2168 = vmatmul.mubr.bf16.gmra.mrb[0].mxu0 %v2109
      %v2169 = vpop.f32.mrb[0].mxu0
      %v2170 = vadd.f32 %v2085, %v2169
      %v2171 = vpop.f32.mrb[0].mxu0
      %v2172 = vpop.f32.mrb[0].mxu0
      %v2173 = vadd.f32 %v2085, %v2172
      %v2174 = vpop.f32.mrb[0].mxu0
      %2175 = vdwg.mxu0
      %v2176 = vmul.f32 %v2146, 0.70710677
      %v2177 = vmul.f32 %v2149, 0.70710677
      %v2178 = vmul.f32 %v2154, 0.70710677
      %v2179 = vmul.f32 %v2157, 0.70710677
      %v2180 = vmul.f32 %v2162, 0.70710677
      %v2181 = vmul.f32 %v2165, 0.70710677
      %v2182 = vmul.f32 %v2170, 0.70710677
      %v2183 = vmul.f32 %v2173, 0.70710677
      %v2184 = vand.u32 2147483647, %v2176
      %v2185 = vand.u32 2147483647, %v2177
      %v2186 = vand.u32 2147483647, %v2178
      %v2187 = vand.u32 2147483647, %v2179
      %v2188 = vand.u32 2147483647, %v2180
      %v2189 = vand.u32 2147483647, %v2181
      %v2190 = vand.u32 2147483647, %v2182
      %v2191 = vand.u32 2147483647, %v2183
      %v2192 = vmul.f32 %v2184, 0.3275911
      %v2193 = vmul.f32 %v2185, 0.3275911
      %v2194 = vmul.f32 %v2186, 0.3275911
      %v2195 = vmul.f32 %v2187, 0.3275911
      %v2196 = vmul.f32 %v2188, 0.3275911
      %v2197 = vmul.f32 %v2189, 0.3275911
      %v2198 = vmul.f32 %v2190, 0.3275911
      %v2199 = vmul.f32 %v2191, 0.3275911
      %v2200 = vadd.f32 %v2192, 1.0
      %v2201 = vadd.f32 %v2193, 1.0
      %v2202 = vadd.f32 %v2194, 1.0
      %v2203 = vadd.f32 %v2195, 1.0
      %v2204 = vadd.f32 %v2196, 1.0
      %v2205 = vadd.f32 %v2197, 1.0
      %v2206 = vadd.f32 %v2198, 1.0
      %v2207 = vadd.f32 %v2199, 1.0
      %v2208 = vrcp.pop %v2200
      %v2209 = vrcp.pop %v2201
      %v2210 = vrcp.pop %v2202
      %v2211 = vrcp.pop %v2203
      %v2212 = vrcp.pop %v2204
      %v2213 = vrcp.pop %v2205
      %v2214 = vrcp.pop %v2206
      %v2215 = vrcp.pop %v2207
      %v2216 = vmul.f32 %v2208, 1.0614054
      %v2217 = vmul.f32 %v2209, 1.0614054
      %v2218 = vmul.f32 %v2210, 1.0614054
      %v2219 = vmul.f32 %v2211, 1.0614054
      %v2220 = vmul.f32 %v2212, 1.0614054
      %v2221 = vmul.f32 %v2213, 1.0614054
      %v2222 = vmul.f32 %v2214, 1.0614054
      %v2223 = vmul.f32 %v2215, 1.0614054
      %v2224 = vadd.f32 %v2216, -1.4531521
      %v2225 = vadd.f32 %v2217, -1.4531521
      %v2226 = vadd.f32 %v2218, -1.4531521
      %v2227 = vadd.f32 %v2219, -1.4531521
      %v2228 = vadd.f32 %v2220, -1.4531521
      %v2229 = vadd.f32 %v2221, -1.4531521
      %v2230 = vadd.f32 %v2222, -1.4531521
      %v2231 = vadd.f32 %v2223, -1.4531521
      %v2232 = vmul.f32 %v2224, %v2208
      %v2233 = vmul.f32 %v2225, %v2209
      %v2234 = vmul.f32 %v2226, %v2210
      %v2235 = vmul.f32 %v2227, %v2211
      %v2236 = vmul.f32 %v2228, %v2212
      %v2237 = vmul.f32 %v2229, %v2213
      %v2238 = vmul.f32 %v2230, %v2214
      %v2239 = vmul.f32 %v2231, %v2215
      %v2240 = vadd.f32 %v2232, 1.4214138
      %v2241 = vadd.f32 %v2233, 1.4214138
      %v2242 = vadd.f32 %v2234, 1.4214138
      %v2243 = vadd.f32 %v2235, 1.4214138
      %v2244 = vadd.f32 %v2236, 1.4214138
      %v2245 = vadd.f32 %v2237, 1.4214138
      %v2246 = vadd.f32 %v2238, 1.4214138
      %v2247 = vadd.f32 %v2239, 1.4214138
      %v2248 = vmul.f32 %v2240, %v2208
      %v2249 = vmul.f32 %v2241, %v2209
      %v2250 = vmul.f32 %v2242, %v2210
      %v2251 = vmul.f32 %v2243, %v2211
      %v2252 = vmul.f32 %v2244, %v2212
      %v2253 = vmul.f32 %v2245, %v2213
      %v2254 = vmul.f32 %v2246, %v2214
      %v2255 = vmul.f32 %v2247, %v2215
      %v2256 = vadd.f32 %v2248, -0.28449672
      %v2257 = vadd.f32 %v2249, -0.28449672
      %v2258 = vadd.f32 %v2250, -0.28449672
      %v2259 = vadd.f32 %v2251, -0.28449672
      %v2260 = vadd.f32 %v2252, -0.28449672
      %v2261 = vadd.f32 %v2253, -0.28449672
      %v2262 = vadd.f32 %v2254, -0.28449672
      %v2263 = vadd.f32 %v2255, -0.28449672
      %v2264 = vmul.f32 %v2256, %v2208
      %v2265 = vmul.f32 %v2257, %v2209
      %v2266 = vmul.f32 %v2258, %v2210
      %v2267 = vmul.f32 %v2259, %v2211
      %v2268 = vmul.f32 %v2260, %v2212
      %v2269 = vmul.f32 %v2261, %v2213
      %v2270 = vmul.f32 %v2262, %v2214
      %v2271 = vmul.f32 %v2263, %v2215
      %v2272 = vadd.f32 %v2264, 0.2548296
      %v2273 = vadd.f32 %v2265, 0.2548296
      %v2274 = vadd.f32 %v2266, 0.2548296
      %v2275 = vadd.f32 %v2267, 0.2548296
      %v2276 = vadd.f32 %v2268, 0.2548296
      %v2277 = vadd.f32 %v2269, 0.2548296
      %v2278 = vadd.f32 %v2270, 0.2548296
      %v2279 = vadd.f32 %v2271, 0.2548296
      %v2280 = vmul.f32 %v2272, %v2208
      %v2281 = vmul.f32 %v2273, %v2209
      %v2282 = vmul.f32 %v2274, %v2210
      %v2283 = vmul.f32 %v2275, %v2211
      %v2284 = vmul.f32 %v2276, %v2212
      %v2285 = vmul.f32 %v2277, %v2213
      %v2286 = vmul.f32 %v2278, %v2214
      %v2287 = vmul.f32 %v2279, %v2215
      %v2288 = vsub.f32 0.0, %v2184
      %v2289 = vsub.f32 0.0, %v2185
      %v2290 = vsub.f32 0.0, %v2186
      %v2291 = vsub.f32 0.0, %v2187
      %v2292 = vsub.f32 0.0, %v2188
      %v2293 = vsub.f32 0.0, %v2189
      %v2294 = vsub.f32 0.0, %v2190
      %v2295 = vsub.f32 0.0, %v2191
      %v2296 = vmul.f32 %v2288, %v2184
      %v2297 = vmul.f32 %v2289, %v2185
      %v2298 = vmul.f32 %v2290, %v2186
      %v2299 = vmul.f32 %v2291, %v2187
      %v2300 = vmul.f32 %v2292, %v2188
      %v2301 = vmul.f32 %v2293, %v2189
      %v2302 = vmul.f32 %v2294, %v2190
      %v2303 = vmul.f32 %v2295, %v2191
      %v2304 = vmul.f32 %v2296, 1.442695
      %v2305 = vpow.pop %v2304
      %v2306 = vmul.f32 %v2297, 1.442695
      %v2307 = vpow.pop %v2306
      %v2308 = vmul.f32 %v2298, 1.442695
      %v2309 = vpow.pop %v2308
      %v2310 = vmul.f32 %v2299, 1.442695
      %v2311 = vpow.pop %v2310
      %v2312 = vmul.f32 %v2300, 1.442695
      %v2313 = vpow.pop %v2312
      %v2314 = vmul.f32 %v2301, 1.442695
      %v2315 = vpow.pop %v2314
      %v2316 = vmul.f32 %v2302, 1.442695
      %v2317 = vpow.pop %v2316
      %v2318 = vmul.f32 %v2303, 1.442695
      %v2319 = vpow.pop %v2318
      %v2320 = vmul.f32 %v2280, %v2305
      %v2321 = vmul.f32 %v2281, %v2307
      %v2322 = vmul.f32 %v2282, %v2309
      %v2323 = vmul.f32 %v2283, %v2311
      %v2324 = vmul.f32 %v2284, %v2313
      %v2325 = vmul.f32 %v2285, %v2315
      %v2326 = vmul.f32 %v2286, %v2317
      %v2327 = vmul.f32 %v2287, %v2319
      %v2328 = vsub.f32 1.0, %v2320
      %v2329 = vsub.f32 1.0, %v2321
      %v2330 = vsub.f32 1.0, %v2322
      %v2331 = vsub.f32 1.0, %v2323
      %v2332 = vsub.f32 1.0, %v2324
      %v2333 = vsub.f32 1.0, %v2325
      %v2334 = vsub.f32 1.0, %v2326
      %v2335 = vsub.f32 1.0, %v2327
      %vm2336 = vcmp.lt.f32.partialorder %v2176, 0.0
      %vm2337 = vcmp.lt.f32.partialorder %v2177, 0.0
      %vm2338 = vcmp.lt.f32.partialorder %v2178, 0.0
      %vm2339 = vcmp.lt.f32.partialorder %v2179, 0.0
      %vm2340 = vcmp.lt.f32.partialorder %v2180, 0.0
      %vm2341 = vcmp.lt.f32.partialorder %v2181, 0.0
      %vm2342 = vcmp.lt.f32.partialorder %v2182, 0.0
      %vm2343 = vcmp.lt.f32.partialorder %v2183, 0.0
      %v2344 = vsub.f32 0.0, %v2328
      %v2345 = vsub.f32 0.0, %v2329
      %v2346 = vsub.f32 0.0, %v2330
      %v2347 = vsub.f32 0.0, %v2331
      %v2348 = vsub.f32 0.0, %v2332
      %v2349 = vsub.f32 0.0, %v2333
      %v2350 = vsub.f32 0.0, %v2334
      %v2351 = vsub.f32 0.0, %v2335
      %v2352 = vsel %vm2336, %v2344, %v2328
      %v2353 = vsel %vm2337, %v2345, %v2329
      %v2354 = vsel %vm2338, %v2346, %v2330
      %v2355 = vsel %vm2339, %v2347, %v2331
      %v2356 = vsel %vm2340, %v2348, %v2332
      %v2357 = vsel %vm2341, %v2349, %v2333
      %v2358 = vsel %vm2342, %v2350, %v2334
      %v2359 = vsel %vm2343, %v2351, %v2335
      %v2360 = vmul.f32 %v2146, 0.5
      %v2361 = vmul.f32 %v2149, 0.5
      %v2362 = vmul.f32 %v2154, 0.5
      %v2363 = vmul.f32 %v2157, 0.5
      %v2364 = vmul.f32 %v2162, 0.5
      %v2365 = vmul.f32 %v2165, 0.5
      %v2366 = vmul.f32 %v2170, 0.5
      %v2367 = vmul.f32 %v2173, 0.5
      %v2368 = vadd.f32 %v2352, 1.0
      %v2369 = vadd.f32 %v2353, 1.0
      %v2370 = vadd.f32 %v2354, 1.0
      %v2371 = vadd.f32 %v2355, 1.0
      %v2372 = vadd.f32 %v2356, 1.0
      %v2373 = vadd.f32 %v2357, 1.0
      %v2374 = vadd.f32 %v2358, 1.0
      %v2375 = vadd.f32 %v2359, 1.0
      %v2376 = vmul.f32 %v2360, %v2368
      %v2377 = vmul.f32 %v2361, %v2369
      %v2378 = vmul.f32 %v2362, %v2370
      %v2379 = vmul.f32 %v2363, %v2371
      %v2380 = vmul.f32 %v2364, %v2372
      %v2381 = vmul.f32 %v2365, %v2373
      %v2382 = vmul.f32 %v2366, %v2374
      %v2383 = vmul.f32 %v2367, %v2375
      %v2384 = vpack.c.bf16 %v2377, %v2376
      %v2385 = vpack.c.bf16 %v2379, %v2378
      %v2386 = vpack.c.bf16 %v2381, %v2380
      %v2387 = vpack.c.bf16 %v2383, %v2382
      %v2388 = vld [vmem:[%s9] sm:$0xf]
      %v2389 = vld [vmem:[%s9 + $0x4] sm:$0xf]
      %v2390 = vld [vmem:[%s9 + $0x8] sm:$0xf]
      %v2391 = vld [vmem:[%s9 + $0xc] sm:$0xf]
      %v2392 = vld [vmem:[%s10] sm:$0x1]
      %v2394 = vlaneseq
      %v2395 = vshrl.u32 %v2394, 7
      %v2396 = vsub.s32 0, %v2395
      %v2397 = vrot.slane %v2392, %v2396
      %v2403 = vunpack.c.l.b16 %v2388
      %v2404 = vunpack.c.l.b16 %v2389
      %v2405 = vunpack.c.l.b16 %v2390
      %v2406 = vunpack.c.l.b16 %v2391
      %v2407 = vpack.c.b16 %v2404, %v2403
      %v2408 = vpack.c.b16 %v2406, %v2405
      %v2412 = vsel %vm447, %v2384, 0
      %v2415 = vsel %vm447, %v2385, 0
      %v2418 = vsel %vm447, %v2386, 0
      %v2421 = vsel %vm447, %v2387, 0
      %2423 = vmatprep.subr.bf16.mxu0 0
      %2424 = vmatpush1.bf16.msra.mxu0 %v2407
      %2425 = vmatprep.subr.bf16.mxu0 0
      %2426 = vmatpush1.bf16.msra.mxu0 %v2408
      %2427 = vmatprep.subr.bf16.mxu0 0
      %2428 = vmatpush1.bf16.msra.mxu0 0
      %2429 = vmatprep.subr.bf16.mxu0 0
      %2430 = vmatpush1.bf16.msra.mxu0 0
      %2431 = vmatprep.subr.bf16.mxu0 0
      %2432 = vmatpush1.bf16.msra.mxu0 0
      %2433 = vmatprep.subr.bf16.mxu0 0
      %2434 = vmatpush1.bf16.msra.mxu0 0
      %2435 = vmatprep.subr.bf16.mxu0 0
      %2436 = vmatpush1.bf16.msra.mxu0 0
      %2437 = vmatprep.subr.bf16.mxu0 0
      %2438 = vmatpush1.bf16.msra.mxu0 0
      %2439 = vmatprep.subr.bf16.mxu0 0
      %2440 = vmatpush1.bf16.msra.mxu0 0
      %2441 = vmatprep.subr.bf16.mxu0 0
      %2442 = vmatpush1.bf16.msra.mxu0 0
      %2443 = vmatprep.subr.bf16.mxu0 0
      %2444 = vmatpush1.bf16.msra.mxu0 0
      %2445 = vmatprep.subr.bf16.mxu0 0
      %2446 = vmatpush1.bf16.msra.mxu0 0
      %2447 = vmatprep.subr.bf16.mxu0 0
      %2448 = vmatpush1.bf16.msra.mxu0 0
      %2449 = vmatprep.subr.bf16.mxu0 0
      %2450 = vmatpush1.bf16.msra.mxu0 0
      %2451 = vmatprep.subr.bf16.mxu0 0
      %2452 = vmatpush1.bf16.msra.mxu0 0
      %2453 = vmatprep.subr.bf16.mxu0 0
      %2454 = vmatpush1.bf16.msra.mxu0 0
      %2455 = vmatprep.mubr.bf16.mxu0 0
      %2456 = vmatmul.mubr.bf16.gmra.mrb[0].mxu0 %v2412
      %v2457 = vpop.f32.mrb[0].mxu0
      %v2458 = vadd.f32 %v2397, %v2457
      %v2459 = vpop.f32.mrb[0].mxu0
      %v2460 = vpop.f32.mrb[0].mxu0
      %v2461 = vadd.f32 %v2397, %v2460
      %v2462 = vpop.f32.mrb[0].mxu0
      %2463 = vmatprep.mubr.bf16.mxu0 0
      %2464 = vmatmul.mubr.bf16.gmra.mrb[0].mxu0 %v2415
      %v2465 = vpop.f32.mrb[0].mxu0
      %v2466 = vadd.f32 %v2397, %v2465
      %v2467 = vpop.f32.mrb[0].mxu0
      %v2468 = vpop.f32.mrb[0].mxu0
      %v2469 = vadd.f32 %v2397, %v2468
      %v2470 = vpop.f32.mrb[0].mxu0
      %2471 = vmatprep.mubr.bf16.mxu0 0
      %2472 = vmatmul.mubr.bf16.gmra.mrb[0].mxu0 %v2418
      %v2473 = vpop.f32.mrb[0].mxu0
      %v2474 = vadd.f32 %v2397, %v2473
      %v2475 = vpop.f32.mrb[0].mxu0
      %v2476 = vpop.f32.mrb[0].mxu0
      %v2477 = vadd.f32 %v2397, %v2476
      %v2478 = vpop.f32.mrb[0].mxu0
      %2479 = vmatprep.mubr.bf16.mxu0 0
      %2480 = vmatmul.mubr.bf16.gmra.mrb[0].mxu0 %v2421
      %v2481 = vpop.f32.mrb[0].mxu0
      %v2482 = vadd.f32 %v2397, %v2481
      %v2483 = vpop.f32.mrb[0].mxu0
      %v2484 = vpop.f32.mrb[0].mxu0
      %v2485 = vadd.f32 %v2397, %v2484
      %v2486 = vpop.f32.mrb[0].mxu0
      %2487 = vdwg.mxu0
      %v2488 = vadd.f32 %v2458, %v1929
      %v2489 = vadd.f32 %v2461, %v1930
      %v2490 = vadd.f32 %v2466, %v1931
      %v2491 = vadd.f32 %v2469, %v1932
      %v2492 = vadd.f32 %v2474, %v1933
      %v2493 = vadd.f32 %v2477, %v1934
      %v2494 = vadd.f32 %v2482, %v1935
      %v2495 = vadd.f32 %v2485, %v1936
      %v2496 = vpack.c.bf16 %v2489, %v2488
      %v2497 = vpack.c.bf16 %v2491, %v2490
      %v2498 = vpack.c.bf16 %v2493, %v2492
      %v2499 = vpack.c.bf16 %v2495, %v2494
      %v2504 = vunpack.c.l.b16 %v2496
      %v2505 = vunpack.c.h.b16 %v2496
      %v2506 = vunpack.c.l.b16 %v2497
      %v2507 = vunpack.c.h.b16 %v2497
      %v2508 = vunpack.c.l.b16 %v2498
      %v2509 = vunpack.c.h.b16 %v2498
      %v2510 = vunpack.c.l.b16 %v2499
      %v2511 = vunpack.c.h.b16 %v2499
      %v2512 = vpack.c.b16 %v2504, %v2504
      %v2513 = vpack.c.b16 %v2505, %v2505
      %v2514 = vpack.c.b16 %v2506, %v2506
      %v2515 = vpack.c.b16 %v2507, %v2507
      %v2516 = vpack.c.b16 %v2508, %v2508
      %v2517 = vpack.c.b16 %v2509, %v2509
      %v2518 = vpack.c.b16 %v2510, %v2510
      %v2519 = vpack.c.b16 %v2511, %v2511
      %vm2528 = vcmask 257024
      %2529 = vst.msk [vmem:[%s386] sm:$0xf] %vm2528, %v2512
      %2530 = vst.msk [vmem:[%s386 + $0x4] sm:$0xf] %vm2528, %v2513
      %2531 = vst.msk [vmem:[%s386 + $0x8] sm:$0xf] %vm2528, %v2514
      %2532 = vst.msk [vmem:[%s386 + $0xc] sm:$0xf] %vm2528, %v2515
      %2533 = vst.msk [vmem:[%s386 + $0x10] sm:$0xf] %vm2528, %v2516
      %2534 = vst.msk [vmem:[%s386 + $0x14] sm:$0xf] %vm2528, %v2517
      %2535 = vst.msk [vmem:[%s386 + $0x18] sm:$0xf] %vm2528, %v2518
      %2536 = vst.msk [vmem:[%s386 + $0x1c] sm:$0xf] %vm2528, %v2519
      %p2537 = scmp.lt.s32.totalorder %s22, 1
      %s2538 = scalar_select %p2537, %s22, 1
      %s2539 = smul.addr %s2538, 8
      %s2540 = smul.addr %s2539, 4
      %s2541 = scalar_lea.vmem %s11, %s2540
      // Predicated region
      $region65: #{vit_forward_pallas.6} parent=63 // pred_check
        %p2542 = pneg %p276
      $region66: #{vit_forward_pallas.6} parent=63 // pred_check_branch
        %2544 = sbr.rel (%p2542) target = $region68
      $region67: #{vit_forward_pallas.6} parent=63 // pred_region
        _
      $region68: #{vit_forward_pallas.6} parent=63 // pred_fallthru
        _
    $region64: #{vit_forward_pallas.6} parent=5 // pred_fallthru
      _
    %p2545 = scmp.le.s32.totalorder 2, %s17
    // Predicated region
    $region69: #{vit_forward_pallas.6} parent=5 // pred_check
      %p2546 = pneg %p2545
    $region70: #{vit_forward_pallas.6} parent=5 // pred_check_branch
      %2548 = sbr.rel (%p2546) target = $region72
    $region71: #{vit_forward_pallas.6} parent=5 // pred_region
      %s2549 = ssub.s32 %s17, 2
      // Predicated region
      $region73: #{vit_forward_pallas.6} parent=71 // pred_check
        %p2550 = pneg %p282
      $region74: #{vit_forward_pallas.6} parent=71 // pred_check_branch
        %2552 = sbr.rel (%p2550) target = $region76
      $region75: #{vit_forward_pallas.6} parent=71 // pred_region
        %p2553 = scmp.lt.s32.totalorder %s23, 1
        %s2554 = scalar_select %p2553, %s23, 1
        %s2555 = smul.addr %s2554, 8
        %s2556 = smul.addr %s2555, 4
        %s2557 = scalar_lea.vmem %s11, %s2556
      $region76: #{vit_forward_pallas.6} parent=71 // pred_fallthru
        _
    $region72: #{vit_forward_pallas.6} parent=5 // pred_fallthru
      _
  $region6: #{vit_forward_pallas.6} parent=0 // loop_footer
    %s21 = sadd.s32 1, %s17
  $region7: #{vit_forward_pallas.6} parent=0 // loop_footer_branch
    %16 = sbr.rel target = $region3
  $region8: #{vit_forward_pallas.6} parent=0 // loop_exit
    _

// kernel: vit_forward_pallas.5
$region0: #{vit_forward_pallas.5}
  #allocation0 [shape = 'u32[]', space=smem, size = 0x4, offset = 0x4, fixed_abs, tag = 'smem constant byte address 0x4 - core index']
  #allocation1 [shape = 'u32[144,128]{1,0:T(1,128)}', space=vmem, size = 0x12000, scoped, tag = 'internal scratch']
  %s0 = inlined_call_operand.vmem [shape: bf16[128,8,32], index: 0, kind: input, shape index: {}]
  %s1 = inlined_call_operand.vmem [shape: f32[1,32], index: 1, kind: input, shape index: {}]
  %s2 = inlined_call_operand.vmem [shape: f32[1,32], index: 2, kind: input, shape index: {}]
  %s3 = inlined_call_operand.vmem [shape: bf16[32,32], index: 3, kind: input, shape index: {}]
  %s4 = inlined_call_operand.vmem [shape: f32[1,32], index: 4, kind: input, shape index: {}]
  %s5 = inlined_call_operand.vmem [shape: bf16[32,64], index: 5, kind: input, shape index: {}]
  %s6 = inlined_call_operand.vmem [shape: f32[1,64], index: 6, kind: input, shape index: {}]
  %s7 = inlined_call_operand.vmem [shape: bf16[32,32], index: 7, kind: input, shape index: {}]
  %s8 = inlined_call_operand.vmem [shape: f32[1,32], index: 8, kind: input, shape index: {}]
  %s9 = inlined_call_operand.vmem [shape: f32[32,4], index: 9, kind: input, shape index: {}]
  %s10 = inlined_call_operand.vmem [shape: f32[4,32], index: 10, kind: input, shape index: {}]
  %s11 = inlined_call_operand.vmem [shape: bf16[128,32], index: 11, kind: output, shape index: {}]
  %s12 = sld [smem:[#allocation0]]
  $region77: #{vit_forward_pallas.5} parent=0
    _
  %s14 = ssub.s32 1, %s12
  %s15 = scalar_select 0, %s14, %s12
  loop: start=0, step=1, limit=6
  $region2: #{vit_forward_pallas.5} parent=0 // loop_pre_header
    _
  $region3: #{vit_forward_pallas.5} parent=0 // loop_header
    %s17 = sphi 0, %s21
    %p18 = scmp.ge.s32.totalorder %s17, 6
    %s27 = sphi 0, %s29
    %s30 = sphi 0, %s27
    %s31 = sphi 0, %s30
    %s47 = sphi 0, %s31
    %s51 = sphi 0, %s51
    %s53 = sphi 0, %s51
    %s54 = sphi 0, %s53
    %s68 = sphi 0, %s54
    %s72 = sphi 0, %s72
    %s74 = sphi 0, %s72
    %s75 = sphi 0, %s74
    %s89 = sphi 0, %s75
    %s93 = sphi 0, %s93
    %s95 = sphi 0, %s93
    %s96 = sphi 0, %s95
    %s110 = sphi 0, %s96
    %s114 = sphi 0, %s114
    %s116 = sphi 0, %s114
    %s117 = sphi 0, %s116
    %s131 = sphi 0, %s117
    %s135 = sphi 0, %s135
    %s137 = sphi 0, %s135
    %s138 = sphi 0, %s137
    %s152 = sphi 0, %s138
    %s156 = sphi 0, %s156
    %s158 = sphi 0, %s156
    %s159 = sphi 0, %s158
    %s173 = sphi 0, %s159
    %s177 = sphi 0, %s177
    %s179 = sphi 0, %s177
    %s180 = sphi 0, %s179
    %s194 = sphi 0, %s180
    %s198 = sphi 0, %s198
    %s200 = sphi 0, %s198
    %s201 = sphi 0, %s200
    %s215 = sphi 0, %s201
    %s219 = sphi 0, %s219
    %s221 = sphi 0, %s219
    %s222 = sphi 0, %s221
    %s236 = sphi 0, %s222
    %s240 = sphi 0, %s240
    %s242 = sphi 0, %s240
    %s243 = sphi 0, %s242
    %s257 = sphi 0, %s243
    %s263 = sphi 0, %s265
    %s266 = sphi 0, %s263
    %s267 = sphi 0, %s266
    %s283 = sphi 0, %s267
  $region4: #{vit_forward_pallas.5} parent=0 // loop_header_branch
    %20 = sbr.rel (%p18) target = $region8
  $region5: #{vit_forward_pallas.5} parent=0 // loop_body
    %s22 = ssub.s32 %s17, 1
    %s23 = ssub.s32 %s17, 2
    %s24 = sadd.s32 %s17, 1
    %s25 = ssub.s32 %s17, %s24
    %p26 = scmp.eq.s32.totalorder %s25, 0
    %s28 = sadd.s32 %s27, 1
    %s29 = scalar_select %p26, %s27, %s28
    %p32 = pneg %p26
    %p33 = scmp.eq.s32.totalorder %s17, 3
    %p34 = por %p32, %p33
    %p35 = scmp.ne.s32.totalorder %s27, %s30
    %p36 = scmp.eq.s32.totalorder %s17, 0
    %p37 = por %p35, %p36
    %p38 = scmp.ne.s32.totalorder %s27, %s30
    %p39 = scmp.eq.s32.totalorder %s22, 3
    %p40 = por %p38, %p39
    %p41 = scmp.ne.s32.totalorder %s30, %s31
    %p42 = scmp.eq.s32.totalorder %s22, 0
    %p43 = por %p41, %p42
    %p44 = scmp.ne.s32.totalorder %s30, %s31
    %p45 = scmp.eq.s32.totalorder %s23, 3
    %p46 = por %p44, %p45
    %p48 = scmp.ne.s32.totalorder %s31, %s47
    %p49 = scmp.eq.s32.totalorder %s23, 0
    %p50 = por %p48, %p49
    %s52 = sadd.s32 %s51, 1
    %p55 = scmp.eq.s32.totalorder %s17, 3
    %p56 = scmp.ne.s32.totalorder %s51, %s53
    %p57 = scmp.eq.s32.totalorder %s17, 0
    %p58 = por %p56, %p57
    %p59 = scmp.ne.s32.totalorder %s51, %s53
    %p60 = scmp.eq.s32.totalorder %s22, 3
    %p61 = por %p59, %p60
    %p62 = scmp.ne.s32.totalorder %s53, %s54
    %p63 = scmp.eq.s32.totalorder %s22, 0
    %p64 = por %p62, %p63
    %p65 = scmp.ne.s32.totalorder %s53, %s54
    %p66 = scmp.eq.s32.totalorder %s23, 3
    %p67 = por %p65, %p66
    %p69 = scmp.ne.s32.totalorder %s54, %s68
    %p70 = scmp.eq.s32.totalorder %s23, 0
    %p71 = por %p69, %p70
    %s73 = sadd.s32 %s72, 1
    %p76 = scmp.eq.s32.totalorder %s17, 3
    %p77 = scmp.ne.s32.totalorder %s72, %s74
    %p78 = scmp.eq.s32.totalorder %s17, 0
    %p79 = por %p77, %p78
    %p80 = scmp.ne.s32.totalorder %s72, %s74
    %p81 = scmp.eq.s32.totalorder %s22, 3
    %p82 = por %p80, %p81
    %p83 = scmp.ne.s32.totalorder %s74, %s75
    %p84 = scmp.eq.s32.totalorder %s22, 0
    %p85 = por %p83, %p84
    %p86 = scmp.ne.s32.totalorder %s74, %s75
    %p87 = scmp.eq.s32.totalorder %s23, 3
    %p88 = por %p86, %p87
    %p90 = scmp.ne.s32.totalorder %s75, %s89
    %p91 = scmp.eq.s32.totalorder %s23, 0
    %p92 = por %p90, %p91
    %s94 = sadd.s32 %s93, 1
    %p97 = scmp.eq.s32.totalorder %s17, 3
    %p98 = scmp.ne.s32.totalorder %s93, %s95
    %p99 = scmp.eq.s32.totalorder %s17, 0
    %p100 = por %p98, %p99
    %p101 = scmp.ne.s32.totalorder %s93, %s95
    %p102 = scmp.eq.s32.totalorder %s22, 3
    %p103 = por %p101, %p102
    %p104 = scmp.ne.s32.totalorder %s95, %s96
    %p105 = scmp.eq.s32.totalorder %s22, 0
    %p106 = por %p104, %p105
    %p107 = scmp.ne.s32.totalorder %s95, %s96
    %p108 = scmp.eq.s32.totalorder %s23, 3
    %p109 = por %p107, %p108
    %p111 = scmp.ne.s32.totalorder %s96, %s110
    %p112 = scmp.eq.s32.totalorder %s23, 0
    %p113 = por %p111, %p112
    %s115 = sadd.s32 %s114, 1
    %p118 = scmp.eq.s32.totalorder %s17, 3
    %p119 = scmp.ne.s32.totalorder %s114, %s116
    %p120 = scmp.eq.s32.totalorder %s17, 0
    %p121 = por %p119, %p120
    %p122 = scmp.ne.s32.totalorder %s114, %s116
    %p123 = scmp.eq.s32.totalorder %s22, 3
    %p124 = por %p122, %p123
    %p125 = scmp.ne.s32.totalorder %s116, %s117
    %p126 = scmp.eq.s32.totalorder %s22, 0
    %p127 = por %p125, %p126
    %p128 = scmp.ne.s32.totalorder %s116, %s117
    %p129 = scmp.eq.s32.totalorder %s23, 3
    %p130 = por %p128, %p129
    %p132 = scmp.ne.s32.totalorder %s117, %s131
    %p133 = scmp.eq.s32.totalorder %s23, 0
    %p134 = por %p132, %p133
    %s136 = sadd.s32 %s135, 1
    %p139 = scmp.eq.s32.totalorder %s17, 3
    %p140 = scmp.ne.s32.totalorder %s135, %s137
    %p141 = scmp.eq.s32.totalorder %s17, 0
    %p142 = por %p140, %p141
    %p143 = scmp.ne.s32.totalorder %s135, %s137
    %p144 = scmp.eq.s32.totalorder %s22, 3
    %p145 = por %p143, %p144
    %p146 = scmp.ne.s32.totalorder %s137, %s138
    %p147 = scmp.eq.s32.totalorder %s22, 0
    %p148 = por %p146, %p147
    %p149 = scmp.ne.s32.totalorder %s137, %s138
    %p150 = scmp.eq.s32.totalorder %s23, 3
    %p151 = por %p149, %p150
    %p153 = scmp.ne.s32.totalorder %s138, %s152
    %p154 = scmp.eq.s32.totalorder %s23, 0
    %p155 = por %p153, %p154
    %s157 = sadd.s32 %s156, 1
    %p160 = scmp.eq.s32.totalorder %s17, 3
    %p161 = scmp.ne.s32.totalorder %s156, %s158
    %p162 = scmp.eq.s32.totalorder %s17, 0
    %p163 = por %p161, %p162
    %p164 = scmp.ne.s32.totalorder %s156, %s158
    %p165 = scmp.eq.s32.totalorder %s22, 3
    %p166 = por %p164, %p165
    %p167 = scmp.ne.s32.totalorder %s158, %s159
    %p168 = scmp.eq.s32.totalorder %s22, 0
    %p169 = por %p167, %p168
    %p170 = scmp.ne.s32.totalorder %s158, %s159
    %p171 = scmp.eq.s32.totalorder %s23, 3
    %p172 = por %p170, %p171
    %p174 = scmp.ne.s32.totalorder %s159, %s173
    %p175 = scmp.eq.s32.totalorder %s23, 0
    %p176 = por %p174, %p175
    %s178 = sadd.s32 %s177, 1
    %p181 = scmp.eq.s32.totalorder %s17, 3
    %p182 = scmp.ne.s32.totalorder %s177, %s179
    %p183 = scmp.eq.s32.totalorder %s17, 0
    %p184 = por %p182, %p183
    %p185 = scmp.ne.s32.totalorder %s177, %s179
    %p186 = scmp.eq.s32.totalorder %s22, 3
    %p187 = por %p185, %p186
    %p188 = scmp.ne.s32.totalorder %s179, %s180
    %p189 = scmp.eq.s32.totalorder %s22, 0
    %p190 = por %p188, %p189
    %p191 = scmp.ne.s32.totalorder %s179, %s180
    %p192 = scmp.eq.s32.totalorder %s23, 3
    %p193 = por %p191, %p192
    %p195 = scmp.ne.s32.totalorder %s180, %s194
    %p196 = scmp.eq.s32.totalorder %s23, 0
    %p197 = por %p195, %p196
    %s199 = sadd.s32 %s198, 1
    %p202 = scmp.eq.s32.totalorder %s17, 3
    %p203 = scmp.ne.s32.totalorder %s198, %s200
    %p204 = scmp.eq.s32.totalorder %s17, 0
    %p205 = por %p203, %p204
    %p206 = scmp.ne.s32.totalorder %s198, %s200
    %p207 = scmp.eq.s32.totalorder %s22, 3
    %p208 = por %p206, %p207
    %p209 = scmp.ne.s32.totalorder %s200, %s201
    %p210 = scmp.eq.s32.totalorder %s22, 0
    %p211 = por %p209, %p210
    %p212 = scmp.ne.s32.totalorder %s200, %s201
    %p213 = scmp.eq.s32.totalorder %s23, 3
    %p214 = por %p212, %p213
    %p216 = scmp.ne.s32.totalorder %s201, %s215
    %p217 = scmp.eq.s32.totalorder %s23, 0
    %p218 = por %p216, %p217
    %s220 = sadd.s32 %s219, 1
    %p223 = scmp.eq.s32.totalorder %s17, 3
    %p224 = scmp.ne.s32.totalorder %s219, %s221
    %p225 = scmp.eq.s32.totalorder %s17, 0
    %p226 = por %p224, %p225
    %p227 = scmp.ne.s32.totalorder %s219, %s221
    %p228 = scmp.eq.s32.totalorder %s22, 3
    %p229 = por %p227, %p228
    %p230 = scmp.ne.s32.totalorder %s221, %s222
    %p231 = scmp.eq.s32.totalorder %s22, 0
    %p232 = por %p230, %p231
    %p233 = scmp.ne.s32.totalorder %s221, %s222
    %p234 = scmp.eq.s32.totalorder %s23, 3
    %p235 = por %p233, %p234
    %p237 = scmp.ne.s32.totalorder %s222, %s236
    %p238 = scmp.eq.s32.totalorder %s23, 0
    %p239 = por %p237, %p238
    %s241 = sadd.s32 %s240, 1
    %p244 = scmp.eq.s32.totalorder %s17, 3
    %p245 = scmp.ne.s32.totalorder %s240, %s242
    %p246 = scmp.eq.s32.totalorder %s17, 0
    %p247 = por %p245, %p246
    %p248 = scmp.ne.s32.totalorder %s240, %s242
    %p249 = scmp.eq.s32.totalorder %s22, 3
    %p250 = por %p248, %p249
    %p251 = scmp.ne.s32.totalorder %s242, %s243
    %p252 = scmp.eq.s32.totalorder %s22, 0
    %p253 = por %p251, %p252
    %p254 = scmp.ne.s32.totalorder %s242, %s243
    %p255 = scmp.eq.s32.totalorder %s23, 3
    %p256 = por %p254, %p255
    %p258 = scmp.ne.s32.totalorder %s243, %s257
    %p259 = scmp.eq.s32.totalorder %s23, 0
    %p260 = por %p258, %p259
    %s261 = ssub.s32 %s17, %s24
    %p262 = scmp.eq.s32.totalorder %s261, 0
    %s264 = sadd.s32 %s263, 1
    %s265 = scalar_select %p262, %s263, %s264
    %p268 = pneg %p262
    %p269 = scmp.eq.s32.totalorder %s17, 3
    %p270 = por %p268, %p269
    %p271 = scmp.ne.s32.totalorder %s263, %s266
    %p272 = scmp.eq.s32.totalorder %s17, 0
    %p273 = por %p271, %p272
    %p274 = scmp.ne.s32.totalorder %s263, %s266
    %p275 = scmp.eq.s32.totalorder %s22, 3
    %p276 = por %p274, %p275
    %p277 = scmp.ne.s32.totalorder %s266, %s267
    %p278 = scmp.eq.s32.totalorder %s22, 0
    %p279 = por %p277, %p278
    %p280 = scmp.ne.s32.totalorder %s266, %s267
    %p281 = scmp.eq.s32.totalorder %s23, 3
    %p282 = por %p280, %p281
    %p284 = scmp.ne.s32.totalorder %s267, %s283
    %p285 = scmp.eq.s32.totalorder %s23, 0
    %p286 = por %p284, %p285
    %p287 = scmp.le.s32.totalorder 1, %s17
    %p288 = scmp.lt.s32.totalorder %s17, 5
    %p289 = pnand %p287, %p288
    %p290 = pneg %p289
    // Predicated region
    $region9: #{vit_forward_pallas.5} parent=5 // pred_check
      _
    $region10: #{vit_forward_pallas.5} parent=5 // pred_check_branch
      %292 = sbr.rel (%p289) target = $region12
    $region11: #{vit_forward_pallas.5} parent=5 // pred_region
      %s293 = ssub.s32 %s17, 1
      // Predicated region
      $region13: #{vit_forward_pallas.5} parent=11 // pred_check
        %p294 = pneg %p64
      $region14: #{vit_forward_pallas.5} parent=11 // pred_check_branch
        %296 = sbr.rel (%p294) target = $region16
      $region15: #{vit_forward_pallas.5} parent=11 // pred_region
        _
      $region16: #{vit_forward_pallas.5} parent=11 // pred_fallthru
        _
      // Predicated region
      $region17: #{vit_forward_pallas.5} parent=11 // pred_check
        %p297 = pneg %p85
      $region18: #{vit_forward_pallas.5} parent=11 // pred_check_branch
        %299 = sbr.rel (%p297) target = $region20
      $region19: #{vit_forward_pallas.5} parent=11 // pred_region
        _
      $region20: #{vit_forward_pallas.5} parent=11 // pred_fallthru
        _
      // Predicated region
      $region21: #{vit_forward_pallas.5} parent=11 // pred_check
        %p300 = pneg %p106
      $region22: #{vit_forward_pallas.5} parent=11 // pred_check_branch
        %302 = sbr.rel (%p300) target = $region24
      $region23: #{vit_forward_pallas.5} parent=11 // pred_region
        _
      $region24: #{vit_forward_pallas.5} parent=11 // pred_fallthru
        _
      // Predicated region
      $region25: #{vit_forward_pallas.5} parent=11 // pred_check
        %p303 = pneg %p127
      $region26: #{vit_forward_pallas.5} parent=11 // pred_check_branch
        %305 = sbr.rel (%p303) target = $region28
      $region27: #{vit_forward_pallas.5} parent=11 // pred_region
        _
      $region28: #{vit_forward_pallas.5} parent=11 // pred_fallthru
        _
      // Predicated region
      $region29: #{vit_forward_pallas.5} parent=11 // pred_check
        %p306 = pneg %p148
      $region30: #{vit_forward_pallas.5} parent=11 // pred_check_branch
        %308 = sbr.rel (%p306) target = $region32
      $region31: #{vit_forward_pallas.5} parent=11 // pred_region
        _
      $region32: #{vit_forward_pallas.5} parent=11 // pred_fallthru
        _
      // Predicated region
      $region33: #{vit_forward_pallas.5} parent=11 // pred_check
        %p309 = pneg %p169
      $region34: #{vit_forward_pallas.5} parent=11 // pred_check_branch
        %311 = sbr.rel (%p309) target = $region36
      $region35: #{vit_forward_pallas.5} parent=11 // pred_region
        _
      $region36: #{vit_forward_pallas.5} parent=11 // pred_fallthru
        _
      // Predicated region
      $region37: #{vit_forward_pallas.5} parent=11 // pred_check
        %p312 = pneg %p190
      $region38: #{vit_forward_pallas.5} parent=11 // pred_check_branch
        %314 = sbr.rel (%p312) target = $region40
      $region39: #{vit_forward_pallas.5} parent=11 // pred_region
        _
      $region40: #{vit_forward_pallas.5} parent=11 // pred_fallthru
        _
      // Predicated region
      $region41: #{vit_forward_pallas.5} parent=11 // pred_check
        %p315 = pneg %p211
      $region42: #{vit_forward_pallas.5} parent=11 // pred_check_branch
        %317 = sbr.rel (%p315) target = $region44
      $region43: #{vit_forward_pallas.5} parent=11 // pred_region
        _
      $region44: #{vit_forward_pallas.5} parent=11 // pred_fallthru
        _
      // Predicated region
      $region45: #{vit_forward_pallas.5} parent=11 // pred_check
        %p318 = pneg %p232
      $region46: #{vit_forward_pallas.5} parent=11 // pred_check_branch
        %320 = sbr.rel (%p318) target = $region48
      $region47: #{vit_forward_pallas.5} parent=11 // pred_region
        _
      $region48: #{vit_forward_pallas.5} parent=11 // pred_fallthru
        _
      // Predicated region
      $region49: #{vit_forward_pallas.5} parent=11 // pred_check
        %p321 = pneg %p253
      $region50: #{vit_forward_pallas.5} parent=11 // pred_check_branch
        %323 = sbr.rel (%p321) target = $region52
      $region51: #{vit_forward_pallas.5} parent=11 // pred_region
        _
      $region52: #{vit_forward_pallas.5} parent=11 // pred_fallthru
        _
    $region12: #{vit_forward_pallas.5} parent=5 // pred_fallthru
      _
    %p324 = scmp.lt.s32.totalorder %s17, 4
    // Predicated region
    $region53: #{vit_forward_pallas.5} parent=5 // pred_check
      %p325 = pneg %p324
    $region54: #{vit_forward_pallas.5} parent=5 // pred_check_branch
      %327 = sbr.rel (%p325) target = $region56
    $region55: #{vit_forward_pallas.5} parent=5 // pred_region
      // Predicated region
      $region57: #{vit_forward_pallas.5} parent=55 // pred_check
        %p328 = pneg %p37
      $region58: #{vit_forward_pallas.5} parent=55 // pred_check_branch
        %330 = sbr.rel (%p328) target = $region60
      $region59: #{vit_forward_pallas.5} parent=55 // pred_region
        %s331 = smul.u32 32, %s17
        %p332 = scmp.lt.s32.totalorder %s331, 127
        %s333 = scalar_select %p332, %s331, 127
        %s334 = smul.addr %s333, 4
        %s335 = scalar_lea.vmem %s0, %s334
        %s336 = smul.u32 32, %s17
      $region60: #{vit_forward_pallas.5} parent=55 // pred_fallthru
        _
    $region56: #{vit_forward_pallas.5} parent=5 // pred_fallthru
      _
    %p337 = scmp.le.s32.totalorder 1, %s17
    %p338 = scmp.lt.s32.totalorder %s17, 5
    %p339 = pnand %p337, %p338
    %p340 = pneg %p339
    // Predicated region
    $region61: #{vit_forward_pallas.5} parent=5 // pred_check
      _
    $region62: #{vit_forward_pallas.5} parent=5 // pred_check_branch
      %342 = sbr.rel (%p339) target = $region64
    $region63: #{vit_forward_pallas.5} parent=5 // pred_region
      %s343 = ssub.s32 %s17, 1
      %s344 = smul.u32 32, %s22
      %p345 = scmp.lt.s32.totalorder %s344, 127
      %s346 = scalar_select %p345, %s344, 127
      %s347 = smul.addr %s346, 4
      %s348 = scalar_lea.vmem %s0, %s347
      %p349 = pneg %p43
      %p350 = pneg %p40
      %p351 = pneg %p64
      %p352 = pneg %p61
      %p353 = pneg %p85
      %p354 = pneg %p82
      %p355 = pneg %p106
      %p356 = pneg %p103
      %p357 = pneg %p127
      %p358 = pneg %p124
      %p359 = pneg %p148
      %p360 = pneg %p145
      %p361 = pneg %p169
      %p362 = pneg %p166
      %p363 = pneg %p190
      %p364 = pneg %p187
      %p365 = pneg %p211
      %p366 = pneg %p208
      %p367 = pneg %p232
      %p368 = pneg %p229
      %p369 = pneg %p253
      %p370 = pneg %p250
      %p371 = pneg %p279
      %p372 = pneg %p276
      %s373 = smul.u32 4, %s22
      %p374 = scmp.lt.s32.totalorder %s373, 15
      %s375 = scalar_select %p374, %s373, 15
      %s376 = smul.addr %s375, 4
      %s377 = scalar_lea.vmem %s11, %s376
      %s378 = smul.u32 32, %s22
      %p379 = scmp.lt.s32.totalorder %s378, 127
      %s380 = scalar_select %p379, %s378, 127
      %s381 = smul.addr %s380, 4
      %s382 = scalar_lea.vmem %s0, %s381
      %s383 = smul.u32 32, %s22
      %s384 = smul.u32 4, %s22
      %p385 = scmp.lt.s32.totalorder %s384, 15
      %s386 = scalar_select %p385, %s384, 15
      %s387 = smul.addr %s386, 4
      %s388 = scalar_lea.vmem %s11, %s387
      %s389 = smul.u32 4, %s22
      %v391 = vld [vmem:[%s382] sm:$0xf]
      %v392 = vld [vmem:[%s382 + $0x4] sm:$0xf]
      %v393 = vld [vmem:[%s382 + $0x8] sm:$0xf]
      %v394 = vld [vmem:[%s382 + $0xc] sm:$0xf]
      %v395 = vld [vmem:[%s382 + $0x10] sm:$0xf]
      %v396 = vld [vmem:[%s382 + $0x14] sm:$0xf]
      %v397 = vld [vmem:[%s382 + $0x18] sm:$0xf]
      %v398 = vld [vmem:[%s382 + $0x1c] sm:$0xf]
      %v399 = vld [vmem:[%s382 + $0x20] sm:$0xf]
      %v400 = vld [vmem:[%s382 + $0x24] sm:$0xf]
      %v401 = vld [vmem:[%s382 + $0x28] sm:$0xf]
      %v402 = vld [vmem:[%s382 + $0x2c] sm:$0xf]
      %v403 = vld [vmem:[%s382 + $0x30] sm:$0xf]
      %v404 = vld [vmem:[%s382 + $0x34] sm:$0xf]
      %v405 = vld [vmem:[%s382 + $0x38] sm:$0xf]
      %v406 = vld [vmem:[%s382 + $0x3c] sm:$0xf]
      %v407 = vld [vmem:[%s382 + $0x40] sm:$0xf]
      %v408 = vld [vmem:[%s382 + $0x44] sm:$0xf]
      %v409 = vld [vmem:[%s382 + $0x48] sm:$0xf]
      %v410 = vld [vmem:[%s382 + $0x4c] sm:$0xf]
      %v411 = vld [vmem:[%s382 + $0x50] sm:$0xf]
      %v412 = vld [vmem:[%s382 + $0x54] sm:$0xf]
      %v413 = vld [vmem:[%s382 + $0x58] sm:$0xf]
      %v414 = vld [vmem:[%s382 + $0x5c] sm:$0xf]
      %v415 = vld [vmem:[%s382 + $0x60] sm:$0xf]
      %v416 = vld [vmem:[%s382 + $0x64] sm:$0xf]
      %v417 = vld [vmem:[%s382 + $0x68] sm:$0xf]
      %v418 = vld [vmem:[%s382 + $0x6c] sm:$0xf]
      %v419 = vld [vmem:[%s382 + $0x70] sm:$0xf]
      %v420 = vld [vmem:[%s382 + $0x74] sm:$0xf]
      %v421 = vld [vmem:[%s382 + $0x78] sm:$0xf]
      %v422 = vld [vmem:[%s382 + $0x7c] sm:$0xf]
      %v423 = vunpack.c.l.bf16 %v391
      %v424 = vunpack.c.l.bf16 %v392
      %v425 = vunpack.c.l.bf16 %v393
      %v426 = vunpack.c.l.bf16 %v394
      %v427 = vunpack.c.l.bf16 %v395
      %v428 = vunpack.c.l.bf16 %v396
      %v429 = vunpack.c.l.bf16 %v397
      %v430 = vunpack.c.l.bf16 %v398
      %v431 = vunpack.c.l.bf16 %v399
      %v432 = vunpack.c.l.bf16 %v400
      %v433 = vunpack.c.l.bf16 %v401
      %v434 = vunpack.c.l.bf16 %v402
      %v435 = vunpack.c.l.bf16 %v403
      %v436 = vunpack.c.l.bf16 %v404
      %v437 = vunpack.c.l.bf16 %v405
      %v438 = vunpack.c.l.bf16 %v406
      %v439 = vunpack.c.l.bf16 %v407
      %v440 = vunpack.c.l.bf16 %v408
      %v441 = vunpack.c.l.bf16 %v409
      %v442 = vunpack.c.l.bf16 %v410
      %v443 = vunpack.c.l.bf16 %v411
      %v444 = vunpack.c.l.bf16 %v412
      %v445 = vunpack.c.l.bf16 %v413
      %v446 = vunpack.c.l.bf16 %v414
      %v447 = vunpack.c.l.bf16 %v415
      %v448 = vunpack.c.l.bf16 %v416
      %v449 = vunpack.c.l.bf16 %v417
      %v450 = vunpack.c.l.bf16 %v418
      %v451 = vunpack.c.l.bf16 %v419
      %v452 = vunpack.c.l.bf16 %v420
      %v453 = vunpack.c.l.bf16 %v421
      %v454 = vunpack.c.l.bf16 %v422
      %v455 = vld [vmem:[%s1] sm:$0x1]
      %v456 = vld [vmem:[%s2] sm:$0x1]
      %vm457 = vcmask 261120
      %v458 = vsel %vm457, %v423, 0.0
      %459 = vadd.xlane.f32.xlu0 %v458
      %v460 = vpop.xlane.xlu0 %459
      %v461 = vsel %vm457, %v424, 0.0
      %462 = vadd.xlane.f32.xlu0 %v461
      %v463 = vpop.xlane.xlu0 %462
      %v464 = vsel %vm457, %v425, 0.0
      %465 = vadd.xlane.f32.xlu0 %v464
      %v466 = vpop.xlane.xlu0 %465
      %v467 = vsel %vm457, %v426, 0.0
      %468 = vadd.xlane.f32.xlu0 %v467
      %v469 = vpop.xlane.xlu0 %468
      %v470 = vsel %vm457, %v427, 0.0
      %471 = vadd.xlane.f32.xlu0 %v470
      %v472 = vpop.xlane.xlu0 %471
      %v473 = vsel %vm457, %v428, 0.0
      %474 = vadd.xlane.f32.xlu0 %v473
      %v475 = vpop.xlane.xlu0 %474
      %v476 = vsel %vm457, %v429, 0.0
      %477 = vadd.xlane.f32.xlu0 %v476
      %v478 = vpop.xlane.xlu0 %477
      %v479 = vsel %vm457, %v430, 0.0
      %480 = vadd.xlane.f32.xlu0 %v479
      %v481 = vpop.xlane.xlu0 %480
      %v482 = vsel %vm457, %v431, 0.0
      %483 = vadd.xlane.f32.xlu0 %v482
      %v484 = vpop.xlane.xlu0 %483
      %v485 = vsel %vm457, %v432, 0.0
      %486 = vadd.xlane.f32.xlu0 %v485
      %v487 = vpop.xlane.xlu0 %486
      %v488 = vsel %vm457, %v433, 0.0
      %489 = vadd.xlane.f32.xlu0 %v488
      %v490 = vpop.xlane.xlu0 %489
      %v491 = vsel %vm457, %v434, 0.0
      %492 = vadd.xlane.f32.xlu0 %v491
      %v493 = vpop.xlane.xlu0 %492
      %v494 = vsel %vm457, %v435, 0.0
      %495 = vadd.xlane.f32.xlu0 %v494
      %v496 = vpop.xlane.xlu0 %495
      %v497 = vsel %vm457, %v436, 0.0
      %498 = vadd.xlane.f32.xlu0 %v497
      %v499 = vpop.xlane.xlu0 %498
      %v500 = vsel %vm457, %v437, 0.0
      %501 = vadd.xlane.f32.xlu0 %v500
      %v502 = vpop.xlane.xlu0 %501
      %v503 = vsel %vm457, %v438, 0.0
      %504 = vadd.xlane.f32.xlu0 %v503
      %v505 = vpop.xlane.xlu0 %504
      %v506 = vsel %vm457, %v439, 0.0
      %507 = vadd.xlane.f32.xlu0 %v506
      %v508 = vpop.xlane.xlu0 %507
      %v509 = vsel %vm457, %v440, 0.0
      %510 = vadd.xlane.f32.xlu0 %v509
      %v511 = vpop.xlane.xlu0 %510
      %v512 = vsel %vm457, %v441, 0.0
      %513 = vadd.xlane.f32.xlu0 %v512
      %v514 = vpop.xlane.xlu0 %513
      %v515 = vsel %vm457, %v442, 0.0
      %516 = vadd.xlane.f32.xlu0 %v515
      %v517 = vpop.xlane.xlu0 %516
      %v518 = vsel %vm457, %v443, 0.0
      %519 = vadd.xlane.f32.xlu0 %v518
      %v520 = vpop.xlane.xlu0 %519
      %v521 = vsel %vm457, %v444, 0.0
      %522 = vadd.xlane.f32.xlu0 %v521
      %v523 = vpop.xlane.xlu0 %522
      %v524 = vsel %vm457, %v445, 0.0
      %525 = vadd.xlane.f32.xlu0 %v524
      %v526 = vpop.xlane.xlu0 %525
      %v527 = vsel %vm457, %v446, 0.0
      %528 = vadd.xlane.f32.xlu0 %v527
      %v529 = vpop.xlane.xlu0 %528
      %v530 = vsel %vm457, %v447, 0.0
      %531 = vadd.xlane.f32.xlu0 %v530
      %v532 = vpop.xlane.xlu0 %531
      %v533 = vsel %vm457, %v448, 0.0
      %534 = vadd.xlane.f32.xlu0 %v533
      %v535 = vpop.xlane.xlu0 %534
      %v536 = vsel %vm457, %v449, 0.0
      %537 = vadd.xlane.f32.xlu0 %v536
      %v538 = vpop.xlane.xlu0 %537
      %v539 = vsel %vm457, %v450, 0.0
      %540 = vadd.xlane.f32.xlu0 %v539
      %v541 = vpop.xlane.xlu0 %540
      %v542 = vsel %vm457, %v451, 0.0
      %543 = vadd.xlane.f32.xlu0 %v542
      %v544 = vpop.xlane.xlu0 %543
      %v545 = vsel %vm457, %v452, 0.0
      %546 = vadd.xlane.f32.xlu0 %v545
      %v547 = vpop.xlane.xlu0 %546
      %v548 = vsel %vm457, %v453, 0.0
      %549 = vadd.xlane.f32.xlu0 %v548
      %v550 = vpop.xlane.xlu0 %549
      %v551 = vsel %vm457, %v454, 0.0
      %552 = vadd.xlane.f32.xlu0 %v551
      %v553 = vpop.xlane.xlu0 %552
      %v554 = vrcp.pop 32.0
      %v555 = vmul.f32 %v460, %v554
      %v556 = vmul.f32 %v463, %v554
      %v557 = vmul.f32 %v466, %v554
      %v558 = vmul.f32 %v469, %v554
      %v559 = vmul.f32 %v472, %v554
      %v560 = vmul.f32 %v475, %v554
      %v561 = vmul.f32 %v478, %v554
      %v562 = vmul.f32 %v481, %v554
      %v563 = vmul.f32 %v484, %v554
      %v564 = vmul.f32 %v487, %v554
      %v565 = vmul.f32 %v490, %v554
      %v566 = vmul.f32 %v493, %v554
      %v567 = vmul.f32 %v496, %v554
      %v568 = vmul.f32 %v499, %v554
      %v569 = vmul.f32 %v502, %v554
      %v570 = vmul.f32 %v505, %v554
      %v571 = vmul.f32 %v508, %v554
      %v572 = vmul.f32 %v511, %v554
      %v573 = vmul.f32 %v514, %v554
      %v574 = vmul.f32 %v517, %v554
      %v575 = vmul.f32 %v520, %v554
      %v576 = vmul.f32 %v523, %v554
      %v577 = vmul.f32 %v526, %v554
      %v578 = vmul.f32 %v529, %v554
      %v579 = vmul.f32 %v532, %v554
      %v580 = vmul.f32 %v535, %v554
      %v581 = vmul.f32 %v538, %v554
      %v582 = vmul.f32 %v541, %v554
      %v583 = vmul.f32 %v544, %v554
      %v584 = vmul.f32 %v547, %v554
      %v585 = vmul.f32 %v550, %v554
      %v586 = vmul.f32 %v553, %v554
      %v587 = vsub.f32 %v423, %v555
      %v588 = vsub.f32 %v424, %v556
      %v589 = vsub.f32 %v425, %v557
      %v590 = vsub.f32 %v426, %v558
      %v591 = vsub.f32 %v427, %v559
      %v592 = vsub.f32 %v428, %v560
      %v593 = vsub.f32 %v429, %v561
      %v594 = vsub.f32 %v430, %v562
      %v595 = vsub.f32 %v431, %v563
      %v596 = vsub.f32 %v432, %v564
      %v597 = vsub.f32 %v433, %v565
      %v598 = vsub.f32 %v434, %v566
      %v599 = vsub.f32 %v435, %v567
      %v600 = vsub.f32 %v436, %v568
      %v601 = vsub.f32 %v437, %v569
      %v602 = vsub.f32 %v438, %v570
      %v603 = vsub.f32 %v439, %v571
      %v604 = vsub.f32 %v440, %v572
      %v605 = vsub.f32 %v441, %v573
      %v606 = vsub.f32 %v442, %v574
      %v607 = vsub.f32 %v443, %v575
      %v608 = vsub.f32 %v444, %v576
      %v609 = vsub.f32 %v445, %v577
      %v610 = vsub.f32 %v446, %v578
      %v611 = vsub.f32 %v447, %v579
      %v612 = vsub.f32 %v448, %v580
      %v613 = vsub.f32 %v449, %v581
      %v614 = vsub.f32 %v450, %v582
      %v615 = vsub.f32 %v451, %v583
      %v616 = vsub.f32 %v452, %v584
      %v617 = vsub.f32 %v453, %v585
      %v618 = vsub.f32 %v454, %v586
      %v619 = vmul.f32 %v587, %v587
      %v620 = vmul.f32 %v588, %v588
      %v621 = vmul.f32 %v589, %v589
      %v622 = vmul.f32 %v590, %v590
      %v623 = vmul.f32 %v591, %v591
      %v624 = vmul.f32 %v592, %v592
      %v625 = vmul.f32 %v593, %v593
      %v626 = vmul.f32 %v594, %v594
      %v627 = vmul.f32 %v595, %v595
      %v628 = vmul.f32 %v596, %v596
      %v629 = vmul.f32 %v597, %v597
      %v630 = vmul.f32 %v598, %v598
      %v631 = vmul.f32 %v599, %v599
      %v632 = vmul.f32 %v600, %v600
      %v633 = vmul.f32 %v601, %v601
      %v634 = vmul.f32 %v602, %v602
      %v635 = vmul.f32 %v603, %v603
      %v636 = vmul.f32 %v604, %v604
      %v637 = vmul.f32 %v605, %v605
      %v638 = vmul.f32 %v606, %v606
      %v639 = vmul.f32 %v607, %v607
      %v640 = vmul.f32 %v608, %v608
      %v641 = vmul.f32 %v609, %v609
      %v642 = vmul.f32 %v610, %v610
      %v643 = vmul.f32 %v611, %v611
      %v644 = vmul.f32 %v612, %v612
      %v645 = vmul.f32 %v613, %v613
      %v646 = vmul.f32 %v614, %v614
      %v647 = vmul.f32 %v615, %v615
      %v648 = vmul.f32 %v616, %v616
      %v649 = vmul.f32 %v617, %v617
      %v650 = vmul.f32 %v618, %v618
      %v651 = vsel %vm457, %v619, 0.0
      %652 = vadd.xlane.f32.xlu0 %v651
      %v653 = vpop.xlane.xlu0 %652
      %v654 = vsel %vm457, %v620, 0.0
      %655 = vadd.xlane.f32.xlu0 %v654
      %v656 = vpop.xlane.xlu0 %655
      %v657 = vsel %vm457, %v621, 0.0
      %658 = vadd.xlane.f32.xlu0 %v657
      %v659 = vpop.xlane.xlu0 %658
      %v660 = vsel %vm457, %v622, 0.0
      %661 = vadd.xlane.f32.xlu0 %v660
      %v662 = vpop.xlane.xlu0 %661
      %v663 = vsel %vm457, %v623, 0.0
      %664 = vadd.xlane.f32.xlu0 %v663
      %v665 = vpop.xlane.xlu0 %664
      %v666 = vsel %vm457, %v624, 0.0
      %667 = vadd.xlane.f32.xlu0 %v666
      %v668 = vpop.xlane.xlu0 %667
      %v669 = vsel %vm457, %v625, 0.0
      %670 = vadd.xlane.f32.xlu0 %v669
      %v671 = vpop.xlane.xlu0 %670
      %v672 = vsel %vm457, %v626, 0.0
      %673 = vadd.xlane.f32.xlu0 %v672
      %v674 = vpop.xlane.xlu0 %673
      %v675 = vsel %vm457, %v627, 0.0
      %676 = vadd.xlane.f32.xlu0 %v675
      %v677 = vpop.xlane.xlu0 %676
      %v678 = vsel %vm457, %v628, 0.0
      %679 = vadd.xlane.f32.xlu0 %v678
      %v680 = vpop.xlane.xlu0 %679
      %v681 = vsel %vm457, %v629, 0.0
      %682 = vadd.xlane.f32.xlu0 %v681
      %v683 = vpop.xlane.xlu0 %682
      %v684 = vsel %vm457, %v630, 0.0
      %685 = vadd.xlane.f32.xlu0 %v684
      %v686 = vpop.xlane.xlu0 %685
      %v687 = vsel %vm457, %v631, 0.0
      %688 = vadd.xlane.f32.xlu0 %v687
      %v689 = vpop.xlane.xlu0 %688
      %v690 = vsel %vm457, %v632, 0.0
      %691 = vadd.xlane.f32.xlu0 %v690
      %v692 = vpop.xlane.xlu0 %691
      %v693 = vsel %vm457, %v633, 0.0
      %694 = vadd.xlane.f32.xlu0 %v693
      %v695 = vpop.xlane.xlu0 %694
      %v696 = vsel %vm457, %v634, 0.0
      %697 = vadd.xlane.f32.xlu0 %v696
      %v698 = vpop.xlane.xlu0 %697
      %v699 = vsel %vm457, %v635, 0.0
      %700 = vadd.xlane.f32.xlu0 %v699
      %v701 = vpop.xlane.xlu0 %700
      %v702 = vsel %vm457, %v636, 0.0
      %703 = vadd.xlane.f32.xlu0 %v702
      %v704 = vpop.xlane.xlu0 %703
      %v705 = vsel %vm457, %v637, 0.0
      %706 = vadd.xlane.f32.xlu0 %v705
      %v707 = vpop.xlane.xlu0 %706
      %v708 = vsel %vm457, %v638, 0.0
      %709 = vadd.xlane.f32.xlu0 %v708
      %v710 = vpop.xlane.xlu0 %709
      %v711 = vsel %vm457, %v639, 0.0
      %712 = vadd.xlane.f32.xlu0 %v711
      %v713 = vpop.xlane.xlu0 %712
      %v714 = vsel %vm457, %v640, 0.0
      %715 = vadd.xlane.f32.xlu0 %v714
      %v716 = vpop.xlane.xlu0 %715
      %v717 = vsel %vm457, %v641, 0.0
      %718 = vadd.xlane.f32.xlu0 %v717
      %v719 = vpop.xlane.xlu0 %718
      %v720 = vsel %vm457, %v642, 0.0
      %721 = vadd.xlane.f32.xlu0 %v720
      %v722 = vpop.xlane.xlu0 %721
      %v723 = vsel %vm457, %v643, 0.0
      %724 = vadd.xlane.f32.xlu0 %v723
      %v725 = vpop.xlane.xlu0 %724
      %v726 = vsel %vm457, %v644, 0.0
      %727 = vadd.xlane.f32.xlu0 %v726
      %v728 = vpop.xlane.xlu0 %727
      %v729 = vsel %vm457, %v645, 0.0
      %730 = vadd.xlane.f32.xlu0 %v729
      %v731 = vpop.xlane.xlu0 %730
      %v732 = vsel %vm457, %v646, 0.0
      %733 = vadd.xlane.f32.xlu0 %v732
      %v734 = vpop.xlane.xlu0 %733
      %v735 = vsel %vm457, %v647, 0.0
      %736 = vadd.xlane.f32.xlu0 %v735
      %v737 = vpop.xlane.xlu0 %736
      %v738 = vsel %vm457, %v648, 0.0
      %739 = vadd.xlane.f32.xlu0 %v738
      %v740 = vpop.xlane.xlu0 %739
      %v741 = vsel %vm457, %v649, 0.0
      %742 = vadd.xlane.f32.xlu0 %v741
      %v743 = vpop.xlane.xlu0 %742
      %v744 = vsel %vm457, %v650, 0.0
      %745 = vadd.xlane.f32.xlu0 %v744
      %v746 = vpop.xlane.xlu0 %745
      %v747 = vmul.f32 %v653, %v554
      %v748 = vmul.f32 %v656, %v554
      %v749 = vmul.f32 %v659, %v554
      %v750 = vmul.f32 %v662, %v554
      %v751 = vmul.f32 %v665, %v554
      %v752 = vmul.f32 %v668, %v554
      %v753 = vmul.f32 %v671, %v554
      %v754 = vmul.f32 %v674, %v554
      %v755 = vmul.f32 %v677, %v554
      %v756 = vmul.f32 %v680, %v554
      %v757 = vmul.f32 %v683, %v554
      %v758 = vmul.f32 %v686, %v554
      %v759 = vmul.f32 %v689, %v554
      %v760 = vmul.f32 %v692, %v554
      %v761 = vmul.f32 %v695, %v554
      %v762 = vmul.f32 %v698, %v554
      %v763 = vmul.f32 %v701, %v554
      %v764 = vmul.f32 %v704, %v554
      %v765 = vmul.f32 %v707, %v554
      %v766 = vmul.f32 %v710, %v554
      %v767 = vmul.f32 %v713, %v554
      %v768 = vmul.f32 %v716, %v554
      %v769 = vmul.f32 %v719, %v554
      %v770 = vmul.f32 %v722, %v554
      %v771 = vmul.f32 %v725, %v554
      %v772 = vmul.f32 %v728, %v554
      %v773 = vmul.f32 %v731, %v554
      %v774 = vmul.f32 %v734, %v554
      %v775 = vmul.f32 %v737, %v554
      %v776 = vmul.f32 %v740, %v554
      %v777 = vmul.f32 %v743, %v554
      %v778 = vmul.f32 %v746, %v554
      %v779 = vadd.f32 %v747, 1e-05
      %v780 = vadd.f32 %v748, 1e-05
      %v781 = vadd.f32 %v749, 1e-05
      %v782 = vadd.f32 %v750, 1e-05
      %v783 = vadd.f32 %v751, 1e-05
      %v784 = vadd.f32 %v752, 1e-05
      %v785 = vadd.f32 %v753, 1e-05
      %v786 = vadd.f32 %v754, 1e-05
      %v787 = vadd.f32 %v755, 1e-05
      %v788 = vadd.f32 %v756, 1e-05
      %v789 = vadd.f32 %v757, 1e-05
      %v790 = vadd.f32 %v758, 1e-05
      %v791 = vadd.f32 %v759, 1e-05
      %v792 = vadd.f32 %v760, 1e-05
      %v793 = vadd.f32 %v761, 1e-05
      %v794 = vadd.f32 %v762, 1e-05
      %v795 = vadd.f32 %v763, 1e-05
      %v796 = vadd.f32 %v764, 1e-05
      %v797 = vadd.f32 %v765, 1e-05
      %v798 = vadd.f32 %v766, 1e-05
      %v799 = vadd.f32 %v767, 1e-05
      %v800 = vadd.f32 %v768, 1e-05
      %v801 = vadd.f32 %v769, 1e-05
      %v802 = vadd.f32 %v770, 1e-05
      %v803 = vadd.f32 %v771, 1e-05
      %v804 = vadd.f32 %v772, 1e-05
      %v805 = vadd.f32 %v773, 1e-05
      %v806 = vadd.f32 %v774, 1e-05
      %v807 = vadd.f32 %v775, 1e-05
      %v808 = vadd.f32 %v776, 1e-05
      %v809 = vadd.f32 %v777, 1e-05
      %v810 = vadd.f32 %v778, 1e-05
      %v811 = vrsqrt.pop %v779
      %v812 = vrsqrt.pop %v780
      %v813 = vrsqrt.pop %v781
      %v814 = vrsqrt.pop %v782
      %v815 = vrsqrt.pop %v783
      %v816 = vrsqrt.pop %v784
      %v817 = vrsqrt.pop %v785
      %v818 = vrsqrt.pop %v786
      %v819 = vrsqrt.pop %v787
      %v820 = vrsqrt.pop %v788
      %v821 = vrsqrt.pop %v789
      %v822 = vrsqrt.pop %v790
      %v823 = vrsqrt.pop %v791
      %v824 = vrsqrt.pop %v792
      %v825 = vrsqrt.pop %v793
      %v826 = vrsqrt.pop %v794
      %v827 = vrsqrt.pop %v795
      %v828 = vrsqrt.pop %v796
      %v829 = vrsqrt.pop %v797
      %v830 = vrsqrt.pop %v798
      %v831 = vrsqrt.pop %v799
      %v832 = vrsqrt.pop %v800
      %v833 = vrsqrt.pop %v801
      %v834 = vrsqrt.pop %v802
      %v835 = vrsqrt.pop %v803
      %v836 = vrsqrt.pop %v804
      %v837 = vrsqrt.pop %v805
      %v838 = vrsqrt.pop %v806
      %v839 = vrsqrt.pop %v807
      %v840 = vrsqrt.pop %v808
      %v841 = vrsqrt.pop %v809
      %v842 = vrsqrt.pop %v810
      %v843 = vmul.f32 %v587, %v811
      %v844 = vmul.f32 %v588, %v812
      %v845 = vmul.f32 %v589, %v813
      %v846 = vmul.f32 %v590, %v814
      %v847 = vmul.f32 %v591, %v815
      %v848 = vmul.f32 %v592, %v816
      %v849 = vmul.f32 %v593, %v817
      %v850 = vmul.f32 %v594, %v818
      %v851 = vmul.f32 %v595, %v819
      %v852 = vmul.f32 %v596, %v820
      %v853 = vmul.f32 %v597, %v821
      %v854 = vmul.f32 %v598, %v822
      %v855 = vmul.f32 %v599, %v823
      %v856 = vmul.f32 %v600, %v824
      %v857 = vmul.f32 %v601, %v825
      %v858 = vmul.f32 %v602, %v826
      %v859 = vmul.f32 %v603, %v827
      %v860 = vmul.f32 %v604, %v828
      %v861 = vmul.f32 %v605, %v829
      %v862 = vmul.f32 %v606, %v830
      %v863 = vmul.f32 %v607, %v831
      %v864 = vmul.f32 %v608, %v832
      %v865 = vmul.f32 %v609, %v833
      %v866 = vmul.f32 %v610, %v834
      %v867 = vmul.f32 %v611, %v835
      %v868 = vmul.f32 %v612, %v836
      %v869 = vmul.f32 %v613, %v837
      %v870 = vmul.f32 %v614, %v838
      %v871 = vmul.f32 %v615, %v839
      %v872 = vmul.f32 %v616, %v840
      %v873 = vmul.f32 %v617, %v841
      %v874 = vmul.f32 %v618, %v842
      %v876 = vlaneseq
      %v877 = vshrl.u32 %v876, 7
      %v878 = vsub.s32 0, %v877
      %v879 = vrot.slane %v455, %v878
      %v881 = vmul.f32 %v843, %v879
      %v882 = vmul.f32 %v844, %v879
      %v883 = vmul.f32 %v845, %v879
      %v884 = vmul.f32 %v846, %v879
      %v885 = vmul.f32 %v847, %v879
      %v886 = vmul.f32 %v848, %v879
      %v887 = vmul.f32 %v849, %v879
      %v888 = vmul.f32 %v850, %v879
      %v889 = vmul.f32 %v851, %v879
      %v890 = vmul.f32 %v852, %v879
      %v891 = vmul.f32 %v853, %v879
      %v892 = vmul.f32 %v854, %v879
      %v893 = vmul.f32 %v855, %v879
      %v894 = vmul.f32 %v856, %v879
      %v895 = vmul.f32 %v857, %v879
      %v896 = vmul.f32 %v858, %v879
      %v897 = vmul.f32 %v859, %v879
      %v898 = vmul.f32 %v860, %v879
      %v899 = vmul.f32 %v861, %v879
      %v900 = vmul.f32 %v862, %v879
      %v901 = vmul.f32 %v863, %v879
      %v902 = vmul.f32 %v864, %v879
      %v903 = vmul.f32 %v865, %v879
      %v904 = vmul.f32 %v866, %v879
      %v905 = vmul.f32 %v867, %v879
      %v906 = vmul.f32 %v868, %v879
      %v907 = vmul.f32 %v869, %v879
      %v908 = vmul.f32 %v870, %v879
      %v909 = vmul.f32 %v871, %v879
      %v910 = vmul.f32 %v872, %v879
      %v911 = vmul.f32 %v873, %v879
      %v912 = vmul.f32 %v874, %v879
      %v914 = vlaneseq
      %v915 = vshrl.u32 %v914, 7
      %v916 = vsub.s32 0, %v915
      %v917 = vrot.slane %v456, %v916
      %v919 = vadd.f32 %v881, %v917
      %v920 = vadd.f32 %v882, %v917
      %v921 = vadd.f32 %v883, %v917
      %v922 = vadd.f32 %v884, %v917
      %v923 = vadd.f32 %v885, %v917
      %v924 = vadd.f32 %v886, %v917
      %v925 = vadd.f32 %v887, %v917
      %v926 = vadd.f32 %v888, %v917
      %v927 = vadd.f32 %v889, %v917
      %v928 = vadd.f32 %v890, %v917
      %v929 = vadd.f32 %v891, %v917
      %v930 = vadd.f32 %v892, %v917
      %v931 = vadd.f32 %v893, %v917
      %v932 = vadd.f32 %v894, %v917
      %v933 = vadd.f32 %v895, %v917
      %v934 = vadd.f32 %v896, %v917
      %v935 = vadd.f32 %v897, %v917
      %v936 = vadd.f32 %v898, %v917
      %v937 = vadd.f32 %v899, %v917
      %v938 = vadd.f32 %v900, %v917
      %v939 = vadd.f32 %v901, %v917
      %v940 = vadd.f32 %v902, %v917
      %v941 = vadd.f32 %v903, %v917
      %v942 = vadd.f32 %v904, %v917
      %v943 = vadd.f32 %v905, %v917
      %v944 = vadd.f32 %v906, %v917
      %v945 = vadd.f32 %v907, %v917
      %v946 = vadd.f32 %v908, %v917
      %v947 = vadd.f32 %v909, %v917
      %v948 = vadd.f32 %v910, %v917
      %v949 = vadd.f32 %v911, %v917
      %v950 = vadd.f32 %v912, %v917
      %v951 = vpack.c.bf16 %v920, %v919
      %v952 = vpack.c.bf16 %v922, %v921
      %v953 = vpack.c.bf16 %v924, %v923
      %v954 = vpack.c.bf16 %v926, %v925
      %v955 = vpack.c.bf16 %v928, %v927
      %v956 = vpack.c.bf16 %v930, %v929
      %v957 = vpack.c.bf16 %v932, %v931
      %v958 = vpack.c.bf16 %v934, %v933
      %v959 = vpack.c.bf16 %v936, %v935
      %v960 = vpack.c.bf16 %v938, %v937
      %v961 = vpack.c.bf16 %v940, %v939
      %v962 = vpack.c.bf16 %v942, %v941
      %v963 = vpack.c.bf16 %v944, %v943
      %v964 = vpack.c.bf16 %v946, %v945
      %v965 = vpack.c.bf16 %v948, %v947
      %v966 = vpack.c.bf16 %v950, %v949
      %v967 = vld [vmem:[%s5] sm:$0xf]
      %v968 = vld [vmem:[%s5 + $0x4] sm:$0xf]
      %v969 = vld [vmem:[%s5 + $0x8] sm:$0xf]
      %v970 = vld [vmem:[%s5 + $0xc] sm:$0xf]
      %v971 = vld [vmem:[%s6] sm:$0x1]
      %v973 = vlaneseq
      %v974 = vshrl.u32 %v973, 7
      %v975 = vsub.s32 0, %v974
      %v976 = vrot.slane %v971, %v975
      %v982 = vunpack.c.l.b16 %v967
      %v983 = vunpack.c.l.b16 %v968
      %v984 = vunpack.c.l.b16 %v969
      %v985 = vunpack.c.l.b16 %v970
      %v986 = vpack.c.b16 %v983, %v982
      %v987 = vpack.c.b16 %v985, %v984
      %v991 = vsel %vm457, %v951, 0
      %v994 = vsel %vm457, %v952, 0
      %v997 = vsel %vm457, %v953, 0
      %v1000 = vsel %vm457, %v954, 0
      %v1003 = vsel %vm457, %v955, 0
      %v1006 = vsel %vm457, %v956, 0
      %v1009 = vsel %vm457, %v957, 0
      %v1012 = vsel %vm457, %v958, 0
      %v1015 = vsel %vm457, %v959, 0
      %v1018 = vsel %vm457, %v960, 0
      %v1021 = vsel %vm457, %v961, 0
      %v1024 = vsel %vm457, %v962, 0
      %v1027 = vsel %vm457, %v963, 0
      %v1030 = vsel %vm457, %v964, 0
      %v1033 = vsel %vm457, %v965, 0
      %v1036 = vsel %vm457, %v966, 0
      %1038 = vmatprep.subr.bf16.mxu0 0
      %1039 = vmatpush1.bf16.msra.mxu0 %v986
      %1040 = vmatprep.subr.bf16.mxu0 0
      %1041 = vmatpush1.bf16.msra.mxu0 %v987
      %1042 = vmatprep.subr.bf16.mxu0 0
      %1043 = vmatpush1.bf16.msra.mxu0 0
      %1044 = vmatprep.subr.bf16.mxu0 0
      %1045 = vmatpush1.bf16.msra.mxu0 0
      %1046 = vmatprep.subr.bf16.mxu0 0
      %1047 = vmatpush1.bf16.msra.mxu0 0
      %1048 = vmatprep.subr.bf16.mxu0 0
      %1049 = vmatpush1.bf16.msra.mxu0 0
      %1050 = vmatprep.subr.bf16.mxu0 0
      %1051 = vmatpush1.bf16.msra.mxu0 0
      %1052 = vmatprep.subr.bf16.mxu0 0
      %1053 = vmatpush1.bf16.msra.mxu0 0
      %1054 = vmatprep.subr.bf16.mxu0 0
      %1055 = vmatpush1.bf16.msra.mxu0 0
      %1056 = vmatprep.subr.bf16.mxu0 0
      %1057 = vmatpush1.bf16.msra.mxu0 0
      %1058 = vmatprep.subr.bf16.mxu0 0
      %1059 = vmatpush1.bf16.msra.mxu0 0
      %1060 = vmatprep.subr.bf16.mxu0 0
      %1061 = vmatpush1.bf16.msra.mxu0 0
      %1062 = vmatprep.subr.bf16.mxu0 0
      %1063 = vmatpush1.bf16.msra.mxu0 0
      %1064 = vmatprep.subr.bf16.mxu0 0
      %1065 = vmatpush1.bf16.msra.mxu0 0
      %1066 = vmatprep.subr.bf16.mxu0 0
      %1067 = vmatpush1.bf16.msra.mxu0 0
      %1068 = vmatprep.subr.bf16.mxu0 0
      %1069 = vmatpush1.bf16.msra.mxu0 0
      %1070 = vmatprep.mubr.bf16.mxu0 0
      %1071 = vmatmul.mubr.bf16.gmra.mrb[0].mxu0 %v991
      %v1072 = vpop.f32.mrb[0].mxu0
      %v1073 = vadd.f32 %v976, %v1072
      %v1074 = vpop.f32.mrb[0].mxu0
      %v1075 = vpop.f32.mrb[0].mxu0
      %v1076 = vadd.f32 %v976, %v1075
      %v1077 = vpop.f32.mrb[0].mxu0
      %1078 = vmatprep.mubr.bf16.mxu0 0
      %1079 = vmatmul.mubr.bf16.gmra.mrb[0].mxu0 %v994
      %v1080 = vpop.f32.mrb[0].mxu0
      %v1081 = vadd.f32 %v976, %v1080
      %v1082 = vpop.f32.mrb[0].mxu0
      %v1083 = vpop.f32.mrb[0].mxu0
      %v1084 = vadd.f32 %v976, %v1083
      %v1085 = vpop.f32.mrb[0].mxu0
      %1086 = vmatprep.mubr.bf16.mxu0 0
      %1087 = vmatmul.mubr.bf16.gmra.mrb[0].mxu0 %v997
      %v1088 = vpop.f32.mrb[0].mxu0
      %v1089 = vadd.f32 %v976, %v1088
      %v1090 = vpop.f32.mrb[0].mxu0
      %v1091 = vpop.f32.mrb[0].mxu0
      %v1092 = vadd.f32 %v976, %v1091
      %v1093 = vpop.f32.mrb[0].mxu0
      %1094 = vmatprep.mubr.bf16.mxu0 0
      %1095 = vmatmul.mubr.bf16.gmra.mrb[0].mxu0 %v1000
      %v1096 = vpop.f32.mrb[0].mxu0
      %v1097 = vadd.f32 %v976, %v1096
      %v1098 = vpop.f32.mrb[0].mxu0
      %v1099 = vpop.f32.mrb[0].mxu0
      %v1100 = vadd.f32 %v976, %v1099
      %v1101 = vpop.f32.mrb[0].mxu0
      %1102 = vmatprep.mubr.bf16.mxu0 0
      %1103 = vmatmul.mubr.bf16.gmra.mrb[0].mxu0 %v1003
      %v1104 = vpop.f32.mrb[0].mxu0
      %v1105 = vadd.f32 %v976, %v1104
      %v1106 = vpop.f32.mrb[0].mxu0
      %v1107 = vpop.f32.mrb[0].mxu0
      %v1108 = vadd.f32 %v976, %v1107
      %v1109 = vpop.f32.mrb[0].mxu0
      %1110 = vmatprep.mubr.bf16.mxu0 0
      %1111 = vmatmul.mubr.bf16.gmra.mrb[0].mxu0 %v1006
      %v1112 = vpop.f32.mrb[0].mxu0
      %v1113 = vadd.f32 %v976, %v1112
      %v1114 = vpop.f32.mrb[0].mxu0
      %v1115 = vpop.f32.mrb[0].mxu0
      %v1116 = vadd.f32 %v976, %v1115
      %v1117 = vpop.f32.mrb[0].mxu0
      %1118 = vmatprep.mubr.bf16.mxu0 0
      %1119 = vmatmul.mubr.bf16.gmra.mrb[0].mxu0 %v1009
      %v1120 = vpop.f32.mrb[0].mxu0
      %v1121 = vadd.f32 %v976, %v1120
      %v1122 = vpop.f32.mrb[0].mxu0
      %v1123 = vpop.f32.mrb[0].mxu0
      %v1124 = vadd.f32 %v976, %v1123
      %v1125 = vpop.f32.mrb[0].mxu0
      %1126 = vmatprep.mubr.bf16.mxu0 0
      %1127 = vmatmul.mubr.bf16.gmra.mrb[0].mxu0 %v1012
      %v1128 = vpop.f32.mrb[0].mxu0
      %v1129 = vadd.f32 %v976, %v1128
      %v1130 = vpop.f32.mrb[0].mxu0
      %v1131 = vpop.f32.mrb[0].mxu0
      %v1132 = vadd.f32 %v976, %v1131
      %v1133 = vpop.f32.mrb[0].mxu0
      %1134 = vmatprep.mubr.bf16.mxu0 0
      %1135 = vmatmul.mubr.bf16.gmra.mrb[0].mxu0 %v1015
      %v1136 = vpop.f32.mrb[0].mxu0
      %v1137 = vadd.f32 %v976, %v1136
      %v1138 = vpop.f32.mrb[0].mxu0
      %v1139 = vpop.f32.mrb[0].mxu0
      %v1140 = vadd.f32 %v976, %v1139
      %v1141 = vpop.f32.mrb[0].mxu0
      %1142 = vmatprep.mubr.bf16.mxu0 0
      %1143 = vmatmul.mubr.bf16.gmra.mrb[0].mxu0 %v1018
      %v1144 = vpop.f32.mrb[0].mxu0
      %v1145 = vadd.f32 %v976, %v1144
      %v1146 = vpop.f32.mrb[0].mxu0
      %v1147 = vpop.f32.mrb[0].mxu0
      %v1148 = vadd.f32 %v976, %v1147
      %v1149 = vpop.f32.mrb[0].mxu0
      %1150 = vmatprep.mubr.bf16.mxu0 0
      %1151 = vmatmul.mubr.bf16.gmra.mrb[0].mxu0 %v1021
      %v1152 = vpop.f32.mrb[0].mxu0
      %v1153 = vadd.f32 %v976, %v1152
      %v1154 = vpop.f32.mrb[0].mxu0
      %v1155 = vpop.f32.mrb[0].mxu0
      %v1156 = vadd.f32 %v976, %v1155
      %v1157 = vpop.f32.mrb[0].mxu0
      %1158 = vmatprep.mubr.bf16.mxu0 0
      %1159 = vmatmul.mubr.bf16.gmra.mrb[0].mxu0 %v1024
      %v1160 = vpop.f32.mrb[0].mxu0
      %v1161 = vadd.f32 %v976, %v1160
      %v1162 = vpop.f32.mrb[0].mxu0
      %v1163 = vpop.f32.mrb[0].mxu0
      %v1164 = vadd.f32 %v976, %v1163
      %v1165 = vpop.f32.mrb[0].mxu0
      %1166 = vmatprep.mubr.bf16.mxu0 0
      %1167 = vmatmul.mubr.bf16.gmra.mrb[0].mxu0 %v1027
      %v1168 = vpop.f32.mrb[0].mxu0
      %v1169 = vadd.f32 %v976, %v1168
      %v1170 = vpop.f32.mrb[0].mxu0
      %v1171 = vpop.f32.mrb[0].mxu0
      %v1172 = vadd.f32 %v976, %v1171
      %v1173 = vpop.f32.mrb[0].mxu0
      %1174 = vmatprep.mubr.bf16.mxu0 0
      %1175 = vmatmul.mubr.bf16.gmra.mrb[0].mxu0 %v1030
      %v1176 = vpop.f32.mrb[0].mxu0
      %v1177 = vadd.f32 %v976, %v1176
      %v1178 = vpop.f32.mrb[0].mxu0
      %v1179 = vpop.f32.mrb[0].mxu0
      %v1180 = vadd.f32 %v976, %v1179
      %v1181 = vpop.f32.mrb[0].mxu0
      %1182 = vmatprep.mubr.bf16.mxu0 0
      %1183 = vmatmul.mubr.bf16.gmra.mrb[0].mxu0 %v1033
      %v1184 = vpop.f32.mrb[0].mxu0
      %v1185 = vadd.f32 %v976, %v1184
      %v1186 = vpop.f32.mrb[0].mxu0
      %v1187 = vpop.f32.mrb[0].mxu0
      %v1188 = vadd.f32 %v976, %v1187
      %v1189 = vpop.f32.mrb[0].mxu0
      %1190 = vmatprep.mubr.bf16.mxu0 0
      %1191 = vmatmul.mubr.bf16.gmra.mrb[0].mxu0 %v1036
      %v1192 = vpop.f32.mrb[0].mxu0
      %v1193 = vadd.f32 %v976, %v1192
      %v1194 = vpop.f32.mrb[0].mxu0
      %v1195 = vpop.f32.mrb[0].mxu0
      %v1196 = vadd.f32 %v976, %v1195
      %v1197 = vpop.f32.mrb[0].mxu0
      %1198 = vdwg.mxu0
      %v1199 = vpack.c.bf16 %v919, %v919
      %v1200 = vpack.c.bf16 %v920, %v920
      %v1201 = vpack.c.bf16 %v921, %v921
      %v1202 = vpack.c.bf16 %v922, %v922
      %v1203 = vpack.c.bf16 %v923, %v923
      %v1204 = vpack.c.bf16 %v924, %v924
      %v1205 = vpack.c.bf16 %v925, %v925
      %v1206 = vpack.c.bf16 %v926, %v926
      %v1207 = vpack.c.bf16 %v927, %v927
      %v1208 = vpack.c.bf16 %v928, %v928
      %v1209 = vpack.c.bf16 %v929, %v929
      %v1210 = vpack.c.bf16 %v930, %v930
      %v1211 = vpack.c.bf16 %v931, %v931
      %v1212 = vpack.c.bf16 %v932, %v932
      %v1213 = vpack.c.bf16 %v933, %v933
      %v1214 = vpack.c.bf16 %v934, %v934
      %v1215 = vpack.c.bf16 %v935, %v935
      %v1216 = vpack.c.bf16 %v936, %v936
      %v1217 = vpack.c.bf16 %v937, %v937
      %v1218 = vpack.c.bf16 %v938, %v938
      %v1219 = vpack.c.bf16 %v939, %v939
      %v1220 = vpack.c.bf16 %v940, %v940
      %v1221 = vpack.c.bf16 %v941, %v941
      %v1222 = vpack.c.bf16 %v942, %v942
      %v1223 = vpack.c.bf16 %v943, %v943
      %v1224 = vpack.c.bf16 %v944, %v944
      %v1225 = vpack.c.bf16 %v945, %v945
      %v1226 = vpack.c.bf16 %v946, %v946
      %v1227 = vpack.c.bf16 %v947, %v947
      %v1228 = vpack.c.bf16 %v948, %v948
      %v1229 = vpack.c.bf16 %v949, %v949
      %v1230 = vpack.c.bf16 %v950, %v950
      %v1231 = vld [vmem:[%s3] sm:$0xf]
      %v1232 = vld [vmem:[%s3 + $0x4] sm:$0xf]
      %v1233 = vld [vmem:[%s3 + $0x8] sm:$0xf]
      %v1234 = vld [vmem:[%s3 + $0xc] sm:$0xf]
      %v1235 = vld [vmem:[%s4] sm:$0x1]
      %v1237 = vlaneseq
      %v1238 = vshrl.u32 %v1237, 7
      %v1239 = vsub.s32 0, %v1238
      %v1240 = vrot.slane %v1235, %v1239
      %v1274 = vunpack.c.l.b16 %v1199
      %v1275 = vunpack.c.l.b16 %v1200
      %v1276 = vunpack.c.l.b16 %v1201
      %v1277 = vunpack.c.l.b16 %v1202
      %v1278 = vunpack.c.l.b16 %v1203
      %v1279 = vunpack.c.l.b16 %v1204
      %v1280 = vunpack.c.l.b16 %v1205
      %v1281 = vunpack.c.l.b16 %v1206
      %v1282 = vunpack.c.l.b16 %v1207
      %v1283 = vunpack.c.l.b16 %v1208
      %v1284 = vunpack.c.l.b16 %v1209
      %v1285 = vunpack.c.l.b16 %v1210
      %v1286 = vunpack.c.l.b16 %v1211
      %v1287 = vunpack.c.l.b16 %v1212
      %v1288 = vunpack.c.l.b16 %v1213
      %v1289 = vunpack.c.l.b16 %v1214
      %v1290 = vunpack.c.l.b16 %v1215
      %v1291 = vunpack.c.l.b16 %v1216
      %v1292 = vunpack.c.l.b16 %v1217
      %v1293 = vunpack.c.l.b16 %v1218
      %v1294 = vunpack.c.l.b16 %v1219
      %v1295 = vunpack.c.l.b16 %v1220
      %v1296 = vunpack.c.l.b16 %v1221
      %v1297 = vunpack.c.l.b16 %v1222
      %v1298 = vunpack.c.l.b16 %v1223
      %v1299 = vunpack.c.l.b16 %v1224
      %v1300 = vunpack.c.l.b16 %v1225
      %v1301 = vunpack.c.l.b16 %v1226
      %v1302 = vunpack.c.l.b16 %v1227
      %v1303 = vunpack.c.l.b16 %v1228
      %v1304 = vunpack.c.l.b16 %v1229
      %v1305 = vunpack.c.l.b16 %v1230
      %v1306 = vrot.slane %v1274, 4
      %v1307 = vrot.slane %v1275, 3
      %vm1308 = vcmask 1041409
      %v1309 = vsel %vm1308, %v1307, %v1306
      %v1310 = vrot.slane %v1276, 2
      %vm1311 = vcmask 1042434
      %v1312 = vsel %vm1311, %v1310, %v1309
      %v1313 = vrot.slane %v1277, 1
      %vm1314 = vcmask 1043459
      %v1315 = vsel %vm1314, %v1313, %v1312
      %vm1316 = vcmask 1044484
      %v1317 = vsel %vm1316, %v1278, %v1315
      %v1318 = vrot.slane %v1279, 7
      %vm1319 = vcmask 1045509
      %v1320 = vsel %vm1319, %v1318, %v1317
      %v1321 = vrot.slane %v1280, 6
      %vm1322 = vcmask 1046534
      %v1323 = vsel %vm1322, %v1321, %v1320
      %v1324 = vrot.slane %v1281, 5
      %vm1325 = vcmask 1047559
      %v1326 = vsel %vm1325, %v1324, %v1323
      %v1327 = vrot.slane %v1282, 4
      %v1328 = vrot.slane %v1283, 3
      %v1329 = vsel %vm1308, %v1328, %v1327
      %v1330 = vrot.slane %v1284, 2
      %v1331 = vsel %vm1311, %v1330, %v1329
      %v1332 = vrot.slane %v1285, 1
      %v1333 = vsel %vm1314, %v1332, %v1331
      %v1334 = vsel %vm1316, %v1286, %v1333
      %v1335 = vrot.slane %v1287, 7
      %v1336 = vsel %vm1319, %v1335, %v1334
      %v1337 = vrot.slane %v1288, 6
      %v1338 = vsel %vm1322, %v1337, %v1336
      %v1339 = vrot.slane %v1289, 5
      %v1340 = vsel %vm1325, %v1339, %v1338
      %v1341 = vrot.slane %v1290, 4
      %v1342 = vrot.slane %v1291, 3
      %v1343 = vsel %vm1308, %v1342, %v1341
      %v1344 = vrot.slane %v1292, 2
      %v1345 = vsel %vm1311, %v1344, %v1343
      %v1346 = vrot.slane %v1293, 1
      %v1347 = vsel %vm1314, %v1346, %v1345
      %v1348 = vsel %vm1316, %v1294, %v1347
      %v1349 = vrot.slane %v1295, 7
      %v1350 = vsel %vm1319, %v1349, %v1348
      %v1351 = vrot.slane %v1296, 6
      %v1352 = vsel %vm1322, %v1351, %v1350
      %v1353 = vrot.slane %v1297, 5
      %v1354 = vsel %vm1325, %v1353, %v1352
      %v1355 = vrot.slane %v1298, 4
      %v1356 = vrot.slane %v1299, 3
      %v1357 = vsel %vm1308, %v1356, %v1355
      %v1358 = vrot.slane %v1300, 2
      %v1359 = vsel %vm1311, %v1358, %v1357
      %v1360 = vrot.slane %v1301, 1
      %v1361 = vsel %vm1314, %v1360, %v1359
      %v1362 = vsel %vm1316, %v1302, %v1361
      %v1363 = vrot.slane %v1303, 7
      %v1364 = vsel %vm1319, %v1363, %v1362
      %v1365 = vrot.slane %v1304, 6
      %v1366 = vsel %vm1322, %v1365, %v1364
      %v1367 = vrot.slane %v1305, 5
      %v1368 = vsel %vm1325, %v1367, %v1366
      %v1369 = vpack.c.b16 %v1340, %v1326
      %v1370 = vpack.c.b16 %v1368, %v1354
      %v1375 = vunpack.c.l.b16 %v1231
      %v1376 = vunpack.c.l.b16 %v1232
      %v1377 = vunpack.c.l.b16 %v1233
      %v1378 = vunpack.c.l.b16 %v1234
      %v1379 = vpack.c.b16 %v1376, %v1375
      %v1380 = vpack.c.b16 %v1378, %v1377
      %v1384 = vsel %vm457, %v1369, 0
      %v1387 = vsel %vm457, %v1370, 0
      %1389 = vmatprep.subr.bf16.mxu0 0
      %1390 = vmatpush1.bf16.msra.mxu0 %v1379
      %1391 = vmatprep.subr.bf16.mxu0 0
      %1392 = vmatpush1.bf16.msra.mxu0 %v1380
      %1393 = vmatprep.subr.bf16.mxu0 0
      %1394 = vmatpush1.bf16.msra.mxu0 0
      %1395 = vmatprep.subr.bf16.mxu0 0
      %1396 = vmatpush1.bf16.msra.mxu0 0
      %1397 = vmatprep.subr.bf16.mxu0 0
      %1398 = vmatpush1.bf16.msra.mxu0 0
      %1399 = vmatprep.subr.bf16.mxu0 0
      %1400 = vmatpush1.bf16.msra.mxu0 0
      %1401 = vmatprep.subr.bf16.mxu0 0
      %1402 = vmatpush1.bf16.msra.mxu0 0
      %1403 = vmatprep.subr.bf16.mxu0 0
      %1404 = vmatpush1.bf16.msra.mxu0 0
      %1405 = vmatprep.subr.bf16.mxu0 0
      %1406 = vmatpush1.bf16.msra.mxu0 0
      %1407 = vmatprep.subr.bf16.mxu0 0
      %1408 = vmatpush1.bf16.msra.mxu0 0
      %1409 = vmatprep.subr.bf16.mxu0 0
      %1410 = vmatpush1.bf16.msra.mxu0 0
      %1411 = vmatprep.subr.bf16.mxu0 0
      %1412 = vmatpush1.bf16.msra.mxu0 0
      %1413 = vmatprep.subr.bf16.mxu0 0
      %1414 = vmatpush1.bf16.msra.mxu0 0
      %1415 = vmatprep.subr.bf16.mxu0 0
      %1416 = vmatpush1.bf16.msra.mxu0 0
      %1417 = vmatprep.subr.bf16.mxu0 0
      %1418 = vmatpush1.bf16.msra.mxu0 0
      %1419 = vmatprep.subr.bf16.mxu0 0
      %1420 = vmatpush1.bf16.msra.mxu0 0
      %1421 = vmatprep.mubr.bf16.mxu0 0
      %1422 = vmatmul.mubr.bf16.gmra.mrb[0].mxu0 %v1384
      %v1423 = vpop.f32.mrb[0].mxu0
      %v1424 = vadd.f32 %v1240, %v1423
      %v1425 = vpop.f32.mrb[0].mxu0
      %v1426 = vpop.f32.mrb[0].mxu0
      %v1427 = vadd.f32 %v1240, %v1426
      %v1428 = vpop.f32.mrb[0].mxu0
      %1429 = vmatprep.mubr.bf16.mxu0 0
      %1430 = vmatmul.mubr.bf16.gmra.mrb[0].mxu0 %v1387
      %v1431 = vpop.f32.mrb[0].mxu0
      %v1432 = vadd.f32 %v1240, %v1431
      %v1433 = vpop.f32.mrb[0].mxu0
      %v1434 = vpop.f32.mrb[0].mxu0
      %v1435 = vadd.f32 %v1240, %v1434
      %v1436 = vpop.f32.mrb[0].mxu0
      %1437 = vdwg.mxu0
      %v1442 = vcombine.high %v1424, %v1424
      %v1444 = vunpack.c.l.s4 1966171168
      %v1445 = vunpack.c.0.s8 %v1444
      %v1446 = vlaneseq
      %v1447 = vshrl.u32 %v1446, 7
      %v1448 = vsub.s32 %v1445, %v1447
      %v1449 = vrot.slane %v1424, %v1448
      %v1451 = vunpack.c.l.s4 1966171168
      %v1452 = vunpack.c.0.s8 %v1451
      %v1453 = vlaneseq
      %v1454 = vshrl.u32 %v1453, 7
      %v1455 = vsub.s32 %v1452, %v1454
      %v1456 = vrot.slane %v1442, %v1455
      %v1457 = vcombine.high %v1449, %v1449
      %v1458 = vcombine.high %v1456, %v1456
      %v1460 = vunpack.c.l.s4 1966171168
      %v1461 = vunpack.c.0.s8 %v1460
      %v1462 = vlaneseq
      %v1463 = vshrl.u32 %v1462, 7
      %v1464 = vsub.s32 %v1461, %v1463
      %v1465 = vrot.slane %v1449, %v1464
      %v1467 = vunpack.c.l.s4 1966171168
      %v1468 = vunpack.c.0.s8 %v1467
      %v1469 = vlaneseq
      %v1470 = vshrl.u32 %v1469, 7
      %v1471 = vsub.s32 %v1468, %v1470
      %v1472 = vrot.slane %v1456, %v1471
      %v1474 = vunpack.c.l.s4 1966171168
      %v1475 = vunpack.c.0.s8 %v1474
      %v1476 = vlaneseq
      %v1477 = vshrl.u32 %v1476, 7
      %v1478 = vsub.s32 %v1475, %v1477
      %v1479 = vrot.slane %v1457, %v1478
      %v1481 = vunpack.c.l.s4 1966171168
      %v1482 = vunpack.c.0.s8 %v1481
      %v1483 = vlaneseq
      %v1484 = vshrl.u32 %v1483, 7
      %v1485 = vsub.s32 %v1482, %v1484
      %v1486 = vrot.slane %v1458, %v1485
      %v1487 = vcombine.high %v1465, %v1465
      %v1488 = vcombine.high %v1472, %v1472
      %v1489 = vcombine.high %v1479, %v1479
      %v1490 = vcombine.high %v1486, %v1486
      %v1491 = vcombine.high %v1427, %v1427
      %v1493 = vunpack.c.l.s4 1966171168
      %v1494 = vunpack.c.0.s8 %v1493
      %v1495 = vlaneseq
      %v1496 = vshrl.u32 %v1495, 7
      %v1497 = vsub.s32 %v1494, %v1496
      %v1498 = vrot.slane %v1427, %v1497
      %v1500 = vunpack.c.l.s4 1966171168
      %v1501 = vunpack.c.0.s8 %v1500
      %v1502 = vlaneseq
      %v1503 = vshrl.u32 %v1502, 7
      %v1504 = vsub.s32 %v1501, %v1503
      %v1505 = vrot.slane %v1491, %v1504
      %v1506 = vcombine.high %v1498, %v1498
      %v1507 = vcombine.high %v1505, %v1505
      %v1509 = vunpack.c.l.s4 1966171168
      %v1510 = vunpack.c.0.s8 %v1509
      %v1511 = vlaneseq
      %v1512 = vshrl.u32 %v1511, 7
      %v1513 = vsub.s32 %v1510, %v1512
      %v1514 = vrot.slane %v1498, %v1513
      %v1516 = vunpack.c.l.s4 1966171168
      %v1517 = vunpack.c.0.s8 %v1516
      %v1518 = vlaneseq
      %v1519 = vshrl.u32 %v1518, 7
      %v1520 = vsub.s32 %v1517, %v1519
      %v1521 = vrot.slane %v1505, %v1520
      %v1523 = vunpack.c.l.s4 1966171168
      %v1524 = vunpack.c.0.s8 %v1523
      %v1525 = vlaneseq
      %v1526 = vshrl.u32 %v1525, 7
      %v1527 = vsub.s32 %v1524, %v1526
      %v1528 = vrot.slane %v1506, %v1527
      %v1530 = vunpack.c.l.s4 1966171168
      %v1531 = vunpack.c.0.s8 %v1530
      %v1532 = vlaneseq
      %v1533 = vshrl.u32 %v1532, 7
      %v1534 = vsub.s32 %v1531, %v1533
      %v1535 = vrot.slane %v1507, %v1534
      %v1536 = vcombine.high %v1514, %v1514
      %v1537 = vcombine.high %v1521, %v1521
      %v1538 = vcombine.high %v1528, %v1528
      %v1539 = vcombine.high %v1535, %v1535
      %v1540 = vcombine.high %v1432, %v1432
      %v1542 = vunpack.c.l.s4 1966171168
      %v1543 = vunpack.c.0.s8 %v1542
      %v1544 = vlaneseq
      %v1545 = vshrl.u32 %v1544, 7
      %v1546 = vsub.s32 %v1543, %v1545
      %v1547 = vrot.slane %v1432, %v1546
      %v1549 = vunpack.c.l.s4 1966171168
      %v1550 = vunpack.c.0.s8 %v1549
      %v1551 = vlaneseq
      %v1552 = vshrl.u32 %v1551, 7
      %v1553 = vsub.s32 %v1550, %v1552
      %v1554 = vrot.slane %v1540, %v1553
      %v1555 = vcombine.high %v1547, %v1547
      %v1556 = vcombine.high %v1554, %v1554
      %v1558 = vunpack.c.l.s4 1966171168
      %v1559 = vunpack.c.0.s8 %v1558
      %v1560 = vlaneseq
      %v1561 = vshrl.u32 %v1560, 7
      %v1562 = vsub.s32 %v1559, %v1561
      %v1563 = vrot.slane %v1547, %v1562
      %v1565 = vunpack.c.l.s4 1966171168
      %v1566 = vunpack.c.0.s8 %v1565
      %v1567 = vlaneseq
      %v1568 = vshrl.u32 %v1567, 7
      %v1569 = vsub.s32 %v1566, %v1568
      %v1570 = vrot.slane %v1554, %v1569
      %v1572 = vunpack.c.l.s4 1966171168
      %v1573 = vunpack.c.0.s8 %v1572
      %v1574 = vlaneseq
      %v1575 = vshrl.u32 %v1574, 7
      %v1576 = vsub.s32 %v1573, %v1575
      %v1577 = vrot.slane %v1555, %v1576
      %v1579 = vunpack.c.l.s4 1966171168
      %v1580 = vunpack.c.0.s8 %v1579
      %v1581 = vlaneseq
      %v1582 = vshrl.u32 %v1581, 7
      %v1583 = vsub.s32 %v1580, %v1582
      %v1584 = vrot.slane %v1556, %v1583
      %v1585 = vcombine.high %v1563, %v1563
      %v1586 = vcombine.high %v1570, %v1570
      %v1587 = vcombine.high %v1577, %v1577
      %v1588 = vcombine.high %v1584, %v1584
      %v1589 = vcombine.high %v1435, %v1435
      %v1591 = vunpack.c.l.s4 1966171168
      %v1592 = vunpack.c.0.s8 %v1591
      %v1593 = vlaneseq
      %v1594 = vshrl.u32 %v1593, 7
      %v1595 = vsub.s32 %v1592, %v1594
      %v1596 = vrot.slane %v1435, %v1595
      %v1598 = vunpack.c.l.s4 1966171168
      %v1599 = vunpack.c.0.s8 %v1598
      %v1600 = vlaneseq
      %v1601 = vshrl.u32 %v1600, 7
      %v1602 = vsub.s32 %v1599, %v1601
      %v1603 = vrot.slane %v1589, %v1602
      %v1604 = vcombine.high %v1596, %v1596
      %v1605 = vcombine.high %v1603, %v1603
      %v1607 = vunpack.c.l.s4 1966171168
      %v1608 = vunpack.c.0.s8 %v1607
      %v1609 = vlaneseq
      %v1610 = vshrl.u32 %v1609, 7
      %v1611 = vsub.s32 %v1608, %v1610
      %v1612 = vrot.slane %v1596, %v1611
      %v1614 = vunpack.c.l.s4 1966171168
      %v1615 = vunpack.c.0.s8 %v1614
      %v1616 = vlaneseq
      %v1617 = vshrl.u32 %v1616, 7
      %v1618 = vsub.s32 %v1615, %v1617
      %v1619 = vrot.slane %v1603, %v1618
      %v1621 = vunpack.c.l.s4 1966171168
      %v1622 = vunpack.c.0.s8 %v1621
      %v1623 = vlaneseq
      %v1624 = vshrl.u32 %v1623, 7
      %v1625 = vsub.s32 %v1622, %v1624
      %v1626 = vrot.slane %v1604, %v1625
      %v1628 = vunpack.c.l.s4 1966171168
      %v1629 = vunpack.c.0.s8 %v1628
      %v1630 = vlaneseq
      %v1631 = vshrl.u32 %v1630, 7
      %v1632 = vsub.s32 %v1629, %v1631
      %v1633 = vrot.slane %v1605, %v1632
      %v1634 = vcombine.high %v1612, %v1612
      %v1635 = vcombine.high %v1619, %v1619
      %v1636 = vcombine.high %v1626, %v1626
      %v1637 = vcombine.high %v1633, %v1633
      %v1638 = vlaneseq
      %v1639 = vshrl.u32 %v1638, 7
      %v1640 = vsub.s32 0, %v1639
      %v1641 = vrot.slane %v1465, %v1640
      %v1642 = vlaneseq
      %v1643 = vshrl.u32 %v1642, 7
      %v1644 = vsub.s32 0, %v1643
      %v1645 = vrot.slane %v1479, %v1644
      %v1646 = vlaneseq
      %v1647 = vshrl.u32 %v1646, 7
      %v1648 = vsub.s32 0, %v1647
      %v1649 = vrot.slane %v1487, %v1648
      %v1650 = vlaneseq
      %v1651 = vshrl.u32 %v1650, 7
      %v1652 = vsub.s32 0, %v1651
      %v1653 = vrot.slane %v1489, %v1652
      %v1654 = vlaneseq
      %v1655 = vshrl.u32 %v1654, 7
      %v1656 = vsub.s32 0, %v1655
      %v1657 = vrot.slane %v1472, %v1656
      %v1658 = vlaneseq
      %v1659 = vshrl.u32 %v1658, 7
      %v1660 = vsub.s32 0, %v1659
      %v1661 = vrot.slane %v1486, %v1660
      %v1662 = vlaneseq
      %v1663 = vshrl.u32 %v1662, 7
      %v1664 = vsub.s32 0, %v1663
      %v1665 = vrot.slane %v1488, %v1664
      %v1666 = vlaneseq
      %v1667 = vshrl.u32 %v1666, 7
      %v1668 = vsub.s32 0, %v1667
      %v1669 = vrot.slane %v1490, %v1668
      %v1670 = vlaneseq
      %v1671 = vshrl.u32 %v1670, 7
      %v1672 = vsub.s32 0, %v1671
      %v1673 = vrot.slane %v1514, %v1672
      %v1674 = vlaneseq
      %v1675 = vshrl.u32 %v1674, 7
      %v1676 = vsub.s32 0, %v1675
      %v1677 = vrot.slane %v1528, %v1676
      %v1678 = vlaneseq
      %v1679 = vshrl.u32 %v1678, 7
      %v1680 = vsub.s32 0, %v1679
      %v1681 = vrot.slane %v1536, %v1680
      %v1682 = vlaneseq
      %v1683 = vshrl.u32 %v1682, 7
      %v1684 = vsub.s32 0, %v1683
      %v1685 = vrot.slane %v1538, %v1684
      %v1686 = vlaneseq
      %v1687 = vshrl.u32 %v1686, 7
      %v1688 = vsub.s32 0, %v1687
      %v1689 = vrot.slane %v1521, %v1688
      %v1690 = vlaneseq
      %v1691 = vshrl.u32 %v1690, 7
      %v1692 = vsub.s32 0, %v1691
      %v1693 = vrot.slane %v1535, %v1692
      %v1694 = vlaneseq
      %v1695 = vshrl.u32 %v1694, 7
      %v1696 = vsub.s32 0, %v1695
      %v1697 = vrot.slane %v1537, %v1696
      %v1698 = vlaneseq
      %v1699 = vshrl.u32 %v1698, 7
      %v1700 = vsub.s32 0, %v1699
      %v1701 = vrot.slane %v1539, %v1700
      %v1702 = vlaneseq
      %v1703 = vshrl.u32 %v1702, 7
      %v1704 = vsub.s32 0, %v1703
      %v1705 = vrot.slane %v1563, %v1704
      %v1706 = vlaneseq
      %v1707 = vshrl.u32 %v1706, 7
      %v1708 = vsub.s32 0, %v1707
      %v1709 = vrot.slane %v1577, %v1708
      %v1710 = vlaneseq
      %v1711 = vshrl.u32 %v1710, 7
      %v1712 = vsub.s32 0, %v1711
      %v1713 = vrot.slane %v1585, %v1712
      %v1714 = vlaneseq
      %v1715 = vshrl.u32 %v1714, 7
      %v1716 = vsub.s32 0, %v1715
      %v1717 = vrot.slane %v1587, %v1716
      %v1718 = vlaneseq
      %v1719 = vshrl.u32 %v1718, 7
      %v1720 = vsub.s32 0, %v1719
      %v1721 = vrot.slane %v1570, %v1720
      %v1722 = vlaneseq
      %v1723 = vshrl.u32 %v1722, 7
      %v1724 = vsub.s32 0, %v1723
      %v1725 = vrot.slane %v1584, %v1724
      %v1726 = vlaneseq
      %v1727 = vshrl.u32 %v1726, 7
      %v1728 = vsub.s32 0, %v1727
      %v1729 = vrot.slane %v1586, %v1728
      %v1730 = vlaneseq
      %v1731 = vshrl.u32 %v1730, 7
      %v1732 = vsub.s32 0, %v1731
      %v1733 = vrot.slane %v1588, %v1732
      %v1734 = vlaneseq
      %v1735 = vshrl.u32 %v1734, 7
      %v1736 = vsub.s32 0, %v1735
      %v1737 = vrot.slane %v1612, %v1736
      %v1738 = vlaneseq
      %v1739 = vshrl.u32 %v1738, 7
      %v1740 = vsub.s32 0, %v1739
      %v1741 = vrot.slane %v1626, %v1740
      %v1742 = vlaneseq
      %v1743 = vshrl.u32 %v1742, 7
      %v1744 = vsub.s32 0, %v1743
      %v1745 = vrot.slane %v1634, %v1744
      %v1746 = vlaneseq
      %v1747 = vshrl.u32 %v1746, 7
      %v1748 = vsub.s32 0, %v1747
      %v1749 = vrot.slane %v1636, %v1748
      %v1750 = vlaneseq
      %v1751 = vshrl.u32 %v1750, 7
      %v1752 = vsub.s32 0, %v1751
      %v1753 = vrot.slane %v1619, %v1752
      %v1754 = vlaneseq
      %v1755 = vshrl.u32 %v1754, 7
      %v1756 = vsub.s32 0, %v1755
      %v1757 = vrot.slane %v1633, %v1756
      %v1758 = vlaneseq
      %v1759 = vshrl.u32 %v1758, 7
      %v1760 = vsub.s32 0, %v1759
      %v1761 = vrot.slane %v1635, %v1760
      %v1762 = vlaneseq
      %v1763 = vshrl.u32 %v1762, 7
      %v1764 = vsub.s32 0, %v1763
      %v1765 = vrot.slane %v1637, %v1764
      %v1798 = vmul.f32 %v1641, %v1073
      %v1799 = vmul.f32 %v1645, %v1076
      %v1800 = vmul.f32 %v1649, %v1081
      %v1801 = vmul.f32 %v1653, %v1084
      %v1802 = vmul.f32 %v1657, %v1089
      %v1803 = vmul.f32 %v1661, %v1092
      %v1804 = vmul.f32 %v1665, %v1097
      %v1805 = vmul.f32 %v1669, %v1100
      %v1806 = vmul.f32 %v1673, %v1105
      %v1807 = vmul.f32 %v1677, %v1108
      %v1808 = vmul.f32 %v1681, %v1113
      %v1809 = vmul.f32 %v1685, %v1116
      %v1810 = vmul.f32 %v1689, %v1121
      %v1811 = vmul.f32 %v1693, %v1124
      %v1812 = vmul.f32 %v1697, %v1129
      %v1813 = vmul.f32 %v1701, %v1132
      %v1814 = vmul.f32 %v1705, %v1137
      %v1815 = vmul.f32 %v1709, %v1140
      %v1816 = vmul.f32 %v1713, %v1145
      %v1817 = vmul.f32 %v1717, %v1148
      %v1818 = vmul.f32 %v1721, %v1153
      %v1819 = vmul.f32 %v1725, %v1156
      %v1820 = vmul.f32 %v1729, %v1161
      %v1821 = vmul.f32 %v1733, %v1164
      %v1822 = vmul.f32 %v1737, %v1169
      %v1823 = vmul.f32 %v1741, %v1172
      %v1824 = vmul.f32 %v1745, %v1177
      %v1825 = vmul.f32 %v1749, %v1180
      %v1826 = vmul.f32 %v1753, %v1185
      %v1827 = vmul.f32 %v1757, %v1188
      %v1828 = vmul.f32 %v1761, %v1193
      %v1829 = vmul.f32 %v1765, %v1196
      %v1830 = vld [vmem:[%s9] sm:$0xff]
      %v1831 = vld [vmem:[%s9 + $0x8] sm:$0xff]
      %v1832 = vld [vmem:[%s9 + $0x10] sm:$0xff]
      %v1833 = vld [vmem:[%s9 + $0x18] sm:$0xff]
      %v1835 = vsel %vm457, %v1798, 0
      %v1838 = vsel %vm457, %v1799, 0
      %v1841 = vsel %vm457, %v1800, 0
      %v1844 = vsel %vm457, %v1801, 0
      %v1847 = vsel %vm457, %v1802, 0
      %v1850 = vsel %vm457, %v1803, 0
      %v1853 = vsel %vm457, %v1804, 0
      %v1856 = vsel %vm457, %v1805, 0
      %v1859 = vsel %vm457, %v1806, 0
      %v1862 = vsel %vm457, %v1807, 0
      %v1865 = vsel %vm457, %v1808, 0
      %v1868 = vsel %vm457, %v1809, 0
      %v1871 = vsel %vm457, %v1810, 0
      %v1874 = vsel %vm457, %v1811, 0
      %v1877 = vsel %vm457, %v1812, 0
      %v1880 = vsel %vm457, %v1813, 0
      %v1883 = vsel %vm457, %v1814, 0
      %v1886 = vsel %vm457, %v1815, 0
      %v1889 = vsel %vm457, %v1816, 0
      %v1892 = vsel %vm457, %v1817, 0
      %v1895 = vsel %vm457, %v1818, 0
      %v1898 = vsel %vm457, %v1819, 0
      %v1901 = vsel %vm457, %v1820, 0
      %v1904 = vsel %vm457, %v1821, 0
      %v1907 = vsel %vm457, %v1822, 0
      %v1910 = vsel %vm457, %v1823, 0
      %v1913 = vsel %vm457, %v1824, 0
      %v1916 = vsel %vm457, %v1825, 0
      %v1919 = vsel %vm457, %v1826, 0
      %v1922 = vsel %vm457, %v1827, 0
      %v1925 = vsel %vm457, %v1828, 0
      %v1928 = vsel %vm457, %v1829, 0
      %1930 = vmatprep.subr.mxu0 0.0
      %1931 = vmatpush1.msra.mxu0 %v1830
      %1932 = vmatprep.subr.mxu0 0.0
      %1933 = vmatpush1.msra.mxu0 %v1831
      %1934 = vmatprep.subr.mxu0 0.0
      %1935 = vmatpush1.msra.mxu0 %v1832
      %1936 = vmatprep.subr.mxu0 0.0
      %1937 = vmatpush1.msra.mxu0 %v1833
      %1938 = vmatprep.subr.mxu0 0.0
      %1939 = vmatpush1.msra.mxu0 0.0
      %1940 = vmatprep.subr.mxu0 0.0
      %1941 = vmatpush1.msra.mxu0 0.0
      %1942 = vmatprep.subr.mxu0 0.0
      %1943 = vmatpush1.msra.mxu0 0.0
      %1944 = vmatprep.subr.mxu0 0.0
      %1945 = vmatpush1.msra.mxu0 0.0
      %1946 = vmatprep.subr.mxu0 0.0
      %1947 = vmatpush1.msra.mxu0 0.0
      %1948 = vmatprep.subr.mxu0 0.0
      %1949 = vmatpush1.msra.mxu0 0.0
      %1950 = vmatprep.subr.mxu0 0.0
      %1951 = vmatpush1.msra.mxu0 0.0
      %1952 = vmatprep.subr.mxu0 0.0
      %1953 = vmatpush1.msra.mxu0 0.0
      %1954 = vmatprep.subr.mxu0 0.0
      %1955 = vmatpush1.msra.mxu0 0.0
      %1956 = vmatprep.subr.mxu0 0.0
      %1957 = vmatpush1.msra.mxu0 0.0
      %1958 = vmatprep.subr.mxu0 0.0
      %1959 = vmatpush1.msra.mxu0 0.0
      %1960 = vmatprep.subr.mxu0 0.0
      %1961 = vmatpush1.msra.mxu0 0.0
      %1962 = vmatprep.subr.mxu0 0.0
      %1963 = vmatpush1.msra.mxu0 0.0
      %1964 = vmatprep.subr.mxu0 0.0
      %1965 = vmatpush1.msra.mxu0 0.0
      %1966 = vmatprep.subr.mxu0 0.0
      %1967 = vmatpush1.msra.mxu0 0.0
      %1968 = vmatprep.subr.mxu0 0.0
      %1969 = vmatpush1.msra.mxu0 0.0
      %1970 = vmatprep.subr.mxu0 0.0
      %1971 = vmatpush1.msra.mxu0 0.0
      %1972 = vmatprep.subr.mxu0 0.0
      %1973 = vmatpush1.msra.mxu0 0.0
      %1974 = vmatprep.subr.mxu0 0.0
      %1975 = vmatpush1.msra.mxu0 0.0
      %1976 = vmatprep.subr.mxu0 0.0
      %1977 = vmatpush1.msra.mxu0 0.0
      %1978 = vmatprep.subr.mxu0 0.0
      %1979 = vmatpush1.msra.mxu0 0.0
      %1980 = vmatprep.subr.mxu0 0.0
      %1981 = vmatpush1.msra.mxu0 0.0
      %1982 = vmatprep.subr.mxu0 0.0
      %1983 = vmatpush1.msra.mxu0 0.0
      %1984 = vmatprep.subr.mxu0 0.0
      %1985 = vmatpush1.msra.mxu0 0.0
      %1986 = vmatprep.subr.mxu0 0.0
      %1987 = vmatpush1.msra.mxu0 0.0
      %1988 = vmatprep.subr.mxu0 0.0
      %1989 = vmatpush1.msra.mxu0 0.0
      %1990 = vmatprep.subr.mxu0 0.0
      %1991 = vmatpush1.msra.mxu0 0.0
      %1992 = vmatprep.subr.mxu0 0.0
      %1993 = vmatpush1.msra.mxu0 0.0
      %1994 = vmatprep.mubr.f32.mxu0 0.0
      %1995 = vmatmul.mubr.f32.gmra.mrb[0].mxu0 %v1835
      %v1996 = vpop.f32.mrb[0].mxu0
      %v1997 = vadd.f32 0.0, %v1996
      %v1998 = vpop.f32.mrb[0].mxu0
      %1999 = vmatprep.mubr.f32.mxu0 0.0
      %2000 = vmatmul.mubr.f32.gmra.mrb[0].mxu0 %v1838
      %v2001 = vpop.f32.mrb[0].mxu0
      %v2002 = vadd.f32 0.0, %v2001
      %v2003 = vpop.f32.mrb[0].mxu0
      %2004 = vmatprep.mubr.f32.mxu0 0.0
      %2005 = vmatmul.mubr.f32.gmra.mrb[0].mxu0 %v1841
      %v2006 = vpop.f32.mrb[0].mxu0
      %v2007 = vadd.f32 0.0, %v2006
      %v2008 = vpop.f32.mrb[0].mxu0
      %2009 = vmatprep.mubr.f32.mxu0 0.0
      %2010 = vmatmul.mubr.f32.gmra.mrb[0].mxu0 %v1844
      %v2011 = vpop.f32.mrb[0].mxu0
      %v2012 = vadd.f32 0.0, %v2011
      %v2013 = vpop.f32.mrb[0].mxu0
      %2014 = vmatprep.mubr.f32.mxu0 0.0
      %2015 = vmatmul.mubr.f32.gmra.mrb[0].mxu0 %v1847
      %v2016 = vpop.f32.mrb[0].mxu0
      %v2017 = vadd.f32 0.0, %v2016
      %v2018 = vpop.f32.mrb[0].mxu0
      %2019 = vmatprep.mubr.f32.mxu0 0.0
      %2020 = vmatmul.mubr.f32.gmra.mrb[0].mxu0 %v1850
      %v2021 = vpop.f32.mrb[0].mxu0
      %v2022 = vadd.f32 0.0, %v2021
      %v2023 = vpop.f32.mrb[0].mxu0
      %2024 = vmatprep.mubr.f32.mxu0 0.0
      %2025 = vmatmul.mubr.f32.gmra.mrb[0].mxu0 %v1853
      %v2026 = vpop.f32.mrb[0].mxu0
      %v2027 = vadd.f32 0.0, %v2026
      %v2028 = vpop.f32.mrb[0].mxu0
      %2029 = vmatprep.mubr.f32.mxu0 0.0
      %2030 = vmatmul.mubr.f32.gmra.mrb[0].mxu0 %v1856
      %v2031 = vpop.f32.mrb[0].mxu0
      %v2032 = vadd.f32 0.0, %v2031
      %v2033 = vpop.f32.mrb[0].mxu0
      %2034 = vmatprep.mubr.f32.mxu0 0.0
      %2035 = vmatmul.mubr.f32.gmra.mrb[0].mxu0 %v1859
      %v2036 = vpop.f32.mrb[0].mxu0
      %v2037 = vadd.f32 0.0, %v2036
      %v2038 = vpop.f32.mrb[0].mxu0
      %2039 = vmatprep.mubr.f32.mxu0 0.0
      %2040 = vmatmul.mubr.f32.gmra.mrb[0].mxu0 %v1862
      %v2041 = vpop.f32.mrb[0].mxu0
      %v2042 = vadd.f32 0.0, %v2041
      %v2043 = vpop.f32.mrb[0].mxu0
      %2044 = vmatprep.mubr.f32.mxu0 0.0
      %2045 = vmatmul.mubr.f32.gmra.mrb[0].mxu0 %v1865
      %v2046 = vpop.f32.mrb[0].mxu0
      %v2047 = vadd.f32 0.0, %v2046
      %v2048 = vpop.f32.mrb[0].mxu0
      %2049 = vmatprep.mubr.f32.mxu0 0.0
      %2050 = vmatmul.mubr.f32.gmra.mrb[0].mxu0 %v1868
      %v2051 = vpop.f32.mrb[0].mxu0
      %v2052 = vadd.f32 0.0, %v2051
      %v2053 = vpop.f32.mrb[0].mxu0
      %2054 = vmatprep.mubr.f32.mxu0 0.0
      %2055 = vmatmul.mubr.f32.gmra.mrb[0].mxu0 %v1871
      %v2056 = vpop.f32.mrb[0].mxu0
      %v2057 = vadd.f32 0.0, %v2056
      %v2058 = vpop.f32.mrb[0].mxu0
      %2059 = vmatprep.mubr.f32.mxu0 0.0
      %2060 = vmatmul.mubr.f32.gmra.mrb[0].mxu0 %v1874
      %v2061 = vpop.f32.mrb[0].mxu0
      %v2062 = vadd.f32 0.0, %v2061
      %v2063 = vpop.f32.mrb[0].mxu0
      %2064 = vmatprep.mubr.f32.mxu0 0.0
      %2065 = vmatmul.mubr.f32.gmra.mrb[0].mxu0 %v1877
      %v2066 = vpop.f32.mrb[0].mxu0
      %v2067 = vadd.f32 0.0, %v2066
      %v2068 = vpop.f32.mrb[0].mxu0
      %2069 = vmatprep.mubr.f32.mxu0 0.0
      %2070 = vmatmul.mubr.f32.gmra.mrb[0].mxu0 %v1880
      %v2071 = vpop.f32.mrb[0].mxu0
      %v2072 = vadd.f32 0.0, %v2071
      %v2073 = vpop.f32.mrb[0].mxu0
      %2074 = vmatprep.mubr.f32.mxu0 0.0
      %2075 = vmatmul.mubr.f32.gmra.mrb[0].mxu0 %v1883
      %v2076 = vpop.f32.mrb[0].mxu0
      %v2077 = vadd.f32 0.0, %v2076
      %v2078 = vpop.f32.mrb[0].mxu0
      %2079 = vmatprep.mubr.f32.mxu0 0.0
      %2080 = vmatmul.mubr.f32.gmra.mrb[0].mxu0 %v1886
      %v2081 = vpop.f32.mrb[0].mxu0
      %v2082 = vadd.f32 0.0, %v2081
      %v2083 = vpop.f32.mrb[0].mxu0
      %2084 = vmatprep.mubr.f32.mxu0 0.0
      %2085 = vmatmul.mubr.f32.gmra.mrb[0].mxu0 %v1889
      %v2086 = vpop.f32.mrb[0].mxu0
      %v2087 = vadd.f32 0.0, %v2086
      %v2088 = vpop.f32.mrb[0].mxu0
      %2089 = vmatprep.mubr.f32.mxu0 0.0
      %2090 = vmatmul.mubr.f32.gmra.mrb[0].mxu0 %v1892
      %v2091 = vpop.f32.mrb[0].mxu0
      %v2092 = vadd.f32 0.0, %v2091
      %v2093 = vpop.f32.mrb[0].mxu0
      %2094 = vmatprep.mubr.f32.mxu0 0.0
      %2095 = vmatmul.mubr.f32.gmra.mrb[0].mxu0 %v1895
      %v2096 = vpop.f32.mrb[0].mxu0
      %v2097 = vadd.f32 0.0, %v2096
      %v2098 = vpop.f32.mrb[0].mxu0
      %2099 = vmatprep.mubr.f32.mxu0 0.0
      %2100 = vmatmul.mubr.f32.gmra.mrb[0].mxu0 %v1898
      %v2101 = vpop.f32.mrb[0].mxu0
      %v2102 = vadd.f32 0.0, %v2101
      %v2103 = vpop.f32.mrb[0].mxu0
      %2104 = vmatprep.mubr.f32.mxu0 0.0
      %2105 = vmatmul.mubr.f32.gmra.mrb[0].mxu0 %v1901
      %v2106 = vpop.f32.mrb[0].mxu0
      %v2107 = vadd.f32 0.0, %v2106
      %v2108 = vpop.f32.mrb[0].mxu0
      %2109 = vmatprep.mubr.f32.mxu0 0.0
      %2110 = vmatmul.mubr.f32.gmra.mrb[0].mxu0 %v1904
      %v2111 = vpop.f32.mrb[0].mxu0
      %v2112 = vadd.f32 0.0, %v2111
      %v2113 = vpop.f32.mrb[0].mxu0
      %2114 = vmatprep.mubr.f32.mxu0 0.0
      %2115 = vmatmul.mubr.f32.gmra.mrb[0].mxu0 %v1907
      %v2116 = vpop.f32.mrb[0].mxu0
      %v2117 = vadd.f32 0.0, %v2116
      %v2118 = vpop.f32.mrb[0].mxu0
      %2119 = vmatprep.mubr.f32.mxu0 0.0
      %2120 = vmatmul.mubr.f32.gmra.mrb[0].mxu0 %v1910
      %v2121 = vpop.f32.mrb[0].mxu0
      %v2122 = vadd.f32 0.0, %v2121
      %v2123 = vpop.f32.mrb[0].mxu0
      %2124 = vmatprep.mubr.f32.mxu0 0.0
      %2125 = vmatmul.mubr.f32.gmra.mrb[0].mxu0 %v1913
      %v2126 = vpop.f32.mrb[0].mxu0
      %v2127 = vadd.f32 0.0, %v2126
      %v2128 = vpop.f32.mrb[0].mxu0
      %2129 = vmatprep.mubr.f32.mxu0 0.0
      %2130 = vmatmul.mubr.f32.gmra.mrb[0].mxu0 %v1916
      %v2131 = vpop.f32.mrb[0].mxu0
      %v2132 = vadd.f32 0.0, %v2131
      %v2133 = vpop.f32.mrb[0].mxu0
      %2134 = vmatprep.mubr.f32.mxu0 0.0
      %2135 = vmatmul.mubr.f32.gmra.mrb[0].mxu0 %v1919
      %v2136 = vpop.f32.mrb[0].mxu0
      %v2137 = vadd.f32 0.0, %v2136
      %v2138 = vpop.f32.mrb[0].mxu0
      %2139 = vmatprep.mubr.f32.mxu0 0.0
      %2140 = vmatmul.mubr.f32.gmra.mrb[0].mxu0 %v1922
      %v2141 = vpop.f32.mrb[0].mxu0
      %v2142 = vadd.f32 0.0, %v2141
      %v2143 = vpop.f32.mrb[0].mxu0
      %2144 = vmatprep.mubr.f32.mxu0 0.0
      %2145 = vmatmul.mubr.f32.gmra.mrb[0].mxu0 %v1925
      %v2146 = vpop.f32.mrb[0].mxu0
      %v2147 = vadd.f32 0.0, %v2146
      %v2148 = vpop.f32.mrb[0].mxu0
      %2149 = vmatprep.mubr.f32.mxu0 0.0
      %2150 = vmatmul.mubr.f32.gmra.mrb[0].mxu0 %v1928
      %v2151 = vpop.f32.mrb[0].mxu0
      %v2152 = vadd.f32 0.0, %v2151
      %v2153 = vpop.f32.mrb[0].mxu0
      %2154 = vdwg.mxu0
      %v2155 = vmul.f32 %v1997, 0.35355338
      %v2156 = vmul.f32 %v2002, 0.35355338
      %v2157 = vmul.f32 %v2007, 0.35355338
      %v2158 = vmul.f32 %v2012, 0.35355338
      %v2159 = vmul.f32 %v2017, 0.35355338
      %v2160 = vmul.f32 %v2022, 0.35355338
      %v2161 = vmul.f32 %v2027, 0.35355338
      %v2162 = vmul.f32 %v2032, 0.35355338
      %v2163 = vmul.f32 %v2037, 0.35355338
      %v2164 = vmul.f32 %v2042, 0.35355338
      %v2165 = vmul.f32 %v2047, 0.35355338
      %v2166 = vmul.f32 %v2052, 0.35355338
      %v2167 = vmul.f32 %v2057, 0.35355338
      %v2168 = vmul.f32 %v2062, 0.35355338
      %v2169 = vmul.f32 %v2067, 0.35355338
      %v2170 = vmul.f32 %v2072, 0.35355338
      %v2171 = vmul.f32 %v2077, 0.35355338
      %v2172 = vmul.f32 %v2082, 0.35355338
      %v2173 = vmul.f32 %v2087, 0.35355338
      %v2174 = vmul.f32 %v2092, 0.35355338
      %v2175 = vmul.f32 %v2097, 0.35355338
      %v2176 = vmul.f32 %v2102, 0.35355338
      %v2177 = vmul.f32 %v2107, 0.35355338
      %v2178 = vmul.f32 %v2112, 0.35355338
      %v2179 = vmul.f32 %v2117, 0.35355338
      %v2180 = vmul.f32 %v2122, 0.35355338
      %v2181 = vmul.f32 %v2127, 0.35355338
      %v2182 = vmul.f32 %v2132, 0.35355338
      %v2183 = vmul.f32 %v2137, 0.35355338
      %v2184 = vmul.f32 %v2142, 0.35355338
      %v2185 = vmul.f32 %v2147, 0.35355338
      %v2186 = vmul.f32 %v2152, 0.35355338
      %vm2187 = vcmask 31744
      %v2188 = vsel %vm2187, %v2155, -inf
      %v2189 = vrot.slane %v2188, 4
      %v2190 = vmax.f32 %v2188, %v2189
      %v2191 = vrot.slane %v2190, 2
      %v2192 = vmax.f32 %v2190, %v2191
      %v2193 = vrot.slane %v2192, 1
      %v2194 = vmax.f32 %v2192, %v2193
      %v2195 = vsel %vm2187, %v2156, -inf
      %v2196 = vrot.slane %v2195, 4
      %v2197 = vmax.f32 %v2195, %v2196
      %v2198 = vrot.slane %v2197, 2
      %v2199 = vmax.f32 %v2197, %v2198
      %v2200 = vrot.slane %v2199, 1
      %v2201 = vmax.f32 %v2199, %v2200
      %v2202 = vsel %vm2187, %v2157, -inf
      %v2203 = vrot.slane %v2202, 4
      %v2204 = vmax.f32 %v2202, %v2203
      %v2205 = vrot.slane %v2204, 2
      %v2206 = vmax.f32 %v2204, %v2205
      %v2207 = vrot.slane %v2206, 1
      %v2208 = vmax.f32 %v2206, %v2207
      %v2209 = vsel %vm2187, %v2158, -inf
      %v2210 = vrot.slane %v2209, 4
      %v2211 = vmax.f32 %v2209, %v2210
      %v2212 = vrot.slane %v2211, 2
      %v2213 = vmax.f32 %v2211, %v2212
      %v2214 = vrot.slane %v2213, 1
      %v2215 = vmax.f32 %v2213, %v2214
      %v2216 = vsel %vm2187, %v2159, -inf
      %v2217 = vrot.slane %v2216, 4
      %v2218 = vmax.f32 %v2216, %v2217
      %v2219 = vrot.slane %v2218, 2
      %v2220 = vmax.f32 %v2218, %v2219
      %v2221 = vrot.slane %v2220, 1
      %v2222 = vmax.f32 %v2220, %v2221
      %v2223 = vsel %vm2187, %v2160, -inf
      %v2224 = vrot.slane %v2223, 4
      %v2225 = vmax.f32 %v2223, %v2224
      %v2226 = vrot.slane %v2225, 2
      %v2227 = vmax.f32 %v2225, %v2226
      %v2228 = vrot.slane %v2227, 1
      %v2229 = vmax.f32 %v2227, %v2228
      %v2230 = vsel %vm2187, %v2161, -inf
      %v2231 = vrot.slane %v2230, 4
      %v2232 = vmax.f32 %v2230, %v2231
      %v2233 = vrot.slane %v2232, 2
      %v2234 = vmax.f32 %v2232, %v2233
      %v2235 = vrot.slane %v2234, 1
      %v2236 = vmax.f32 %v2234, %v2235
      %v2237 = vsel %vm2187, %v2162, -inf
      %v2238 = vrot.slane %v2237, 4
      %v2239 = vmax.f32 %v2237, %v2238
      %v2240 = vrot.slane %v2239, 2
      %v2241 = vmax.f32 %v2239, %v2240
      %v2242 = vrot.slane %v2241, 1
      %v2243 = vmax.f32 %v2241, %v2242
      %v2244 = vsel %vm2187, %v2163, -inf
      %v2245 = vrot.slane %v2244, 4
      %v2246 = vmax.f32 %v2244, %v2245
      %v2247 = vrot.slane %v2246, 2
      %v2248 = vmax.f32 %v2246, %v2247
      %v2249 = vrot.slane %v2248, 1
      %v2250 = vmax.f32 %v2248, %v2249
      %v2251 = vsel %vm2187, %v2164, -inf
      %v2252 = vrot.slane %v2251, 4
      %v2253 = vmax.f32 %v2251, %v2252
      %v2254 = vrot.slane %v2253, 2
      %v2255 = vmax.f32 %v2253, %v2254
      %v2256 = vrot.slane %v2255, 1
      %v2257 = vmax.f32 %v2255, %v2256
      %v2258 = vsel %vm2187, %v2165, -inf
      %v2259 = vrot.slane %v2258, 4
      %v2260 = vmax.f32 %v2258, %v2259
      %v2261 = vrot.slane %v2260, 2
      %v2262 = vmax.f32 %v2260, %v2261
      %v2263 = vrot.slane %v2262, 1
      %v2264 = vmax.f32 %v2262, %v2263
      %v2265 = vsel %vm2187, %v2166, -inf
      %v2266 = vrot.slane %v2265, 4
      %v2267 = vmax.f32 %v2265, %v2266
      %v2268 = vrot.slane %v2267, 2
      %v2269 = vmax.f32 %v2267, %v2268
      %v2270 = vrot.slane %v2269, 1
      %v2271 = vmax.f32 %v2269, %v2270
      %v2272 = vsel %vm2187, %v2167, -inf
      %v2273 = vrot.slane %v2272, 4
      %v2274 = vmax.f32 %v2272, %v2273
      %v2275 = vrot.slane %v2274, 2
      %v2276 = vmax.f32 %v2274, %v2275
      %v2277 = vrot.slane %v2276, 1
      %v2278 = vmax.f32 %v2276, %v2277
      %v2279 = vsel %vm2187, %v2168, -inf
      %v2280 = vrot.slane %v2279, 4
      %v2281 = vmax.f32 %v2279, %v2280
      %v2282 = vrot.slane %v2281, 2
      %v2283 = vmax.f32 %v2281, %v2282
      %v2284 = vrot.slane %v2283, 1
      %v2285 = vmax.f32 %v2283, %v2284
      %v2286 = vsel %vm2187, %v2169, -inf
      %v2287 = vrot.slane %v2286, 4
      %v2288 = vmax.f32 %v2286, %v2287
      %v2289 = vrot.slane %v2288, 2
      %v2290 = vmax.f32 %v2288, %v2289
      %v2291 = vrot.slane %v2290, 1
      %v2292 = vmax.f32 %v2290, %v2291
      %v2293 = vsel %vm2187, %v2170, -inf
      %v2294 = vrot.slane %v2293, 4
      %v2295 = vmax.f32 %v2293, %v2294
      %v2296 = vrot.slane %v2295, 2
      %v2297 = vmax.f32 %v2295, %v2296
      %v2298 = vrot.slane %v2297, 1
      %v2299 = vmax.f32 %v2297, %v2298
      %v2300 = vsel %vm2187, %v2171, -inf
      %v2301 = vrot.slane %v2300, 4
      %v2302 = vmax.f32 %v2300, %v2301
      %v2303 = vrot.slane %v2302, 2
      %v2304 = vmax.f32 %v2302, %v2303
      %v2305 = vrot.slane %v2304, 1
      %v2306 = vmax.f32 %v2304, %v2305
      %v2307 = vsel %vm2187, %v2172, -inf
      %v2308 = vrot.slane %v2307, 4
      %v2309 = vmax.f32 %v2307, %v2308
      %v2310 = vrot.slane %v2309, 2
      %v2311 = vmax.f32 %v2309, %v2310
      %v2312 = vrot.slane %v2311, 1
      %v2313 = vmax.f32 %v2311, %v2312
      %v2314 = vsel %vm2187, %v2173, -inf
      %v2315 = vrot.slane %v2314, 4
      %v2316 = vmax.f32 %v2314, %v2315
      %v2317 = vrot.slane %v2316, 2
      %v2318 = vmax.f32 %v2316, %v2317
      %v2319 = vrot.slane %v2318, 1
      %v2320 = vmax.f32 %v2318, %v2319
      %v2321 = vsel %vm2187, %v2174, -inf
      %v2322 = vrot.slane %v2321, 4
      %v2323 = vmax.f32 %v2321, %v2322
      %v2324 = vrot.slane %v2323, 2
      %v2325 = vmax.f32 %v2323, %v2324
      %v2326 = vrot.slane %v2325, 1
      %v2327 = vmax.f32 %v2325, %v2326
      %v2328 = vsel %vm2187, %v2175, -inf
      %v2329 = vrot.slane %v2328, 4
      %v2330 = vmax.f32 %v2328, %v2329
      %v2331 = vrot.slane %v2330, 2
      %v2332 = vmax.f32 %v2330, %v2331
      %v2333 = vrot.slane %v2332, 1
      %v2334 = vmax.f32 %v2332, %v2333
      %v2335 = vsel %vm2187, %v2176, -inf
      %v2336 = vrot.slane %v2335, 4
      %v2337 = vmax.f32 %v2335, %v2336
      %v2338 = vrot.slane %v2337, 2
      %v2339 = vmax.f32 %v2337, %v2338
      %v2340 = vrot.slane %v2339, 1
      %v2341 = vmax.f32 %v2339, %v2340
      %v2342 = vsel %vm2187, %v2177, -inf
      %v2343 = vrot.slane %v2342, 4
      %v2344 = vmax.f32 %v2342, %v2343
      %v2345 = vrot.slane %v2344, 2
      %v2346 = vmax.f32 %v2344, %v2345
      %v2347 = vrot.slane %v2346, 1
      %v2348 = vmax.f32 %v2346, %v2347
      %v2349 = vsel %vm2187, %v2178, -inf
      %v2350 = vrot.slane %v2349, 4
      %v2351 = vmax.f32 %v2349, %v2350
      %v2352 = vrot.slane %v2351, 2
      %v2353 = vmax.f32 %v2351, %v2352
      %v2354 = vrot.slane %v2353, 1
      %v2355 = vmax.f32 %v2353, %v2354
      %v2356 = vsel %vm2187, %v2179, -inf
      %v2357 = vrot.slane %v2356, 4
      %v2358 = vmax.f32 %v2356, %v2357
      %v2359 = vrot.slane %v2358, 2
      %v2360 = vmax.f32 %v2358, %v2359
      %v2361 = vrot.slane %v2360, 1
      %v2362 = vmax.f32 %v2360, %v2361
      %v2363 = vsel %vm2187, %v2180, -inf
      %v2364 = vrot.slane %v2363, 4
      %v2365 = vmax.f32 %v2363, %v2364
      %v2366 = vrot.slane %v2365, 2
      %v2367 = vmax.f32 %v2365, %v2366
      %v2368 = vrot.slane %v2367, 1
      %v2369 = vmax.f32 %v2367, %v2368
      %v2370 = vsel %vm2187, %v2181, -inf
      %v2371 = vrot.slane %v2370, 4
      %v2372 = vmax.f32 %v2370, %v2371
      %v2373 = vrot.slane %v2372, 2
      %v2374 = vmax.f32 %v2372, %v2373
      %v2375 = vrot.slane %v2374, 1
      %v2376 = vmax.f32 %v2374, %v2375
      %v2377 = vsel %vm2187, %v2182, -inf
      %v2378 = vrot.slane %v2377, 4
      %v2379 = vmax.f32 %v2377, %v2378
      %v2380 = vrot.slane %v2379, 2
      %v2381 = vmax.f32 %v2379, %v2380
      %v2382 = vrot.slane %v2381, 1
      %v2383 = vmax.f32 %v2381, %v2382
      %v2384 = vsel %vm2187, %v2183, -inf
      %v2385 = vrot.slane %v2384, 4
      %v2386 = vmax.f32 %v2384, %v2385
      %v2387 = vrot.slane %v2386, 2
      %v2388 = vmax.f32 %v2386, %v2387
      %v2389 = vrot.slane %v2388, 1
      %v2390 = vmax.f32 %v2388, %v2389
      %v2391 = vsel %vm2187, %v2184, -inf
      %v2392 = vrot.slane %v2391, 4
      %v2393 = vmax.f32 %v2391, %v2392
      %v2394 = vrot.slane %v2393, 2
      %v2395 = vmax.f32 %v2393, %v2394
      %v2396 = vrot.slane %v2395, 1
      %v2397 = vmax.f32 %v2395, %v2396
      %v2398 = vsel %vm2187, %v2185, -inf
      %v2399 = vrot.slane %v2398, 4
      %v2400 = vmax.f32 %v2398, %v2399
      %v2401 = vrot.slane %v2400, 2
      %v2402 = vmax.f32 %v2400, %v2401
      %v2403 = vrot.slane %v2402, 1
      %v2404 = vmax.f32 %v2402, %v2403
      %v2405 = vsel %vm2187, %v2186, -inf
      %v2406 = vrot.slane %v2405, 4
      %v2407 = vmax.f32 %v2405, %v2406
      %v2408 = vrot.slane %v2407, 2
      %v2409 = vmax.f32 %v2407, %v2408
      %v2410 = vrot.slane %v2409, 1
      %v2411 = vmax.f32 %v2409, %v2410
      %v2412 = vsub.f32 %v2155, %v2194
      %v2413 = vsub.f32 %v2156, %v2201
      %v2414 = vsub.f32 %v2157, %v2208
      %v2415 = vsub.f32 %v2158, %v2215
      %v2416 = vsub.f32 %v2159, %v2222
      %v2417 = vsub.f32 %v2160, %v2229
      %v2418 = vsub.f32 %v2161, %v2236
      %v2419 = vsub.f32 %v2162, %v2243
      %v2420 = vsub.f32 %v2163, %v2250
      %v2421 = vsub.f32 %v2164, %v2257
      %v2422 = vsub.f32 %v2165, %v2264
      %v2423 = vsub.f32 %v2166, %v2271
      %v2424 = vsub.f32 %v2167, %v2278
      %v2425 = vsub.f32 %v2168, %v2285
      %v2426 = vsub.f32 %v2169, %v2292
      %v2427 = vsub.f32 %v2170, %v2299
      %v2428 = vsub.f32 %v2171, %v2306
      %v2429 = vsub.f32 %v2172, %v2313
      %v2430 = vsub.f32 %v2173, %v2320
      %v2431 = vsub.f32 %v2174, %v2327
      %v2432 = vsub.f32 %v2175, %v2334
      %v2433 = vsub.f32 %v2176, %v2341
      %v2434 = vsub.f32 %v2177, %v2348
      %v2435 = vsub.f32 %v2178, %v2355
      %v2436 = vsub.f32 %v2179, %v2362
      %v2437 = vsub.f32 %v2180, %v2369
      %v2438 = vsub.f32 %v2181, %v2376
      %v2439 = vsub.f32 %v2182, %v2383
      %v2440 = vsub.f32 %v2183, %v2390
      %v2441 = vsub.f32 %v2184, %v2397
      %v2442 = vsub.f32 %v2185, %v2404
      %v2443 = vsub.f32 %v2186, %v2411
      %v2444 = vmul.f32 %v2412, 1.442695
      %v2445 = vpow.pop %v2444
      %v2446 = vmul.f32 %v2413, 1.442695
      %v2447 = vpow.pop %v2446
      %v2448 = vmul.f32 %v2414, 1.442695
      %v2449 = vpow.pop %v2448
      %v2450 = vmul.f32 %v2415, 1.442695
      %v2451 = vpow.pop %v2450
      %v2452 = vmul.f32 %v2416, 1.442695
      %v2453 = vpow.pop %v2452
      %v2454 = vmul.f32 %v2417, 1.442695
      %v2455 = vpow.pop %v2454
      %v2456 = vmul.f32 %v2418, 1.442695
      %v2457 = vpow.pop %v2456
      %v2458 = vmul.f32 %v2419, 1.442695
      %v2459 = vpow.pop %v2458
      %v2460 = vmul.f32 %v2420, 1.442695
      %v2461 = vpow.pop %v2460
      %v2462 = vmul.f32 %v2421, 1.442695
      %v2463 = vpow.pop %v2462
      %v2464 = vmul.f32 %v2422, 1.442695
      %v2465 = vpow.pop %v2464
      %v2466 = vmul.f32 %v2423, 1.442695
      %v2467 = vpow.pop %v2466
      %v2468 = vmul.f32 %v2424, 1.442695
      %v2469 = vpow.pop %v2468
      %v2470 = vmul.f32 %v2425, 1.442695
      %v2471 = vpow.pop %v2470
      %v2472 = vmul.f32 %v2426, 1.442695
      %v2473 = vpow.pop %v2472
      %v2474 = vmul.f32 %v2427, 1.442695
      %v2475 = vpow.pop %v2474
      %v2476 = vmul.f32 %v2428, 1.442695
      %v2477 = vpow.pop %v2476
      %v2478 = vmul.f32 %v2429, 1.442695
      %v2479 = vpow.pop %v2478
      %v2480 = vmul.f32 %v2430, 1.442695
      %v2481 = vpow.pop %v2480
      %v2482 = vmul.f32 %v2431, 1.442695
      %v2483 = vpow.pop %v2482
      %v2484 = vmul.f32 %v2432, 1.442695
      %v2485 = vpow.pop %v2484
      %v2486 = vmul.f32 %v2433, 1.442695
      %v2487 = vpow.pop %v2486
      %v2488 = vmul.f32 %v2434, 1.442695
      %v2489 = vpow.pop %v2488
      %v2490 = vmul.f32 %v2435, 1.442695
      %v2491 = vpow.pop %v2490
      %v2492 = vmul.f32 %v2436, 1.442695
      %v2493 = vpow.pop %v2492
      %v2494 = vmul.f32 %v2437, 1.442695
      %v2495 = vpow.pop %v2494
      %v2496 = vmul.f32 %v2438, 1.442695
      %v2497 = vpow.pop %v2496
      %v2498 = vmul.f32 %v2439, 1.442695
      %v2499 = vpow.pop %v2498
      %v2500 = vmul.f32 %v2440, 1.442695
      %v2501 = vpow.pop %v2500
      %v2502 = vmul.f32 %v2441, 1.442695
      %v2503 = vpow.pop %v2502
      %v2504 = vmul.f32 %v2442, 1.442695
      %v2505 = vpow.pop %v2504
      %v2506 = vmul.f32 %v2443, 1.442695
      %v2507 = vpow.pop %v2506
      %v2508 = vsel %vm2187, %v2445, 0.0
      %v2509 = vrot.slane %v2508, 4
      %v2510 = vadd.f32 %v2508, %v2509
      %v2511 = vrot.slane %v2510, 2
      %v2512 = vadd.f32 %v2510, %v2511
      %v2513 = vrot.slane %v2512, 1
      %v2514 = vadd.f32 %v2512, %v2513
      %v2515 = vsel %vm2187, %v2447, 0.0
      %v2516 = vrot.slane %v2515, 4
      %v2517 = vadd.f32 %v2515, %v2516
      %v2518 = vrot.slane %v2517, 2
      %v2519 = vadd.f32 %v2517, %v2518
      %v2520 = vrot.slane %v2519, 1
      %v2521 = vadd.f32 %v2519, %v2520
      %v2522 = vsel %vm2187, %v2449, 0.0
      %v2523 = vrot.slane %v2522, 4
      %v2524 = vadd.f32 %v2522, %v2523
      %v2525 = vrot.slane %v2524, 2
      %v2526 = vadd.f32 %v2524, %v2525
      %v2527 = vrot.slane %v2526, 1
      %v2528 = vadd.f32 %v2526, %v2527
      %v2529 = vsel %vm2187, %v2451, 0.0
      %v2530 = vrot.slane %v2529, 4
      %v2531 = vadd.f32 %v2529, %v2530
      %v2532 = vrot.slane %v2531, 2
      %v2533 = vadd.f32 %v2531, %v2532
      %v2534 = vrot.slane %v2533, 1
      %v2535 = vadd.f32 %v2533, %v2534
      %v2536 = vsel %vm2187, %v2453, 0.0
      %v2537 = vrot.slane %v2536, 4
      %v2538 = vadd.f32 %v2536, %v2537
      %v2539 = vrot.slane %v2538, 2
      %v2540 = vadd.f32 %v2538, %v2539
      %v2541 = vrot.slane %v2540, 1
      %v2542 = vadd.f32 %v2540, %v2541
      %v2543 = vsel %vm2187, %v2455, 0.0
      %v2544 = vrot.slane %v2543, 4
      %v2545 = vadd.f32 %v2543, %v2544
      %v2546 = vrot.slane %v2545, 2
      %v2547 = vadd.f32 %v2545, %v2546
      %v2548 = vrot.slane %v2547, 1
      %v2549 = vadd.f32 %v2547, %v2548
      %v2550 = vsel %vm2187, %v2457, 0.0
      %v2551 = vrot.slane %v2550, 4
      %v2552 = vadd.f32 %v2550, %v2551
      %v2553 = vrot.slane %v2552, 2
      %v2554 = vadd.f32 %v2552, %v2553
      %v2555 = vrot.slane %v2554, 1
      %v2556 = vadd.f32 %v2554, %v2555
      %v2557 = vsel %vm2187, %v2459, 0.0
      %v2558 = vrot.slane %v2557, 4
      %v2559 = vadd.f32 %v2557, %v2558
      %v2560 = vrot.slane %v2559, 2
      %v2561 = vadd.f32 %v2559, %v2560
      %v2562 = vrot.slane %v2561, 1
      %v2563 = vadd.f32 %v2561, %v2562
      %v2564 = vsel %vm2187, %v2461, 0.0
      %v2565 = vrot.slane %v2564, 4
      %v2566 = vadd.f32 %v2564, %v2565
      %v2567 = vrot.slane %v2566, 2
      %v2568 = vadd.f32 %v2566, %v2567
      %v2569 = vrot.slane %v2568, 1
      %v2570 = vadd.f32 %v2568, %v2569
      %v2571 = vsel %vm2187, %v2463, 0.0
      %v2572 = vrot.slane %v2571, 4
      %v2573 = vadd.f32 %v2571, %v2572
      %v2574 = vrot.slane %v2573, 2
      %v2575 = vadd.f32 %v2573, %v2574
      %v2576 = vrot.slane %v2575, 1
      %v2577 = vadd.f32 %v2575, %v2576
      %v2578 = vsel %vm2187, %v2465, 0.0
      %v2579 = vrot.slane %v2578, 4
      %v2580 = vadd.f32 %v2578, %v2579
      %v2581 = vrot.slane %v2580, 2
      %v2582 = vadd.f32 %v2580, %v2581
      %v2583 = vrot.slane %v2582, 1
      %v2584 = vadd.f32 %v2582, %v2583
      %v2585 = vsel %vm2187, %v2467, 0.0
      %v2586 = vrot.slane %v2585, 4
      %v2587 = vadd.f32 %v2585, %v2586
      %v2588 = vrot.slane %v2587, 2
      %v2589 = vadd.f32 %v2587, %v2588
      %v2590 = vrot.slane %v2589, 1
      %v2591 = vadd.f32 %v2589, %v2590
      %v2592 = vsel %vm2187, %v2469, 0.0
      %v2593 = vrot.slane %v2592, 4
      %v2594 = vadd.f32 %v2592, %v2593
      %v2595 = vrot.slane %v2594, 2
      %v2596 = vadd.f32 %v2594, %v2595
      %v2597 = vrot.slane %v2596, 1
      %v2598 = vadd.f32 %v2596, %v2597
      %v2599 = vsel %vm2187, %v2471, 0.0
      %v2600 = vrot.slane %v2599, 4
      %v2601 = vadd.f32 %v2599, %v2600
      %v2602 = vrot.slane %v2601, 2
      %v2603 = vadd.f32 %v2601, %v2602
      %v2604 = vrot.slane %v2603, 1
      %v2605 = vadd.f32 %v2603, %v2604
      %v2606 = vsel %vm2187, %v2473, 0.0
      %v2607 = vrot.slane %v2606, 4
      %v2608 = vadd.f32 %v2606, %v2607
      %v2609 = vrot.slane %v2608, 2
      %v2610 = vadd.f32 %v2608, %v2609
      %v2611 = vrot.slane %v2610, 1
      %v2612 = vadd.f32 %v2610, %v2611
      %v2613 = vsel %vm2187, %v2475, 0.0
      %v2614 = vrot.slane %v2613, 4
      %v2615 = vadd.f32 %v2613, %v2614
      %v2616 = vrot.slane %v2615, 2
      %v2617 = vadd.f32 %v2615, %v2616
      %v2618 = vrot.slane %v2617, 1
      %v2619 = vadd.f32 %v2617, %v2618
      %v2620 = vsel %vm2187, %v2477, 0.0
      %v2621 = vrot.slane %v2620, 4
      %v2622 = vadd.f32 %v2620, %v2621
      %v2623 = vrot.slane %v2622, 2
      %v2624 = vadd.f32 %v2622, %v2623
      %v2625 = vrot.slane %v2624, 1
      %v2626 = vadd.f32 %v2624, %v2625
      %v2627 = vsel %vm2187, %v2479, 0.0
      %v2628 = vrot.slane %v2627, 4
      %v2629 = vadd.f32 %v2627, %v2628
      %v2630 = vrot.slane %v2629, 2
      %v2631 = vadd.f32 %v2629, %v2630
      %v2632 = vrot.slane %v2631, 1
      %v2633 = vadd.f32 %v2631, %v2632
      %v2634 = vsel %vm2187, %v2481, 0.0
      %v2635 = vrot.slane %v2634, 4
      %v2636 = vadd.f32 %v2634, %v2635
      %v2637 = vrot.slane %v2636, 2
      %v2638 = vadd.f32 %v2636, %v2637
      %v2639 = vrot.slane %v2638, 1
      %v2640 = vadd.f32 %v2638, %v2639
      %v2641 = vsel %vm2187, %v2483, 0.0
      %v2642 = vrot.slane %v2641, 4
      %v2643 = vadd.f32 %v2641, %v2642
      %v2644 = vrot.slane %v2643, 2
      %v2645 = vadd.f32 %v2643, %v2644
      %v2646 = vrot.slane %v2645, 1
      %v2647 = vadd.f32 %v2645, %v2646
      %v2648 = vsel %vm2187, %v2485, 0.0
      %v2649 = vrot.slane %v2648, 4
      %v2650 = vadd.f32 %v2648, %v2649
      %v2651 = vrot.slane %v2650, 2
      %v2652 = vadd.f32 %v2650, %v2651
      %v2653 = vrot.slane %v2652, 1
      %v2654 = vadd.f32 %v2652, %v2653
      %v2655 = vsel %vm2187, %v2487, 0.0
      %v2656 = vrot.slane %v2655, 4
      %v2657 = vadd.f32 %v2655, %v2656
      %v2658 = vrot.slane %v2657, 2
      %v2659 = vadd.f32 %v2657, %v2658
      %v2660 = vrot.slane %v2659, 1
      %v2661 = vadd.f32 %v2659, %v2660
      %v2662 = vsel %vm2187, %v2489, 0.0
      %v2663 = vrot.slane %v2662, 4
      %v2664 = vadd.f32 %v2662, %v2663
      %v2665 = vrot.slane %v2664, 2
      %v2666 = vadd.f32 %v2664, %v2665
      %v2667 = vrot.slane %v2666, 1
      %v2668 = vadd.f32 %v2666, %v2667
      %v2669 = vsel %vm2187, %v2491, 0.0
      %v2670 = vrot.slane %v2669, 4
      %v2671 = vadd.f32 %v2669, %v2670
      %v2672 = vrot.slane %v2671, 2
      %v2673 = vadd.f32 %v2671, %v2672
      %v2674 = vrot.slane %v2673, 1
      %v2675 = vadd.f32 %v2673, %v2674
      %v2676 = vsel %vm2187, %v2493, 0.0
      %v2677 = vrot.slane %v2676, 4
      %v2678 = vadd.f32 %v2676, %v2677
      %v2679 = vrot.slane %v2678, 2
      %v2680 = vadd.f32 %v2678, %v2679
      %v2681 = vrot.slane %v2680, 1
      %v2682 = vadd.f32 %v2680, %v2681
      %v2683 = vsel %vm2187, %v2495, 0.0
      %v2684 = vrot.slane %v2683, 4
      %v2685 = vadd.f32 %v2683, %v2684
      %v2686 = vrot.slane %v2685, 2
      %v2687 = vadd.f32 %v2685, %v2686
      %v2688 = vrot.slane %v2687, 1
      %v2689 = vadd.f32 %v2687, %v2688
      %v2690 = vsel %vm2187, %v2497, 0.0
      %v2691 = vrot.slane %v2690, 4
      %v2692 = vadd.f32 %v2690, %v2691
      %v2693 = vrot.slane %v2692, 2
      %v2694 = vadd.f32 %v2692, %v2693
      %v2695 = vrot.slane %v2694, 1
      %v2696 = vadd.f32 %v2694, %v2695
      %v2697 = vsel %vm2187, %v2499, 0.0
      %v2698 = vrot.slane %v2697, 4
      %v2699 = vadd.f32 %v2697, %v2698
      %v2700 = vrot.slane %v2699, 2
      %v2701 = vadd.f32 %v2699, %v2700
      %v2702 = vrot.slane %v2701, 1
      %v2703 = vadd.f32 %v2701, %v2702
      %v2704 = vsel %vm2187, %v2501, 0.0
      %v2705 = vrot.slane %v2704, 4
      %v2706 = vadd.f32 %v2704, %v2705
      %v2707 = vrot.slane %v2706, 2
      %v2708 = vadd.f32 %v2706, %v2707
      %v2709 = vrot.slane %v2708, 1
      %v2710 = vadd.f32 %v2708, %v2709
      %v2711 = vsel %vm2187, %v2503, 0.0
      %v2712 = vrot.slane %v2711, 4
      %v2713 = vadd.f32 %v2711, %v2712
      %v2714 = vrot.slane %v2713, 2
      %v2715 = vadd.f32 %v2713, %v2714
      %v2716 = vrot.slane %v2715, 1
      %v2717 = vadd.f32 %v2715, %v2716
      %v2718 = vsel %vm2187, %v2505, 0.0
      %v2719 = vrot.slane %v2718, 4
      %v2720 = vadd.f32 %v2718, %v2719
      %v2721 = vrot.slane %v2720, 2
      %v2722 = vadd.f32 %v2720, %v2721
      %v2723 = vrot.slane %v2722, 1
      %v2724 = vadd.f32 %v2722, %v2723
      %v2725 = vsel %vm2187, %v2507, 0.0
      %v2726 = vrot.slane %v2725, 4
      %v2727 = vadd.f32 %v2725, %v2726
      %v2728 = vrot.slane %v2727, 2
      %v2729 = vadd.f32 %v2727, %v2728
      %v2730 = vrot.slane %v2729, 1
      %v2731 = vadd.f32 %v2729, %v2730
      %v2732 = vrcp.pop %v2514
      %v2733 = vrcp.pop %v2521
      %v2734 = vrcp.pop %v2528
      %v2735 = vrcp.pop %v2535
      %v2736 = vrcp.pop %v2542
      %v2737 = vrcp.pop %v2549
      %v2738 = vrcp.pop %v2556
      %v2739 = vrcp.pop %v2563
      %v2740 = vrcp.pop %v2570
      %v2741 = vrcp.pop %v2577
      %v2742 = vrcp.pop %v2584
      %v2743 = vrcp.pop %v2591
      %v2744 = vrcp.pop %v2598
      %v2745 = vrcp.pop %v2605
      %v2746 = vrcp.pop %v2612
      %v2747 = vrcp.pop %v2619
      %v2748 = vrcp.pop %v2626
      %v2749 = vrcp.pop %v2633
      %v2750 = vrcp.pop %v2640
      %v2751 = vrcp.pop %v2647
      %v2752 = vrcp.pop %v2654
      %v2753 = vrcp.pop %v2661
      %v2754 = vrcp.pop %v2668
      %v2755 = vrcp.pop %v2675
      %v2756 = vrcp.pop %v2682
      %v2757 = vrcp.pop %v2689
      %v2758 = vrcp.pop %v2696
      %v2759 = vrcp.pop %v2703
      %v2760 = vrcp.pop %v2710
      %v2761 = vrcp.pop %v2717
      %v2762 = vrcp.pop %v2724
      %v2763 = vrcp.pop %v2731
      %v2764 = vmul.f32 %v2445, %v2732
      %v2765 = vmul.f32 %v2447, %v2733
      %v2766 = vmul.f32 %v2449, %v2734
      %v2767 = vmul.f32 %v2451, %v2735
      %v2768 = vmul.f32 %v2453, %v2736
      %v2769 = vmul.f32 %v2455, %v2737
      %v2770 = vmul.f32 %v2457, %v2738
      %v2771 = vmul.f32 %v2459, %v2739
      %v2772 = vmul.f32 %v2461, %v2740
      %v2773 = vmul.f32 %v2463, %v2741
      %v2774 = vmul.f32 %v2465, %v2742
      %v2775 = vmul.f32 %v2467, %v2743
      %v2776 = vmul.f32 %v2469, %v2744
      %v2777 = vmul.f32 %v2471, %v2745
      %v2778 = vmul.f32 %v2473, %v2746
      %v2779 = vmul.f32 %v2475, %v2747
      %v2780 = vmul.f32 %v2477, %v2748
      %v2781 = vmul.f32 %v2479, %v2749
      %v2782 = vmul.f32 %v2481, %v2750
      %v2783 = vmul.f32 %v2483, %v2751
      %v2784 = vmul.f32 %v2485, %v2752
      %v2785 = vmul.f32 %v2487, %v2753
      %v2786 = vmul.f32 %v2489, %v2754
      %v2787 = vmul.f32 %v2491, %v2755
      %v2788 = vmul.f32 %v2493, %v2756
      %v2789 = vmul.f32 %v2495, %v2757
      %v2790 = vmul.f32 %v2497, %v2758
      %v2791 = vmul.f32 %v2499, %v2759
      %v2792 = vmul.f32 %v2501, %v2760
      %v2793 = vmul.f32 %v2503, %v2761
      %v2794 = vmul.f32 %v2505, %v2762
      %v2795 = vmul.f32 %v2507, %v2763
      %v2796 = vld [vmem:[%s10] sm:$0xf]
      %v2798 = vsel %vm2187, %v2764, 0
      %v2801 = vsel %vm2187, %v2765, 0
      %v2804 = vsel %vm2187, %v2766, 0
      %v2807 = vsel %vm2187, %v2767, 0
      %v2810 = vsel %vm2187, %v2768, 0
      %v2813 = vsel %vm2187, %v2769, 0
      %v2816 = vsel %vm2187, %v2770, 0
      %v2819 = vsel %vm2187, %v2771, 0
      %v2822 = vsel %vm2187, %v2772, 0
      %v2825 = vsel %vm2187, %v2773, 0
      %v2828 = vsel %vm2187, %v2774, 0
      %v2831 = vsel %vm2187, %v2775, 0
      %v2834 = vsel %vm2187, %v2776, 0
      %v2837 = vsel %vm2187, %v2777, 0
      %v2840 = vsel %vm2187, %v2778, 0
      %v2843 = vsel %vm2187, %v2779, 0
      %v2846 = vsel %vm2187, %v2780, 0
      %v2849 = vsel %vm2187, %v2781, 0
      %v2852 = vsel %vm2187, %v2782, 0
      %v2855 = vsel %vm2187, %v2783, 0
      %v2858 = vsel %vm2187, %v2784, 0
      %v2861 = vsel %vm2187, %v2785, 0
      %v2864 = vsel %vm2187, %v2786, 0
      %v2867 = vsel %vm2187, %v2787, 0
      %v2870 = vsel %vm2187, %v2788, 0
      %v2873 = vsel %vm2187, %v2789, 0
      %v2876 = vsel %vm2187, %v2790, 0
      %v2879 = vsel %vm2187, %v2791, 0
      %v2882 = vsel %vm2187, %v2792, 0
      %v2885 = vsel %vm2187, %v2793, 0
      %v2888 = vsel %vm2187, %v2794, 0
      %v2891 = vsel %vm2187, %v2795, 0
      %vm2893 = vcmask 1043456
      %v2895 = vsel %vm2893, %v2796, 0
      %2897 = vmatprep.subr.mxu0 0.0
      %2898 = vmatpush1.msra.mxu0 %v2895
      %2899 = vmatprep.subr.mxu0 0.0
      %2900 = vmatpush1.msra.mxu0 0.0
      %2901 = vmatprep.subr.mxu0 0.0
      %2902 = vmatpush1.msra.mxu0 0.0
      %2903 = vmatprep.subr.mxu0 0.0
      %2904 = vmatpush1.msra.mxu0 0.0
      %2905 = vmatprep.subr.mxu0 0.0
      %2906 = vmatpush1.msra.mxu0 0.0
      %2907 = vmatprep.subr.mxu0 0.0
      %2908 = vmatpush1.msra.mxu0 0.0
      %2909 = vmatprep.subr.mxu0 0.0
      %2910 = vmatpush1.msra.mxu0 0.0
      %2911 = vmatprep.subr.mxu0 0.0
      %2912 = vmatpush1.msra.mxu0 0.0
      %2913 = vmatprep.subr.mxu0 0.0
      %2914 = vmatpush1.msra.mxu0 0.0
      %2915 = vmatprep.subr.mxu0 0.0
      %2916 = vmatpush1.msra.mxu0 0.0
      %2917 = vmatprep.subr.mxu0 0.0
      %2918 = vmatpush1.msra.mxu0 0.0
      %2919 = vmatprep.subr.mxu0 0.0
      %2920 = vmatpush1.msra.mxu0 0.0
      %2921 = vmatprep.subr.mxu0 0.0
      %2922 = vmatpush1.msra.mxu0 0.0
      %2923 = vmatprep.subr.mxu0 0.0
      %2924 = vmatpush1.msra.mxu0 0.0
      %2925 = vmatprep.subr.mxu0 0.0
      %2926 = vmatpush1.msra.mxu0 0.0
      %2927 = vmatprep.subr.mxu0 0.0
      %2928 = vmatpush1.msra.mxu0 0.0
      %2929 = vmatprep.subr.mxu0 0.0
      %2930 = vmatpush1.msra.mxu0 0.0
      %2931 = vmatprep.subr.mxu0 0.0
      %2932 = vmatpush1.msra.mxu0 0.0
      %2933 = vmatprep.subr.mxu0 0.0
      %2934 = vmatpush1.msra.mxu0 0.0
      %2935 = vmatprep.subr.mxu0 0.0
      %2936 = vmatpush1.msra.mxu0 0.0
      %2937 = vmatprep.subr.mxu0 0.0
      %2938 = vmatpush1.msra.mxu0 0.0
      %2939 = vmatprep.subr.mxu0 0.0
      %2940 = vmatpush1.msra.mxu0 0.0
      %2941 = vmatprep.subr.mxu0 0.0
      %2942 = vmatpush1.msra.mxu0 0.0
      %2943 = vmatprep.subr.mxu0 0.0
      %2944 = vmatpush1.msra.mxu0 0.0
      %2945 = vmatprep.subr.mxu0 0.0
      %2946 = vmatpush1.msra.mxu0 0.0
      %2947 = vmatprep.subr.mxu0 0.0
      %2948 = vmatpush1.msra.mxu0 0.0
      %2949 = vmatprep.subr.mxu0 0.0
      %2950 = vmatpush1.msra.mxu0 0.0
      %2951 = vmatprep.subr.mxu0 0.0
      %2952 = vmatpush1.msra.mxu0 0.0
      %2953 = vmatprep.subr.mxu0 0.0
      %2954 = vmatpush1.msra.mxu0 0.0
      %2955 = vmatprep.subr.mxu0 0.0
      %2956 = vmatpush1.msra.mxu0 0.0
      %2957 = vmatprep.subr.mxu0 0.0
      %2958 = vmatpush1.msra.mxu0 0.0
      %2959 = vmatprep.subr.mxu0 0.0
      %2960 = vmatpush1.msra.mxu0 0.0
      %2961 = vmatprep.mubr.f32.mxu0 0.0
      %2962 = vmatmul.mubr.f32.gmra.mrb[0].mxu0 %v2798
      %v2963 = vpop.f32.mrb[0].mxu0
      %v2964 = vadd.f32 0.0, %v2963
      %v2965 = vpop.f32.mrb[0].mxu0
      %2966 = vmatprep.mubr.f32.mxu0 0.0
      %2967 = vmatmul.mubr.f32.gmra.mrb[0].mxu0 %v2801
      %v2968 = vpop.f32.mrb[0].mxu0
      %v2969 = vadd.f32 0.0, %v2968
      %v2970 = vpop.f32.mrb[0].mxu0
      %2971 = vmatprep.mubr.f32.mxu0 0.0
      %2972 = vmatmul.mubr.f32.gmra.mrb[0].mxu0 %v2804
      %v2973 = vpop.f32.mrb[0].mxu0
      %v2974 = vadd.f32 0.0, %v2973
      %v2975 = vpop.f32.mrb[0].mxu0
      %2976 = vmatprep.mubr.f32.mxu0 0.0
      %2977 = vmatmul.mubr.f32.gmra.mrb[0].mxu0 %v2807
      %v2978 = vpop.f32.mrb[0].mxu0
      %v2979 = vadd.f32 0.0, %v2978
      %v2980 = vpop.f32.mrb[0].mxu0
      %2981 = vmatprep.mubr.f32.mxu0 0.0
      %2982 = vmatmul.mubr.f32.gmra.mrb[0].mxu0 %v2810
      %v2983 = vpop.f32.mrb[0].mxu0
      %v2984 = vadd.f32 0.0, %v2983
      %v2985 = vpop.f32.mrb[0].mxu0
      %2986 = vmatprep.mubr.f32.mxu0 0.0
      %2987 = vmatmul.mubr.f32.gmra.mrb[0].mxu0 %v2813
      %v2988 = vpop.f32.mrb[0].mxu0
      %v2989 = vadd.f32 0.0, %v2988
      %v2990 = vpop.f32.mrb[0].mxu0
      %2991 = vmatprep.mubr.f32.mxu0 0.0
      %2992 = vmatmul.mubr.f32.gmra.mrb[0].mxu0 %v2816
      %v2993 = vpop.f32.mrb[0].mxu0
      %v2994 = vadd.f32 0.0, %v2993
      %v2995 = vpop.f32.mrb[0].mxu0
      %2996 = vmatprep.mubr.f32.mxu0 0.0
      %2997 = vmatmul.mubr.f32.gmra.mrb[0].mxu0 %v2819
      %v2998 = vpop.f32.mrb[0].mxu0
      %v2999 = vadd.f32 0.0, %v2998
      %v3000 = vpop.f32.mrb[0].mxu0
      %3001 = vmatprep.mubr.f32.mxu0 0.0
      %3002 = vmatmul.mubr.f32.gmra.mrb[0].mxu0 %v2822
      %v3003 = vpop.f32.mrb[0].mxu0
      %v3004 = vadd.f32 0.0, %v3003
      %v3005 = vpop.f32.mrb[0].mxu0
      %3006 = vmatprep.mubr.f32.mxu0 0.0
      %3007 = vmatmul.mubr.f32.gmra.mrb[0].mxu0 %v2825
      %v3008 = vpop.f32.mrb[0].mxu0
      %v3009 = vadd.f32 0.0, %v3008
      %v3010 = vpop.f32.mrb[0].mxu0
      %3011 = vmatprep.mubr.f32.mxu0 0.0
      %3012 = vmatmul.mubr.f32.gmra.mrb[0].mxu0 %v2828
      %v3013 = vpop.f32.mrb[0].mxu0
      %v3014 = vadd.f32 0.0, %v3013
      %v3015 = vpop.f32.mrb[0].mxu0
      %3016 = vmatprep.mubr.f32.mxu0 0.0
      %3017 = vmatmul.mubr.f32.gmra.mrb[0].mxu0 %v2831
      %v3018 = vpop.f32.mrb[0].mxu0
      %v3019 = vadd.f32 0.0, %v3018
      %v3020 = vpop.f32.mrb[0].mxu0
      %3021 = vmatprep.mubr.f32.mxu0 0.0
      %3022 = vmatmul.mubr.f32.gmra.mrb[0].mxu0 %v2834
      %v3023 = vpop.f32.mrb[0].mxu0
      %v3024 = vadd.f32 0.0, %v3023
      %v3025 = vpop.f32.mrb[0].mxu0
      %3026 = vmatprep.mubr.f32.mxu0 0.0
      %3027 = vmatmul.mubr.f32.gmra.mrb[0].mxu0 %v2837
      %v3028 = vpop.f32.mrb[0].mxu0
      %v3029 = vadd.f32 0.0, %v3028
      %v3030 = vpop.f32.mrb[0].mxu0
      %3031 = vmatprep.mubr.f32.mxu0 0.0
      %3032 = vmatmul.mubr.f32.gmra.mrb[0].mxu0 %v2840
      %v3033 = vpop.f32.mrb[0].mxu0
      %v3034 = vadd.f32 0.0, %v3033
      %v3035 = vpop.f32.mrb[0].mxu0
      %3036 = vmatprep.mubr.f32.mxu0 0.0
      %3037 = vmatmul.mubr.f32.gmra.mrb[0].mxu0 %v2843
      %v3038 = vpop.f32.mrb[0].mxu0
      %v3039 = vadd.f32 0.0, %v3038
      %v3040 = vpop.f32.mrb[0].mxu0
      %3041 = vmatprep.mubr.f32.mxu0 0.0
      %3042 = vmatmul.mubr.f32.gmra.mrb[0].mxu0 %v2846
      %v3043 = vpop.f32.mrb[0].mxu0
      %v3044 = vadd.f32 0.0, %v3043
      %v3045 = vpop.f32.mrb[0].mxu0
      %3046 = vmatprep.mubr.f32.mxu0 0.0
      %3047 = vmatmul.mubr.f32.gmra.mrb[0].mxu0 %v2849
      %v3048 = vpop.f32.mrb[0].mxu0
      %v3049 = vadd.f32 0.0, %v3048
      %v3050 = vpop.f32.mrb[0].mxu0
      %3051 = vmatprep.mubr.f32.mxu0 0.0
      %3052 = vmatmul.mubr.f32.gmra.mrb[0].mxu0 %v2852
      %v3053 = vpop.f32.mrb[0].mxu0
      %v3054 = vadd.f32 0.0, %v3053
      %v3055 = vpop.f32.mrb[0].mxu0
      %3056 = vmatprep.mubr.f32.mxu0 0.0
      %3057 = vmatmul.mubr.f32.gmra.mrb[0].mxu0 %v2855
      %v3058 = vpop.f32.mrb[0].mxu0
      %v3059 = vadd.f32 0.0, %v3058
      %v3060 = vpop.f32.mrb[0].mxu0
      %3061 = vmatprep.mubr.f32.mxu0 0.0
      %3062 = vmatmul.mubr.f32.gmra.mrb[0].mxu0 %v2858
      %v3063 = vpop.f32.mrb[0].mxu0
      %v3064 = vadd.f32 0.0, %v3063
      %v3065 = vpop.f32.mrb[0].mxu0
      %3066 = vmatprep.mubr.f32.mxu0 0.0
      %3067 = vmatmul.mubr.f32.gmra.mrb[0].mxu0 %v2861
      %v3068 = vpop.f32.mrb[0].mxu0
      %v3069 = vadd.f32 0.0, %v3068
      %v3070 = vpop.f32.mrb[0].mxu0
      %3071 = vmatprep.mubr.f32.mxu0 0.0
      %3072 = vmatmul.mubr.f32.gmra.mrb[0].mxu0 %v2864
      %v3073 = vpop.f32.mrb[0].mxu0
      %v3074 = vadd.f32 0.0, %v3073
      %v3075 = vpop.f32.mrb[0].mxu0
      %3076 = vmatprep.mubr.f32.mxu0 0.0
      %3077 = vmatmul.mubr.f32.gmra.mrb[0].mxu0 %v2867
      %v3078 = vpop.f32.mrb[0].mxu0
      %v3079 = vadd.f32 0.0, %v3078
      %v3080 = vpop.f32.mrb[0].mxu0
      %3081 = vmatprep.mubr.f32.mxu0 0.0
      %3082 = vmatmul.mubr.f32.gmra.mrb[0].mxu0 %v2870
      %v3083 = vpop.f32.mrb[0].mxu0
      %v3084 = vadd.f32 0.0, %v3083
      %v3085 = vpop.f32.mrb[0].mxu0
      %3086 = vmatprep.mubr.f32.mxu0 0.0
      %3087 = vmatmul.mubr.f32.gmra.mrb[0].mxu0 %v2873
      %v3088 = vpop.f32.mrb[0].mxu0
      %v3089 = vadd.f32 0.0, %v3088
      %v3090 = vpop.f32.mrb[0].mxu0
      %3091 = vmatprep.mubr.f32.mxu0 0.0
      %3092 = vmatmul.mubr.f32.gmra.mrb[0].mxu0 %v2876
      %v3093 = vpop.f32.mrb[0].mxu0
      %v3094 = vadd.f32 0.0, %v3093
      %v3095 = vpop.f32.mrb[0].mxu0
      %3096 = vmatprep.mubr.f32.mxu0 0.0
      %3097 = vmatmul.mubr.f32.gmra.mrb[0].mxu0 %v2879
      %v3098 = vpop.f32.mrb[0].mxu0
      %v3099 = vadd.f32 0.0, %v3098
      %v3100 = vpop.f32.mrb[0].mxu0
      %3101 = vmatprep.mubr.f32.mxu0 0.0
      %3102 = vmatmul.mubr.f32.gmra.mrb[0].mxu0 %v2882
      %v3103 = vpop.f32.mrb[0].mxu0
      %v3104 = vadd.f32 0.0, %v3103
      %v3105 = vpop.f32.mrb[0].mxu0
      %3106 = vmatprep.mubr.f32.mxu0 0.0
      %3107 = vmatmul.mubr.f32.gmra.mrb[0].mxu0 %v2885
      %v3108 = vpop.f32.mrb[0].mxu0
      %v3109 = vadd.f32 0.0, %v3108
      %v3110 = vpop.f32.mrb[0].mxu0
      %3111 = vmatprep.mubr.f32.mxu0 0.0
      %3112 = vmatmul.mubr.f32.gmra.mrb[0].mxu0 %v2888
      %v3113 = vpop.f32.mrb[0].mxu0
      %v3114 = vadd.f32 0.0, %v3113
      %v3115 = vpop.f32.mrb[0].mxu0
      %3116 = vmatprep.mubr.f32.mxu0 0.0
      %3117 = vmatmul.mubr.f32.gmra.mrb[0].mxu0 %v2891
      %v3118 = vpop.f32.mrb[0].mxu0
      %v3119 = vadd.f32 0.0, %v3118
      %v3120 = vpop.f32.mrb[0].mxu0
      %3121 = vdwg.mxu0
      %3154 = vrot.lane.b32.xlu0 %v1073, 96
      %v3155 = vpop.permute.xlu0 %3154
      %3156 = vrot.lane.b32.xlu0 %v1076, 96
      %v3157 = vpop.permute.xlu0 %3156
      %3158 = vrot.lane.b32.xlu0 %v1081, 96
      %v3159 = vpop.permute.xlu0 %3158
      %3160 = vrot.lane.b32.xlu0 %v1084, 96
      %v3161 = vpop.permute.xlu0 %3160
      %3162 = vrot.lane.b32.xlu0 %v1089, 96
      %v3163 = vpop.permute.xlu0 %3162
      %3164 = vrot.lane.b32.xlu0 %v1092, 96
      %v3165 = vpop.permute.xlu0 %3164
      %3166 = vrot.lane.b32.xlu0 %v1097, 96
      %v3167 = vpop.permute.xlu0 %3166
      %3168 = vrot.lane.b32.xlu0 %v1100, 96
      %v3169 = vpop.permute.xlu0 %3168
      %3170 = vrot.lane.b32.xlu0 %v1105, 96
      %v3171 = vpop.permute.xlu0 %3170
      %3172 = vrot.lane.b32.xlu0 %v1108, 96
      %v3173 = vpop.permute.xlu0 %3172
      %3174 = vrot.lane.b32.xlu0 %v1113, 96
      %v3175 = vpop.permute.xlu0 %3174
      %3176 = vrot.lane.b32.xlu0 %v1116, 96
      %v3177 = vpop.permute.xlu0 %3176
      %3178 = vrot.lane.b32.xlu0 %v1121, 96
      %v3179 = vpop.permute.xlu0 %3178
      %3180 = vrot.lane.b32.xlu0 %v1124, 96
      %v3181 = vpop.permute.xlu0 %3180
      %3182 = vrot.lane.b32.xlu0 %v1129, 96
      %v3183 = vpop.permute.xlu0 %3182
      %3184 = vrot.lane.b32.xlu0 %v1132, 96
      %v3185 = vpop.permute.xlu0 %3184
      %3186 = vrot.lane.b32.xlu0 %v1137, 96
      %v3187 = vpop.permute.xlu0 %3186
      %3188 = vrot.lane.b32.xlu0 %v1140, 96
      %v3189 = vpop.permute.xlu0 %3188
      %3190 = vrot.lane.b32.xlu0 %v1145, 96
      %v3191 = vpop.permute.xlu0 %3190
      %3192 = vrot.lane.b32.xlu0 %v1148, 96
      %v3193 = vpop.permute.xlu0 %3192
      %3194 = vrot.lane.b32.xlu0 %v1153, 96
      %v3195 = vpop.permute.xlu0 %3194
      %3196 = vrot.lane.b32.xlu0 %v1156, 96
      %v3197 = vpop.permute.xlu0 %3196
      %3198 = vrot.lane.b32.xlu0 %v1161, 96
      %v3199 = vpop.permute.xlu0 %3198
      %3200 = vrot.lane.b32.xlu0 %v1164, 96
      %v3201 = vpop.permute.xlu0 %3200
      %3202 = vrot.lane.b32.xlu0 %v1169, 96
      %v3203 = vpop.permute.xlu0 %3202
      %3204 = vrot.lane.b32.xlu0 %v1172, 96
      %v3205 = vpop.permute.xlu0 %3204
      %3206 = vrot.lane.b32.xlu0 %v1177, 96
      %v3207 = vpop.permute.xlu0 %3206
      %3208 = vrot.lane.b32.xlu0 %v1180, 96
      %v3209 = vpop.permute.xlu0 %3208
      %3210 = vrot.lane.b32.xlu0 %v1185, 96
      %v3211 = vpop.permute.xlu0 %3210
      %3212 = vrot.lane.b32.xlu0 %v1188, 96
      %v3213 = vpop.permute.xlu0 %3212
      %3214 = vrot.lane.b32.xlu0 %v1193, 96
      %v3215 = vpop.permute.xlu0 %3214
      %3216 = vrot.lane.b32.xlu0 %v1196, 96
      %v3217 = vpop.permute.xlu0 %3216
      %v3250 = vmul.f32 %v2964, %v3155
      %v3251 = vmul.f32 %v2969, %v3157
      %v3252 = vmul.f32 %v2974, %v3159
      %v3253 = vmul.f32 %v2979, %v3161
      %v3254 = vmul.f32 %v2984, %v3163
      %v3255 = vmul.f32 %v2989, %v3165
      %v3256 = vmul.f32 %v2994, %v3167
      %v3257 = vmul.f32 %v2999, %v3169
      %v3258 = vmul.f32 %v3004, %v3171
      %v3259 = vmul.f32 %v3009, %v3173
      %v3260 = vmul.f32 %v3014, %v3175
      %v3261 = vmul.f32 %v3019, %v3177
      %v3262 = vmul.f32 %v3024, %v3179
      %v3263 = vmul.f32 %v3029, %v3181
      %v3264 = vmul.f32 %v3034, %v3183
      %v3265 = vmul.f32 %v3039, %v3185
      %v3266 = vmul.f32 %v3044, %v3187
      %v3267 = vmul.f32 %v3049, %v3189
      %v3268 = vmul.f32 %v3054, %v3191
      %v3269 = vmul.f32 %v3059, %v3193
      %v3270 = vmul.f32 %v3064, %v3195
      %v3271 = vmul.f32 %v3069, %v3197
      %v3272 = vmul.f32 %v3074, %v3199
      %v3273 = vmul.f32 %v3079, %v3201
      %v3274 = vmul.f32 %v3084, %v3203
      %v3275 = vmul.f32 %v3089, %v3205
      %v3276 = vmul.f32 %v3094, %v3207
      %v3277 = vmul.f32 %v3099, %v3209
      %v3278 = vmul.f32 %v3104, %v3211
      %v3279 = vmul.f32 %v3109, %v3213
      %v3280 = vmul.f32 %v3114, %v3215
      %v3281 = vmul.f32 %v3119, %v3217
      %v3282 = vsel %vm457, %v3250, 0.0
      %v3283 = vrot.slane %v3282, 4
      %v3284 = vadd.f32 %v3282, %v3283
      %v3285 = vrot.slane %v3284, 2
      %v3286 = vadd.f32 %v3284, %v3285
      %v3287 = vrot.slane %v3286, 1
      %v3288 = vadd.f32 %v3286, %v3287
      %v3289 = vsel %vm457, %v3251, 0.0
      %v3290 = vrot.slane %v3289, 4
      %v3291 = vadd.f32 %v3289, %v3290
      %v3292 = vrot.slane %v3291, 2
      %v3293 = vadd.f32 %v3291, %v3292
      %v3294 = vrot.slane %v3293, 1
      %v3295 = vadd.f32 %v3293, %v3294
      %v3296 = vsel %vm457, %v3252, 0.0
      %v3297 = vrot.slane %v3296, 4
      %v3298 = vadd.f32 %v3296, %v3297
      %v3299 = vrot.slane %v3298, 2
      %v3300 = vadd.f32 %v3298, %v3299
      %v3301 = vrot.slane %v3300, 1
      %v3302 = vadd.f32 %v3300, %v3301
      %v3303 = vsel %vm457, %v3253, 0.0
      %v3304 = vrot.slane %v3303, 4
      %v3305 = vadd.f32 %v3303, %v3304
      %v3306 = vrot.slane %v3305, 2
      %v3307 = vadd.f32 %v3305, %v3306
      %v3308 = vrot.slane %v3307, 1
      %v3309 = vadd.f32 %v3307, %v3308
      %v3310 = vsel %vm457, %v3254, 0.0
      %v3311 = vrot.slane %v3310, 4
      %v3312 = vadd.f32 %v3310, %v3311
      %v3313 = vrot.slane %v3312, 2
      %v3314 = vadd.f32 %v3312, %v3313
      %v3315 = vrot.slane %v3314, 1
      %v3316 = vadd.f32 %v3314, %v3315
      %v3317 = vsel %vm457, %v3255, 0.0
      %v3318 = vrot.slane %v3317, 4
      %v3319 = vadd.f32 %v3317, %v3318
      %v3320 = vrot.slane %v3319, 2
      %v3321 = vadd.f32 %v3319, %v3320
      %v3322 = vrot.slane %v3321, 1
      %v3323 = vadd.f32 %v3321, %v3322
      %v3324 = vsel %vm457, %v3256, 0.0
      %v3325 = vrot.slane %v3324, 4
      %v3326 = vadd.f32 %v3324, %v3325
      %v3327 = vrot.slane %v3326, 2
      %v3328 = vadd.f32 %v3326, %v3327
      %v3329 = vrot.slane %v3328, 1
      %v3330 = vadd.f32 %v3328, %v3329
      %v3331 = vsel %vm457, %v3257, 0.0
      %v3332 = vrot.slane %v3331, 4
      %v3333 = vadd.f32 %v3331, %v3332
      %v3334 = vrot.slane %v3333, 2
      %v3335 = vadd.f32 %v3333, %v3334
      %v3336 = vrot.slane %v3335, 1
      %v3337 = vadd.f32 %v3335, %v3336
      %v3338 = vsel %vm457, %v3258, 0.0
      %v3339 = vrot.slane %v3338, 4
      %v3340 = vadd.f32 %v3338, %v3339
      %v3341 = vrot.slane %v3340, 2
      %v3342 = vadd.f32 %v3340, %v3341
      %v3343 = vrot.slane %v3342, 1
      %v3344 = vadd.f32 %v3342, %v3343
      %v3345 = vsel %vm457, %v3259, 0.0
      %v3346 = vrot.slane %v3345, 4
      %v3347 = vadd.f32 %v3345, %v3346
      %v3348 = vrot.slane %v3347, 2
      %v3349 = vadd.f32 %v3347, %v3348
      %v3350 = vrot.slane %v3349, 1
      %v3351 = vadd.f32 %v3349, %v3350
      %v3352 = vsel %vm457, %v3260, 0.0
      %v3353 = vrot.slane %v3352, 4
      %v3354 = vadd.f32 %v3352, %v3353
      %v3355 = vrot.slane %v3354, 2
      %v3356 = vadd.f32 %v3354, %v3355
      %v3357 = vrot.slane %v3356, 1
      %v3358 = vadd.f32 %v3356, %v3357
      %v3359 = vsel %vm457, %v3261, 0.0
      %v3360 = vrot.slane %v3359, 4
      %v3361 = vadd.f32 %v3359, %v3360
      %v3362 = vrot.slane %v3361, 2
      %v3363 = vadd.f32 %v3361, %v3362
      %v3364 = vrot.slane %v3363, 1
      %v3365 = vadd.f32 %v3363, %v3364
      %v3366 = vsel %vm457, %v3262, 0.0
      %v3367 = vrot.slane %v3366, 4
      %v3368 = vadd.f32 %v3366, %v3367
      %v3369 = vrot.slane %v3368, 2
      %v3370 = vadd.f32 %v3368, %v3369
      %v3371 = vrot.slane %v3370, 1
      %v3372 = vadd.f32 %v3370, %v3371
      %v3373 = vsel %vm457, %v3263, 0.0
      %v3374 = vrot.slane %v3373, 4
      %v3375 = vadd.f32 %v3373, %v3374
      %v3376 = vrot.slane %v3375, 2
      %v3377 = vadd.f32 %v3375, %v3376
      %v3378 = vrot.slane %v3377, 1
      %v3379 = vadd.f32 %v3377, %v3378
      %v3380 = vsel %vm457, %v3264, 0.0
      %v3381 = vrot.slane %v3380, 4
      %v3382 = vadd.f32 %v3380, %v3381
      %v3383 = vrot.slane %v3382, 2
      %v3384 = vadd.f32 %v3382, %v3383
      %v3385 = vrot.slane %v3384, 1
      %v3386 = vadd.f32 %v3384, %v3385
      %v3387 = vsel %vm457, %v3265, 0.0
      %v3388 = vrot.slane %v3387, 4
      %v3389 = vadd.f32 %v3387, %v3388
      %v3390 = vrot.slane %v3389, 2
      %v3391 = vadd.f32 %v3389, %v3390
      %v3392 = vrot.slane %v3391, 1
      %v3393 = vadd.f32 %v3391, %v3392
      %v3394 = vsel %vm457, %v3266, 0.0
      %v3395 = vrot.slane %v3394, 4
      %v3396 = vadd.f32 %v3394, %v3395
      %v3397 = vrot.slane %v3396, 2
      %v3398 = vadd.f32 %v3396, %v3397
      %v3399 = vrot.slane %v3398, 1
      %v3400 = vadd.f32 %v3398, %v3399
      %v3401 = vsel %vm457, %v3267, 0.0
      %v3402 = vrot.slane %v3401, 4
      %v3403 = vadd.f32 %v3401, %v3402
      %v3404 = vrot.slane %v3403, 2
      %v3405 = vadd.f32 %v3403, %v3404
      %v3406 = vrot.slane %v3405, 1
      %v3407 = vadd.f32 %v3405, %v3406
      %v3408 = vsel %vm457, %v3268, 0.0
      %v3409 = vrot.slane %v3408, 4
      %v3410 = vadd.f32 %v3408, %v3409
      %v3411 = vrot.slane %v3410, 2
      %v3412 = vadd.f32 %v3410, %v3411
      %v3413 = vrot.slane %v3412, 1
      %v3414 = vadd.f32 %v3412, %v3413
      %v3415 = vsel %vm457, %v3269, 0.0
      %v3416 = vrot.slane %v3415, 4
      %v3417 = vadd.f32 %v3415, %v3416
      %v3418 = vrot.slane %v3417, 2
      %v3419 = vadd.f32 %v3417, %v3418
      %v3420 = vrot.slane %v3419, 1
      %v3421 = vadd.f32 %v3419, %v3420
      %v3422 = vsel %vm457, %v3270, 0.0
      %v3423 = vrot.slane %v3422, 4
      %v3424 = vadd.f32 %v3422, %v3423
      %v3425 = vrot.slane %v3424, 2
      %v3426 = vadd.f32 %v3424, %v3425
      %v3427 = vrot.slane %v3426, 1
      %v3428 = vadd.f32 %v3426, %v3427
      %v3429 = vsel %vm457, %v3271, 0.0
      %v3430 = vrot.slane %v3429, 4
      %v3431 = vadd.f32 %v3429, %v3430
      %v3432 = vrot.slane %v3431, 2
      %v3433 = vadd.f32 %v3431, %v3432
      %v3434 = vrot.slane %v3433, 1
      %v3435 = vadd.f32 %v3433, %v3434
      %v3436 = vsel %vm457, %v3272, 0.0
      %v3437 = vrot.slane %v3436, 4
      %v3438 = vadd.f32 %v3436, %v3437
      %v3439 = vrot.slane %v3438, 2
      %v3440 = vadd.f32 %v3438, %v3439
      %v3441 = vrot.slane %v3440, 1
      %v3442 = vadd.f32 %v3440, %v3441
      %v3443 = vsel %vm457, %v3273, 0.0
      %v3444 = vrot.slane %v3443, 4
      %v3445 = vadd.f32 %v3443, %v3444
      %v3446 = vrot.slane %v3445, 2
      %v3447 = vadd.f32 %v3445, %v3446
      %v3448 = vrot.slane %v3447, 1
      %v3449 = vadd.f32 %v3447, %v3448
      %v3450 = vsel %vm457, %v3274, 0.0
      %v3451 = vrot.slane %v3450, 4
      %v3452 = vadd.f32 %v3450, %v3451
      %v3453 = vrot.slane %v3452, 2
      %v3454 = vadd.f32 %v3452, %v3453
      %v3455 = vrot.slane %v3454, 1
      %v3456 = vadd.f32 %v3454, %v3455
      %v3457 = vsel %vm457, %v3275, 0.0
      %v3458 = vrot.slane %v3457, 4
      %v3459 = vadd.f32 %v3457, %v3458
      %v3460 = vrot.slane %v3459, 2
      %v3461 = vadd.f32 %v3459, %v3460
      %v3462 = vrot.slane %v3461, 1
      %v3463 = vadd.f32 %v3461, %v3462
      %v3464 = vsel %vm457, %v3276, 0.0
      %v3465 = vrot.slane %v3464, 4
      %v3466 = vadd.f32 %v3464, %v3465
      %v3467 = vrot.slane %v3466, 2
      %v3468 = vadd.f32 %v3466, %v3467
      %v3469 = vrot.slane %v3468, 1
      %v3470 = vadd.f32 %v3468, %v3469
      %v3471 = vsel %vm457, %v3277, 0.0
      %v3472 = vrot.slane %v3471, 4
      %v3473 = vadd.f32 %v3471, %v3472
      %v3474 = vrot.slane %v3473, 2
      %v3475 = vadd.f32 %v3473, %v3474
      %v3476 = vrot.slane %v3475, 1
      %v3477 = vadd.f32 %v3475, %v3476
      %v3478 = vsel %vm457, %v3278, 0.0
      %v3479 = vrot.slane %v3478, 4
      %v3480 = vadd.f32 %v3478, %v3479
      %v3481 = vrot.slane %v3480, 2
      %v3482 = vadd.f32 %v3480, %v3481
      %v3483 = vrot.slane %v3482, 1
      %v3484 = vadd.f32 %v3482, %v3483
      %v3485 = vsel %vm457, %v3279, 0.0
      %v3486 = vrot.slane %v3485, 4
      %v3487 = vadd.f32 %v3485, %v3486
      %v3488 = vrot.slane %v3487, 2
      %v3489 = vadd.f32 %v3487, %v3488
      %v3490 = vrot.slane %v3489, 1
      %v3491 = vadd.f32 %v3489, %v3490
      %v3492 = vsel %vm457, %v3280, 0.0
      %v3493 = vrot.slane %v3492, 4
      %v3494 = vadd.f32 %v3492, %v3493
      %v3495 = vrot.slane %v3494, 2
      %v3496 = vadd.f32 %v3494, %v3495
      %v3497 = vrot.slane %v3496, 1
      %v3498 = vadd.f32 %v3496, %v3497
      %v3499 = vsel %vm457, %v3281, 0.0
      %v3500 = vrot.slane %v3499, 4
      %v3501 = vadd.f32 %v3499, %v3500
      %v3502 = vrot.slane %v3501, 2
      %v3503 = vadd.f32 %v3501, %v3502
      %v3504 = vrot.slane %v3503, 1
      %v3505 = vadd.f32 %v3503, %v3504
      %v3506 = vpack.c.bf16 %v3288, %v3288
      %v3507 = vpack.c.bf16 %v3295, %v3295
      %v3508 = vpack.c.bf16 %v3302, %v3302
      %v3509 = vpack.c.bf16 %v3309, %v3309
      %v3510 = vpack.c.bf16 %v3316, %v3316
      %v3511 = vpack.c.bf16 %v3323, %v3323
      %v3512 = vpack.c.bf16 %v3330, %v3330
      %v3513 = vpack.c.bf16 %v3337, %v3337
      %v3514 = vpack.c.bf16 %v3344, %v3344
      %v3515 = vpack.c.bf16 %v3351, %v3351
      %v3516 = vpack.c.bf16 %v3358, %v3358
      %v3517 = vpack.c.bf16 %v3365, %v3365
      %v3518 = vpack.c.bf16 %v3372, %v3372
      %v3519 = vpack.c.bf16 %v3379, %v3379
      %v3520 = vpack.c.bf16 %v3386, %v3386
      %v3521 = vpack.c.bf16 %v3393, %v3393
      %v3522 = vpack.c.bf16 %v3400, %v3400
      %v3523 = vpack.c.bf16 %v3407, %v3407
      %v3524 = vpack.c.bf16 %v3414, %v3414
      %v3525 = vpack.c.bf16 %v3421, %v3421
      %v3526 = vpack.c.bf16 %v3428, %v3428
      %v3527 = vpack.c.bf16 %v3435, %v3435
      %v3528 = vpack.c.bf16 %v3442, %v3442
      %v3529 = vpack.c.bf16 %v3449, %v3449
      %v3530 = vpack.c.bf16 %v3456, %v3456
      %v3531 = vpack.c.bf16 %v3463, %v3463
      %v3532 = vpack.c.bf16 %v3470, %v3470
      %v3533 = vpack.c.bf16 %v3477, %v3477
      %v3534 = vpack.c.bf16 %v3484, %v3484
      %v3535 = vpack.c.bf16 %v3491, %v3491
      %v3536 = vpack.c.bf16 %v3498, %v3498
      %v3537 = vpack.c.bf16 %v3505, %v3505
      %v3538 = vld [vmem:[%s7] sm:$0xf]
      %v3539 = vld [vmem:[%s7 + $0x4] sm:$0xf]
      %v3540 = vld [vmem:[%s7 + $0x8] sm:$0xf]
      %v3541 = vld [vmem:[%s7 + $0xc] sm:$0xf]
      %v3542 = vld [vmem:[%s8] sm:$0x1]
      %v3544 = vlaneseq
      %v3545 = vshrl.u32 %v3544, 7
      %v3546 = vsub.s32 0, %v3545
      %v3547 = vrot.slane %v3542, %v3546
      %v3581 = vunpack.c.l.b16 %v3506
      %v3582 = vunpack.c.l.b16 %v3507
      %v3583 = vunpack.c.l.b16 %v3508
      %v3584 = vunpack.c.l.b16 %v3509
      %v3585 = vunpack.c.l.b16 %v3510
      %v3586 = vunpack.c.l.b16 %v3511
      %v3587 = vunpack.c.l.b16 %v3512
      %v3588 = vunpack.c.l.b16 %v3513
      %v3589 = vunpack.c.l.b16 %v3514
      %v3590 = vunpack.c.l.b16 %v3515
      %v3591 = vunpack.c.l.b16 %v3516
      %v3592 = vunpack.c.l.b16 %v3517
      %v3593 = vunpack.c.l.b16 %v3518
      %v3594 = vunpack.c.l.b16 %v3519
      %v3595 = vunpack.c.l.b16 %v3520
      %v3596 = vunpack.c.l.b16 %v3521
      %v3597 = vunpack.c.l.b16 %v3522
      %v3598 = vunpack.c.l.b16 %v3523
      %v3599 = vunpack.c.l.b16 %v3524
      %v3600 = vunpack.c.l.b16 %v3525
      %v3601 = vunpack.c.l.b16 %v3526
      %v3602 = vunpack.c.l.b16 %v3527
      %v3603 = vunpack.c.l.b16 %v3528
      %v3604 = vunpack.c.l.b16 %v3529
      %v3605 = vunpack.c.l.b16 %v3530
      %v3606 = vunpack.c.l.b16 %v3531
      %v3607 = vunpack.c.l.b16 %v3532
      %v3608 = vunpack.c.l.b16 %v3533
      %v3609 = vunpack.c.l.b16 %v3534
      %v3610 = vunpack.c.l.b16 %v3535
      %v3611 = vunpack.c.l.b16 %v3536
      %v3612 = vunpack.c.l.b16 %v3537
      %v3613 = vsel %vm1308, %v3582, %v3581
      %v3614 = vsel %vm1311, %v3583, %v3613
      %v3615 = vsel %vm1314, %v3584, %v3614
      %v3616 = vsel %vm1316, %v3585, %v3615
      %v3617 = vsel %vm1319, %v3586, %v3616
      %v3618 = vsel %vm1322, %v3587, %v3617
      %v3619 = vsel %vm1325, %v3588, %v3618
      %v3620 = vsel %vm1308, %v3590, %v3589
      %v3621 = vsel %vm1311, %v3591, %v3620
      %v3622 = vsel %vm1314, %v3592, %v3621
      %v3623 = vsel %vm1316, %v3593, %v3622
      %v3624 = vsel %vm1319, %v3594, %v3623
      %v3625 = vsel %vm1322, %v3595, %v3624
      %v3626 = vsel %vm1325, %v3596, %v3625
      %v3627 = vsel %vm1308, %v3598, %v3597
      %v3628 = vsel %vm1311, %v3599, %v3627
      %v3629 = vsel %vm1314, %v3600, %v3628
      %v3630 = vsel %vm1316, %v3601, %v3629
      %v3631 = vsel %vm1319, %v3602, %v3630
      %v3632 = vsel %vm1322, %v3603, %v3631
      %v3633 = vsel %vm1325, %v3604, %v3632
      %v3634 = vsel %vm1308, %v3606, %v3605
      %v3635 = vsel %vm1311, %v3607, %v3634
      %v3636 = vsel %vm1314, %v3608, %v3635
      %v3637 = vsel %vm1316, %v3609, %v3636
      %v3638 = vsel %vm1319, %v3610, %v3637
      %v3639 = vsel %vm1322, %v3611, %v3638
      %v3640 = vsel %vm1325, %v3612, %v3639
      %v3641 = vpack.c.b16 %v3626, %v3619
      %v3642 = vpack.c.b16 %v3640, %v3633
      %v3647 = vunpack.c.l.b16 %v3538
      %v3648 = vunpack.c.l.b16 %v3539
      %v3649 = vunpack.c.l.b16 %v3540
      %v3650 = vunpack.c.l.b16 %v3541
      %v3651 = vpack.c.b16 %v3648, %v3647
      %v3652 = vpack.c.b16 %v3650, %v3649
      %v3656 = vsel %vm457, %v3641, 0
      %v3659 = vsel %vm457, %v3642, 0
      %3661 = vmatprep.subr.bf16.mxu0 0
      %3662 = vmatpush1.bf16.msra.mxu0 %v3651
      %3663 = vmatprep.subr.bf16.mxu0 0
      %3664 = vmatpush1.bf16.msra.mxu0 %v3652
      %3665 = vmatprep.subr.bf16.mxu0 0
      %3666 = vmatpush1.bf16.msra.mxu0 0
      %3667 = vmatprep.subr.bf16.mxu0 0
      %3668 = vmatpush1.bf16.msra.mxu0 0
      %3669 = vmatprep.subr.bf16.mxu0 0
      %3670 = vmatpush1.bf16.msra.mxu0 0
      %3671 = vmatprep.subr.bf16.mxu0 0
      %3672 = vmatpush1.bf16.msra.mxu0 0
      %3673 = vmatprep.subr.bf16.mxu0 0
      %3674 = vmatpush1.bf16.msra.mxu0 0
      %3675 = vmatprep.subr.bf16.mxu0 0
      %3676 = vmatpush1.bf16.msra.mxu0 0
      %3677 = vmatprep.subr.bf16.mxu0 0
      %3678 = vmatpush1.bf16.msra.mxu0 0
      %3679 = vmatprep.subr.bf16.mxu0 0
      %3680 = vmatpush1.bf16.msra.mxu0 0
      %3681 = vmatprep.subr.bf16.mxu0 0
      %3682 = vmatpush1.bf16.msra.mxu0 0
      %3683 = vmatprep.subr.bf16.mxu0 0
      %3684 = vmatpush1.bf16.msra.mxu0 0
      %3685 = vmatprep.subr.bf16.mxu0 0
      %3686 = vmatpush1.bf16.msra.mxu0 0
      %3687 = vmatprep.subr.bf16.mxu0 0
      %3688 = vmatpush1.bf16.msra.mxu0 0
      %3689 = vmatprep.subr.bf16.mxu0 0
      %3690 = vmatpush1.bf16.msra.mxu0 0
      %3691 = vmatprep.subr.bf16.mxu0 0
      %3692 = vmatpush1.bf16.msra.mxu0 0
      %3693 = vmatprep.mubr.bf16.mxu0 0
      %3694 = vmatmul.mubr.bf16.gmra.mrb[0].mxu0 %v3656
      %v3695 = vpop.f32.mrb[0].mxu0
      %v3696 = vadd.f32 %v3547, %v3695
      %v3697 = vpop.f32.mrb[0].mxu0
      %v3698 = vpop.f32.mrb[0].mxu0
      %v3699 = vadd.f32 %v3547, %v3698
      %v3700 = vpop.f32.mrb[0].mxu0
      %3701 = vmatprep.mubr.bf16.mxu0 0
      %3702 = vmatmul.mubr.bf16.gmra.mrb[0].mxu0 %v3659
      %v3703 = vpop.f32.mrb[0].mxu0
      %v3704 = vadd.f32 %v3547, %v3703
      %v3705 = vpop.f32.mrb[0].mxu0
      %v3706 = vpop.f32.mrb[0].mxu0
      %v3707 = vadd.f32 %v3547, %v3706
      %v3708 = vpop.f32.mrb[0].mxu0
      %3709 = vdwg.mxu0
      %v3742 = vrot.slane %v423, 4
      %v3743 = vrot.slane %v424, 3
      %v3744 = vsel %vm1308, %v3743, %v3742
      %v3745 = vrot.slane %v425, 2
      %v3746 = vsel %vm1311, %v3745, %v3744
      %v3747 = vrot.slane %v426, 1
      %v3748 = vsel %vm1314, %v3747, %v3746
      %v3749 = vsel %vm1316, %v427, %v3748
      %v3750 = vrot.slane %v428, 7
      %v3751 = vsel %vm1319, %v3750, %v3749
      %v3752 = vrot.slane %v429, 6
      %v3753 = vsel %vm1322, %v3752, %v3751
      %v3754 = vrot.slane %v430, 5
      %v3755 = vsel %vm1325, %v3754, %v3753
      %v3756 = vrot.slane %v431, 4
      %v3757 = vrot.slane %v432, 3
      %v3758 = vsel %vm1308, %v3757, %v3756
      %v3759 = vrot.slane %v433, 2
      %v3760 = vsel %vm1311, %v3759, %v3758
      %v3761 = vrot.slane %v434, 1
      %v3762 = vsel %vm1314, %v3761, %v3760
      %v3763 = vsel %vm1316, %v435, %v3762
      %v3764 = vrot.slane %v436, 7
      %v3765 = vsel %vm1319, %v3764, %v3763
      %v3766 = vrot.slane %v437, 6
      %v3767 = vsel %vm1322, %v3766, %v3765
      %v3768 = vrot.slane %v438, 5
      %v3769 = vsel %vm1325, %v3768, %v3767
      %v3770 = vrot.slane %v439, 4
      %v3771 = vrot.slane %v440, 3
      %v3772 = vsel %vm1308, %v3771, %v3770
      %v3773 = vrot.slane %v441, 2
      %v3774 = vsel %vm1311, %v3773, %v3772
      %v3775 = vrot.slane %v442, 1
      %v3776 = vsel %vm1314, %v3775, %v3774
      %v3777 = vsel %vm1316, %v443, %v3776
      %v3778 = vrot.slane %v444, 7
      %v3779 = vsel %vm1319, %v3778, %v3777
      %v3780 = vrot.slane %v445, 6
      %v3781 = vsel %vm1322, %v3780, %v3779
      %v3782 = vrot.slane %v446, 5
      %v3783 = vsel %vm1325, %v3782, %v3781
      %v3784 = vrot.slane %v447, 4
      %v3785 = vrot.slane %v448, 3
      %v3786 = vsel %vm1308, %v3785, %v3784
      %v3787 = vrot.slane %v449, 2
      %v3788 = vsel %vm1311, %v3787, %v3786
      %v3789 = vrot.slane %v450, 1
      %v3790 = vsel %vm1314, %v3789, %v3788
      %v3791 = vsel %vm1316, %v451, %v3790
      %v3792 = vrot.slane %v452, 7
      %v3793 = vsel %vm1319, %v3792, %v3791
      %v3794 = vrot.slane %v453, 6
      %v3795 = vsel %vm1322, %v3794, %v3793
      %v3796 = vrot.slane %v454, 5
      %v3797 = vsel %vm1325, %v3796, %v3795
      %v3802 = vadd.f32 %v3696, %v3755
      %v3803 = vadd.f32 %v3699, %v3769
      %v3804 = vadd.f32 %v3704, %v3783
      %v3805 = vadd.f32 %v3707, %v3797
      %v3806 = vpack.c.bf16 %v3803, %v3802
      %v3807 = vpack.c.bf16 %v3805, %v3804
      %v3810 = vunpack.c.l.b16 %v3806
      %v3811 = vunpack.c.h.b16 %v3806
      %v3812 = vunpack.c.l.b16 %v3807
      %v3813 = vunpack.c.h.b16 %v3807
      %v3814 = vpack.c.b16 %v3810, %v3810
      %v3815 = vpack.c.b16 %v3811, %v3811
      %v3816 = vpack.c.b16 %v3812, %v3812
      %v3817 = vpack.c.b16 %v3813, %v3813
      %vm3822 = vcmask 257024
      %3823 = vst.msk [vmem:[%s388] sm:$0xf] %vm3822, %v3814
      %3824 = vst.msk [vmem:[%s388 + $0x4] sm:$0xf] %vm3822, %v3815
      %3825 = vst.msk [vmem:[%s388 + $0x8] sm:$0xf] %vm3822, %v3816
      %3826 = vst.msk [vmem:[%s388 + $0xc] sm:$0xf] %vm3822, %v3817
      %s3827 = smul.u32 4, %s22
      %p3828 = scmp.lt.s32.totalorder %s3827, 15
      %s3829 = scalar_select %p3828, %s3827, 15
      %s3830 = smul.addr %s3829, 4
      %s3831 = scalar_lea.vmem %s11, %s3830
      // Predicated region
      $region65: #{vit_forward_pallas.5} parent=63 // pred_check
        %p3832 = pneg %p276
      $region66: #{vit_forward_pallas.5} parent=63 // pred_check_branch
        %3834 = sbr.rel (%p3832) target = $region68
      $region67: #{vit_forward_pallas.5} parent=63 // pred_region
        %s3835 = smul.u32 4, %s22
      $region68: #{vit_forward_pallas.5} parent=63 // pred_fallthru
        _
    $region64: #{vit_forward_pallas.5} parent=5 // pred_fallthru
      _
    %p3836 = scmp.le.s32.totalorder 2, %s17
    // Predicated region
    $region69: #{vit_forward_pallas.5} parent=5 // pred_check
      %p3837 = pneg %p3836
    $region70: #{vit_forward_pallas.5} parent=5 // pred_check_branch
      %3839 = sbr.rel (%p3837) target = $region72
    $region71: #{vit_forward_pallas.5} parent=5 // pred_region
      %s3840 = ssub.s32 %s17, 2
      // Predicated region
      $region73: #{vit_forward_pallas.5} parent=71 // pred_check
        %p3841 = pneg %p282
      $region74: #{vit_forward_pallas.5} parent=71 // pred_check_branch
        %3843 = sbr.rel (%p3841) target = $region76
      $region75: #{vit_forward_pallas.5} parent=71 // pred_region
        %s3844 = smul.u32 4, %s23
        %p3845 = scmp.lt.s32.totalorder %s3844, 15
        %s3846 = scalar_select %p3845, %s3844, 15
        %s3847 = smul.addr %s3846, 4
        %s3848 = scalar_lea.vmem %s11, %s3847
      $region76: #{vit_forward_pallas.5} parent=71 // pred_fallthru
        _
    $region72: #{vit_forward_pallas.5} parent=5 // pred_fallthru
      _
  $region6: #{vit_forward_pallas.5} parent=0 // loop_footer
    %s21 = sadd.s32 1, %s17
  $region7: #{vit_forward_pallas.5} parent=0 // loop_footer_branch
    %16 = sbr.rel target = $region3
  $region8: #{vit_forward_pallas.5} parent=0 // loop_exit
    _

// kernel: vit_forward_pallas.7
$region0: #{vit_forward_pallas.7}
  #allocation0 [shape = 'u32[]', space=smem, size = 0x4, offset = 0x4, fixed_abs, tag = 'smem constant byte address 0x4 - core index']
  #allocation1 [shape = 'u32[144,128]{1,0:T(1,128)}', space=vmem, size = 0x12000, scoped, tag = 'internal scratch']
  %s0 = inlined_call_operand.vmem [shape: bf16[128,32], index: 0, kind: input, shape index: {}]
  %s1 = inlined_call_operand.vmem [shape: f32[1,32], index: 1, kind: input, shape index: {}]
  %s2 = inlined_call_operand.vmem [shape: f32[1,32], index: 2, kind: input, shape index: {}]
  %s3 = inlined_call_operand.vmem [shape: bf16[32,128], index: 3, kind: input, shape index: {}]
  %s4 = inlined_call_operand.vmem [shape: f32[1,128], index: 4, kind: input, shape index: {}]
  %s5 = inlined_call_operand.vmem [shape: f32[128,128], index: 5, kind: output, shape index: {}]
  %s6 = sld [smem:[#allocation0]]
  $region30: #{vit_forward_pallas.7} parent=0
    _
  %s8 = ssub.s32 1, %s6
  %s9 = scalar_select 0, %s8, %s6
  // Predicated region
  $region2: #{vit_forward_pallas.7} parent=0 // pred_check
    _
  $region3: #{vit_forward_pallas.7} parent=0 // pred_check_branch
    %11 = sbr.rel (0) target = $region5
  $region4: #{vit_forward_pallas.7} parent=0 // pred_region
    _
  $region5: #{vit_forward_pallas.7} parent=0 // pred_fallthru
    _
  // Predicated region
  $region6: #{vit_forward_pallas.7} parent=0 // pred_check
    _
  $region7: #{vit_forward_pallas.7} parent=0 // pred_check_branch
    %13 = sbr.rel (0) target = $region9
  $region8: #{vit_forward_pallas.7} parent=0 // pred_region
    _
  $region9: #{vit_forward_pallas.7} parent=0 // pred_fallthru
    _
  // Predicated region
  $region10: #{vit_forward_pallas.7} parent=0 // pred_check
    _
  $region11: #{vit_forward_pallas.7} parent=0 // pred_check_branch
    %15 = sbr.rel (0) target = $region13
  $region12: #{vit_forward_pallas.7} parent=0 // pred_region
    _
  $region13: #{vit_forward_pallas.7} parent=0 // pred_fallthru
    _
  // Predicated region
  $region14: #{vit_forward_pallas.7} parent=0 // pred_check
    _
  $region15: #{vit_forward_pallas.7} parent=0 // pred_check_branch
    %17 = sbr.rel (0) target = $region17
  $region16: #{vit_forward_pallas.7} parent=0 // pred_region
    _
  $region17: #{vit_forward_pallas.7} parent=0 // pred_fallthru
    _
  // Predicated region
  $region18: #{vit_forward_pallas.7} parent=0 // pred_check
    _
  $region19: #{vit_forward_pallas.7} parent=0 // pred_check_branch
    %19 = sbr.rel (0) target = $region21
  $region20: #{vit_forward_pallas.7} parent=0 // pred_region
    _
  $region21: #{vit_forward_pallas.7} parent=0 // pred_fallthru
    _
  %v21 = vld [vmem:[%s0] sm:$0xf]
  %v22 = vld [vmem:[%s0 + $0x4] sm:$0xf]
  %v23 = vld [vmem:[%s0 + $0x8] sm:$0xf]
  %v24 = vld [vmem:[%s0 + $0xc] sm:$0xf]
  %v25 = vld [vmem:[%s0 + $0x10] sm:$0xf]
  %v26 = vld [vmem:[%s0 + $0x14] sm:$0xf]
  %v27 = vld [vmem:[%s0 + $0x18] sm:$0xf]
  %v28 = vld [vmem:[%s0 + $0x1c] sm:$0xf]
  %v29 = vld [vmem:[%s0 + $0x20] sm:$0xf]
  %v30 = vld [vmem:[%s0 + $0x24] sm:$0xf]
  %v31 = vld [vmem:[%s0 + $0x28] sm:$0xf]
  %v32 = vld [vmem:[%s0 + $0x2c] sm:$0xf]
  %v33 = vld [vmem:[%s0 + $0x30] sm:$0xf]
  %v34 = vld [vmem:[%s0 + $0x34] sm:$0xf]
  %v35 = vld [vmem:[%s0 + $0x38] sm:$0xf]
  %v36 = vld [vmem:[%s0 + $0x3c] sm:$0xf]
  %v37 = vunpack.c.l.bf16 %v21
  %v38 = vunpack.c.l.bf16 %v22
  %v39 = vunpack.c.l.bf16 %v23
  %v40 = vunpack.c.l.bf16 %v24
  %v41 = vunpack.c.l.bf16 %v25
  %v42 = vunpack.c.l.bf16 %v26
  %v43 = vunpack.c.l.bf16 %v27
  %v44 = vunpack.c.l.bf16 %v28
  %v45 = vunpack.c.l.bf16 %v29
  %v46 = vunpack.c.l.bf16 %v30
  %v47 = vunpack.c.l.bf16 %v31
  %v48 = vunpack.c.l.bf16 %v32
  %v49 = vunpack.c.l.bf16 %v33
  %v50 = vunpack.c.l.bf16 %v34
  %v51 = vunpack.c.l.bf16 %v35
  %v52 = vunpack.c.l.bf16 %v36
  %v53 = vld [vmem:[%s1] sm:$0x1]
  %v54 = vld [vmem:[%s2] sm:$0x1]
  %vm55 = vcmask 261120
  %v56 = vsel %vm55, %v37, 0.0
  %57 = vadd.xlane.f32.xlu0 %v56
  %v58 = vpop.xlane.xlu0 %57
  %v59 = vsel %vm55, %v38, 0.0
  %60 = vadd.xlane.f32.xlu0 %v59
  %v61 = vpop.xlane.xlu0 %60
  %v62 = vsel %vm55, %v39, 0.0
  %63 = vadd.xlane.f32.xlu0 %v62
  %v64 = vpop.xlane.xlu0 %63
  %v65 = vsel %vm55, %v40, 0.0
  %66 = vadd.xlane.f32.xlu0 %v65
  %v67 = vpop.xlane.xlu0 %66
  %v68 = vsel %vm55, %v41, 0.0
  %69 = vadd.xlane.f32.xlu0 %v68
  %v70 = vpop.xlane.xlu0 %69
  %v71 = vsel %vm55, %v42, 0.0
  %72 = vadd.xlane.f32.xlu0 %v71
  %v73 = vpop.xlane.xlu0 %72
  %v74 = vsel %vm55, %v43, 0.0
  %75 = vadd.xlane.f32.xlu0 %v74
  %v76 = vpop.xlane.xlu0 %75
  %v77 = vsel %vm55, %v44, 0.0
  %78 = vadd.xlane.f32.xlu0 %v77
  %v79 = vpop.xlane.xlu0 %78
  %v80 = vsel %vm55, %v45, 0.0
  %81 = vadd.xlane.f32.xlu0 %v80
  %v82 = vpop.xlane.xlu0 %81
  %v83 = vsel %vm55, %v46, 0.0
  %84 = vadd.xlane.f32.xlu0 %v83
  %v85 = vpop.xlane.xlu0 %84
  %v86 = vsel %vm55, %v47, 0.0
  %87 = vadd.xlane.f32.xlu0 %v86
  %v88 = vpop.xlane.xlu0 %87
  %v89 = vsel %vm55, %v48, 0.0
  %90 = vadd.xlane.f32.xlu0 %v89
  %v91 = vpop.xlane.xlu0 %90
  %v92 = vsel %vm55, %v49, 0.0
  %93 = vadd.xlane.f32.xlu0 %v92
  %v94 = vpop.xlane.xlu0 %93
  %v95 = vsel %vm55, %v50, 0.0
  %96 = vadd.xlane.f32.xlu0 %v95
  %v97 = vpop.xlane.xlu0 %96
  %v98 = vsel %vm55, %v51, 0.0
  %99 = vadd.xlane.f32.xlu0 %v98
  %v100 = vpop.xlane.xlu0 %99
  %v101 = vsel %vm55, %v52, 0.0
  %102 = vadd.xlane.f32.xlu0 %v101
  %v103 = vpop.xlane.xlu0 %102
  %v104 = vrcp.pop 32.0
  %v105 = vmul.f32 %v58, %v104
  %v106 = vmul.f32 %v61, %v104
  %v107 = vmul.f32 %v64, %v104
  %v108 = vmul.f32 %v67, %v104
  %v109 = vmul.f32 %v70, %v104
  %v110 = vmul.f32 %v73, %v104
  %v111 = vmul.f32 %v76, %v104
  %v112 = vmul.f32 %v79, %v104
  %v113 = vmul.f32 %v82, %v104
  %v114 = vmul.f32 %v85, %v104
  %v115 = vmul.f32 %v88, %v104
  %v116 = vmul.f32 %v91, %v104
  %v117 = vmul.f32 %v94, %v104
  %v118 = vmul.f32 %v97, %v104
  %v119 = vmul.f32 %v100, %v104
  %v120 = vmul.f32 %v103, %v104
  %v121 = vsub.f32 %v37, %v105
  %v122 = vsub.f32 %v38, %v106
  %v123 = vsub.f32 %v39, %v107
  %v124 = vsub.f32 %v40, %v108
  %v125 = vsub.f32 %v41, %v109
  %v126 = vsub.f32 %v42, %v110
  %v127 = vsub.f32 %v43, %v111
  %v128 = vsub.f32 %v44, %v112
  %v129 = vsub.f32 %v45, %v113
  %v130 = vsub.f32 %v46, %v114
  %v131 = vsub.f32 %v47, %v115
  %v132 = vsub.f32 %v48, %v116
  %v133 = vsub.f32 %v49, %v117
  %v134 = vsub.f32 %v50, %v118
  %v135 = vsub.f32 %v51, %v119
  %v136 = vsub.f32 %v52, %v120
  %v137 = vmul.f32 %v121, %v121
  %v138 = vmul.f32 %v122, %v122
  %v139 = vmul.f32 %v123, %v123
  %v140 = vmul.f32 %v124, %v124
  %v141 = vmul.f32 %v125, %v125
  %v142 = vmul.f32 %v126, %v126
  %v143 = vmul.f32 %v127, %v127
  %v144 = vmul.f32 %v128, %v128
  %v145 = vmul.f32 %v129, %v129
  %v146 = vmul.f32 %v130, %v130
  %v147 = vmul.f32 %v131, %v131
  %v148 = vmul.f32 %v132, %v132
  %v149 = vmul.f32 %v133, %v133
  %v150 = vmul.f32 %v134, %v134
  %v151 = vmul.f32 %v135, %v135
  %v152 = vmul.f32 %v136, %v136
  %v153 = vsel %vm55, %v137, 0.0
  %154 = vadd.xlane.f32.xlu0 %v153
  %v155 = vpop.xlane.xlu0 %154
  %v156 = vsel %vm55, %v138, 0.0
  %157 = vadd.xlane.f32.xlu0 %v156
  %v158 = vpop.xlane.xlu0 %157
  %v159 = vsel %vm55, %v139, 0.0
  %160 = vadd.xlane.f32.xlu0 %v159
  %v161 = vpop.xlane.xlu0 %160
  %v162 = vsel %vm55, %v140, 0.0
  %163 = vadd.xlane.f32.xlu0 %v162
  %v164 = vpop.xlane.xlu0 %163
  %v165 = vsel %vm55, %v141, 0.0
  %166 = vadd.xlane.f32.xlu0 %v165
  %v167 = vpop.xlane.xlu0 %166
  %v168 = vsel %vm55, %v142, 0.0
  %169 = vadd.xlane.f32.xlu0 %v168
  %v170 = vpop.xlane.xlu0 %169
  %v171 = vsel %vm55, %v143, 0.0
  %172 = vadd.xlane.f32.xlu0 %v171
  %v173 = vpop.xlane.xlu0 %172
  %v174 = vsel %vm55, %v144, 0.0
  %175 = vadd.xlane.f32.xlu0 %v174
  %v176 = vpop.xlane.xlu0 %175
  %v177 = vsel %vm55, %v145, 0.0
  %178 = vadd.xlane.f32.xlu0 %v177
  %v179 = vpop.xlane.xlu0 %178
  %v180 = vsel %vm55, %v146, 0.0
  %181 = vadd.xlane.f32.xlu0 %v180
  %v182 = vpop.xlane.xlu0 %181
  %v183 = vsel %vm55, %v147, 0.0
  %184 = vadd.xlane.f32.xlu0 %v183
  %v185 = vpop.xlane.xlu0 %184
  %v186 = vsel %vm55, %v148, 0.0
  %187 = vadd.xlane.f32.xlu0 %v186
  %v188 = vpop.xlane.xlu0 %187
  %v189 = vsel %vm55, %v149, 0.0
  %190 = vadd.xlane.f32.xlu0 %v189
  %v191 = vpop.xlane.xlu0 %190
  %v192 = vsel %vm55, %v150, 0.0
  %193 = vadd.xlane.f32.xlu0 %v192
  %v194 = vpop.xlane.xlu0 %193
  %v195 = vsel %vm55, %v151, 0.0
  %196 = vadd.xlane.f32.xlu0 %v195
  %v197 = vpop.xlane.xlu0 %196
  %v198 = vsel %vm55, %v152, 0.0
  %199 = vadd.xlane.f32.xlu0 %v198
  %v200 = vpop.xlane.xlu0 %199
  %v201 = vmul.f32 %v155, %v104
  %v202 = vmul.f32 %v158, %v104
  %v203 = vmul.f32 %v161, %v104
  %v204 = vmul.f32 %v164, %v104
  %v205 = vmul.f32 %v167, %v104
  %v206 = vmul.f32 %v170, %v104
  %v207 = vmul.f32 %v173, %v104
  %v208 = vmul.f32 %v176, %v104
  %v209 = vmul.f32 %v179, %v104
  %v210 = vmul.f32 %v182, %v104
  %v211 = vmul.f32 %v185, %v104
  %v212 = vmul.f32 %v188, %v104
  %v213 = vmul.f32 %v191, %v104
  %v214 = vmul.f32 %v194, %v104
  %v215 = vmul.f32 %v197, %v104
  %v216 = vmul.f32 %v200, %v104
  %v217 = vadd.f32 %v201, 1e-05
  %v218 = vadd.f32 %v202, 1e-05
  %v219 = vadd.f32 %v203, 1e-05
  %v220 = vadd.f32 %v204, 1e-05
  %v221 = vadd.f32 %v205, 1e-05
  %v222 = vadd.f32 %v206, 1e-05
  %v223 = vadd.f32 %v207, 1e-05
  %v224 = vadd.f32 %v208, 1e-05
  %v225 = vadd.f32 %v209, 1e-05
  %v226 = vadd.f32 %v210, 1e-05
  %v227 = vadd.f32 %v211, 1e-05
  %v228 = vadd.f32 %v212, 1e-05
  %v229 = vadd.f32 %v213, 1e-05
  %v230 = vadd.f32 %v214, 1e-05
  %v231 = vadd.f32 %v215, 1e-05
  %v232 = vadd.f32 %v216, 1e-05
  %v233 = vrsqrt.pop %v217
  %v234 = vrsqrt.pop %v218
  %v235 = vrsqrt.pop %v219
  %v236 = vrsqrt.pop %v220
  %v237 = vrsqrt.pop %v221
  %v238 = vrsqrt.pop %v222
  %v239 = vrsqrt.pop %v223
  %v240 = vrsqrt.pop %v224
  %v241 = vrsqrt.pop %v225
  %v242 = vrsqrt.pop %v226
  %v243 = vrsqrt.pop %v227
  %v244 = vrsqrt.pop %v228
  %v245 = vrsqrt.pop %v229
  %v246 = vrsqrt.pop %v230
  %v247 = vrsqrt.pop %v231
  %v248 = vrsqrt.pop %v232
  %v249 = vmul.f32 %v121, %v233
  %v250 = vmul.f32 %v122, %v234
  %v251 = vmul.f32 %v123, %v235
  %v252 = vmul.f32 %v124, %v236
  %v253 = vmul.f32 %v125, %v237
  %v254 = vmul.f32 %v126, %v238
  %v255 = vmul.f32 %v127, %v239
  %v256 = vmul.f32 %v128, %v240
  %v257 = vmul.f32 %v129, %v241
  %v258 = vmul.f32 %v130, %v242
  %v259 = vmul.f32 %v131, %v243
  %v260 = vmul.f32 %v132, %v244
  %v261 = vmul.f32 %v133, %v245
  %v262 = vmul.f32 %v134, %v246
  %v263 = vmul.f32 %v135, %v247
  %v264 = vmul.f32 %v136, %v248
  %v266 = vlaneseq
  %v267 = vshrl.u32 %v266, 7
  %v268 = vsub.s32 0, %v267
  %v269 = vrot.slane %v53, %v268
  %v271 = vmul.f32 %v249, %v269
  %v272 = vmul.f32 %v250, %v269
  %v273 = vmul.f32 %v251, %v269
  %v274 = vmul.f32 %v252, %v269
  %v275 = vmul.f32 %v253, %v269
  %v276 = vmul.f32 %v254, %v269
  %v277 = vmul.f32 %v255, %v269
  %v278 = vmul.f32 %v256, %v269
  %v279 = vmul.f32 %v257, %v269
  %v280 = vmul.f32 %v258, %v269
  %v281 = vmul.f32 %v259, %v269
  %v282 = vmul.f32 %v260, %v269
  %v283 = vmul.f32 %v261, %v269
  %v284 = vmul.f32 %v262, %v269
  %v285 = vmul.f32 %v263, %v269
  %v286 = vmul.f32 %v264, %v269
  %v288 = vlaneseq
  %v289 = vshrl.u32 %v288, 7
  %v290 = vsub.s32 0, %v289
  %v291 = vrot.slane %v54, %v290
  %v293 = vadd.f32 %v271, %v291
  %v294 = vadd.f32 %v272, %v291
  %v295 = vadd.f32 %v273, %v291
  %v296 = vadd.f32 %v274, %v291
  %v297 = vadd.f32 %v275, %v291
  %v298 = vadd.f32 %v276, %v291
  %v299 = vadd.f32 %v277, %v291
  %v300 = vadd.f32 %v278, %v291
  %v301 = vadd.f32 %v279, %v291
  %v302 = vadd.f32 %v280, %v291
  %v303 = vadd.f32 %v281, %v291
  %v304 = vadd.f32 %v282, %v291
  %v305 = vadd.f32 %v283, %v291
  %v306 = vadd.f32 %v284, %v291
  %v307 = vadd.f32 %v285, %v291
  %v308 = vadd.f32 %v286, %v291
  %v309 = vpack.c.bf16 %v294, %v293
  %v310 = vpack.c.bf16 %v296, %v295
  %v311 = vpack.c.bf16 %v298, %v297
  %v312 = vpack.c.bf16 %v300, %v299
  %v313 = vpack.c.bf16 %v302, %v301
  %v314 = vpack.c.bf16 %v304, %v303
  %v315 = vpack.c.bf16 %v306, %v305
  %v316 = vpack.c.bf16 %v308, %v307
  %v317 = vld [vmem:[%s3] sm:$0xf]
  %v318 = vld [vmem:[%s3 + $0x4] sm:$0xf]
  %v319 = vld [vmem:[%s3 + $0x8] sm:$0xf]
  %v320 = vld [vmem:[%s3 + $0xc] sm:$0xf]
  %v321 = vld [vmem:[%s4] sm:$0x1]
  %v323 = vlaneseq
  %v324 = vshrl.u32 %v323, 7
  %v325 = vsub.s32 0, %v324
  %v326 = vrot.slane %v321, %v325
  %v332 = vunpack.c.l.b16 %v317
  %v333 = vunpack.c.l.b16 %v318
  %v334 = vunpack.c.l.b16 %v319
  %v335 = vunpack.c.l.b16 %v320
  %v336 = vpack.c.b16 %v333, %v332
  %v337 = vpack.c.b16 %v335, %v334
  %v341 = vsel %vm55, %v309, 0
  %v344 = vsel %vm55, %v310, 0
  %v347 = vsel %vm55, %v311, 0
  %v350 = vsel %vm55, %v312, 0
  %v353 = vsel %vm55, %v313, 0
  %v356 = vsel %vm55, %v314, 0
  %v359 = vsel %vm55, %v315, 0
  %v362 = vsel %vm55, %v316, 0
  %364 = vmatprep.subr.bf16.mxu0 0
  %365 = vmatpush1.bf16.msra.mxu0 %v336
  %366 = vmatprep.subr.bf16.mxu0 0
  %367 = vmatpush1.bf16.msra.mxu0 %v337
  %368 = vmatprep.subr.bf16.mxu0 0
  %369 = vmatpush1.bf16.msra.mxu0 0
  %370 = vmatprep.subr.bf16.mxu0 0
  %371 = vmatpush1.bf16.msra.mxu0 0
  %372 = vmatprep.subr.bf16.mxu0 0
  %373 = vmatpush1.bf16.msra.mxu0 0
  %374 = vmatprep.subr.bf16.mxu0 0
  %375 = vmatpush1.bf16.msra.mxu0 0
  %376 = vmatprep.subr.bf16.mxu0 0
  %377 = vmatpush1.bf16.msra.mxu0 0
  %378 = vmatprep.subr.bf16.mxu0 0
  %379 = vmatpush1.bf16.msra.mxu0 0
  %380 = vmatprep.subr.bf16.mxu0 0
  %381 = vmatpush1.bf16.msra.mxu0 0
  %382 = vmatprep.subr.bf16.mxu0 0
  %383 = vmatpush1.bf16.msra.mxu0 0
  %384 = vmatprep.subr.bf16.mxu0 0
  %385 = vmatpush1.bf16.msra.mxu0 0
  %386 = vmatprep.subr.bf16.mxu0 0
  %387 = vmatpush1.bf16.msra.mxu0 0
  %388 = vmatprep.subr.bf16.mxu0 0
  %389 = vmatpush1.bf16.msra.mxu0 0
  %390 = vmatprep.subr.bf16.mxu0 0
  %391 = vmatpush1.bf16.msra.mxu0 0
  %392 = vmatprep.subr.bf16.mxu0 0
  %393 = vmatpush1.bf16.msra.mxu0 0
  %394 = vmatprep.subr.bf16.mxu0 0
  %395 = vmatpush1.bf16.msra.mxu0 0
  %396 = vmatprep.mubr.bf16.mxu0 0
  %397 = vmatmul.mubr.bf16.gmra.mrb[0].mxu0 %v341
  %v398 = vpop.f32.mrb[0].mxu0
  %v399 = vadd.f32 %v326, %v398
  %v400 = vpop.f32.mrb[0].mxu0
  %v401 = vpop.f32.mrb[0].mxu0
  %v402 = vadd.f32 %v326, %v401
  %v403 = vpop.f32.mrb[0].mxu0
  %404 = vmatprep.mubr.bf16.mxu0 0
  %405 = vmatmul.mubr.bf16.gmra.mrb[0].mxu0 %v344
  %v406 = vpop.f32.mrb[0].mxu0
  %v407 = vadd.f32 %v326, %v406
  %v408 = vpop.f32.mrb[0].mxu0
  %v409 = vpop.f32.mrb[0].mxu0
  %v410 = vadd.f32 %v326, %v409
  %v411 = vpop.f32.mrb[0].mxu0
  %412 = vmatprep.mubr.bf16.mxu0 0
  %413 = vmatmul.mubr.bf16.gmra.mrb[0].mxu0 %v347
  %v414 = vpop.f32.mrb[0].mxu0
  %v415 = vadd.f32 %v326, %v414
  %v416 = vpop.f32.mrb[0].mxu0
  %v417 = vpop.f32.mrb[0].mxu0
  %v418 = vadd.f32 %v326, %v417
  %v419 = vpop.f32.mrb[0].mxu0
  %420 = vmatprep.mubr.bf16.mxu0 0
  %421 = vmatmul.mubr.bf16.gmra.mrb[0].mxu0 %v350
  %v422 = vpop.f32.mrb[0].mxu0
  %v423 = vadd.f32 %v326, %v422
  %v424 = vpop.f32.mrb[0].mxu0
  %v425 = vpop.f32.mrb[0].mxu0
  %v426 = vadd.f32 %v326, %v425
  %v427 = vpop.f32.mrb[0].mxu0
  %428 = vmatprep.mubr.bf16.mxu0 0
  %429 = vmatmul.mubr.bf16.gmra.mrb[0].mxu0 %v353
  %v430 = vpop.f32.mrb[0].mxu0
  %v431 = vadd.f32 %v326, %v430
  %v432 = vpop.f32.mrb[0].mxu0
  %v433 = vpop.f32.mrb[0].mxu0
  %v434 = vadd.f32 %v326, %v433
  %v435 = vpop.f32.mrb[0].mxu0
  %436 = vmatprep.mubr.bf16.mxu0 0
  %437 = vmatmul.mubr.bf16.gmra.mrb[0].mxu0 %v356
  %v438 = vpop.f32.mrb[0].mxu0
  %v439 = vadd.f32 %v326, %v438
  %v440 = vpop.f32.mrb[0].mxu0
  %v441 = vpop.f32.mrb[0].mxu0
  %v442 = vadd.f32 %v326, %v441
  %v443 = vpop.f32.mrb[0].mxu0
  %444 = vmatprep.mubr.bf16.mxu0 0
  %445 = vmatmul.mubr.bf16.gmra.mrb[0].mxu0 %v359
  %v446 = vpop.f32.mrb[0].mxu0
  %v447 = vadd.f32 %v326, %v446
  %v448 = vpop.f32.mrb[0].mxu0
  %v449 = vpop.f32.mrb[0].mxu0
  %v450 = vadd.f32 %v326, %v449
  %v451 = vpop.f32.mrb[0].mxu0
  %452 = vmatprep.mubr.bf16.mxu0 0
  %453 = vmatmul.mubr.bf16.gmra.mrb[0].mxu0 %v362
  %v454 = vpop.f32.mrb[0].mxu0
  %v455 = vadd.f32 %v326, %v454
  %v456 = vpop.f32.mrb[0].mxu0
  %v457 = vpop.f32.mrb[0].mxu0
  %v458 = vadd.f32 %v326, %v457
  %v459 = vpop.f32.mrb[0].mxu0
  %460 = vdwg.mxu0
  %461 = vst [vmem:[%s5] sm:$0xff] %v399
  %462 = vst [vmem:[%s5 + $0x8] sm:$0xff] %v402
  %463 = vst [vmem:[%s5 + $0x10] sm:$0xff] %v407
  %464 = vst [vmem:[%s5 + $0x18] sm:$0xff] %v410
  %465 = vst [vmem:[%s5 + $0x20] sm:$0xff] %v415
  %466 = vst [vmem:[%s5 + $0x28] sm:$0xff] %v418
  %467 = vst [vmem:[%s5 + $0x30] sm:$0xff] %v423
  %468 = vst [vmem:[%s5 + $0x38] sm:$0xff] %v426
  %469 = vst [vmem:[%s5 + $0x40] sm:$0xff] %v431
  %470 = vst [vmem:[%s5 + $0x48] sm:$0xff] %v434
  %471 = vst [vmem:[%s5 + $0x50] sm:$0xff] %v439
  %472 = vst [vmem:[%s5 + $0x58] sm:$0xff] %v442
  %473 = vst [vmem:[%s5 + $0x60] sm:$0xff] %v447
  %474 = vst [vmem:[%s5 + $0x68] sm:$0xff] %v450
  %475 = vst [vmem:[%s5 + $0x70] sm:$0xff] %v455
  %476 = vst [vmem:[%s5 + $0x78] sm:$0xff] %v458
  // Predicated region
  $region22: #{vit_forward_pallas.7} parent=0 // pred_check
    _
  $region23: #{vit_forward_pallas.7} parent=0 // pred_check_branch
    %478 = sbr.rel (0) target = $region25
  $region24: #{vit_forward_pallas.7} parent=0 // pred_region
    _
  $region25: #{vit_forward_pallas.7} parent=0 // pred_fallthru
    _
  // Predicated region
  $region26: #{vit_forward_pallas.7} parent=0 // pred_check
    _
  $region27: #{vit_forward_pallas.7} parent=0 // pred_check_branch
    %480 = sbr.rel (0) target = $region29
  $region28: #{vit_forward_pallas.7} parent=0 // pred_region
    _
  $region29: #{vit_forward_pallas.7} parent=0 // pred_fallthru
    _

</llo_original>
